<compile_context>
chip_gen: v6e
topology: v6e:2x2x1
jax: 0.10.0
libtpu: 0.0.40
codegen_flags: <defaults>
</compile_context>

<pallas_src>
import jax
import jax.numpy as jnp
from jax import lax
from jax.experimental import pallas as pl
from jax.experimental.pallas import tpu as pltpu

KH = KW = 49
PAD = 24  # output spatial size == input spatial size (H + 2*24 - 49 + 1 = H)


def _conv_kernel(x_ref, b_ref, o_ref):
    """One batch element.

    x_ref : (1, Hp, Cin*Wp)        padded, channel-folded input slab (lane-dense)
    b_ref : (KH, Cin*Wp, Cout*W)   banded weights (lane-dense)
    o_ref : (1, H, Cout*W)         output slab (lane-dense, last dim multiple of 128)
    """
    H = o_ref.shape[1]
    ncols = o_ref.shape[2]          # Cout * W
    kh_taps = b_ref.shape[0]        # KH

    acc = jnp.zeros((H, ncols), jnp.float32)
    # Fully static 49-tap loop: each tap is one dense (H, K) @ (K, Cout*W) MXU matmul
    # with K = Cin*Wp (>= 128), operands read via static sublane-offset slices.
    for kh in range(kh_taps):
        x_win = x_ref[0, kh:kh + H, :]                       # (H, Cin*Wp)
        acc = acc + jnp.dot(x_win, b_ref[kh],
                            preferred_element_type=jnp.float32)
    o_ref[0] = acc.astype(o_ref.dtype)


def _build_banded_weights(weight_oihw, W, Wp):
    """(Cout, Cin, KH, KW) -> banded (KH, Cin*Wp, Cout*W) matrix.

    B[kh, ci*Wp + wp, co*W + w] = weight[co, ci, kh, wp - w]  if 0 <= wp - w < KW else 0
    """
    Cout, Cin, _, _ = weight_oihw.shape
    wt = jnp.transpose(weight_oihw, (2, 1, 3, 0))            # (KH, Cin, KW, Cout)

    wp_idx = jnp.arange(Wp)[:, None]                         # (Wp, 1)
    w_idx = jnp.arange(W)[None, :]                           # (1, W)
    kw_idx = wp_idx - w_idx                                  # (Wp, W)
    mask = (kw_idx >= 0) & (kw_idx < KW)
    kw_clamped = jnp.clip(kw_idx, 0, KW - 1)

    band = wt[:, :, kw_clamped, :]                           # (KH, Cin, Wp, W, Cout)
    band = jnp.where(mask[None, None, :, :, None], band, 0.0)
    band = jnp.transpose(band, (0, 1, 2, 4, 3))              # (KH, Cin, Wp, Cout, W)
    return band.reshape(KH, Cin * Wp, Cout * W)


def basic_refine_forward(x_nchw, weight_oihw):
    """Forward pass of BasicRefine.

    x_nchw      : (N, Cin, H, W)      float32
    weight_oihw : (Cout, Cin, KH, KW) float32
    returns     : (N, Cout, H, W)     float32
    """
    N, Cin, H, W = x_nchw.shape
    Cout = weight_oihw.shape[0]
    Hp, Wp = H + 2 * PAD, W + 2 * PAD

    # ---- layout plumbing (plain JAX) ----
    x_pad = jnp.pad(x_nchw, ((0, 0), (0, 0), (PAD, PAD), (PAD, PAD)))   # (N, Cin, Hp, Wp)
    # [n, hp, ci*Wp + wp] : lane-dense last dim (Cin*Wp)
    x2 = jnp.transpose(x_pad, (0, 2, 1, 3)).reshape(N, Hp, Cin * Wp)
    b = _build_banded_weights(weight_oihw, W, Wp)                        # (KH, Cin*Wp, Cout*W)

    out2 = pl.pallas_call(
        _conv_kernel,
        out_shape=jax.ShapeDtypeStruct((N, H, Cout * W), jnp.float32),
        grid_spec=pltpu.PrefetchScalarGridSpec(
            num_scalar_prefetch=0,
            grid=(N,),
            in_specs=[
                pl.BlockSpec((1, Hp, Cin * Wp), lambda bidx: (bidx, 0, 0)),
                pl.BlockSpec((KH, Cin * Wp, Cout * W), lambda bidx: (0, 0, 0)),
            ],
            out_specs=pl.BlockSpec((1, H, Cout * W), lambda bidx: (bidx, 0, 0)),
        ),
        compiler_params=pltpu.CompilerParams(
            dimension_semantics=("parallel",),
            vmem_limit_bytes=32 * 1024 * 1024,
        ),
    )(x2, b)

    # (N, H, Cout*W) -> (N, Cout, H, W)  (PyTorch NCHW convention)
    out = out2.reshape(N, H, Cout, W)
    return jnp.transpose(out, (0, 2, 1, 3))


def _reference_forward(x_nchw, weight_oihw):
    """Pure-JAX reference (XLA conv) for correctness checking."""
    return lax.conv_general_dilated(
        x_nchw,
        weight_oihw,
        window_strides=(1, 1),
        padding=((PAD, PAD), (PAD, PAD)),
        dimension_numbers=("NCHW", "OIHW", "NCHW"),
    )


if __name__ == "__main__":
    # Small shapes consistent with the module: inplanes=4, planes=8, 16x16 spatial.
    N, Cin, Cout, H, W = 2, 4, 8, 16, 16

    key = jax.random.PRNGKey(0)
    kx, kw = jax.random.split(key)
    x = jax.random.normal(kx, (N, Cin, H, W), dtype=jnp.float32)
    # Deterministic synthetic weights (PyTorch shape: (Cout, Cin, 49, 49)).
    weight = jax.random.normal(kw, (Cout, Cin, KH, KW), dtype=jnp.float32) * 0.02

    fwd = jax.jit(basic_refine_forward)
    out = jax.block_until_ready(fwd(x, weight))

    ref = jax.block_until_ready(_reference_forward(x, weight))
    assert out.shape == (N, Cout, H, W)
    assert jnp.allclose(out, ref, rtol=1e-3, atol=1e-3), "mismatch vs XLA conv reference"

    print("KERNEL_OK")
</pallas_src>

<mosaic_0001>
module attributes {stable_mosaic.version = 11 : i64} {
  func.func @_conv_kernel(%arg0: i32, %arg1: memref<1x64x256xf32, #tpu.memory_space<vmem>>, %arg2: memref<49x256x128xf32, #tpu.memory_space<vmem>>, %arg3: memref<1x16x128xf32, #tpu.memory_space<vmem>>) attributes {dimension_semantics = [#tpu.dimension_semantics<parallel>], iteration_bounds = array<i64: 2>, scalar_prefetch = 0 : i64, scratch_operands = 0 : i64, tpu.core_type = #tpu.core_type<tc>, window_params = [{transform_indices = @transform_0, window_bounds = array<i64: 1, 64, 256>}, {pipeline_mode = #tpu.pipeline_mode<synchronous>, transform_indices = @transform_1, window_bounds = array<i64: 49, 256, 128>}, {transform_indices = @transform_2, window_bounds = array<i64: 1, 16, 128>}]} {
    %cst = arith.constant 0.000000e+00 : f32
    %0 = vector.broadcast %cst : f32 to vector<16x128xf32>
    %c0 = arith.constant 0 : index
    %c0_0 = arith.constant 0 : index
    %c0_1 = arith.constant 0 : index
    %1 = vector.load %arg1[%c0, %c0_0, %c0_1] : memref<1x64x256xf32, #tpu.memory_space<vmem>>, vector<1x16x256xf32>
    %2 = vector.shape_cast %1 : vector<1x16x256xf32> to vector<16x256xf32>
    %c0_2 = arith.constant 0 : index
    %c0_3 = arith.constant 0 : index
    %c0_4 = arith.constant 0 : index
    %3 = vector.load %arg2[%c0_2, %c0_3, %c0_4] : memref<49x256x128xf32, #tpu.memory_space<vmem>>, vector<1x256x128xf32>
    %4 = vector.shape_cast %3 : vector<1x256x128xf32> to vector<256x128xf32>
    %cst_5 = arith.constant dense<0.000000e+00> : vector<16x128xf32>
    %5 = tpu.matmul %2, %4, %cst_5 {dimension_numbers = #tpu.dot_dimension_numbers<[1], [0], [0], [1], [0, 0, 1, 1], [], []>} : vector<16x256xf32>, vector<256x128xf32>, vector<16x128xf32> -> vector<16x128xf32>
    %6 = arith.addf %0, %5 : vector<16x128xf32>
    %c0_6 = arith.constant 0 : index
    %c1 = arith.constant 1 : index
    %c0_7 = arith.constant 0 : index
    %7 = vector.load %arg1[%c0_6, %c1, %c0_7] : memref<1x64x256xf32, #tpu.memory_space<vmem>>, vector<1x16x256xf32>
    %8 = vector.shape_cast %7 : vector<1x16x256xf32> to vector<16x256xf32>
    %c1_8 = arith.constant 1 : index
    %c0_9 = arith.constant 0 : index
    %c0_10 = arith.constant 0 : index
    %9 = vector.load %arg2[%c1_8, %c0_9, %c0_10] : memref<49x256x128xf32, #tpu.memory_space<vmem>>, vector<1x256x128xf32>
    %10 = vector.shape_cast %9 : vector<1x256x128xf32> to vector<256x128xf32>
    %cst_11 = arith.constant dense<0.000000e+00> : vector<16x128xf32>
    %11 = tpu.matmul %8, %10, %cst_11 {dimension_numbers = #tpu.dot_dimension_numbers<[1], [0], [0], [1], [0, 0, 1, 1], [], []>} : vector<16x256xf32>, vector<256x128xf32>, vector<16x128xf32> -> vector<16x128xf32>
    %12 = arith.addf %6, %11 : vector<16x128xf32>
    %c0_12 = arith.constant 0 : index
    %c2 = arith.constant 2 : index
    %c0_13 = arith.constant 0 : index
    %13 = vector.load %arg1[%c0_12, %c2, %c0_13] : memref<1x64x256xf32, #tpu.memory_space<vmem>>, vector<1x16x256xf32>
    %14 = vector.shape_cast %13 : vector<1x16x256xf32> to vector<16x256xf32>
    %c2_14 = arith.constant 2 : index
    %c0_15 = arith.constant 0 : index
    %c0_16 = arith.constant 0 : index
    %15 = vector.load %arg2[%c2_14, %c0_15, %c0_16] : memref<49x256x128xf32, #tpu.memory_space<vmem>>, vector<1x256x128xf32>
    %16 = vector.shape_cast %15 : vector<1x256x128xf32> to vector<256x128xf32>
    %cst_17 = arith.constant dense<0.000000e+00> : vector<16x128xf32>
    %17 = tpu.matmul %14, %16, %cst_17 {dimension_numbers = #tpu.dot_dimension_numbers<[1], [0], [0], [1], [0, 0, 1, 1], [], []>} : vector<16x256xf32>, vector<256x128xf32>, vector<16x128xf32> -> vector<16x128xf32>
    %18 = arith.addf %12, %17 : vector<16x128xf32>
    %c0_18 = arith.constant 0 : index
    %c3 = arith.constant 3 : index
    %c0_19 = arith.constant 0 : index
    %19 = vector.load %arg1[%c0_18, %c3, %c0_19] : memref<1x64x256xf32, #tpu.memory_space<vmem>>, vector<1x16x256xf32>
    %20 = vector.shape_cast %19 : vector<1x16x256xf32> to vector<16x256xf32>
    %c3_20 = arith.constant 3 : index
    %c0_21 = arith.constant 0 : index
    %c0_22 = arith.constant 0 : index
    %21 = vector.load %arg2[%c3_20, %c0_21, %c0_22] : memref<49x256x128xf32, #tpu.memory_space<vmem>>, vector<1x256x128xf32>
    %22 = vector.shape_cast %21 : vector<1x256x128xf32> to vector<256x128xf32>
    %cst_23 = arith.constant dense<0.000000e+00> : vector<16x128xf32>
    %23 = tpu.matmul %20, %22, %cst_23 {dimension_numbers = #tpu.dot_dimension_numbers<[1], [0], [0], [1], [0, 0, 1, 1], [], []>} : vector<16x256xf32>, vector<256x128xf32>, vector<16x128xf32> -> vector<16x128xf32>
    %24 = arith.addf %18, %23 : vector<16x128xf32>
    %c0_24 = arith.constant 0 : index
    %c4 = arith.constant 4 : index
    %c0_25 = arith.constant 0 : index
    %25 = vector.load %arg1[%c0_24, %c4, %c0_25] : memref<1x64x256xf32, #tpu.memory_space<vmem>>, vector<1x16x256xf32>
    %26 = vector.shape_cast %25 : vector<1x16x256xf32> to vector<16x256xf32>
    %c4_26 = arith.constant 4 : index
    %c0_27 = arith.constant 0 : index
    %c0_28 = arith.constant 0 : index
    %27 = vector.load %arg2[%c4_26, %c0_27, %c0_28] : memref<49x256x128xf32, #tpu.memory_space<vmem>>, vector<1x256x128xf32>
    %28 = vector.shape_cast %27 : vector<1x256x128xf32> to vector<256x128xf32>
    %cst_29 = arith.constant dense<0.000000e+00> : vector<16x128xf32>
    %29 = tpu.matmul %26, %28, %cst_29 {dimension_numbers = #tpu.dot_dimension_numbers<[1], [0], [0], [1], [0, 0, 1, 1], [], []>} : vector<16x256xf32>, vector<256x128xf32>, vector<16x128xf32> -> vector<16x128xf32>
    %30 = arith.addf %24, %29 : vector<16x128xf32>
    %c0_30 = arith.constant 0 : index
    %c5 = arith.constant 5 : index
    %c0_31 = arith.constant 0 : index
    %31 = vector.load %arg1[%c0_30, %c5, %c0_31] : memref<1x64x256xf32, #tpu.memory_space<vmem>>, vector<1x16x256xf32>
    %32 = vector.shape_cast %31 : vector<1x16x256xf32> to vector<16x256xf32>
    %c5_32 = arith.constant 5 : index
    %c0_33 = arith.constant 0 : index
    %c0_34 = arith.constant 0 : index
    %33 = vector.load %arg2[%c5_32, %c0_33, %c0_34] : memref<49x256x128xf32, #tpu.memory_space<vmem>>, vector<1x256x128xf32>
    %34 = vector.shape_cast %33 : vector<1x256x128xf32> to vector<256x128xf32>
    %cst_35 = arith.constant dense<0.000000e+00> : vector<16x128xf32>
    %35 = tpu.matmul %32, %34, %cst_35 {dimension_numbers = #tpu.dot_dimension_numbers<[1], [0], [0], [1], [0, 0, 1, 1], [], []>} : vector<16x256xf32>, vector<256x128xf32>, vector<16x128xf32> -> vector<16x128xf32>
    %36 = arith.addf %30, %35 : vector<16x128xf32>
    %c0_36 = arith.constant 0 : index
    %c6 = arith.constant 6 : index
    %c0_37 = arith.constant 0 : index
    %37 = vector.load %arg1[%c0_36, %c6, %c0_37] : memref<1x64x256xf32, #tpu.memory_space<vmem>>, vector<1x16x256xf32>
    %38 = vector.shape_cast %37 : vector<1x16x256xf32> to vector<16x256xf32>
    %c6_38 = arith.constant 6 : index
    %c0_39 = arith.constant 0 : index
    %c0_40 = arith.constant 0 : index
    %39 = vector.load %arg2[%c6_38, %c0_39, %c0_40] : memref<49x256x128xf32, #tpu.memory_space<vmem>>, vector<1x256x128xf32>
    %40 = vector.shape_cast %39 : vector<1x256x128xf32> to vector<256x128xf32>
    %cst_41 = arith.constant dense<0.000000e+00> : vector<16x128xf32>
    %41 = tpu.matmul %38, %40, %cst_41 {dimension_numbers = #tpu.dot_dimension_numbers<[1], [0], [0], [1], [0, 0, 1, 1], [], []>} : vector<16x256xf32>, vector<256x128xf32>, vector<16x128xf32> -> vector<16x128xf32>
    %42 = arith.addf %36, %41 : vector<16x128xf32>
    %c0_42 = arith.constant 0 : index
    %c7 = arith.constant 7 : index
    %c0_43 = arith.constant 0 : index
    %43 = vector.load %arg1[%c0_42, %c7, %c0_43] : memref<1x64x256xf32, #tpu.memory_space<vmem>>, vector<1x16x256xf32>
    %44 = vector.shape_cast %43 : vector<1x16x256xf32> to vector<16x256xf32>
    %c7_44 = arith.constant 7 : index
    %c0_45 = arith.constant 0 : index
    %c0_46 = arith.constant 0 : index
    %45 = vector.load %arg2[%c7_44, %c0_45, %c0_46] : memref<49x256x128xf32, #tpu.memory_space<vmem>>, vector<1x256x128xf32>
    %46 = vector.shape_cast %45 : vector<1x256x128xf32> to vector<256x128xf32>
    %cst_47 = arith.constant dense<0.000000e+00> : vector<16x128xf32>
    %47 = tpu.matmul %44, %46, %cst_47 {dimension_numbers = #tpu.dot_dimension_numbers<[1], [0], [0], [1], [0, 0, 1, 1], [], []>} : vector<16x256xf32>, vector<256x128xf32>, vector<16x128xf32> -> vector<16x128xf32>
    %48 = arith.addf %42, %47 : vector<16x128xf32>
    %c0_48 = arith.constant 0 : index
    %c8 = arith.constant 8 : index
    %c0_49 = arith.constant 0 : index
    %49 = vector.load %arg1[%c0_48, %c8, %c0_49] : memref<1x64x256xf32, #tpu.memory_space<vmem>>, vector<1x16x256xf32>
    %50 = vector.shape_cast %49 : vector<1x16x256xf32> to vector<16x256xf32>
    %c8_50 = arith.constant 8 : index
    %c0_51 = arith.constant 0 : index
    %c0_52 = arith.constant 0 : index
    %51 = vector.load %arg2[%c8_50, %c0_51, %c0_52] : memref<49x256x128xf32, #tpu.memory_space<vmem>>, vector<1x256x128xf32>
    %52 = vector.shape_cast %51 : vector<1x256x128xf32> to vector<256x128xf32>
    %cst_53 = arith.constant dense<0.000000e+00> : vector<16x128xf32>
    %53 = tpu.matmul %50, %52, %cst_53 {dimension_numbers = #tpu.dot_dimension_numbers<[1], [0], [0], [1], [0, 0, 1, 1], [], []>} : vector<16x256xf32>, vector<256x128xf32>, vector<16x128xf32> -> vector<16x128xf32>
    %54 = arith.addf %48, %53 : vector<16x128xf32>
    %c0_54 = arith.constant 0 : index
    %c9 = arith.constant 9 : index
    %c0_55 = arith.constant 0 : index
    %55 = vector.load %arg1[%c0_54, %c9, %c0_55] : memref<1x64x256xf32, #tpu.memory_space<vmem>>, vector<1x16x256xf32>
    %56 = vector.shape_cast %55 : vector<1x16x256xf32> to vector<16x256xf32>
    %c9_56 = arith.constant 9 : index
    %c0_57 = arith.constant 0 : index
    %c0_58 = arith.constant 0 : index
    %57 = vector.load %arg2[%c9_56, %c0_57, %c0_58] : memref<49x256x128xf32, #tpu.memory_space<vmem>>, vector<1x256x128xf32>
    %58 = vector.shape_cast %57 : vector<1x256x128xf32> to vector<256x128xf32>
    %cst_59 = arith.constant dense<0.000000e+00> : vector<16x128xf32>
    %59 = tpu.matmul %56, %58, %cst_59 {dimension_numbers = #tpu.dot_dimension_numbers<[1], [0], [0], [1], [0, 0, 1, 1], [], []>} : vector<16x256xf32>, vector<256x128xf32>, vector<16x128xf32> -> vector<16x128xf32>
    %60 = arith.addf %54, %59 : vector<16x128xf32>
    %c0_60 = arith.constant 0 : index
    %c10 = arith.constant 10 : index
    %c0_61 = arith.constant 0 : index
    %61 = vector.load %arg1[%c0_60, %c10, %c0_61] : memref<1x64x256xf32, #tpu.memory_space<vmem>>, vector<1x16x256xf32>
    %62 = vector.shape_cast %61 : vector<1x16x256xf32> to vector<16x256xf32>
    %c10_62 = arith.constant 10 : index
    %c0_63 = arith.constant 0 : index
    %c0_64 = arith.constant 0 : index
    %63 = vector.load %arg2[%c10_62, %c0_63, %c0_64] : memref<49x256x128xf32, #tpu.memory_space<vmem>>, vector<1x256x128xf32>
    %64 = vector.shape_cast %63 : vector<1x256x128xf32> to vector<256x128xf32>
    %cst_65 = arith.constant dense<0.000000e+00> : vector<16x128xf32>
    %65 = tpu.matmul %62, %64, %cst_65 {dimension_numbers = #tpu.dot_dimension_numbers<[1], [0], [0], [1], [0, 0, 1, 1], [], []>} : vector<16x256xf32>, vector<256x128xf32>, vector<16x128xf32> -> vector<16x128xf32>
    %66 = arith.addf %60, %65 : vector<16x128xf32>
    %c0_66 = arith.constant 0 : index
    %c11 = arith.constant 11 : index
    %c0_67 = arith.constant 0 : index
    %67 = vector.load %arg1[%c0_66, %c11, %c0_67] : memref<1x64x256xf32, #tpu.memory_space<vmem>>, vector<1x16x256xf32>
    %68 = vector.shape_cast %67 : vector<1x16x256xf32> to vector<16x256xf32>
    %c11_68 = arith.constant 11 : index
    %c0_69 = arith.constant 0 : index
    %c0_70 = arith.constant 0 : index
    %69 = vector.load %arg2[%c11_68, %c0_69, %c0_70] : memref<49x256x128xf32, #tpu.memory_space<vmem>>, vector<1x256x128xf32>
    %70 = vector.shape_cast %69 : vector<1x256x128xf32> to vector<256x128xf32>
    %cst_71 = arith.constant dense<0.000000e+00> : vector<16x128xf32>
    %71 = tpu.matmul %68, %70, %cst_71 {dimension_numbers = #tpu.dot_dimension_numbers<[1], [0], [0], [1], [0, 0, 1, 1], [], []>} : vector<16x256xf32>, vector<256x128xf32>, vector<16x128xf32> -> vector<16x128xf32>
    %72 = arith.addf %66, %71 : vector<16x128xf32>
    %c0_72 = arith.constant 0 : index
    %c12 = arith.constant 12 : index
    %c0_73 = arith.constant 0 : index
    %73 = vector.load %arg1[%c0_72, %c12, %c0_73] : memref<1x64x256xf32, #tpu.memory_space<vmem>>, vector<1x16x256xf32>
    %74 = vector.shape_cast %73 : vector<1x16x256xf32> to vector<16x256xf32>
    %c12_74 = arith.constant 12 : index
    %c0_75 = arith.constant 0 : index
    %c0_76 = arith.constant 0 : index
    %75 = vector.load %arg2[%c12_74, %c0_75, %c0_76] : memref<49x256x128xf32, #tpu.memory_space<vmem>>, vector<1x256x128xf32>
    %76 = vector.shape_cast %75 : vector<1x256x128xf32> to vector<256x128xf32>
    %cst_77 = arith.constant dense<0.000000e+00> : vector<16x128xf32>
    %77 = tpu.matmul %74, %76, %cst_77 {dimension_numbers = #tpu.dot_dimension_numbers<[1], [0], [0], [1], [0, 0, 1, 1], [], []>} : vector<16x256xf32>, vector<256x128xf32>, vector<16x128xf32> -> vector<16x128xf32>
    %78 = arith.addf %72, %77 : vector<16x128xf32>
    %c0_78 = arith.constant 0 : index
    %c13 = arith.constant 13 : index
    %c0_79 = arith.constant 0 : index
    %79 = vector.load %arg1[%c0_78, %c13, %c0_79] : memref<1x64x256xf32, #tpu.memory_space<vmem>>, vector<1x16x256xf32>
    %80 = vector.shape_cast %79 : vector<1x16x256xf32> to vector<16x256xf32>
    %c13_80 = arith.constant 13 : index
    %c0_81 = arith.constant 0 : index
    %c0_82 = arith.constant 0 : index
    %81 = vector.load %arg2[%c13_80, %c0_81, %c0_82] : memref<49x256x128xf32, #tpu.memory_space<vmem>>, vector<1x256x128xf32>
    %82 = vector.shape_cast %81 : vector<1x256x128xf32> to vector<256x128xf32>
    %cst_83 = arith.constant dense<0.000000e+00> : vector<16x128xf32>
    %83 = tpu.matmul %80, %82, %cst_83 {dimension_numbers = #tpu.dot_dimension_numbers<[1], [0], [0], [1], [0, 0, 1, 1], [], []>} : vector<16x256xf32>, vector<256x128xf32>, vector<16x128xf32> -> vector<16x128xf32>
    %84 = arith.addf %78, %83 : vector<16x128xf32>
    %c0_84 = arith.constant 0 : index
    %c14 = arith.constant 14 : index
    %c0_85 = arith.constant 0 : index
    %85 = vector.load %arg1[%c0_84, %c14, %c0_85] : memref<1x64x256xf32, #tpu.memory_space<vmem>>, vector<1x16x256xf32>
    %86 = vector.shape_cast %85 : vector<1x16x256xf32> to vector<16x256xf32>
    %c14_86 = arith.constant 14 : index
    %c0_87 = arith.constant 0 : index
    %c0_88 = arith.constant 0 : index
    %87 = vector.load %arg2[%c14_86, %c0_87, %c0_88] : memref<49x256x128xf32, #tpu.memory_space<vmem>>, vector<1x256x128xf32>
    %88 = vector.shape_cast %87 : vector<1x256x128xf32> to vector<256x128xf32>
    %cst_89 = arith.constant dense<0.000000e+00> : vector<16x128xf32>
    %89 = tpu.matmul %86, %88, %cst_89 {dimension_numbers = #tpu.dot_dimension_numbers<[1], [0], [0], [1], [0, 0, 1, 1], [], []>} : vector<16x256xf32>, vector<256x128xf32>, vector<16x128xf32> -> vector<16x128xf32>
    %90 = arith.addf %84, %89 : vector<16x128xf32>
    %c0_90 = arith.constant 0 : index
    %c15 = arith.constant 15 : index
    %c0_91 = arith.constant 0 : index
    %91 = vector.load %arg1[%c0_90, %c15, %c0_91] : memref<1x64x256xf32, #tpu.memory_space<vmem>>, vector<1x16x256xf32>
    %92 = vector.shape_cast %91 : vector<1x16x256xf32> to vector<16x256xf32>
    %c15_92 = arith.constant 15 : index
    %c0_93 = arith.constant 0 : index
    %c0_94 = arith.constant 0 : index
    %93 = vector.load %arg2[%c15_92, %c0_93, %c0_94] : memref<49x256x128xf32, #tpu.memory_space<vmem>>, vector<1x256x128xf32>
    %94 = vector.shape_cast %93 : vector<1x256x128xf32> to vector<256x128xf32>
    %cst_95 = arith.constant dense<0.000000e+00> : vector<16x128xf32>
    %95 = tpu.matmul %92, %94, %cst_95 {dimension_numbers = #tpu.dot_dimension_numbers<[1], [0], [0], [1], [0, 0, 1, 1], [], []>} : vector<16x256xf32>, vector<256x128xf32>, vector<16x128xf32> -> vector<16x128xf32>
    %96 = arith.addf %90, %95 : vector<16x128xf32>
    %c0_96 = arith.constant 0 : index
    %c16 = arith.constant 16 : index
    %c0_97 = arith.constant 0 : index
    %97 = vector.load %arg1[%c0_96, %c16, %c0_97] : memref<1x64x256xf32, #tpu.memory_space<vmem>>, vector<1x16x256xf32>
    %98 = vector.shape_cast %97 : vector<1x16x256xf32> to vector<16x256xf32>
    %c16_98 = arith.constant 16 : index
    %c0_99 = arith.constant 0 : index
    %c0_100 = arith.constant 0 : index
    %99 = vector.load %arg2[%c16_98, %c0_99, %c0_100] : memref<49x256x128xf32, #tpu.memory_space<vmem>>, vector<1x256x128xf32>
    %100 = vector.shape_cast %99 : vector<1x256x128xf32> to vector<256x128xf32>
    %cst_101 = arith.constant dense<0.000000e+00> : vector<16x128xf32>
    %101 = tpu.matmul %98, %100, %cst_101 {dimension_numbers = #tpu.dot_dimension_numbers<[1], [0], [0], [1], [0, 0, 1, 1], [], []>} : vector<16x256xf32>, vector<256x128xf32>, vector<16x128xf32> -> vector<16x128xf32>
    %102 = arith.addf %96, %101 : vector<16x128xf32>
    %c0_102 = arith.constant 0 : index
    %c17 = arith.constant 17 : index
    %c0_103 = arith.constant 0 : index
    %103 = vector.load %arg1[%c0_102, %c17, %c0_103] : memref<1x64x256xf32, #tpu.memory_space<vmem>>, vector<1x16x256xf32>
    %104 = vector.shape_cast %103 : vector<1x16x256xf32> to vector<16x256xf32>
    %c17_104 = arith.constant 17 : index
    %c0_105 = arith.constant 0 : index
    %c0_106 = arith.constant 0 : index
    %105 = vector.load %arg2[%c17_104, %c0_105, %c0_106] : memref<49x256x128xf32, #tpu.memory_space<vmem>>, vector<1x256x128xf32>
    %106 = vector.shape_cast %105 : vector<1x256x128xf32> to vector<256x128xf32>
    %cst_107 = arith.constant dense<0.000000e+00> : vector<16x128xf32>
    %107 = tpu.matmul %104, %106, %cst_107 {dimension_numbers = #tpu.dot_dimension_numbers<[1], [0], [0], [1], [0, 0, 1, 1], [], []>} : vector<16x256xf32>, vector<256x128xf32>, vector<16x128xf32> -> vector<16x128xf32>
    %108 = arith.addf %102, %107 : vector<16x128xf32>
    %c0_108 = arith.constant 0 : index
    %c18 = arith.constant 18 : index
    %c0_109 = arith.constant 0 : index
    %109 = vector.load %arg1[%c0_108, %c18, %c0_109] : memref<1x64x256xf32, #tpu.memory_space<vmem>>, vector<1x16x256xf32>
    %110 = vector.shape_cast %109 : vector<1x16x256xf32> to vector<16x256xf32>
    %c18_110 = arith.constant 18 : index
    %c0_111 = arith.constant 0 : index
    %c0_112 = arith.constant 0 : index
    %111 = vector.load %arg2[%c18_110, %c0_111, %c0_112] : memref<49x256x128xf32, #tpu.memory_space<vmem>>, vector<1x256x128xf32>
    %112 = vector.shape_cast %111 : vector<1x256x128xf32> to vector<256x128xf32>
    %cst_113 = arith.constant dense<0.000000e+00> : vector<16x128xf32>
    %113 = tpu.matmul %110, %112, %cst_113 {dimension_numbers = #tpu.dot_dimension_numbers<[1], [0], [0], [1], [0, 0, 1, 1], [], []>} : vector<16x256xf32>, vector<256x128xf32>, vector<16x128xf32> -> vector<16x128xf32>
    %114 = arith.addf %108, %113 : vector<16x128xf32>
    %c0_114 = arith.constant 0 : index
    %c19 = arith.constant 19 : index
    %c0_115 = arith.constant 0 : index
    %115 = vector.load %arg1[%c0_114, %c19, %c0_115] : memref<1x64x256xf32, #tpu.memory_space<vmem>>, vector<1x16x256xf32>
    %116 = vector.shape_cast %115 : vector<1x16x256xf32> to vector<16x256xf32>
    %c19_116 = arith.constant 19 : index
    %c0_117 = arith.constant 0 : index
    %c0_118 = arith.constant 0 : index
    %117 = vector.load %arg2[%c19_116, %c0_117, %c0_118] : memref<49x256x128xf32, #tpu.memory_space<vmem>>, vector<1x256x128xf32>
    %118 = vector.shape_cast %117 : vector<1x256x128xf32> to vector<256x128xf32>
    %cst_119 = arith.constant dense<0.000000e+00> : vector<16x128xf32>
    %119 = tpu.matmul %116, %118, %cst_119 {dimension_numbers = #tpu.dot_dimension_numbers<[1], [0], [0], [1], [0, 0, 1, 1], [], []>} : vector<16x256xf32>, vector<256x128xf32>, vector<16x128xf32> -> vector<16x128xf32>
    %120 = arith.addf %114, %119 : vector<16x128xf32>
    %c0_120 = arith.constant 0 : index
    %c20 = arith.constant 20 : index
    %c0_121 = arith.constant 0 : index
    %121 = vector.load %arg1[%c0_120, %c20, %c0_121] : memref<1x64x256xf32, #tpu.memory_space<vmem>>, vector<1x16x256xf32>
    %122 = vector.shape_cast %121 : vector<1x16x256xf32> to vector<16x256xf32>
    %c20_122 = arith.constant 20 : index
    %c0_123 = arith.constant 0 : index
    %c0_124 = arith.constant 0 : index
    %123 = vector.load %arg2[%c20_122, %c0_123, %c0_124] : memref<49x256x128xf32, #tpu.memory_space<vmem>>, vector<1x256x128xf32>
    %124 = vector.shape_cast %123 : vector<1x256x128xf32> to vector<256x128xf32>
    %cst_125 = arith.constant dense<0.000000e+00> : vector<16x128xf32>
    %125 = tpu.matmul %122, %124, %cst_125 {dimension_numbers = #tpu.dot_dimension_numbers<[1], [0], [0], [1], [0, 0, 1, 1], [], []>} : vector<16x256xf32>, vector<256x128xf32>, vector<16x128xf32> -> vector<16x128xf32>
    %126 = arith.addf %120, %125 : vector<16x128xf32>
    %c0_126 = arith.constant 0 : index
    %c21 = arith.constant 21 : index
    %c0_127 = arith.constant 0 : index
    %127 = vector.load %arg1[%c0_126, %c21, %c0_127] : memref<1x64x256xf32, #tpu.memory_space<vmem>>, vector<1x16x256xf32>
    %128 = vector.shape_cast %127 : vector<1x16x256xf32> to vector<16x256xf32>
    %c21_128 = arith.constant 21 : index
    %c0_129 = arith.constant 0 : index
    %c0_130 = arith.constant 0 : index
    %129 = vector.load %arg2[%c21_128, %c0_129, %c0_130] : memref<49x256x128xf32, #tpu.memory_space<vmem>>, vector<1x256x128xf32>
    %130 = vector.shape_cast %129 : vector<1x256x128xf32> to vector<256x128xf32>
    %cst_131 = arith.constant dense<0.000000e+00> : vector<16x128xf32>
    %131 = tpu.matmul %128, %130, %cst_131 {dimension_numbers = #tpu.dot_dimension_numbers<[1], [0], [0], [1], [0, 0, 1, 1], [], []>} : vector<16x256xf32>, vector<256x128xf32>, vector<16x128xf32> -> vector<16x128xf32>
    %132 = arith.addf %126, %131 : vector<16x128xf32>
    %c0_132 = arith.constant 0 : index
    %c22 = arith.constant 22 : index
    %c0_133 = arith.constant 0 : index
    %133 = vector.load %arg1[%c0_132, %c22, %c0_133] : memref<1x64x256xf32, #tpu.memory_space<vmem>>, vector<1x16x256xf32>
    %134 = vector.shape_cast %133 : vector<1x16x256xf32> to vector<16x256xf32>
    %c22_134 = arith.constant 22 : index
    %c0_135 = arith.constant 0 : index
    %c0_136 = arith.constant 0 : index
    %135 = vector.load %arg2[%c22_134, %c0_135, %c0_136] : memref<49x256x128xf32, #tpu.memory_space<vmem>>, vector<1x256x128xf32>
    %136 = vector.shape_cast %135 : vector<1x256x128xf32> to vector<256x128xf32>
    %cst_137 = arith.constant dense<0.000000e+00> : vector<16x128xf32>
    %137 = tpu.matmul %134, %136, %cst_137 {dimension_numbers = #tpu.dot_dimension_numbers<[1], [0], [0], [1], [0, 0, 1, 1], [], []>} : vector<16x256xf32>, vector<256x128xf32>, vector<16x128xf32> -> vector<16x128xf32>
    %138 = arith.addf %132, %137 : vector<16x128xf32>
    %c0_138 = arith.constant 0 : index
    %c23 = arith.constant 23 : index
    %c0_139 = arith.constant 0 : index
    %139 = vector.load %arg1[%c0_138, %c23, %c0_139] : memref<1x64x256xf32, #tpu.memory_space<vmem>>, vector<1x16x256xf32>
    %140 = vector.shape_cast %139 : vector<1x16x256xf32> to vector<16x256xf32>
    %c23_140 = arith.constant 23 : index
    %c0_141 = arith.constant 0 : index
    %c0_142 = arith.constant 0 : index
    %141 = vector.load %arg2[%c23_140, %c0_141, %c0_142] : memref<49x256x128xf32, #tpu.memory_space<vmem>>, vector<1x256x128xf32>
    %142 = vector.shape_cast %141 : vector<1x256x128xf32> to vector<256x128xf32>
    %cst_143 = arith.constant dense<0.000000e+00> : vector<16x128xf32>
    %143 = tpu.matmul %140, %142, %cst_143 {dimension_numbers = #tpu.dot_dimension_numbers<[1], [0], [0], [1], [0, 0, 1, 1], [], []>} : vector<16x256xf32>, vector<256x128xf32>, vector<16x128xf32> -> vector<16x128xf32>
    %144 = arith.addf %138, %143 : vector<16x128xf32>
    %c0_144 = arith.constant 0 : index
    %c24 = arith.constant 24 : index
    %c0_145 = arith.constant 0 : index
    %145 = vector.load %arg1[%c0_144, %c24, %c0_145] : memref<1x64x256xf32, #tpu.memory_space<vmem>>, vector<1x16x256xf32>
    %146 = vector.shape_cast %145 : vector<1x16x256xf32> to vector<16x256xf32>
    %c24_146 = arith.constant 24 : index
    %c0_147 = arith.constant 0 : index
    %c0_148 = arith.constant 0 : index
    %147 = vector.load %arg2[%c24_146, %c0_147, %c0_148] : memref<49x256x128xf32, #tpu.memory_space<vmem>>, vector<1x256x128xf32>
    %148 = vector.shape_cast %147 : vector<1x256x128xf32> to vector<256x128xf32>
    %cst_149 = arith.constant dense<0.000000e+00> : vector<16x128xf32>
    %149 = tpu.matmul %146, %148, %cst_149 {dimension_numbers = #tpu.dot_dimension_numbers<[1], [0], [0], [1], [0, 0, 1, 1], [], []>} : vector<16x256xf32>, vector<256x128xf32>, vector<16x128xf32> -> vector<16x128xf32>
    %150 = arith.addf %144, %149 : vector<16x128xf32>
    %c0_150 = arith.constant 0 : index
    %c25 = arith.constant 25 : index
    %c0_151 = arith.constant 0 : index
    %151 = vector.load %arg1[%c0_150, %c25, %c0_151] : memref<1x64x256xf32, #tpu.memory_space<vmem>>, vector<1x16x256xf32>
    %152 = vector.shape_cast %151 : vector<1x16x256xf32> to vector<16x256xf32>
    %c25_152 = arith.constant 25 : index
    %c0_153 = arith.constant 0 : index
    %c0_154 = arith.constant 0 : index
    %153 = vector.load %arg2[%c25_152, %c0_153, %c0_154] : memref<49x256x128xf32, #tpu.memory_space<vmem>>, vector<1x256x128xf32>
    %154 = vector.shape_cast %153 : vector<1x256x128xf32> to vector<256x128xf32>
    %cst_155 = arith.constant dense<0.000000e+00> : vector<16x128xf32>
    %155 = tpu.matmul %152, %154, %cst_155 {dimension_numbers = #tpu.dot_dimension_numbers<[1], [0], [0], [1], [0, 0, 1, 1], [], []>} : vector<16x256xf32>, vector<256x128xf32>, vector<16x128xf32> -> vector<16x128xf32>
    %156 = arith.addf %150, %155 : vector<16x128xf32>
    %c0_156 = arith.constant 0 : index
    %c26 = arith.constant 26 : index
    %c0_157 = arith.constant 0 : index
    %157 = vector.load %arg1[%c0_156, %c26, %c0_157] : memref<1x64x256xf32, #tpu.memory_space<vmem>>, vector<1x16x256xf32>
    %158 = vector.shape_cast %157 : vector<1x16x256xf32> to vector<16x256xf32>
    %c26_158 = arith.constant 26 : index
    %c0_159 = arith.constant 0 : index
    %c0_160 = arith.constant 0 : index
    %159 = vector.load %arg2[%c26_158, %c0_159, %c0_160] : memref<49x256x128xf32, #tpu.memory_space<vmem>>, vector<1x256x128xf32>
    %160 = vector.shape_cast %159 : vector<1x256x128xf32> to vector<256x128xf32>
    %cst_161 = arith.constant dense<0.000000e+00> : vector<16x128xf32>
    %161 = tpu.matmul %158, %160, %cst_161 {dimension_numbers = #tpu.dot_dimension_numbers<[1], [0], [0], [1], [0, 0, 1, 1], [], []>} : vector<16x256xf32>, vector<256x128xf32>, vector<16x128xf32> -> vector<16x128xf32>
    %162 = arith.addf %156, %161 : vector<16x128xf32>
    %c0_162 = arith.constant 0 : index
    %c27 = arith.constant 27 : index
    %c0_163 = arith.constant 0 : index
    %163 = vector.load %arg1[%c0_162, %c27, %c0_163] : memref<1x64x256xf32, #tpu.memory_space<vmem>>, vector<1x16x256xf32>
    %164 = vector.shape_cast %163 : vector<1x16x256xf32> to vector<16x256xf32>
    %c27_164 = arith.constant 27 : index
    %c0_165 = arith.constant 0 : index
    %c0_166 = arith.constant 0 : index
    %165 = vector.load %arg2[%c27_164, %c0_165, %c0_166] : memref<49x256x128xf32, #tpu.memory_space<vmem>>, vector<1x256x128xf32>
    %166 = vector.shape_cast %165 : vector<1x256x128xf32> to vector<256x128xf32>
    %cst_167 = arith.constant dense<0.000000e+00> : vector<16x128xf32>
    %167 = tpu.matmul %164, %166, %cst_167 {dimension_numbers = #tpu.dot_dimension_numbers<[1], [0], [0], [1], [0, 0, 1, 1], [], []>} : vector<16x256xf32>, vector<256x128xf32>, vector<16x128xf32> -> vector<16x128xf32>
    %168 = arith.addf %162, %167 : vector<16x128xf32>
    %c0_168 = arith.constant 0 : index
    %c28 = arith.constant 28 : index
    %c0_169 = arith.constant 0 : index
    %169 = vector.load %arg1[%c0_168, %c28, %c0_169] : memref<1x64x256xf32, #tpu.memory_space<vmem>>, vector<1x16x256xf32>
    %170 = vector.shape_cast %169 : vector<1x16x256xf32> to vector<16x256xf32>
    %c28_170 = arith.constant 28 : index
    %c0_171 = arith.constant 0 : index
    %c0_172 = arith.constant 0 : index
    %171 = vector.load %arg2[%c28_170, %c0_171, %c0_172] : memref<49x256x128xf32, #tpu.memory_space<vmem>>, vector<1x256x128xf32>
    %172 = vector.shape_cast %171 : vector<1x256x128xf32> to vector<256x128xf32>
    %cst_173 = arith.constant dense<0.000000e+00> : vector<16x128xf32>
    %173 = tpu.matmul %170, %172, %cst_173 {dimension_numbers = #tpu.dot_dimension_numbers<[1], [0], [0], [1], [0, 0, 1, 1], [], []>} : vector<16x256xf32>, vector<256x128xf32>, vector<16x128xf32> -> vector<16x128xf32>
    %174 = arith.addf %168, %173 : vector<16x128xf32>
    %c0_174 = arith.constant 0 : index
    %c29 = arith.constant 29 : index
    %c0_175 = arith.constant 0 : index
    %175 = vector.load %arg1[%c0_174, %c29, %c0_175] : memref<1x64x256xf32, #tpu.memory_space<vmem>>, vector<1x16x256xf32>
    %176 = vector.shape_cast %175 : vector<1x16x256xf32> to vector<16x256xf32>
    %c29_176 = arith.constant 29 : index
    %c0_177 = arith.constant 0 : index
    %c0_178 = arith.constant 0 : index
    %177 = vector.load %arg2[%c29_176, %c0_177, %c0_178] : memref<49x256x128xf32, #tpu.memory_space<vmem>>, vector<1x256x128xf32>
    %178 = vector.shape_cast %177 : vector<1x256x128xf32> to vector<256x128xf32>
    %cst_179 = arith.constant dense<0.000000e+00> : vector<16x128xf32>
    %179 = tpu.matmul %176, %178, %cst_179 {dimension_numbers = #tpu.dot_dimension_numbers<[1], [0], [0], [1], [0, 0, 1, 1], [], []>} : vector<16x256xf32>, vector<256x128xf32>, vector<16x128xf32> -> vector<16x128xf32>
    %180 = arith.addf %174, %179 : vector<16x128xf32>
    %c0_180 = arith.constant 0 : index
    %c30 = arith.constant 30 : index
    %c0_181 = arith.constant 0 : index
    %181 = vector.load %arg1[%c0_180, %c30, %c0_181] : memref<1x64x256xf32, #tpu.memory_space<vmem>>, vector<1x16x256xf32>
    %182 = vector.shape_cast %181 : vector<1x16x256xf32> to vector<16x256xf32>
    %c30_182 = arith.constant 30 : index
    %c0_183 = arith.constant 0 : index
    %c0_184 = arith.constant 0 : index
    %183 = vector.load %arg2[%c30_182, %c0_183, %c0_184] : memref<49x256x128xf32, #tpu.memory_space<vmem>>, vector<1x256x128xf32>
    %184 = vector.shape_cast %183 : vector<1x256x128xf32> to vector<256x128xf32>
    %cst_185 = arith.constant dense<0.000000e+00> : vector<16x128xf32>
    %185 = tpu.matmul %182, %184, %cst_185 {dimension_numbers = #tpu.dot_dimension_numbers<[1], [0], [0], [1], [0, 0, 1, 1], [], []>} : vector<16x256xf32>, vector<256x128xf32>, vector<16x128xf32> -> vector<16x128xf32>
    %186 = arith.addf %180, %185 : vector<16x128xf32>
    %c0_186 = arith.constant 0 : index
    %c31 = arith.constant 31 : index
    %c0_187 = arith.constant 0 : index
    %187 = vector.load %arg1[%c0_186, %c31, %c0_187] : memref<1x64x256xf32, #tpu.memory_space<vmem>>, vector<1x16x256xf32>
    %188 = vector.shape_cast %187 : vector<1x16x256xf32> to vector<16x256xf32>
    %c31_188 = arith.constant 31 : index
    %c0_189 = arith.constant 0 : index
    %c0_190 = arith.constant 0 : index
    %189 = vector.load %arg2[%c31_188, %c0_189, %c0_190] : memref<49x256x128xf32, #tpu.memory_space<vmem>>, vector<1x256x128xf32>
    %190 = vector.shape_cast %189 : vector<1x256x128xf32> to vector<256x128xf32>
    %cst_191 = arith.constant dense<0.000000e+00> : vector<16x128xf32>
    %191 = tpu.matmul %188, %190, %cst_191 {dimension_numbers = #tpu.dot_dimension_numbers<[1], [0], [0], [1], [0, 0, 1, 1], [], []>} : vector<16x256xf32>, vector<256x128xf32>, vector<16x128xf32> -> vector<16x128xf32>
    %192 = arith.addf %186, %191 : vector<16x128xf32>
    %c0_192 = arith.constant 0 : index
    %c32 = arith.constant 32 : index
    %c0_193 = arith.constant 0 : index
    %193 = vector.load %arg1[%c0_192, %c32, %c0_193] : memref<1x64x256xf32, #tpu.memory_space<vmem>>, vector<1x16x256xf32>
    %194 = vector.shape_cast %193 : vector<1x16x256xf32> to vector<16x256xf32>
    %c32_194 = arith.constant 32 : index
    %c0_195 = arith.constant 0 : index
    %c0_196 = arith.constant 0 : index
    %195 = vector.load %arg2[%c32_194, %c0_195, %c0_196] : memref<49x256x128xf32, #tpu.memory_space<vmem>>, vector<1x256x128xf32>
    %196 = vector.shape_cast %195 : vector<1x256x128xf32> to vector<256x128xf32>
    %cst_197 = arith.constant dense<0.000000e+00> : vector<16x128xf32>
    %197 = tpu.matmul %194, %196, %cst_197 {dimension_numbers = #tpu.dot_dimension_numbers<[1], [0], [0], [1], [0, 0, 1, 1], [], []>} : vector<16x256xf32>, vector<256x128xf32>, vector<16x128xf32> -> vector<16x128xf32>
    %198 = arith.addf %192, %197 : vector<16x128xf32>
    %c0_198 = arith.constant 0 : index
    %c33 = arith.constant 33 : index
    %c0_199 = arith.constant 0 : index
    %199 = vector.load %arg1[%c0_198, %c33, %c0_199] : memref<1x64x256xf32, #tpu.memory_space<vmem>>, vector<1x16x256xf32>
    %200 = vector.shape_cast %199 : vector<1x16x256xf32> to vector<16x256xf32>
    %c33_200 = arith.constant 33 : index
    %c0_201 = arith.constant 0 : index
    %c0_202 = arith.constant 0 : index
    %201 = vector.load %arg2[%c33_200, %c0_201, %c0_202] : memref<49x256x128xf32, #tpu.memory_space<vmem>>, vector<1x256x128xf32>
    %202 = vector.shape_cast %201 : vector<1x256x128xf32> to vector<256x128xf32>
    %cst_203 = arith.constant dense<0.000000e+00> : vector<16x128xf32>
    %203 = tpu.matmul %200, %202, %cst_203 {dimension_numbers = #tpu.dot_dimension_numbers<[1], [0], [0], [1], [0, 0, 1, 1], [], []>} : vector<16x256xf32>, vector<256x128xf32>, vector<16x128xf32> -> vector<16x128xf32>
    %204 = arith.addf %198, %203 : vector<16x128xf32>
    %c0_204 = arith.constant 0 : index
    %c34 = arith.constant 34 : index
    %c0_205 = arith.constant 0 : index
    %205 = vector.load %arg1[%c0_204, %c34, %c0_205] : memref<1x64x256xf32, #tpu.memory_space<vmem>>, vector<1x16x256xf32>
    %206 = vector.shape_cast %205 : vector<1x16x256xf32> to vector<16x256xf32>
    %c34_206 = arith.constant 34 : index
    %c0_207 = arith.constant 0 : index
    %c0_208 = arith.constant 0 : index
    %207 = vector.load %arg2[%c34_206, %c0_207, %c0_208] : memref<49x256x128xf32, #tpu.memory_space<vmem>>, vector<1x256x128xf32>
    %208 = vector.shape_cast %207 : vector<1x256x128xf32> to vector<256x128xf32>
    %cst_209 = arith.constant dense<0.000000e+00> : vector<16x128xf32>
    %209 = tpu.matmul %206, %208, %cst_209 {dimension_numbers = #tpu.dot_dimension_numbers<[1], [0], [0], [1], [0, 0, 1, 1], [], []>} : vector<16x256xf32>, vector<256x128xf32>, vector<16x128xf32> -> vector<16x128xf32>
    %210 = arith.addf %204, %209 : vector<16x128xf32>
    %c0_210 = arith.constant 0 : index
    %c35 = arith.constant 35 : index
    %c0_211 = arith.constant 0 : index
    %211 = vector.load %arg1[%c0_210, %c35, %c0_211] : memref<1x64x256xf32, #tpu.memory_space<vmem>>, vector<1x16x256xf32>
    %212 = vector.shape_cast %211 : vector<1x16x256xf32> to vector<16x256xf32>
    %c35_212 = arith.constant 35 : index
    %c0_213 = arith.constant 0 : index
    %c0_214 = arith.constant 0 : index
    %213 = vector.load %arg2[%c35_212, %c0_213, %c0_214] : memref<49x256x128xf32, #tpu.memory_space<vmem>>, vector<1x256x128xf32>
    %214 = vector.shape_cast %213 : vector<1x256x128xf32> to vector<256x128xf32>
    %cst_215 = arith.constant dense<0.000000e+00> : vector<16x128xf32>
    %215 = tpu.matmul %212, %214, %cst_215 {dimension_numbers = #tpu.dot_dimension_numbers<[1], [0], [0], [1], [0, 0, 1, 1], [], []>} : vector<16x256xf32>, vector<256x128xf32>, vector<16x128xf32> -> vector<16x128xf32>
    %216 = arith.addf %210, %215 : vector<16x128xf32>
    %c0_216 = arith.constant 0 : index
    %c36 = arith.constant 36 : index
    %c0_217 = arith.constant 0 : index
    %217 = vector.load %arg1[%c0_216, %c36, %c0_217] : memref<1x64x256xf32, #tpu.memory_space<vmem>>, vector<1x16x256xf32>
    %218 = vector.shape_cast %217 : vector<1x16x256xf32> to vector<16x256xf32>
    %c36_218 = arith.constant 36 : index
    %c0_219 = arith.constant 0 : index
    %c0_220 = arith.constant 0 : index
    %219 = vector.load %arg2[%c36_218, %c0_219, %c0_220] : memref<49x256x128xf32, #tpu.memory_space<vmem>>, vector<1x256x128xf32>
    %220 = vector.shape_cast %219 : vector<1x256x128xf32> to vector<256x128xf32>
    %cst_221 = arith.constant dense<0.000000e+00> : vector<16x128xf32>
    %221 = tpu.matmul %218, %220, %cst_221 {dimension_numbers = #tpu.dot_dimension_numbers<[1], [0], [0], [1], [0, 0, 1, 1], [], []>} : vector<16x256xf32>, vector<256x128xf32>, vector<16x128xf32> -> vector<16x128xf32>
    %222 = arith.addf %216, %221 : vector<16x128xf32>
    %c0_222 = arith.constant 0 : index
    %c37 = arith.constant 37 : index
    %c0_223 = arith.constant 0 : index
    %223 = vector.load %arg1[%c0_222, %c37, %c0_223] : memref<1x64x256xf32, #tpu.memory_space<vmem>>, vector<1x16x256xf32>
    %224 = vector.shape_cast %223 : vector<1x16x256xf32> to vector<16x256xf32>
    %c37_224 = arith.constant 37 : index
    %c0_225 = arith.constant 0 : index
    %c0_226 = arith.constant 0 : index
    %225 = vector.load %arg2[%c37_224, %c0_225, %c0_226] : memref<49x256x128xf32, #tpu.memory_space<vmem>>, vector<1x256x128xf32>
    %226 = vector.shape_cast %225 : vector<1x256x128xf32> to vector<256x128xf32>
    %cst_227 = arith.constant dense<0.000000e+00> : vector<16x128xf32>
    %227 = tpu.matmul %224, %226, %cst_227 {dimension_numbers = #tpu.dot_dimension_numbers<[1], [0], [0], [1], [0, 0, 1, 1], [], []>} : vector<16x256xf32>, vector<256x128xf32>, vector<16x128xf32> -> vector<16x128xf32>
    %228 = arith.addf %222, %227 : vector<16x128xf32>
    %c0_228 = arith.constant 0 : index
    %c38 = arith.constant 38 : index
    %c0_229 = arith.constant 0 : index
    %229 = vector.load %arg1[%c0_228, %c38, %c0_229] : memref<1x64x256xf32, #tpu.memory_space<vmem>>, vector<1x16x256xf32>
    %230 = vector.shape_cast %229 : vector<1x16x256xf32> to vector<16x256xf32>
    %c38_230 = arith.constant 38 : index
    %c0_231 = arith.constant 0 : index
    %c0_232 = arith.constant 0 : index
    %231 = vector.load %arg2[%c38_230, %c0_231, %c0_232] : memref<49x256x128xf32, #tpu.memory_space<vmem>>, vector<1x256x128xf32>
    %232 = vector.shape_cast %231 : vector<1x256x128xf32> to vector<256x128xf32>
    %cst_233 = arith.constant dense<0.000000e+00> : vector<16x128xf32>
    %233 = tpu.matmul %230, %232, %cst_233 {dimension_numbers = #tpu.dot_dimension_numbers<[1], [0], [0], [1], [0, 0, 1, 1], [], []>} : vector<16x256xf32>, vector<256x128xf32>, vector<16x128xf32> -> vector<16x128xf32>
    %234 = arith.addf %228, %233 : vector<16x128xf32>
    %c0_234 = arith.constant 0 : index
    %c39 = arith.constant 39 : index
    %c0_235 = arith.constant 0 : index
    %235 = vector.load %arg1[%c0_234, %c39, %c0_235] : memref<1x64x256xf32, #tpu.memory_space<vmem>>, vector<1x16x256xf32>
    %236 = vector.shape_cast %235 : vector<1x16x256xf32> to vector<16x256xf32>
    %c39_236 = arith.constant 39 : index
    %c0_237 = arith.constant 0 : index
    %c0_238 = arith.constant 0 : index
    %237 = vector.load %arg2[%c39_236, %c0_237, %c0_238] : memref<49x256x128xf32, #tpu.memory_space<vmem>>, vector<1x256x128xf32>
    %238 = vector.shape_cast %237 : vector<1x256x128xf32> to vector<256x128xf32>
    %cst_239 = arith.constant dense<0.000000e+00> : vector<16x128xf32>
    %239 = tpu.matmul %236, %238, %cst_239 {dimension_numbers = #tpu.dot_dimension_numbers<[1], [0], [0], [1], [0, 0, 1, 1], [], []>} : vector<16x256xf32>, vector<256x128xf32>, vector<16x128xf32> -> vector<16x128xf32>
    %240 = arith.addf %234, %239 : vector<16x128xf32>
    %c0_240 = arith.constant 0 : index
    %c40 = arith.constant 40 : index
    %c0_241 = arith.constant 0 : index
    %241 = vector.load %arg1[%c0_240, %c40, %c0_241] : memref<1x64x256xf32, #tpu.memory_space<vmem>>, vector<1x16x256xf32>
    %242 = vector.shape_cast %241 : vector<1x16x256xf32> to vector<16x256xf32>
    %c40_242 = arith.constant 40 : index
    %c0_243 = arith.constant 0 : index
    %c0_244 = arith.constant 0 : index
    %243 = vector.load %arg2[%c40_242, %c0_243, %c0_244] : memref<49x256x128xf32, #tpu.memory_space<vmem>>, vector<1x256x128xf32>
    %244 = vector.shape_cast %243 : vector<1x256x128xf32> to vector<256x128xf32>
    %cst_245 = arith.constant dense<0.000000e+00> : vector<16x128xf32>
    %245 = tpu.matmul %242, %244, %cst_245 {dimension_numbers = #tpu.dot_dimension_numbers<[1], [0], [0], [1], [0, 0, 1, 1], [], []>} : vector<16x256xf32>, vector<256x128xf32>, vector<16x128xf32> -> vector<16x128xf32>
    %246 = arith.addf %240, %245 : vector<16x128xf32>
    %c0_246 = arith.constant 0 : index
    %c41 = arith.constant 41 : index
    %c0_247 = arith.constant 0 : index
    %247 = vector.load %arg1[%c0_246, %c41, %c0_247] : memref<1x64x256xf32, #tpu.memory_space<vmem>>, vector<1x16x256xf32>
    %248 = vector.shape_cast %247 : vector<1x16x256xf32> to vector<16x256xf32>
    %c41_248 = arith.constant 41 : index
    %c0_249 = arith.constant 0 : index
    %c0_250 = arith.constant 0 : index
    %249 = vector.load %arg2[%c41_248, %c0_249, %c0_250] : memref<49x256x128xf32, #tpu.memory_space<vmem>>, vector<1x256x128xf32>
    %250 = vector.shape_cast %249 : vector<1x256x128xf32> to vector<256x128xf32>
    %cst_251 = arith.constant dense<0.000000e+00> : vector<16x128xf32>
    %251 = tpu.matmul %248, %250, %cst_251 {dimension_numbers = #tpu.dot_dimension_numbers<[1], [0], [0], [1], [0, 0, 1, 1], [], []>} : vector<16x256xf32>, vector<256x128xf32>, vector<16x128xf32> -> vector<16x128xf32>
    %252 = arith.addf %246, %251 : vector<16x128xf32>
    %c0_252 = arith.constant 0 : index
    %c42 = arith.constant 42 : index
    %c0_253 = arith.constant 0 : index
    %253 = vector.load %arg1[%c0_252, %c42, %c0_253] : memref<1x64x256xf32, #tpu.memory_space<vmem>>, vector<1x16x256xf32>
    %254 = vector.shape_cast %253 : vector<1x16x256xf32> to vector<16x256xf32>
    %c42_254 = arith.constant 42 : index
    %c0_255 = arith.constant 0 : index
    %c0_256 = arith.constant 0 : index
    %255 = vector.load %arg2[%c42_254, %c0_255, %c0_256] : memref<49x256x128xf32, #tpu.memory_space<vmem>>, vector<1x256x128xf32>
    %256 = vector.shape_cast %255 : vector<1x256x128xf32> to vector<256x128xf32>
    %cst_257 = arith.constant dense<0.000000e+00> : vector<16x128xf32>
    %257 = tpu.matmul %254, %256, %cst_257 {dimension_numbers = #tpu.dot_dimension_numbers<[1], [0], [0], [1], [0, 0, 1, 1], [], []>} : vector<16x256xf32>, vector<256x128xf32>, vector<16x128xf32> -> vector<16x128xf32>
    %258 = arith.addf %252, %257 : vector<16x128xf32>
    %c0_258 = arith.constant 0 : index
    %c43 = arith.constant 43 : index
    %c0_259 = arith.constant 0 : index
    %259 = vector.load %arg1[%c0_258, %c43, %c0_259] : memref<1x64x256xf32, #tpu.memory_space<vmem>>, vector<1x16x256xf32>
    %260 = vector.shape_cast %259 : vector<1x16x256xf32> to vector<16x256xf32>
    %c43_260 = arith.constant 43 : index
    %c0_261 = arith.constant 0 : index
    %c0_262 = arith.constant 0 : index
    %261 = vector.load %arg2[%c43_260, %c0_261, %c0_262] : memref<49x256x128xf32, #tpu.memory_space<vmem>>, vector<1x256x128xf32>
    %262 = vector.shape_cast %261 : vector<1x256x128xf32> to vector<256x128xf32>
    %cst_263 = arith.constant dense<0.000000e+00> : vector<16x128xf32>
    %263 = tpu.matmul %260, %262, %cst_263 {dimension_numbers = #tpu.dot_dimension_numbers<[1], [0], [0], [1], [0, 0, 1, 1], [], []>} : vector<16x256xf32>, vector<256x128xf32>, vector<16x128xf32> -> vector<16x128xf32>
    %264 = arith.addf %258, %263 : vector<16x128xf32>
    %c0_264 = arith.constant 0 : index
    %c44 = arith.constant 44 : index
    %c0_265 = arith.constant 0 : index
    %265 = vector.load %arg1[%c0_264, %c44, %c0_265] : memref<1x64x256xf32, #tpu.memory_space<vmem>>, vector<1x16x256xf32>
    %266 = vector.shape_cast %265 : vector<1x16x256xf32> to vector<16x256xf32>
    %c44_266 = arith.constant 44 : index
    %c0_267 = arith.constant 0 : index
    %c0_268 = arith.constant 0 : index
    %267 = vector.load %arg2[%c44_266, %c0_267, %c0_268] : memref<49x256x128xf32, #tpu.memory_space<vmem>>, vector<1x256x128xf32>
    %268 = vector.shape_cast %267 : vector<1x256x128xf32> to vector<256x128xf32>
    %cst_269 = arith.constant dense<0.000000e+00> : vector<16x128xf32>
    %269 = tpu.matmul %266, %268, %cst_269 {dimension_numbers = #tpu.dot_dimension_numbers<[1], [0], [0], [1], [0, 0, 1, 1], [], []>} : vector<16x256xf32>, vector<256x128xf32>, vector<16x128xf32> -> vector<16x128xf32>
    %270 = arith.addf %264, %269 : vector<16x128xf32>
    %c0_270 = arith.constant 0 : index
    %c45 = arith.constant 45 : index
    %c0_271 = arith.constant 0 : index
    %271 = vector.load %arg1[%c0_270, %c45, %c0_271] : memref<1x64x256xf32, #tpu.memory_space<vmem>>, vector<1x16x256xf32>
    %272 = vector.shape_cast %271 : vector<1x16x256xf32> to vector<16x256xf32>
    %c45_272 = arith.constant 45 : index
    %c0_273 = arith.constant 0 : index
    %c0_274 = arith.constant 0 : index
    %273 = vector.load %arg2[%c45_272, %c0_273, %c0_274] : memref<49x256x128xf32, #tpu.memory_space<vmem>>, vector<1x256x128xf32>
    %274 = vector.shape_cast %273 : vector<1x256x128xf32> to vector<256x128xf32>
    %cst_275 = arith.constant dense<0.000000e+00> : vector<16x128xf32>
    %275 = tpu.matmul %272, %274, %cst_275 {dimension_numbers = #tpu.dot_dimension_numbers<[1], [0], [0], [1], [0, 0, 1, 1], [], []>} : vector<16x256xf32>, vector<256x128xf32>, vector<16x128xf32> -> vector<16x128xf32>
    %276 = arith.addf %270, %275 : vector<16x128xf32>
    %c0_276 = arith.constant 0 : index
    %c46 = arith.constant 46 : index
    %c0_277 = arith.constant 0 : index
    %277 = vector.load %arg1[%c0_276, %c46, %c0_277] : memref<1x64x256xf32, #tpu.memory_space<vmem>>, vector<1x16x256xf32>
    %278 = vector.shape_cast %277 : vector<1x16x256xf32> to vector<16x256xf32>
    %c46_278 = arith.constant 46 : index
    %c0_279 = arith.constant 0 : index
    %c0_280 = arith.constant 0 : index
    %279 = vector.load %arg2[%c46_278, %c0_279, %c0_280] : memref<49x256x128xf32, #tpu.memory_space<vmem>>, vector<1x256x128xf32>
    %280 = vector.shape_cast %279 : vector<1x256x128xf32> to vector<256x128xf32>
    %cst_281 = arith.constant dense<0.000000e+00> : vector<16x128xf32>
    %281 = tpu.matmul %278, %280, %cst_281 {dimension_numbers = #tpu.dot_dimension_numbers<[1], [0], [0], [1], [0, 0, 1, 1], [], []>} : vector<16x256xf32>, vector<256x128xf32>, vector<16x128xf32> -> vector<16x128xf32>
    %282 = arith.addf %276, %281 : vector<16x128xf32>
    %c0_282 = arith.constant 0 : index
    %c47 = arith.constant 47 : index
    %c0_283 = arith.constant 0 : index
    %283 = vector.load %arg1[%c0_282, %c47, %c0_283] : memref<1x64x256xf32, #tpu.memory_space<vmem>>, vector<1x16x256xf32>
    %284 = vector.shape_cast %283 : vector<1x16x256xf32> to vector<16x256xf32>
    %c47_284 = arith.constant 47 : index
    %c0_285 = arith.constant 0 : index
    %c0_286 = arith.constant 0 : index
    %285 = vector.load %arg2[%c47_284, %c0_285, %c0_286] : memref<49x256x128xf32, #tpu.memory_space<vmem>>, vector<1x256x128xf32>
    %286 = vector.shape_cast %285 : vector<1x256x128xf32> to vector<256x128xf32>
    %cst_287 = arith.constant dense<0.000000e+00> : vector<16x128xf32>
    %287 = tpu.matmul %284, %286, %cst_287 {dimension_numbers = #tpu.dot_dimension_numbers<[1], [0], [0], [1], [0, 0, 1, 1], [], []>} : vector<16x256xf32>, vector<256x128xf32>, vector<16x128xf32> -> vector<16x128xf32>
    %288 = arith.addf %282, %287 : vector<16x128xf32>
    %c0_288 = arith.constant 0 : index
    %c48 = arith.constant 48 : index
    %c0_289 = arith.constant 0 : index
    %289 = vector.load %arg1[%c0_288, %c48, %c0_289] : memref<1x64x256xf32, #tpu.memory_space<vmem>>, vector<1x16x256xf32>
    %290 = vector.shape_cast %289 : vector<1x16x256xf32> to vector<16x256xf32>
    %c48_290 = arith.constant 48 : index
    %c0_291 = arith.constant 0 : index
    %c0_292 = arith.constant 0 : index
    %291 = vector.load %arg2[%c48_290, %c0_291, %c0_292] : memref<49x256x128xf32, #tpu.memory_space<vmem>>, vector<1x256x128xf32>
    %292 = vector.shape_cast %291 : vector<1x256x128xf32> to vector<256x128xf32>
    %cst_293 = arith.constant dense<0.000000e+00> : vector<16x128xf32>
    %293 = tpu.matmul %290, %292, %cst_293 {dimension_numbers = #tpu.dot_dimension_numbers<[1], [0], [0], [1], [0, 0, 1, 1], [], []>} : vector<16x256xf32>, vector<256x128xf32>, vector<16x128xf32> -> vector<16x128xf32>
    %294 = arith.addf %288, %293 : vector<16x128xf32>
    %c0_294 = arith.constant 0 : index
    %c0_295 = arith.constant 0 : index
    %c0_296 = arith.constant 0 : index
    %295 = vector.load %arg3[%c0_294, %c0_295, %c0_296] : memref<1x16x128xf32, #tpu.memory_space<vmem>>, vector<1x16x128xf32>
    %296 = vector.shape_cast %295 : vector<1x16x128xf32> to vector<16x128xf32>
    %297 = vector.shape_cast %294 : vector<16x128xf32> to vector<1x16x128xf32>
    tpu.vector_store %arg3[%c0_294, %c0_295, %c0_296], %297 {strides = array<i32>} : memref<1x16x128xf32, #tpu.memory_space<vmem>>, vector<1x16x128xf32>,
    return
  }
  func.func @transform_0(%arg0: i32) -> (i32, i32, i32) {
    %c0_i32 = arith.constant 0 : i32
    %c0_i32_0 = arith.constant 0 : i32
    %c0_i32_1 = arith.constant 0 : i32
    return %arg0, %c0_i32, %c0_i32_0 : i32, i32, i32
  }
  func.func @transform_1(%arg0: i32) -> (i32, i32, i32) {
    %c0_i32 = arith.constant 0 : i32
    %c0_i32_0 = arith.constant 0 : i32
    %c0_i32_1 = arith.constant 0 : i32
    %c0_i32_2 = arith.constant 0 : i32
    return %c0_i32, %c0_i32_0, %c0_i32_1 : i32, i32, i32
  }
  func.func @transform_2(%arg0: i32) -> (i32, i32, i32) {
    %c0_i32 = arith.constant 0 : i32
    %c0_i32_0 = arith.constant 0 : i32
    %c0_i32_1 = arith.constant 0 : i32
    return %arg0, %c0_i32, %c0_i32_0 : i32, i32, i32
  }
}

</mosaic_0001>

<llo_original>
// kernel: basic_refine_forward.1
$region0: #{basic_refine_forward.1}
  #allocation0 [shape = 'u32[]', space=smem, size = 0x4, offset = 0x4, fixed_abs, tag = 'smem constant byte address 0x4 - core index']
  #allocation1 [shape = 'u32[144,128]{1,0:T(1,128)}', space=vmem, size = 0x12000, scoped, tag = 'internal scratch']
  %s0 = inlined_call_operand.vmem [shape: f32[2,64,256], index: 0, kind: input, shape index: {}]
  %s1 = inlined_call_operand.vmem [shape: f32[49,256,128], index: 1, kind: input, shape index: {}]
  %s2 = inlined_call_operand.vmem [shape: f32[2,16,128], index: 2, kind: output, shape index: {}]
  %s3 = sld [smem:[#allocation0]]
  $region41: #{basic_refine_forward.1} parent=0
    _
  %s5 = ssub.s32 1, %s3
  %s6 = scalar_select 0, %s5, %s3
  loop: start=0, step=1, limit=4
  $region2: #{basic_refine_forward.1} parent=0 // loop_pre_header
    _
  $region3: #{basic_refine_forward.1} parent=0 // loop_header
    %s8 = sphi 0, %s12
    %p9 = scmp.ge.s32.totalorder %s8, 4
    %s18 = sphi 0, %s20
    %s21 = sphi 0, %s18
    %s22 = sphi 0, %s21
    %s38 = sphi 0, %s22
    %s42 = sphi 0, %s42
    %s44 = sphi 0, %s42
    %s45 = sphi 0, %s44
    %s59 = sphi 0, %s45
    %s65 = sphi 0, %s67
    %s68 = sphi 0, %s65
    %s69 = sphi 0, %s68
    %s85 = sphi 0, %s69
  $region4: #{basic_refine_forward.1} parent=0 // loop_header_branch
    %11 = sbr.rel (%p9) target = $region8
  $region5: #{basic_refine_forward.1} parent=0 // loop_body
    %s13 = ssub.s32 %s8, 1
    %s14 = ssub.s32 %s8, 2
    %s15 = sadd.s32 %s8, 1
    %s16 = ssub.s32 %s8, %s15
    %p17 = scmp.eq.s32.totalorder %s16, 0
    %s19 = sadd.s32 %s18, 1
    %s20 = scalar_select %p17, %s18, %s19
    %p23 = pneg %p17
    %p24 = scmp.eq.s32.totalorder %s8, 1
    %p25 = por %p23, %p24
    %p26 = scmp.ne.s32.totalorder %s18, %s21
    %p27 = scmp.eq.s32.totalorder %s8, 0
    %p28 = por %p26, %p27
    %p29 = scmp.ne.s32.totalorder %s18, %s21
    %p30 = scmp.eq.s32.totalorder %s13, 1
    %p31 = por %p29, %p30
    %p32 = scmp.ne.s32.totalorder %s21, %s22
    %p33 = scmp.eq.s32.totalorder %s13, 0
    %p34 = por %p32, %p33
    %p35 = scmp.ne.s32.totalorder %s21, %s22
    %p36 = scmp.eq.s32.totalorder %s14, 1
    %p37 = por %p35, %p36
    %p39 = scmp.ne.s32.totalorder %s22, %s38
    %p40 = scmp.eq.s32.totalorder %s14, 0
    %p41 = por %p39, %p40
    %s43 = sadd.s32 %s42, 1
    %p46 = scmp.eq.s32.totalorder %s8, 1
    %p47 = scmp.ne.s32.totalorder %s42, %s44
    %p48 = scmp.eq.s32.totalorder %s8, 0
    %p49 = por %p47, %p48
    %p50 = scmp.ne.s32.totalorder %s42, %s44
    %p51 = scmp.eq.s32.totalorder %s13, 1
    %p52 = por %p50, %p51
    %p53 = scmp.ne.s32.totalorder %s44, %s45
    %p54 = scmp.eq.s32.totalorder %s13, 0
    %p55 = por %p53, %p54
    %p56 = scmp.ne.s32.totalorder %s44, %s45
    %p57 = scmp.eq.s32.totalorder %s14, 1
    %p58 = por %p56, %p57
    %p60 = scmp.ne.s32.totalorder %s45, %s59
    %p61 = scmp.eq.s32.totalorder %s14, 0
    %p62 = por %p60, %p61
    %s63 = ssub.s32 %s8, %s15
    %p64 = scmp.eq.s32.totalorder %s63, 0
    %s66 = sadd.s32 %s65, 1
    %s67 = scalar_select %p64, %s65, %s66
    %p70 = pneg %p64
    %p71 = scmp.eq.s32.totalorder %s8, 1
    %p72 = por %p70, %p71
    %p73 = scmp.ne.s32.totalorder %s65, %s68
    %p74 = scmp.eq.s32.totalorder %s8, 0
    %p75 = por %p73, %p74
    %p76 = scmp.ne.s32.totalorder %s65, %s68
    %p77 = scmp.eq.s32.totalorder %s13, 1
    %p78 = por %p76, %p77
    %p79 = scmp.ne.s32.totalorder %s68, %s69
    %p80 = scmp.eq.s32.totalorder %s13, 0
    %p81 = por %p79, %p80
    %p82 = scmp.ne.s32.totalorder %s68, %s69
    %p83 = scmp.eq.s32.totalorder %s14, 1
    %p84 = por %p82, %p83
    %p86 = scmp.ne.s32.totalorder %s69, %s85
    %p87 = scmp.eq.s32.totalorder %s14, 0
    %p88 = por %p86, %p87
    %p89 = scmp.le.s32.totalorder 1, %s8
    %p90 = scmp.lt.s32.totalorder %s8, 3
    %p91 = pnand %p89, %p90
    %p92 = pneg %p91
    // Predicated region
    $region9: #{basic_refine_forward.1} parent=5 // pred_check
      _
    $region10: #{basic_refine_forward.1} parent=5 // pred_check_branch
      %94 = sbr.rel (%p91) target = $region12
    $region11: #{basic_refine_forward.1} parent=5 // pred_region
      %s95 = ssub.s32 %s8, 1
      // Predicated region
      $region13: #{basic_refine_forward.1} parent=11 // pred_check
        %p96 = pneg %p55
      $region14: #{basic_refine_forward.1} parent=11 // pred_check_branch
        %98 = sbr.rel (%p96) target = $region16
      $region15: #{basic_refine_forward.1} parent=11 // pred_region
        _
      $region16: #{basic_refine_forward.1} parent=11 // pred_fallthru
        _
    $region12: #{basic_refine_forward.1} parent=5 // pred_fallthru
      _
    %p99 = scmp.lt.s32.totalorder %s8, 2
    // Predicated region
    $region17: #{basic_refine_forward.1} parent=5 // pred_check
      %p100 = pneg %p99
    $region18: #{basic_refine_forward.1} parent=5 // pred_check_branch
      %102 = sbr.rel (%p100) target = $region20
    $region19: #{basic_refine_forward.1} parent=5 // pred_region
      // Predicated region
      $region21: #{basic_refine_forward.1} parent=19 // pred_check
        %p103 = pneg %p28
      $region22: #{basic_refine_forward.1} parent=19 // pred_check_branch
        %105 = sbr.rel (%p103) target = $region24
      $region23: #{basic_refine_forward.1} parent=19 // pred_region
        %p106 = scmp.lt.s32.totalorder %s8, 1
        %s107 = scalar_select %p106, %s8, 1
        %s108 = smul.addr %s107, 16
        %s109 = smul.addr %s108, 8
        %s110 = scalar_lea.vmem %s0, %s109
      $region24: #{basic_refine_forward.1} parent=19 // pred_fallthru
        _
    $region20: #{basic_refine_forward.1} parent=5 // pred_fallthru
      _
    %p111 = scmp.le.s32.totalorder 1, %s8
    %p112 = scmp.lt.s32.totalorder %s8, 3
    %p113 = pnand %p111, %p112
    %p114 = pneg %p113
    // Predicated region
    $region25: #{basic_refine_forward.1} parent=5 // pred_check
      _
    $region26: #{basic_refine_forward.1} parent=5 // pred_check_branch
      %116 = sbr.rel (%p113) target = $region28
    $region27: #{basic_refine_forward.1} parent=5 // pred_region
      %s117 = ssub.s32 %s8, 1
      %p118 = scmp.lt.s32.totalorder %s13, 1
      %s119 = scalar_select %p118, %s13, 1
      %s120 = smul.addr %s119, 16
      %s121 = smul.addr %s120, 8
      %s122 = scalar_lea.vmem %s0, %s121
      %p123 = pneg %p34
      %p124 = pneg %p31
      %p125 = pneg %p55
      %p126 = pneg %p52
      %p127 = pneg %p81
      %p128 = pneg %p78
      %p129 = scmp.lt.s32.totalorder %s13, 1
      %s130 = scalar_select %p129, %s13, 1
      %s131 = smul.addr %s130, 2
      %s132 = smul.addr %s131, 8
      %s133 = scalar_lea.vmem %s2, %s132
      %p134 = scmp.lt.s32.totalorder %s13, 1
      %s135 = scalar_select %p134, %s13, 1
      %s136 = smul.addr %s135, 16
      %s137 = smul.addr %s136, 8
      %s138 = scalar_lea.vmem %s0, %s137
      %p139 = scmp.lt.s32.totalorder %s13, 1
      %s140 = scalar_select %p139, %s13, 1
      %s141 = smul.addr %s140, 2
      %s142 = smul.addr %s141, 8
      %s143 = scalar_lea.vmem %s2, %s142
      %v144 = vld [vmem:[%s138] sm:$0xff]
      %v145 = vld [vmem:[%s138 + $0x8] sm:$0xff]
      %v146 = vld [vmem:[%s138 + $0x10] sm:$0xff]
      %v147 = vld [vmem:[%s138 + $0x18] sm:$0xff]
      %v148 = vld [vmem:[%s1] sm:$0xff]
      %v149 = vld [vmem:[%s1 + $0x8] sm:$0xff]
      %v150 = vld [vmem:[%s1 + $0x10] sm:$0xff]
      %v151 = vld [vmem:[%s1 + $0x18] sm:$0xff]
      %v152 = vld [vmem:[%s1 + $0x20] sm:$0xff]
      %v153 = vld [vmem:[%s1 + $0x28] sm:$0xff]
      %v154 = vld [vmem:[%s1 + $0x30] sm:$0xff]
      %v155 = vld [vmem:[%s1 + $0x38] sm:$0xff]
      %v156 = vld [vmem:[%s1 + $0x40] sm:$0xff]
      %v157 = vld [vmem:[%s1 + $0x48] sm:$0xff]
      %v158 = vld [vmem:[%s1 + $0x50] sm:$0xff]
      %v159 = vld [vmem:[%s1 + $0x58] sm:$0xff]
      %v160 = vld [vmem:[%s1 + $0x60] sm:$0xff]
      %v161 = vld [vmem:[%s1 + $0x68] sm:$0xff]
      %v162 = vld [vmem:[%s1 + $0x70] sm:$0xff]
      %v163 = vld [vmem:[%s1 + $0x78] sm:$0xff]
      %v164 = vld [vmem:[%s1 + $0x80] sm:$0xff]
      %v165 = vld [vmem:[%s1 + $0x88] sm:$0xff]
      %v166 = vld [vmem:[%s1 + $0x90] sm:$0xff]
      %v167 = vld [vmem:[%s1 + $0x98] sm:$0xff]
      %v168 = vld [vmem:[%s1 + $0xa0] sm:$0xff]
      %v169 = vld [vmem:[%s1 + $0xa8] sm:$0xff]
      %v170 = vld [vmem:[%s1 + $0xb0] sm:$0xff]
      %v171 = vld [vmem:[%s1 + $0xb8] sm:$0xff]
      %v172 = vld [vmem:[%s1 + $0xc0] sm:$0xff]
      %v173 = vld [vmem:[%s1 + $0xc8] sm:$0xff]
      %v174 = vld [vmem:[%s1 + $0xd0] sm:$0xff]
      %v175 = vld [vmem:[%s1 + $0xd8] sm:$0xff]
      %v176 = vld [vmem:[%s1 + $0xe0] sm:$0xff]
      %v177 = vld [vmem:[%s1 + $0xe8] sm:$0xff]
      %v178 = vld [vmem:[%s1 + $0xf0] sm:$0xff]
      %v179 = vld [vmem:[%s1 + $0xf8] sm:$0xff]
      %v180 = vld [vmem:[%s138] sm:$0xfe]
      %v181 = vld [vmem:[%s138 + $0x8] sm:$0xfe]
      %v182 = vld [vmem:[%s138 + $0x20] sm:$0x1]
      %v183 = vld [vmem:[%s138 + $0x28] sm:$0x1]
      %s184 = scalar_lea.vmem %s1, 256
      %v185 = vld [vmem:[%s184] sm:$0xff]
      %v186 = vld [vmem:[%s184 + $0x8] sm:$0xff]
      %v187 = vld [vmem:[%s184 + $0x10] sm:$0xff]
      %v188 = vld [vmem:[%s184 + $0x18] sm:$0xff]
      %v189 = vld [vmem:[%s184 + $0x20] sm:$0xff]
      %v190 = vld [vmem:[%s184 + $0x28] sm:$0xff]
      %v191 = vld [vmem:[%s184 + $0x30] sm:$0xff]
      %v192 = vld [vmem:[%s184 + $0x38] sm:$0xff]
      %v193 = vld [vmem:[%s184 + $0x40] sm:$0xff]
      %v194 = vld [vmem:[%s184 + $0x48] sm:$0xff]
      %v195 = vld [vmem:[%s184 + $0x50] sm:$0xff]
      %v196 = vld [vmem:[%s184 + $0x58] sm:$0xff]
      %v197 = vld [vmem:[%s184 + $0x60] sm:$0xff]
      %v198 = vld [vmem:[%s184 + $0x68] sm:$0xff]
      %v199 = vld [vmem:[%s184 + $0x70] sm:$0xff]
      %v200 = vld [vmem:[%s184 + $0x78] sm:$0xff]
      %v201 = vld [vmem:[%s184 + $0x80] sm:$0xff]
      %v202 = vld [vmem:[%s184 + $0x88] sm:$0xff]
      %v203 = vld [vmem:[%s184 + $0x90] sm:$0xff]
      %v204 = vld [vmem:[%s184 + $0x98] sm:$0xff]
      %v205 = vld [vmem:[%s184 + $0xa0] sm:$0xff]
      %v206 = vld [vmem:[%s184 + $0xa8] sm:$0xff]
      %v207 = vld [vmem:[%s184 + $0xb0] sm:$0xff]
      %v208 = vld [vmem:[%s184 + $0xb8] sm:$0xff]
      %v209 = vld [vmem:[%s184 + $0xc0] sm:$0xff]
      %v210 = vld [vmem:[%s184 + $0xc8] sm:$0xff]
      %v211 = vld [vmem:[%s184 + $0xd0] sm:$0xff]
      %v212 = vld [vmem:[%s184 + $0xd8] sm:$0xff]
      %v213 = vld [vmem:[%s184 + $0xe0] sm:$0xff]
      %v214 = vld [vmem:[%s184 + $0xe8] sm:$0xff]
      %v215 = vld [vmem:[%s184 + $0xf0] sm:$0xff]
      %v216 = vld [vmem:[%s184 + $0xf8] sm:$0xff]
      %vm223 = vcmask 1046528
      %v224 = vrot.slane %v180, 1
      %v225 = vrot.slane %v146, 1
      %v226 = vsel %vm223, %v224, %v225
      %v227 = vrot.slane %v181, 1
      %v228 = vrot.slane %v147, 1
      %v229 = vsel %vm223, %v227, %v228
      %v230 = vrot.slane %v182, 1
      %v231 = vsel %vm223, %v225, %v230
      %v232 = vrot.slane %v183, 1
      %v233 = vsel %vm223, %v228, %v232
      %238 = vmatprep.subr.mxu0 0.0
      %239 = vmatpush1.msra.mxu0 %v200
      %240 = vmatprep.subr.mxu0 0.0
      %241 = vmatpush1.msra.mxu0 %v199
      %242 = vmatprep.subr.mxu0 0.0
      %243 = vmatpush1.msra.mxu0 %v198
      %244 = vmatprep.subr.mxu0 0.0
      %245 = vmatpush1.msra.mxu0 %v197
      %246 = vmatprep.subr.mxu0 0.0
      %247 = vmatpush1.msra.mxu0 %v196
      %248 = vmatprep.subr.mxu0 0.0
      %249 = vmatpush1.msra.mxu0 %v195
      %250 = vmatprep.subr.mxu0 0.0
      %251 = vmatpush1.msra.mxu0 %v194
      %252 = vmatprep.subr.mxu0 0.0
      %253 = vmatpush1.msra.mxu0 %v193
      %254 = vmatprep.subr.mxu0 0.0
      %255 = vmatpush1.msra.mxu0 %v192
      %256 = vmatprep.subr.mxu0 0.0
      %257 = vmatpush1.msra.mxu0 %v191
      %258 = vmatprep.subr.mxu0 0.0
      %259 = vmatpush1.msra.mxu0 %v190
      %260 = vmatprep.subr.mxu0 0.0
      %261 = vmatpush1.msra.mxu0 %v189
      %262 = vmatprep.subr.mxu0 0.0
      %263 = vmatpush1.msra.mxu0 %v188
      %264 = vmatprep.subr.mxu0 0.0
      %265 = vmatpush1.msra.mxu0 %v187
      %266 = vmatprep.subr.mxu0 0.0
      %267 = vmatpush1.msra.mxu0 %v186
      %268 = vmatprep.subr.mxu0 0.0
      %269 = vmatpush1.msra.mxu0 %v185
      %270 = vmatprep.subr.mxu0 0.0
      %271 = vmatpush2.msra.mxu0 %v216
      %272 = vmatprep.subr.mxu0 0.0
      %273 = vmatpush2.msra.mxu0 %v215
      %274 = vmatprep.subr.mxu0 0.0
      %275 = vmatpush2.msra.mxu0 %v214
      %276 = vmatprep.subr.mxu0 0.0
      %277 = vmatpush2.msra.mxu0 %v213
      %278 = vmatprep.subr.mxu0 0.0
      %279 = vmatpush2.msra.mxu0 %v212
      %280 = vmatprep.subr.mxu0 0.0
      %281 = vmatpush2.msra.mxu0 %v211
      %282 = vmatprep.subr.mxu0 0.0
      %283 = vmatpush2.msra.mxu0 %v210
      %284 = vmatprep.subr.mxu0 0.0
      %285 = vmatpush2.msra.mxu0 %v209
      %286 = vmatprep.subr.mxu0 0.0
      %287 = vmatpush2.msra.mxu0 %v208
      %288 = vmatprep.subr.mxu0 0.0
      %289 = vmatpush2.msra.mxu0 %v207
      %290 = vmatprep.subr.mxu0 0.0
      %291 = vmatpush2.msra.mxu0 %v206
      %292 = vmatprep.subr.mxu0 0.0
      %293 = vmatpush2.msra.mxu0 %v205
      %294 = vmatprep.subr.mxu0 0.0
      %295 = vmatpush2.msra.mxu0 %v204
      %296 = vmatprep.subr.mxu0 0.0
      %297 = vmatpush2.msra.mxu0 %v203
      %298 = vmatprep.subr.mxu0 0.0
      %299 = vmatpush2.msra.mxu0 %v202
      %300 = vmatprep.subr.mxu0 0.0
      %301 = vmatpush2.msra.mxu0 %v201
      %302 = vmatprep.mubr.f32.mxu0 %v229
      %303 = vmatmul.mubr.f32.gmra.mxu0 %v226
      %v304 = vpop.f32.mrf.mxu0
      %v305 = vadd.f32 0.0, %v304
      %v306 = vpop.f32.mrf.mxu0
      %307 = vmatprep.mubr.f32.mxu0 %v233
      %308 = vmatmul.mubr.f32.gmra.mxu0 %v231
      %v309 = vpop.f32.mrf.mxu0
      %v310 = vadd.f32 0.0, %v309
      %v311 = vpop.f32.mrf.mxu0
      %312 = vdwg.mxu0
      %313 = vmatprep.subr.mxu0 0.0
      %314 = vmatpush1.msra.mxu0 %v163
      %315 = vmatprep.subr.mxu0 0.0
      %316 = vmatpush1.msra.mxu0 %v162
      %317 = vmatprep.subr.mxu0 0.0
      %318 = vmatpush1.msra.mxu0 %v161
      %319 = vmatprep.subr.mxu0 0.0
      %320 = vmatpush1.msra.mxu0 %v160
      %321 = vmatprep.subr.mxu0 0.0
      %322 = vmatpush1.msra.mxu0 %v159
      %323 = vmatprep.subr.mxu0 0.0
      %324 = vmatpush1.msra.mxu0 %v158
      %325 = vmatprep.subr.mxu0 0.0
      %326 = vmatpush1.msra.mxu0 %v157
      %327 = vmatprep.subr.mxu0 0.0
      %328 = vmatpush1.msra.mxu0 %v156
      %329 = vmatprep.subr.mxu0 0.0
      %330 = vmatpush1.msra.mxu0 %v155
      %331 = vmatprep.subr.mxu0 0.0
      %332 = vmatpush1.msra.mxu0 %v154
      %333 = vmatprep.subr.mxu0 0.0
      %334 = vmatpush1.msra.mxu0 %v153
      %335 = vmatprep.subr.mxu0 0.0
      %336 = vmatpush1.msra.mxu0 %v152
      %337 = vmatprep.subr.mxu0 0.0
      %338 = vmatpush1.msra.mxu0 %v151
      %339 = vmatprep.subr.mxu0 0.0
      %340 = vmatpush1.msra.mxu0 %v150
      %341 = vmatprep.subr.mxu0 0.0
      %342 = vmatpush1.msra.mxu0 %v149
      %343 = vmatprep.subr.mxu0 0.0
      %344 = vmatpush1.msra.mxu0 %v148
      %345 = vmatprep.subr.mxu0 0.0
      %346 = vmatpush2.msra.mxu0 %v179
      %347 = vmatprep.subr.mxu0 0.0
      %348 = vmatpush2.msra.mxu0 %v178
      %349 = vmatprep.subr.mxu0 0.0
      %350 = vmatpush2.msra.mxu0 %v177
      %351 = vmatprep.subr.mxu0 0.0
      %352 = vmatpush2.msra.mxu0 %v176
      %353 = vmatprep.subr.mxu0 0.0
      %354 = vmatpush2.msra.mxu0 %v175
      %355 = vmatprep.subr.mxu0 0.0
      %356 = vmatpush2.msra.mxu0 %v174
      %357 = vmatprep.subr.mxu0 0.0
      %358 = vmatpush2.msra.mxu0 %v173
      %359 = vmatprep.subr.mxu0 0.0
      %360 = vmatpush2.msra.mxu0 %v172
      %361 = vmatprep.subr.mxu0 0.0
      %362 = vmatpush2.msra.mxu0 %v171
      %363 = vmatprep.subr.mxu0 0.0
      %364 = vmatpush2.msra.mxu0 %v170
      %365 = vmatprep.subr.mxu0 0.0
      %366 = vmatpush2.msra.mxu0 %v169
      %367 = vmatprep.subr.mxu0 0.0
      %368 = vmatpush2.msra.mxu0 %v168
      %369 = vmatprep.subr.mxu0 0.0
      %370 = vmatpush2.msra.mxu0 %v167
      %371 = vmatprep.subr.mxu0 0.0
      %372 = vmatpush2.msra.mxu0 %v166
      %373 = vmatprep.subr.mxu0 0.0
      %374 = vmatpush2.msra.mxu0 %v165
      %375 = vmatprep.subr.mxu0 0.0
      %376 = vmatpush2.msra.mxu0 %v164
      %377 = vmatprep.mubr.f32.mxu0 %v145
      %378 = vmatmul.mubr.f32.gmra.mxu0 %v144
      %v379 = vpop.f32.mrf.mxu0
      %v380 = vadd.f32 %v305, %v379
      %v381 = vpop.f32.mrf.mxu0
      %382 = vmatprep.mubr.f32.mxu0 %v147
      %383 = vmatmul.mubr.f32.gmra.mxu0 %v146
      %v384 = vpop.f32.mrf.mxu0
      %v385 = vadd.f32 %v310, %v384
      %v386 = vpop.f32.mrf.mxu0
      %387 = vdwg.mxu0
      %v388 = vld [vmem:[%s138] sm:$0xfc]
      %v389 = vld [vmem:[%s138 + $0x8] sm:$0xfc]
      %v390 = vld [vmem:[%s138 + $0x20] sm:$0x3]
      %v391 = vld [vmem:[%s138 + $0x28] sm:$0x3]
      %s392 = scalar_lea.vmem %s1, 512
      %v393 = vld [vmem:[%s392] sm:$0xff]
      %v394 = vld [vmem:[%s392 + $0x8] sm:$0xff]
      %v395 = vld [vmem:[%s392 + $0x10] sm:$0xff]
      %v396 = vld [vmem:[%s392 + $0x18] sm:$0xff]
      %v397 = vld [vmem:[%s392 + $0x20] sm:$0xff]
      %v398 = vld [vmem:[%s392 + $0x28] sm:$0xff]
      %v399 = vld [vmem:[%s392 + $0x30] sm:$0xff]
      %v400 = vld [vmem:[%s392 + $0x38] sm:$0xff]
      %v401 = vld [vmem:[%s392 + $0x40] sm:$0xff]
      %v402 = vld [vmem:[%s392 + $0x48] sm:$0xff]
      %v403 = vld [vmem:[%s392 + $0x50] sm:$0xff]
      %v404 = vld [vmem:[%s392 + $0x58] sm:$0xff]
      %v405 = vld [vmem:[%s392 + $0x60] sm:$0xff]
      %v406 = vld [vmem:[%s392 + $0x68] sm:$0xff]
      %v407 = vld [vmem:[%s392 + $0x70] sm:$0xff]
      %v408 = vld [vmem:[%s392 + $0x78] sm:$0xff]
      %v409 = vld [vmem:[%s392 + $0x80] sm:$0xff]
      %v410 = vld [vmem:[%s392 + $0x88] sm:$0xff]
      %v411 = vld [vmem:[%s392 + $0x90] sm:$0xff]
      %v412 = vld [vmem:[%s392 + $0x98] sm:$0xff]
      %v413 = vld [vmem:[%s392 + $0xa0] sm:$0xff]
      %v414 = vld [vmem:[%s392 + $0xa8] sm:$0xff]
      %v415 = vld [vmem:[%s392 + $0xb0] sm:$0xff]
      %v416 = vld [vmem:[%s392 + $0xb8] sm:$0xff]
      %v417 = vld [vmem:[%s392 + $0xc0] sm:$0xff]
      %v418 = vld [vmem:[%s392 + $0xc8] sm:$0xff]
      %v419 = vld [vmem:[%s392 + $0xd0] sm:$0xff]
      %v420 = vld [vmem:[%s392 + $0xd8] sm:$0xff]
      %v421 = vld [vmem:[%s392 + $0xe0] sm:$0xff]
      %v422 = vld [vmem:[%s392 + $0xe8] sm:$0xff]
      %v423 = vld [vmem:[%s392 + $0xf0] sm:$0xff]
      %v424 = vld [vmem:[%s392 + $0xf8] sm:$0xff]
      %vm429 = vcmask 1045504
      %v430 = vrot.slane %v388, 2
      %v431 = vrot.slane %v146, 2
      %v432 = vsel %vm429, %v430, %v431
      %v433 = vrot.slane %v389, 2
      %v434 = vrot.slane %v147, 2
      %v435 = vsel %vm429, %v433, %v434
      %v436 = vrot.slane %v390, 2
      %v437 = vsel %vm429, %v431, %v436
      %v438 = vrot.slane %v391, 2
      %v439 = vsel %vm429, %v434, %v438
      %444 = vmatprep.subr.mxu0 0.0
      %445 = vmatpush1.msra.mxu0 %v408
      %446 = vmatprep.subr.mxu0 0.0
      %447 = vmatpush1.msra.mxu0 %v407
      %448 = vmatprep.subr.mxu0 0.0
      %449 = vmatpush1.msra.mxu0 %v406
      %450 = vmatprep.subr.mxu0 0.0
      %451 = vmatpush1.msra.mxu0 %v405
      %452 = vmatprep.subr.mxu0 0.0
      %453 = vmatpush1.msra.mxu0 %v404
      %454 = vmatprep.subr.mxu0 0.0
      %455 = vmatpush1.msra.mxu0 %v403
      %456 = vmatprep.subr.mxu0 0.0
      %457 = vmatpush1.msra.mxu0 %v402
      %458 = vmatprep.subr.mxu0 0.0
      %459 = vmatpush1.msra.mxu0 %v401
      %460 = vmatprep.subr.mxu0 0.0
      %461 = vmatpush1.msra.mxu0 %v400
      %462 = vmatprep.subr.mxu0 0.0
      %463 = vmatpush1.msra.mxu0 %v399
      %464 = vmatprep.subr.mxu0 0.0
      %465 = vmatpush1.msra.mxu0 %v398
      %466 = vmatprep.subr.mxu0 0.0
      %467 = vmatpush1.msra.mxu0 %v397
      %468 = vmatprep.subr.mxu0 0.0
      %469 = vmatpush1.msra.mxu0 %v396
      %470 = vmatprep.subr.mxu0 0.0
      %471 = vmatpush1.msra.mxu0 %v395
      %472 = vmatprep.subr.mxu0 0.0
      %473 = vmatpush1.msra.mxu0 %v394
      %474 = vmatprep.subr.mxu0 0.0
      %475 = vmatpush1.msra.mxu0 %v393
      %476 = vmatprep.subr.mxu0 0.0
      %477 = vmatpush2.msra.mxu0 %v424
      %478 = vmatprep.subr.mxu0 0.0
      %479 = vmatpush2.msra.mxu0 %v423
      %480 = vmatprep.subr.mxu0 0.0
      %481 = vmatpush2.msra.mxu0 %v422
      %482 = vmatprep.subr.mxu0 0.0
      %483 = vmatpush2.msra.mxu0 %v421
      %484 = vmatprep.subr.mxu0 0.0
      %485 = vmatpush2.msra.mxu0 %v420
      %486 = vmatprep.subr.mxu0 0.0
      %487 = vmatpush2.msra.mxu0 %v419
      %488 = vmatprep.subr.mxu0 0.0
      %489 = vmatpush2.msra.mxu0 %v418
      %490 = vmatprep.subr.mxu0 0.0
      %491 = vmatpush2.msra.mxu0 %v417
      %492 = vmatprep.subr.mxu0 0.0
      %493 = vmatpush2.msra.mxu0 %v416
      %494 = vmatprep.subr.mxu0 0.0
      %495 = vmatpush2.msra.mxu0 %v415
      %496 = vmatprep.subr.mxu0 0.0
      %497 = vmatpush2.msra.mxu0 %v414
      %498 = vmatprep.subr.mxu0 0.0
      %499 = vmatpush2.msra.mxu0 %v413
      %500 = vmatprep.subr.mxu0 0.0
      %501 = vmatpush2.msra.mxu0 %v412
      %502 = vmatprep.subr.mxu0 0.0
      %503 = vmatpush2.msra.mxu0 %v411
      %504 = vmatprep.subr.mxu0 0.0
      %505 = vmatpush2.msra.mxu0 %v410
      %506 = vmatprep.subr.mxu0 0.0
      %507 = vmatpush2.msra.mxu0 %v409
      %508 = vmatprep.mubr.f32.mxu0 %v435
      %509 = vmatmul.mubr.f32.gmra.mxu0 %v432
      %v510 = vpop.f32.mrf.mxu0
      %v511 = vadd.f32 0.0, %v510
      %v512 = vpop.f32.mrf.mxu0
      %513 = vmatprep.mubr.f32.mxu0 %v439
      %514 = vmatmul.mubr.f32.gmra.mxu0 %v437
      %v515 = vpop.f32.mrf.mxu0
      %v516 = vadd.f32 0.0, %v515
      %v517 = vpop.f32.mrf.mxu0
      %518 = vdwg.mxu0
      %v519 = vadd.f32 %v380, %v511
      %v520 = vadd.f32 %v385, %v516
      %v521 = vld [vmem:[%s138] sm:$0xf8]
      %v522 = vld [vmem:[%s138 + $0x8] sm:$0xf8]
      %v523 = vld [vmem:[%s138 + $0x20] sm:$0x7]
      %v524 = vld [vmem:[%s138 + $0x28] sm:$0x7]
      %s525 = scalar_lea.vmem %s1, 768
      %v526 = vld [vmem:[%s525] sm:$0xff]
      %v527 = vld [vmem:[%s525 + $0x8] sm:$0xff]
      %v528 = vld [vmem:[%s525 + $0x10] sm:$0xff]
      %v529 = vld [vmem:[%s525 + $0x18] sm:$0xff]
      %v530 = vld [vmem:[%s525 + $0x20] sm:$0xff]
      %v531 = vld [vmem:[%s525 + $0x28] sm:$0xff]
      %v532 = vld [vmem:[%s525 + $0x30] sm:$0xff]
      %v533 = vld [vmem:[%s525 + $0x38] sm:$0xff]
      %v534 = vld [vmem:[%s525 + $0x40] sm:$0xff]
      %v535 = vld [vmem:[%s525 + $0x48] sm:$0xff]
      %v536 = vld [vmem:[%s525 + $0x50] sm:$0xff]
      %v537 = vld [vmem:[%s525 + $0x58] sm:$0xff]
      %v538 = vld [vmem:[%s525 + $0x60] sm:$0xff]
      %v539 = vld [vmem:[%s525 + $0x68] sm:$0xff]
      %v540 = vld [vmem:[%s525 + $0x70] sm:$0xff]
      %v541 = vld [vmem:[%s525 + $0x78] sm:$0xff]
      %v542 = vld [vmem:[%s525 + $0x80] sm:$0xff]
      %v543 = vld [vmem:[%s525 + $0x88] sm:$0xff]
      %v544 = vld [vmem:[%s525 + $0x90] sm:$0xff]
      %v545 = vld [vmem:[%s525 + $0x98] sm:$0xff]
      %v546 = vld [vmem:[%s525 + $0xa0] sm:$0xff]
      %v547 = vld [vmem:[%s525 + $0xa8] sm:$0xff]
      %v548 = vld [vmem:[%s525 + $0xb0] sm:$0xff]
      %v549 = vld [vmem:[%s525 + $0xb8] sm:$0xff]
      %v550 = vld [vmem:[%s525 + $0xc0] sm:$0xff]
      %v551 = vld [vmem:[%s525 + $0xc8] sm:$0xff]
      %v552 = vld [vmem:[%s525 + $0xd0] sm:$0xff]
      %v553 = vld [vmem:[%s525 + $0xd8] sm:$0xff]
      %v554 = vld [vmem:[%s525 + $0xe0] sm:$0xff]
      %v555 = vld [vmem:[%s525 + $0xe8] sm:$0xff]
      %v556 = vld [vmem:[%s525 + $0xf0] sm:$0xff]
      %v557 = vld [vmem:[%s525 + $0xf8] sm:$0xff]
      %vm562 = vcmask 1044480
      %v563 = vrot.slane %v521, 3
      %v564 = vrot.slane %v146, 3
      %v565 = vsel %vm562, %v563, %v564
      %v566 = vrot.slane %v522, 3
      %v567 = vrot.slane %v147, 3
      %v568 = vsel %vm562, %v566, %v567
      %v569 = vrot.slane %v523, 3
      %v570 = vsel %vm562, %v564, %v569
      %v571 = vrot.slane %v524, 3
      %v572 = vsel %vm562, %v567, %v571
      %577 = vmatprep.subr.mxu0 0.0
      %578 = vmatpush1.msra.mxu0 %v541
      %579 = vmatprep.subr.mxu0 0.0
      %580 = vmatpush1.msra.mxu0 %v540
      %581 = vmatprep.subr.mxu0 0.0
      %582 = vmatpush1.msra.mxu0 %v539
      %583 = vmatprep.subr.mxu0 0.0
      %584 = vmatpush1.msra.mxu0 %v538
      %585 = vmatprep.subr.mxu0 0.0
      %586 = vmatpush1.msra.mxu0 %v537
      %587 = vmatprep.subr.mxu0 0.0
      %588 = vmatpush1.msra.mxu0 %v536
      %589 = vmatprep.subr.mxu0 0.0
      %590 = vmatpush1.msra.mxu0 %v535
      %591 = vmatprep.subr.mxu0 0.0
      %592 = vmatpush1.msra.mxu0 %v534
      %593 = vmatprep.subr.mxu0 0.0
      %594 = vmatpush1.msra.mxu0 %v533
      %595 = vmatprep.subr.mxu0 0.0
      %596 = vmatpush1.msra.mxu0 %v532
      %597 = vmatprep.subr.mxu0 0.0
      %598 = vmatpush1.msra.mxu0 %v531
      %599 = vmatprep.subr.mxu0 0.0
      %600 = vmatpush1.msra.mxu0 %v530
      %601 = vmatprep.subr.mxu0 0.0
      %602 = vmatpush1.msra.mxu0 %v529
      %603 = vmatprep.subr.mxu0 0.0
      %604 = vmatpush1.msra.mxu0 %v528
      %605 = vmatprep.subr.mxu0 0.0
      %606 = vmatpush1.msra.mxu0 %v527
      %607 = vmatprep.subr.mxu0 0.0
      %608 = vmatpush1.msra.mxu0 %v526
      %609 = vmatprep.subr.mxu0 0.0
      %610 = vmatpush2.msra.mxu0 %v557
      %611 = vmatprep.subr.mxu0 0.0
      %612 = vmatpush2.msra.mxu0 %v556
      %613 = vmatprep.subr.mxu0 0.0
      %614 = vmatpush2.msra.mxu0 %v555
      %615 = vmatprep.subr.mxu0 0.0
      %616 = vmatpush2.msra.mxu0 %v554
      %617 = vmatprep.subr.mxu0 0.0
      %618 = vmatpush2.msra.mxu0 %v553
      %619 = vmatprep.subr.mxu0 0.0
      %620 = vmatpush2.msra.mxu0 %v552
      %621 = vmatprep.subr.mxu0 0.0
      %622 = vmatpush2.msra.mxu0 %v551
      %623 = vmatprep.subr.mxu0 0.0
      %624 = vmatpush2.msra.mxu0 %v550
      %625 = vmatprep.subr.mxu0 0.0
      %626 = vmatpush2.msra.mxu0 %v549
      %627 = vmatprep.subr.mxu0 0.0
      %628 = vmatpush2.msra.mxu0 %v548
      %629 = vmatprep.subr.mxu0 0.0
      %630 = vmatpush2.msra.mxu0 %v547
      %631 = vmatprep.subr.mxu0 0.0
      %632 = vmatpush2.msra.mxu0 %v546
      %633 = vmatprep.subr.mxu0 0.0
      %634 = vmatpush2.msra.mxu0 %v545
      %635 = vmatprep.subr.mxu0 0.0
      %636 = vmatpush2.msra.mxu0 %v544
      %637 = vmatprep.subr.mxu0 0.0
      %638 = vmatpush2.msra.mxu0 %v543
      %639 = vmatprep.subr.mxu0 0.0
      %640 = vmatpush2.msra.mxu0 %v542
      %641 = vmatprep.mubr.f32.mxu0 %v568
      %642 = vmatmul.mubr.f32.gmra.mxu0 %v565
      %v643 = vpop.f32.mrf.mxu0
      %v644 = vadd.f32 0.0, %v643
      %v645 = vpop.f32.mrf.mxu0
      %646 = vmatprep.mubr.f32.mxu0 %v572
      %647 = vmatmul.mubr.f32.gmra.mxu0 %v570
      %v648 = vpop.f32.mrf.mxu0
      %v649 = vadd.f32 0.0, %v648
      %v650 = vpop.f32.mrf.mxu0
      %651 = vdwg.mxu0
      %v652 = vadd.f32 %v519, %v644
      %v653 = vadd.f32 %v520, %v649
      %v654 = vld [vmem:[%s138] sm:$0xf0]
      %v655 = vld [vmem:[%s138 + $0x8] sm:$0xf0]
      %v656 = vld [vmem:[%s138 + $0x20] sm:$0xf]
      %v657 = vld [vmem:[%s138 + $0x28] sm:$0xf]
      %s658 = scalar_lea.vmem %s1, 1024
      %v659 = vld [vmem:[%s658] sm:$0xff]
      %v660 = vld [vmem:[%s658 + $0x8] sm:$0xff]
      %v661 = vld [vmem:[%s658 + $0x10] sm:$0xff]
      %v662 = vld [vmem:[%s658 + $0x18] sm:$0xff]
      %v663 = vld [vmem:[%s658 + $0x20] sm:$0xff]
      %v664 = vld [vmem:[%s658 + $0x28] sm:$0xff]
      %v665 = vld [vmem:[%s658 + $0x30] sm:$0xff]
      %v666 = vld [vmem:[%s658 + $0x38] sm:$0xff]
      %v667 = vld [vmem:[%s658 + $0x40] sm:$0xff]
      %v668 = vld [vmem:[%s658 + $0x48] sm:$0xff]
      %v669 = vld [vmem:[%s658 + $0x50] sm:$0xff]
      %v670 = vld [vmem:[%s658 + $0x58] sm:$0xff]
      %v671 = vld [vmem:[%s658 + $0x60] sm:$0xff]
      %v672 = vld [vmem:[%s658 + $0x68] sm:$0xff]
      %v673 = vld [vmem:[%s658 + $0x70] sm:$0xff]
      %v674 = vld [vmem:[%s658 + $0x78] sm:$0xff]
      %v675 = vld [vmem:[%s658 + $0x80] sm:$0xff]
      %v676 = vld [vmem:[%s658 + $0x88] sm:$0xff]
      %v677 = vld [vmem:[%s658 + $0x90] sm:$0xff]
      %v678 = vld [vmem:[%s658 + $0x98] sm:$0xff]
      %v679 = vld [vmem:[%s658 + $0xa0] sm:$0xff]
      %v680 = vld [vmem:[%s658 + $0xa8] sm:$0xff]
      %v681 = vld [vmem:[%s658 + $0xb0] sm:$0xff]
      %v682 = vld [vmem:[%s658 + $0xb8] sm:$0xff]
      %v683 = vld [vmem:[%s658 + $0xc0] sm:$0xff]
      %v684 = vld [vmem:[%s658 + $0xc8] sm:$0xff]
      %v685 = vld [vmem:[%s658 + $0xd0] sm:$0xff]
      %v686 = vld [vmem:[%s658 + $0xd8] sm:$0xff]
      %v687 = vld [vmem:[%s658 + $0xe0] sm:$0xff]
      %v688 = vld [vmem:[%s658 + $0xe8] sm:$0xff]
      %v689 = vld [vmem:[%s658 + $0xf0] sm:$0xff]
      %v690 = vld [vmem:[%s658 + $0xf8] sm:$0xff]
      %vm695 = vcmask 1043456
      %v696 = vrot.slane %v654, 4
      %v697 = vrot.slane %v146, 4
      %v698 = vsel %vm695, %v696, %v697
      %v699 = vrot.slane %v655, 4
      %v700 = vrot.slane %v147, 4
      %v701 = vsel %vm695, %v699, %v700
      %v702 = vrot.slane %v656, 4
      %v703 = vsel %vm695, %v697, %v702
      %v704 = vrot.slane %v657, 4
      %v705 = vsel %vm695, %v700, %v704
      %710 = vmatprep.subr.mxu0 0.0
      %711 = vmatpush1.msra.mxu0 %v674
      %712 = vmatprep.subr.mxu0 0.0
      %713 = vmatpush1.msra.mxu0 %v673
      %714 = vmatprep.subr.mxu0 0.0
      %715 = vmatpush1.msra.mxu0 %v672
      %716 = vmatprep.subr.mxu0 0.0
      %717 = vmatpush1.msra.mxu0 %v671
      %718 = vmatprep.subr.mxu0 0.0
      %719 = vmatpush1.msra.mxu0 %v670
      %720 = vmatprep.subr.mxu0 0.0
      %721 = vmatpush1.msra.mxu0 %v669
      %722 = vmatprep.subr.mxu0 0.0
      %723 = vmatpush1.msra.mxu0 %v668
      %724 = vmatprep.subr.mxu0 0.0
      %725 = vmatpush1.msra.mxu0 %v667
      %726 = vmatprep.subr.mxu0 0.0
      %727 = vmatpush1.msra.mxu0 %v666
      %728 = vmatprep.subr.mxu0 0.0
      %729 = vmatpush1.msra.mxu0 %v665
      %730 = vmatprep.subr.mxu0 0.0
      %731 = vmatpush1.msra.mxu0 %v664
      %732 = vmatprep.subr.mxu0 0.0
      %733 = vmatpush1.msra.mxu0 %v663
      %734 = vmatprep.subr.mxu0 0.0
      %735 = vmatpush1.msra.mxu0 %v662
      %736 = vmatprep.subr.mxu0 0.0
      %737 = vmatpush1.msra.mxu0 %v661
      %738 = vmatprep.subr.mxu0 0.0
      %739 = vmatpush1.msra.mxu0 %v660
      %740 = vmatprep.subr.mxu0 0.0
      %741 = vmatpush1.msra.mxu0 %v659
      %742 = vmatprep.subr.mxu0 0.0
      %743 = vmatpush2.msra.mxu0 %v690
      %744 = vmatprep.subr.mxu0 0.0
      %745 = vmatpush2.msra.mxu0 %v689
      %746 = vmatprep.subr.mxu0 0.0
      %747 = vmatpush2.msra.mxu0 %v688
      %748 = vmatprep.subr.mxu0 0.0
      %749 = vmatpush2.msra.mxu0 %v687
      %750 = vmatprep.subr.mxu0 0.0
      %751 = vmatpush2.msra.mxu0 %v686
      %752 = vmatprep.subr.mxu0 0.0
      %753 = vmatpush2.msra.mxu0 %v685
      %754 = vmatprep.subr.mxu0 0.0
      %755 = vmatpush2.msra.mxu0 %v684
      %756 = vmatprep.subr.mxu0 0.0
      %757 = vmatpush2.msra.mxu0 %v683
      %758 = vmatprep.subr.mxu0 0.0
      %759 = vmatpush2.msra.mxu0 %v682
      %760 = vmatprep.subr.mxu0 0.0
      %761 = vmatpush2.msra.mxu0 %v681
      %762 = vmatprep.subr.mxu0 0.0
      %763 = vmatpush2.msra.mxu0 %v680
      %764 = vmatprep.subr.mxu0 0.0
      %765 = vmatpush2.msra.mxu0 %v679
      %766 = vmatprep.subr.mxu0 0.0
      %767 = vmatpush2.msra.mxu0 %v678
      %768 = vmatprep.subr.mxu0 0.0
      %769 = vmatpush2.msra.mxu0 %v677
      %770 = vmatprep.subr.mxu0 0.0
      %771 = vmatpush2.msra.mxu0 %v676
      %772 = vmatprep.subr.mxu0 0.0
      %773 = vmatpush2.msra.mxu0 %v675
      %774 = vmatprep.mubr.f32.mxu0 %v701
      %775 = vmatmul.mubr.f32.gmra.mxu0 %v698
      %v776 = vpop.f32.mrf.mxu0
      %v777 = vadd.f32 0.0, %v776
      %v778 = vpop.f32.mrf.mxu0
      %779 = vmatprep.mubr.f32.mxu0 %v705
      %780 = vmatmul.mubr.f32.gmra.mxu0 %v703
      %v781 = vpop.f32.mrf.mxu0
      %v782 = vadd.f32 0.0, %v781
      %v783 = vpop.f32.mrf.mxu0
      %784 = vdwg.mxu0
      %v785 = vadd.f32 %v652, %v777
      %v786 = vadd.f32 %v653, %v782
      %v787 = vld [vmem:[%s138] sm:$0xe0]
      %v788 = vld [vmem:[%s138 + $0x8] sm:$0xe0]
      %v789 = vld [vmem:[%s138 + $0x20] sm:$0x1f]
      %v790 = vld [vmem:[%s138 + $0x28] sm:$0x1f]
      %s791 = scalar_lea.vmem %s1, 1280
      %v792 = vld [vmem:[%s791] sm:$0xff]
      %v793 = vld [vmem:[%s791 + $0x8] sm:$0xff]
      %v794 = vld [vmem:[%s791 + $0x10] sm:$0xff]
      %v795 = vld [vmem:[%s791 + $0x18] sm:$0xff]
      %v796 = vld [vmem:[%s791 + $0x20] sm:$0xff]
      %v797 = vld [vmem:[%s791 + $0x28] sm:$0xff]
      %v798 = vld [vmem:[%s791 + $0x30] sm:$0xff]
      %v799 = vld [vmem:[%s791 + $0x38] sm:$0xff]
      %v800 = vld [vmem:[%s791 + $0x40] sm:$0xff]
      %v801 = vld [vmem:[%s791 + $0x48] sm:$0xff]
      %v802 = vld [vmem:[%s791 + $0x50] sm:$0xff]
      %v803 = vld [vmem:[%s791 + $0x58] sm:$0xff]
      %v804 = vld [vmem:[%s791 + $0x60] sm:$0xff]
      %v805 = vld [vmem:[%s791 + $0x68] sm:$0xff]
      %v806 = vld [vmem:[%s791 + $0x70] sm:$0xff]
      %v807 = vld [vmem:[%s791 + $0x78] sm:$0xff]
      %v808 = vld [vmem:[%s791 + $0x80] sm:$0xff]
      %v809 = vld [vmem:[%s791 + $0x88] sm:$0xff]
      %v810 = vld [vmem:[%s791 + $0x90] sm:$0xff]
      %v811 = vld [vmem:[%s791 + $0x98] sm:$0xff]
      %v812 = vld [vmem:[%s791 + $0xa0] sm:$0xff]
      %v813 = vld [vmem:[%s791 + $0xa8] sm:$0xff]
      %v814 = vld [vmem:[%s791 + $0xb0] sm:$0xff]
      %v815 = vld [vmem:[%s791 + $0xb8] sm:$0xff]
      %v816 = vld [vmem:[%s791 + $0xc0] sm:$0xff]
      %v817 = vld [vmem:[%s791 + $0xc8] sm:$0xff]
      %v818 = vld [vmem:[%s791 + $0xd0] sm:$0xff]
      %v819 = vld [vmem:[%s791 + $0xd8] sm:$0xff]
      %v820 = vld [vmem:[%s791 + $0xe0] sm:$0xff]
      %v821 = vld [vmem:[%s791 + $0xe8] sm:$0xff]
      %v822 = vld [vmem:[%s791 + $0xf0] sm:$0xff]
      %v823 = vld [vmem:[%s791 + $0xf8] sm:$0xff]
      %vm828 = vcmask 1042432
      %v829 = vrot.slane %v787, 5
      %v830 = vrot.slane %v146, 5
      %v831 = vsel %vm828, %v829, %v830
      %v832 = vrot.slane %v788, 5
      %v833 = vrot.slane %v147, 5
      %v834 = vsel %vm828, %v832, %v833
      %v835 = vrot.slane %v789, 5
      %v836 = vsel %vm828, %v830, %v835
      %v837 = vrot.slane %v790, 5
      %v838 = vsel %vm828, %v833, %v837
      %843 = vmatprep.subr.mxu0 0.0
      %844 = vmatpush1.msra.mxu0 %v807
      %845 = vmatprep.subr.mxu0 0.0
      %846 = vmatpush1.msra.mxu0 %v806
      %847 = vmatprep.subr.mxu0 0.0
      %848 = vmatpush1.msra.mxu0 %v805
      %849 = vmatprep.subr.mxu0 0.0
      %850 = vmatpush1.msra.mxu0 %v804
      %851 = vmatprep.subr.mxu0 0.0
      %852 = vmatpush1.msra.mxu0 %v803
      %853 = vmatprep.subr.mxu0 0.0
      %854 = vmatpush1.msra.mxu0 %v802
      %855 = vmatprep.subr.mxu0 0.0
      %856 = vmatpush1.msra.mxu0 %v801
      %857 = vmatprep.subr.mxu0 0.0
      %858 = vmatpush1.msra.mxu0 %v800
      %859 = vmatprep.subr.mxu0 0.0
      %860 = vmatpush1.msra.mxu0 %v799
      %861 = vmatprep.subr.mxu0 0.0
      %862 = vmatpush1.msra.mxu0 %v798
      %863 = vmatprep.subr.mxu0 0.0
      %864 = vmatpush1.msra.mxu0 %v797
      %865 = vmatprep.subr.mxu0 0.0
      %866 = vmatpush1.msra.mxu0 %v796
      %867 = vmatprep.subr.mxu0 0.0
      %868 = vmatpush1.msra.mxu0 %v795
      %869 = vmatprep.subr.mxu0 0.0
      %870 = vmatpush1.msra.mxu0 %v794
      %871 = vmatprep.subr.mxu0 0.0
      %872 = vmatpush1.msra.mxu0 %v793
      %873 = vmatprep.subr.mxu0 0.0
      %874 = vmatpush1.msra.mxu0 %v792
      %875 = vmatprep.subr.mxu0 0.0
      %876 = vmatpush2.msra.mxu0 %v823
      %877 = vmatprep.subr.mxu0 0.0
      %878 = vmatpush2.msra.mxu0 %v822
      %879 = vmatprep.subr.mxu0 0.0
      %880 = vmatpush2.msra.mxu0 %v821
      %881 = vmatprep.subr.mxu0 0.0
      %882 = vmatpush2.msra.mxu0 %v820
      %883 = vmatprep.subr.mxu0 0.0
      %884 = vmatpush2.msra.mxu0 %v819
      %885 = vmatprep.subr.mxu0 0.0
      %886 = vmatpush2.msra.mxu0 %v818
      %887 = vmatprep.subr.mxu0 0.0
      %888 = vmatpush2.msra.mxu0 %v817
      %889 = vmatprep.subr.mxu0 0.0
      %890 = vmatpush2.msra.mxu0 %v816
      %891 = vmatprep.subr.mxu0 0.0
      %892 = vmatpush2.msra.mxu0 %v815
      %893 = vmatprep.subr.mxu0 0.0
      %894 = vmatpush2.msra.mxu0 %v814
      %895 = vmatprep.subr.mxu0 0.0
      %896 = vmatpush2.msra.mxu0 %v813
      %897 = vmatprep.subr.mxu0 0.0
      %898 = vmatpush2.msra.mxu0 %v812
      %899 = vmatprep.subr.mxu0 0.0
      %900 = vmatpush2.msra.mxu0 %v811
      %901 = vmatprep.subr.mxu0 0.0
      %902 = vmatpush2.msra.mxu0 %v810
      %903 = vmatprep.subr.mxu0 0.0
      %904 = vmatpush2.msra.mxu0 %v809
      %905 = vmatprep.subr.mxu0 0.0
      %906 = vmatpush2.msra.mxu0 %v808
      %907 = vmatprep.mubr.f32.mxu0 %v834
      %908 = vmatmul.mubr.f32.gmra.mxu0 %v831
      %v909 = vpop.f32.mrf.mxu0
      %v910 = vadd.f32 0.0, %v909
      %v911 = vpop.f32.mrf.mxu0
      %912 = vmatprep.mubr.f32.mxu0 %v838
      %913 = vmatmul.mubr.f32.gmra.mxu0 %v836
      %v914 = vpop.f32.mrf.mxu0
      %v915 = vadd.f32 0.0, %v914
      %v916 = vpop.f32.mrf.mxu0
      %917 = vdwg.mxu0
      %v918 = vadd.f32 %v785, %v910
      %v919 = vadd.f32 %v786, %v915
      %v920 = vld [vmem:[%s138] sm:$0xc0]
      %v921 = vld [vmem:[%s138 + $0x8] sm:$0xc0]
      %v922 = vld [vmem:[%s138 + $0x20] sm:$0x3f]
      %v923 = vld [vmem:[%s138 + $0x28] sm:$0x3f]
      %s924 = scalar_lea.vmem %s1, 1536
      %v925 = vld [vmem:[%s924] sm:$0xff]
      %v926 = vld [vmem:[%s924 + $0x8] sm:$0xff]
      %v927 = vld [vmem:[%s924 + $0x10] sm:$0xff]
      %v928 = vld [vmem:[%s924 + $0x18] sm:$0xff]
      %v929 = vld [vmem:[%s924 + $0x20] sm:$0xff]
      %v930 = vld [vmem:[%s924 + $0x28] sm:$0xff]
      %v931 = vld [vmem:[%s924 + $0x30] sm:$0xff]
      %v932 = vld [vmem:[%s924 + $0x38] sm:$0xff]
      %v933 = vld [vmem:[%s924 + $0x40] sm:$0xff]
      %v934 = vld [vmem:[%s924 + $0x48] sm:$0xff]
      %v935 = vld [vmem:[%s924 + $0x50] sm:$0xff]
      %v936 = vld [vmem:[%s924 + $0x58] sm:$0xff]
      %v937 = vld [vmem:[%s924 + $0x60] sm:$0xff]
      %v938 = vld [vmem:[%s924 + $0x68] sm:$0xff]
      %v939 = vld [vmem:[%s924 + $0x70] sm:$0xff]
      %v940 = vld [vmem:[%s924 + $0x78] sm:$0xff]
      %v941 = vld [vmem:[%s924 + $0x80] sm:$0xff]
      %v942 = vld [vmem:[%s924 + $0x88] sm:$0xff]
      %v943 = vld [vmem:[%s924 + $0x90] sm:$0xff]
      %v944 = vld [vmem:[%s924 + $0x98] sm:$0xff]
      %v945 = vld [vmem:[%s924 + $0xa0] sm:$0xff]
      %v946 = vld [vmem:[%s924 + $0xa8] sm:$0xff]
      %v947 = vld [vmem:[%s924 + $0xb0] sm:$0xff]
      %v948 = vld [vmem:[%s924 + $0xb8] sm:$0xff]
      %v949 = vld [vmem:[%s924 + $0xc0] sm:$0xff]
      %v950 = vld [vmem:[%s924 + $0xc8] sm:$0xff]
      %v951 = vld [vmem:[%s924 + $0xd0] sm:$0xff]
      %v952 = vld [vmem:[%s924 + $0xd8] sm:$0xff]
      %v953 = vld [vmem:[%s924 + $0xe0] sm:$0xff]
      %v954 = vld [vmem:[%s924 + $0xe8] sm:$0xff]
      %v955 = vld [vmem:[%s924 + $0xf0] sm:$0xff]
      %v956 = vld [vmem:[%s924 + $0xf8] sm:$0xff]
      %vm961 = vcmask 1041408
      %v962 = vrot.slane %v920, 6
      %v963 = vrot.slane %v146, 6
      %v964 = vsel %vm961, %v962, %v963
      %v965 = vrot.slane %v921, 6
      %v966 = vrot.slane %v147, 6
      %v967 = vsel %vm961, %v965, %v966
      %v968 = vrot.slane %v922, 6
      %v969 = vsel %vm961, %v963, %v968
      %v970 = vrot.slane %v923, 6
      %v971 = vsel %vm961, %v966, %v970
      %976 = vmatprep.subr.mxu0 0.0
      %977 = vmatpush1.msra.mxu0 %v940
      %978 = vmatprep.subr.mxu0 0.0
      %979 = vmatpush1.msra.mxu0 %v939
      %980 = vmatprep.subr.mxu0 0.0
      %981 = vmatpush1.msra.mxu0 %v938
      %982 = vmatprep.subr.mxu0 0.0
      %983 = vmatpush1.msra.mxu0 %v937
      %984 = vmatprep.subr.mxu0 0.0
      %985 = vmatpush1.msra.mxu0 %v936
      %986 = vmatprep.subr.mxu0 0.0
      %987 = vmatpush1.msra.mxu0 %v935
      %988 = vmatprep.subr.mxu0 0.0
      %989 = vmatpush1.msra.mxu0 %v934
      %990 = vmatprep.subr.mxu0 0.0
      %991 = vmatpush1.msra.mxu0 %v933
      %992 = vmatprep.subr.mxu0 0.0
      %993 = vmatpush1.msra.mxu0 %v932
      %994 = vmatprep.subr.mxu0 0.0
      %995 = vmatpush1.msra.mxu0 %v931
      %996 = vmatprep.subr.mxu0 0.0
      %997 = vmatpush1.msra.mxu0 %v930
      %998 = vmatprep.subr.mxu0 0.0
      %999 = vmatpush1.msra.mxu0 %v929
      %1000 = vmatprep.subr.mxu0 0.0
      %1001 = vmatpush1.msra.mxu0 %v928
      %1002 = vmatprep.subr.mxu0 0.0
      %1003 = vmatpush1.msra.mxu0 %v927
      %1004 = vmatprep.subr.mxu0 0.0
      %1005 = vmatpush1.msra.mxu0 %v926
      %1006 = vmatprep.subr.mxu0 0.0
      %1007 = vmatpush1.msra.mxu0 %v925
      %1008 = vmatprep.subr.mxu0 0.0
      %1009 = vmatpush2.msra.mxu0 %v956
      %1010 = vmatprep.subr.mxu0 0.0
      %1011 = vmatpush2.msra.mxu0 %v955
      %1012 = vmatprep.subr.mxu0 0.0
      %1013 = vmatpush2.msra.mxu0 %v954
      %1014 = vmatprep.subr.mxu0 0.0
      %1015 = vmatpush2.msra.mxu0 %v953
      %1016 = vmatprep.subr.mxu0 0.0
      %1017 = vmatpush2.msra.mxu0 %v952
      %1018 = vmatprep.subr.mxu0 0.0
      %1019 = vmatpush2.msra.mxu0 %v951
      %1020 = vmatprep.subr.mxu0 0.0
      %1021 = vmatpush2.msra.mxu0 %v950
      %1022 = vmatprep.subr.mxu0 0.0
      %1023 = vmatpush2.msra.mxu0 %v949
      %1024 = vmatprep.subr.mxu0 0.0
      %1025 = vmatpush2.msra.mxu0 %v948
      %1026 = vmatprep.subr.mxu0 0.0
      %1027 = vmatpush2.msra.mxu0 %v947
      %1028 = vmatprep.subr.mxu0 0.0
      %1029 = vmatpush2.msra.mxu0 %v946
      %1030 = vmatprep.subr.mxu0 0.0
      %1031 = vmatpush2.msra.mxu0 %v945
      %1032 = vmatprep.subr.mxu0 0.0
      %1033 = vmatpush2.msra.mxu0 %v944
      %1034 = vmatprep.subr.mxu0 0.0
      %1035 = vmatpush2.msra.mxu0 %v943
      %1036 = vmatprep.subr.mxu0 0.0
      %1037 = vmatpush2.msra.mxu0 %v942
      %1038 = vmatprep.subr.mxu0 0.0
      %1039 = vmatpush2.msra.mxu0 %v941
      %1040 = vmatprep.mubr.f32.mxu0 %v967
      %1041 = vmatmul.mubr.f32.gmra.mxu0 %v964
      %v1042 = vpop.f32.mrf.mxu0
      %v1043 = vadd.f32 0.0, %v1042
      %v1044 = vpop.f32.mrf.mxu0
      %1045 = vmatprep.mubr.f32.mxu0 %v971
      %1046 = vmatmul.mubr.f32.gmra.mxu0 %v969
      %v1047 = vpop.f32.mrf.mxu0
      %v1048 = vadd.f32 0.0, %v1047
      %v1049 = vpop.f32.mrf.mxu0
      %1050 = vdwg.mxu0
      %v1051 = vadd.f32 %v918, %v1043
      %v1052 = vadd.f32 %v919, %v1048
      %v1053 = vld [vmem:[%s138] sm:$0x80]
      %v1054 = vld [vmem:[%s138 + $0x8] sm:$0x80]
      %v1055 = vld [vmem:[%s138 + $0x20] sm:$0x7f]
      %v1056 = vld [vmem:[%s138 + $0x28] sm:$0x7f]
      %s1057 = scalar_lea.vmem %s1, 1792
      %v1058 = vld [vmem:[%s1057] sm:$0xff]
      %v1059 = vld [vmem:[%s1057 + $0x8] sm:$0xff]
      %v1060 = vld [vmem:[%s1057 + $0x10] sm:$0xff]
      %v1061 = vld [vmem:[%s1057 + $0x18] sm:$0xff]
      %v1062 = vld [vmem:[%s1057 + $0x20] sm:$0xff]
      %v1063 = vld [vmem:[%s1057 + $0x28] sm:$0xff]
      %v1064 = vld [vmem:[%s1057 + $0x30] sm:$0xff]
      %v1065 = vld [vmem:[%s1057 + $0x38] sm:$0xff]
      %v1066 = vld [vmem:[%s1057 + $0x40] sm:$0xff]
      %v1067 = vld [vmem:[%s1057 + $0x48] sm:$0xff]
      %v1068 = vld [vmem:[%s1057 + $0x50] sm:$0xff]
      %v1069 = vld [vmem:[%s1057 + $0x58] sm:$0xff]
      %v1070 = vld [vmem:[%s1057 + $0x60] sm:$0xff]
      %v1071 = vld [vmem:[%s1057 + $0x68] sm:$0xff]
      %v1072 = vld [vmem:[%s1057 + $0x70] sm:$0xff]
      %v1073 = vld [vmem:[%s1057 + $0x78] sm:$0xff]
      %v1074 = vld [vmem:[%s1057 + $0x80] sm:$0xff]
      %v1075 = vld [vmem:[%s1057 + $0x88] sm:$0xff]
      %v1076 = vld [vmem:[%s1057 + $0x90] sm:$0xff]
      %v1077 = vld [vmem:[%s1057 + $0x98] sm:$0xff]
      %v1078 = vld [vmem:[%s1057 + $0xa0] sm:$0xff]
      %v1079 = vld [vmem:[%s1057 + $0xa8] sm:$0xff]
      %v1080 = vld [vmem:[%s1057 + $0xb0] sm:$0xff]
      %v1081 = vld [vmem:[%s1057 + $0xb8] sm:$0xff]
      %v1082 = vld [vmem:[%s1057 + $0xc0] sm:$0xff]
      %v1083 = vld [vmem:[%s1057 + $0xc8] sm:$0xff]
      %v1084 = vld [vmem:[%s1057 + $0xd0] sm:$0xff]
      %v1085 = vld [vmem:[%s1057 + $0xd8] sm:$0xff]
      %v1086 = vld [vmem:[%s1057 + $0xe0] sm:$0xff]
      %v1087 = vld [vmem:[%s1057 + $0xe8] sm:$0xff]
      %v1088 = vld [vmem:[%s1057 + $0xf0] sm:$0xff]
      %v1089 = vld [vmem:[%s1057 + $0xf8] sm:$0xff]
      %vm1094 = vcmask 1040384
      %v1095 = vrot.slane %v1053, 7
      %v1096 = vrot.slane %v146, 7
      %v1097 = vsel %vm1094, %v1095, %v1096
      %v1098 = vrot.slane %v1054, 7
      %v1099 = vrot.slane %v147, 7
      %v1100 = vsel %vm1094, %v1098, %v1099
      %v1101 = vrot.slane %v1055, 7
      %v1102 = vsel %vm1094, %v1096, %v1101
      %v1103 = vrot.slane %v1056, 7
      %v1104 = vsel %vm1094, %v1099, %v1103
      %1109 = vmatprep.subr.mxu0 0.0
      %1110 = vmatpush1.msra.mxu0 %v1073
      %1111 = vmatprep.subr.mxu0 0.0
      %1112 = vmatpush1.msra.mxu0 %v1072
      %1113 = vmatprep.subr.mxu0 0.0
      %1114 = vmatpush1.msra.mxu0 %v1071
      %1115 = vmatprep.subr.mxu0 0.0
      %1116 = vmatpush1.msra.mxu0 %v1070
      %1117 = vmatprep.subr.mxu0 0.0
      %1118 = vmatpush1.msra.mxu0 %v1069
      %1119 = vmatprep.subr.mxu0 0.0
      %1120 = vmatpush1.msra.mxu0 %v1068
      %1121 = vmatprep.subr.mxu0 0.0
      %1122 = vmatpush1.msra.mxu0 %v1067
      %1123 = vmatprep.subr.mxu0 0.0
      %1124 = vmatpush1.msra.mxu0 %v1066
      %1125 = vmatprep.subr.mxu0 0.0
      %1126 = vmatpush1.msra.mxu0 %v1065
      %1127 = vmatprep.subr.mxu0 0.0
      %1128 = vmatpush1.msra.mxu0 %v1064
      %1129 = vmatprep.subr.mxu0 0.0
      %1130 = vmatpush1.msra.mxu0 %v1063
      %1131 = vmatprep.subr.mxu0 0.0
      %1132 = vmatpush1.msra.mxu0 %v1062
      %1133 = vmatprep.subr.mxu0 0.0
      %1134 = vmatpush1.msra.mxu0 %v1061
      %1135 = vmatprep.subr.mxu0 0.0
      %1136 = vmatpush1.msra.mxu0 %v1060
      %1137 = vmatprep.subr.mxu0 0.0
      %1138 = vmatpush1.msra.mxu0 %v1059
      %1139 = vmatprep.subr.mxu0 0.0
      %1140 = vmatpush1.msra.mxu0 %v1058
      %1141 = vmatprep.subr.mxu0 0.0
      %1142 = vmatpush2.msra.mxu0 %v1089
      %1143 = vmatprep.subr.mxu0 0.0
      %1144 = vmatpush2.msra.mxu0 %v1088
      %1145 = vmatprep.subr.mxu0 0.0
      %1146 = vmatpush2.msra.mxu0 %v1087
      %1147 = vmatprep.subr.mxu0 0.0
      %1148 = vmatpush2.msra.mxu0 %v1086
      %1149 = vmatprep.subr.mxu0 0.0
      %1150 = vmatpush2.msra.mxu0 %v1085
      %1151 = vmatprep.subr.mxu0 0.0
      %1152 = vmatpush2.msra.mxu0 %v1084
      %1153 = vmatprep.subr.mxu0 0.0
      %1154 = vmatpush2.msra.mxu0 %v1083
      %1155 = vmatprep.subr.mxu0 0.0
      %1156 = vmatpush2.msra.mxu0 %v1082
      %1157 = vmatprep.subr.mxu0 0.0
      %1158 = vmatpush2.msra.mxu0 %v1081
      %1159 = vmatprep.subr.mxu0 0.0
      %1160 = vmatpush2.msra.mxu0 %v1080
      %1161 = vmatprep.subr.mxu0 0.0
      %1162 = vmatpush2.msra.mxu0 %v1079
      %1163 = vmatprep.subr.mxu0 0.0
      %1164 = vmatpush2.msra.mxu0 %v1078
      %1165 = vmatprep.subr.mxu0 0.0
      %1166 = vmatpush2.msra.mxu0 %v1077
      %1167 = vmatprep.subr.mxu0 0.0
      %1168 = vmatpush2.msra.mxu0 %v1076
      %1169 = vmatprep.subr.mxu0 0.0
      %1170 = vmatpush2.msra.mxu0 %v1075
      %1171 = vmatprep.subr.mxu0 0.0
      %1172 = vmatpush2.msra.mxu0 %v1074
      %1173 = vmatprep.mubr.f32.mxu0 %v1100
      %1174 = vmatmul.mubr.f32.gmra.mxu0 %v1097
      %v1175 = vpop.f32.mrf.mxu0
      %v1176 = vadd.f32 0.0, %v1175
      %v1177 = vpop.f32.mrf.mxu0
      %1178 = vmatprep.mubr.f32.mxu0 %v1104
      %1179 = vmatmul.mubr.f32.gmra.mxu0 %v1102
      %v1180 = vpop.f32.mrf.mxu0
      %v1181 = vadd.f32 0.0, %v1180
      %v1182 = vpop.f32.mrf.mxu0
      %1183 = vdwg.mxu0
      %v1184 = vadd.f32 %v1051, %v1176
      %v1185 = vadd.f32 %v1052, %v1181
      %v1186 = vld [vmem:[%s138 + $0x20] sm:$0xff]
      %v1187 = vld [vmem:[%s138 + $0x28] sm:$0xff]
      %s1188 = scalar_lea.vmem %s1, 2048
      %v1189 = vld [vmem:[%s1188] sm:$0xff]
      %v1190 = vld [vmem:[%s1188 + $0x8] sm:$0xff]
      %v1191 = vld [vmem:[%s1188 + $0x10] sm:$0xff]
      %v1192 = vld [vmem:[%s1188 + $0x18] sm:$0xff]
      %v1193 = vld [vmem:[%s1188 + $0x20] sm:$0xff]
      %v1194 = vld [vmem:[%s1188 + $0x28] sm:$0xff]
      %v1195 = vld [vmem:[%s1188 + $0x30] sm:$0xff]
      %v1196 = vld [vmem:[%s1188 + $0x38] sm:$0xff]
      %v1197 = vld [vmem:[%s1188 + $0x40] sm:$0xff]
      %v1198 = vld [vmem:[%s1188 + $0x48] sm:$0xff]
      %v1199 = vld [vmem:[%s1188 + $0x50] sm:$0xff]
      %v1200 = vld [vmem:[%s1188 + $0x58] sm:$0xff]
      %v1201 = vld [vmem:[%s1188 + $0x60] sm:$0xff]
      %v1202 = vld [vmem:[%s1188 + $0x68] sm:$0xff]
      %v1203 = vld [vmem:[%s1188 + $0x70] sm:$0xff]
      %v1204 = vld [vmem:[%s1188 + $0x78] sm:$0xff]
      %v1205 = vld [vmem:[%s1188 + $0x80] sm:$0xff]
      %v1206 = vld [vmem:[%s1188 + $0x88] sm:$0xff]
      %v1207 = vld [vmem:[%s1188 + $0x90] sm:$0xff]
      %v1208 = vld [vmem:[%s1188 + $0x98] sm:$0xff]
      %v1209 = vld [vmem:[%s1188 + $0xa0] sm:$0xff]
      %v1210 = vld [vmem:[%s1188 + $0xa8] sm:$0xff]
      %v1211 = vld [vmem:[%s1188 + $0xb0] sm:$0xff]
      %v1212 = vld [vmem:[%s1188 + $0xb8] sm:$0xff]
      %v1213 = vld [vmem:[%s1188 + $0xc0] sm:$0xff]
      %v1214 = vld [vmem:[%s1188 + $0xc8] sm:$0xff]
      %v1215 = vld [vmem:[%s1188 + $0xd0] sm:$0xff]
      %v1216 = vld [vmem:[%s1188 + $0xd8] sm:$0xff]
      %v1217 = vld [vmem:[%s1188 + $0xe0] sm:$0xff]
      %v1218 = vld [vmem:[%s1188 + $0xe8] sm:$0xff]
      %v1219 = vld [vmem:[%s1188 + $0xf0] sm:$0xff]
      %v1220 = vld [vmem:[%s1188 + $0xf8] sm:$0xff]
      %1221 = vmatprep.subr.mxu0 0.0
      %1222 = vmatpush1.msra.mxu0 %v1204
      %1223 = vmatprep.subr.mxu0 0.0
      %1224 = vmatpush1.msra.mxu0 %v1203
      %1225 = vmatprep.subr.mxu0 0.0
      %1226 = vmatpush1.msra.mxu0 %v1202
      %1227 = vmatprep.subr.mxu0 0.0
      %1228 = vmatpush1.msra.mxu0 %v1201
      %1229 = vmatprep.subr.mxu0 0.0
      %1230 = vmatpush1.msra.mxu0 %v1200
      %1231 = vmatprep.subr.mxu0 0.0
      %1232 = vmatpush1.msra.mxu0 %v1199
      %1233 = vmatprep.subr.mxu0 0.0
      %1234 = vmatpush1.msra.mxu0 %v1198
      %1235 = vmatprep.subr.mxu0 0.0
      %1236 = vmatpush1.msra.mxu0 %v1197
      %1237 = vmatprep.subr.mxu0 0.0
      %1238 = vmatpush1.msra.mxu0 %v1196
      %1239 = vmatprep.subr.mxu0 0.0
      %1240 = vmatpush1.msra.mxu0 %v1195
      %1241 = vmatprep.subr.mxu0 0.0
      %1242 = vmatpush1.msra.mxu0 %v1194
      %1243 = vmatprep.subr.mxu0 0.0
      %1244 = vmatpush1.msra.mxu0 %v1193
      %1245 = vmatprep.subr.mxu0 0.0
      %1246 = vmatpush1.msra.mxu0 %v1192
      %1247 = vmatprep.subr.mxu0 0.0
      %1248 = vmatpush1.msra.mxu0 %v1191
      %1249 = vmatprep.subr.mxu0 0.0
      %1250 = vmatpush1.msra.mxu0 %v1190
      %1251 = vmatprep.subr.mxu0 0.0
      %1252 = vmatpush1.msra.mxu0 %v1189
      %1253 = vmatprep.subr.mxu0 0.0
      %1254 = vmatpush2.msra.mxu0 %v1220
      %1255 = vmatprep.subr.mxu0 0.0
      %1256 = vmatpush2.msra.mxu0 %v1219
      %1257 = vmatprep.subr.mxu0 0.0
      %1258 = vmatpush2.msra.mxu0 %v1218
      %1259 = vmatprep.subr.mxu0 0.0
      %1260 = vmatpush2.msra.mxu0 %v1217
      %1261 = vmatprep.subr.mxu0 0.0
      %1262 = vmatpush2.msra.mxu0 %v1216
      %1263 = vmatprep.subr.mxu0 0.0
      %1264 = vmatpush2.msra.mxu0 %v1215
      %1265 = vmatprep.subr.mxu0 0.0
      %1266 = vmatpush2.msra.mxu0 %v1214
      %1267 = vmatprep.subr.mxu0 0.0
      %1268 = vmatpush2.msra.mxu0 %v1213
      %1269 = vmatprep.subr.mxu0 0.0
      %1270 = vmatpush2.msra.mxu0 %v1212
      %1271 = vmatprep.subr.mxu0 0.0
      %1272 = vmatpush2.msra.mxu0 %v1211
      %1273 = vmatprep.subr.mxu0 0.0
      %1274 = vmatpush2.msra.mxu0 %v1210
      %1275 = vmatprep.subr.mxu0 0.0
      %1276 = vmatpush2.msra.mxu0 %v1209
      %1277 = vmatprep.subr.mxu0 0.0
      %1278 = vmatpush2.msra.mxu0 %v1208
      %1279 = vmatprep.subr.mxu0 0.0
      %1280 = vmatpush2.msra.mxu0 %v1207
      %1281 = vmatprep.subr.mxu0 0.0
      %1282 = vmatpush2.msra.mxu0 %v1206
      %1283 = vmatprep.subr.mxu0 0.0
      %1284 = vmatpush2.msra.mxu0 %v1205
      %1285 = vmatprep.mubr.f32.mxu0 %v147
      %1286 = vmatmul.mubr.f32.gmra.mxu0 %v146
      %v1287 = vpop.f32.mrf.mxu0
      %v1288 = vadd.f32 0.0, %v1287
      %v1289 = vpop.f32.mrf.mxu0
      %1290 = vmatprep.mubr.f32.mxu0 %v1187
      %1291 = vmatmul.mubr.f32.gmra.mxu0 %v1186
      %v1292 = vpop.f32.mrf.mxu0
      %v1293 = vadd.f32 0.0, %v1292
      %v1294 = vpop.f32.mrf.mxu0
      %1295 = vdwg.mxu0
      %v1296 = vadd.f32 %v1184, %v1288
      %v1297 = vadd.f32 %v1185, %v1293
      %v1298 = vld [vmem:[%s138 + $0x10] sm:$0xfe]
      %v1299 = vld [vmem:[%s138 + $0x18] sm:$0xfe]
      %v1300 = vld [vmem:[%s138 + $0x20] sm:$0xff]
      %v1301 = vld [vmem:[%s138 + $0x28] sm:$0xff]
      %v1302 = vld [vmem:[%s138 + $0x30] sm:$0x1]
      %v1303 = vld [vmem:[%s138 + $0x38] sm:$0x1]
      %s1304 = scalar_lea.vmem %s1, 2304
      %v1305 = vld [vmem:[%s1304] sm:$0xff]
      %v1306 = vld [vmem:[%s1304 + $0x8] sm:$0xff]
      %v1307 = vld [vmem:[%s1304 + $0x10] sm:$0xff]
      %v1308 = vld [vmem:[%s1304 + $0x18] sm:$0xff]
      %v1309 = vld [vmem:[%s1304 + $0x20] sm:$0xff]
      %v1310 = vld [vmem:[%s1304 + $0x28] sm:$0xff]
      %v1311 = vld [vmem:[%s1304 + $0x30] sm:$0xff]
      %v1312 = vld [vmem:[%s1304 + $0x38] sm:$0xff]
      %v1313 = vld [vmem:[%s1304 + $0x40] sm:$0xff]
      %v1314 = vld [vmem:[%s1304 + $0x48] sm:$0xff]
      %v1315 = vld [vmem:[%s1304 + $0x50] sm:$0xff]
      %v1316 = vld [vmem:[%s1304 + $0x58] sm:$0xff]
      %v1317 = vld [vmem:[%s1304 + $0x60] sm:$0xff]
      %v1318 = vld [vmem:[%s1304 + $0x68] sm:$0xff]
      %v1319 = vld [vmem:[%s1304 + $0x70] sm:$0xff]
      %v1320 = vld [vmem:[%s1304 + $0x78] sm:$0xff]
      %v1321 = vld [vmem:[%s1304 + $0x80] sm:$0xff]
      %v1322 = vld [vmem:[%s1304 + $0x88] sm:$0xff]
      %v1323 = vld [vmem:[%s1304 + $0x90] sm:$0xff]
      %v1324 = vld [vmem:[%s1304 + $0x98] sm:$0xff]
      %v1325 = vld [vmem:[%s1304 + $0xa0] sm:$0xff]
      %v1326 = vld [vmem:[%s1304 + $0xa8] sm:$0xff]
      %v1327 = vld [vmem:[%s1304 + $0xb0] sm:$0xff]
      %v1328 = vld [vmem:[%s1304 + $0xb8] sm:$0xff]
      %v1329 = vld [vmem:[%s1304 + $0xc0] sm:$0xff]
      %v1330 = vld [vmem:[%s1304 + $0xc8] sm:$0xff]
      %v1331 = vld [vmem:[%s1304 + $0xd0] sm:$0xff]
      %v1332 = vld [vmem:[%s1304 + $0xd8] sm:$0xff]
      %v1333 = vld [vmem:[%s1304 + $0xe0] sm:$0xff]
      %v1334 = vld [vmem:[%s1304 + $0xe8] sm:$0xff]
      %v1335 = vld [vmem:[%s1304 + $0xf0] sm:$0xff]
      %v1336 = vld [vmem:[%s1304 + $0xf8] sm:$0xff]
      %v1343 = vrot.slane %v1298, 1
      %v1344 = vrot.slane %v1300, 1
      %v1345 = vsel %vm223, %v1343, %v1344
      %v1346 = vrot.slane %v1299, 1
      %v1347 = vrot.slane %v1301, 1
      %v1348 = vsel %vm223, %v1346, %v1347
      %v1349 = vrot.slane %v1302, 1
      %v1350 = vsel %vm223, %v1344, %v1349
      %v1351 = vrot.slane %v1303, 1
      %v1352 = vsel %vm223, %v1347, %v1351
      %1357 = vmatprep.subr.mxu0 0.0
      %1358 = vmatpush1.msra.mxu0 %v1320
      %1359 = vmatprep.subr.mxu0 0.0
      %1360 = vmatpush1.msra.mxu0 %v1319
      %1361 = vmatprep.subr.mxu0 0.0
      %1362 = vmatpush1.msra.mxu0 %v1318
      %1363 = vmatprep.subr.mxu0 0.0
      %1364 = vmatpush1.msra.mxu0 %v1317
      %1365 = vmatprep.subr.mxu0 0.0
      %1366 = vmatpush1.msra.mxu0 %v1316
      %1367 = vmatprep.subr.mxu0 0.0
      %1368 = vmatpush1.msra.mxu0 %v1315
      %1369 = vmatprep.subr.mxu0 0.0
      %1370 = vmatpush1.msra.mxu0 %v1314
      %1371 = vmatprep.subr.mxu0 0.0
      %1372 = vmatpush1.msra.mxu0 %v1313
      %1373 = vmatprep.subr.mxu0 0.0
      %1374 = vmatpush1.msra.mxu0 %v1312
      %1375 = vmatprep.subr.mxu0 0.0
      %1376 = vmatpush1.msra.mxu0 %v1311
      %1377 = vmatprep.subr.mxu0 0.0
      %1378 = vmatpush1.msra.mxu0 %v1310
      %1379 = vmatprep.subr.mxu0 0.0
      %1380 = vmatpush1.msra.mxu0 %v1309
      %1381 = vmatprep.subr.mxu0 0.0
      %1382 = vmatpush1.msra.mxu0 %v1308
      %1383 = vmatprep.subr.mxu0 0.0
      %1384 = vmatpush1.msra.mxu0 %v1307
      %1385 = vmatprep.subr.mxu0 0.0
      %1386 = vmatpush1.msra.mxu0 %v1306
      %1387 = vmatprep.subr.mxu0 0.0
      %1388 = vmatpush1.msra.mxu0 %v1305
      %1389 = vmatprep.subr.mxu0 0.0
      %1390 = vmatpush2.msra.mxu0 %v1336
      %1391 = vmatprep.subr.mxu0 0.0
      %1392 = vmatpush2.msra.mxu0 %v1335
      %1393 = vmatprep.subr.mxu0 0.0
      %1394 = vmatpush2.msra.mxu0 %v1334
      %1395 = vmatprep.subr.mxu0 0.0
      %1396 = vmatpush2.msra.mxu0 %v1333
      %1397 = vmatprep.subr.mxu0 0.0
      %1398 = vmatpush2.msra.mxu0 %v1332
      %1399 = vmatprep.subr.mxu0 0.0
      %1400 = vmatpush2.msra.mxu0 %v1331
      %1401 = vmatprep.subr.mxu0 0.0
      %1402 = vmatpush2.msra.mxu0 %v1330
      %1403 = vmatprep.subr.mxu0 0.0
      %1404 = vmatpush2.msra.mxu0 %v1329
      %1405 = vmatprep.subr.mxu0 0.0
      %1406 = vmatpush2.msra.mxu0 %v1328
      %1407 = vmatprep.subr.mxu0 0.0
      %1408 = vmatpush2.msra.mxu0 %v1327
      %1409 = vmatprep.subr.mxu0 0.0
      %1410 = vmatpush2.msra.mxu0 %v1326
      %1411 = vmatprep.subr.mxu0 0.0
      %1412 = vmatpush2.msra.mxu0 %v1325
      %1413 = vmatprep.subr.mxu0 0.0
      %1414 = vmatpush2.msra.mxu0 %v1324
      %1415 = vmatprep.subr.mxu0 0.0
      %1416 = vmatpush2.msra.mxu0 %v1323
      %1417 = vmatprep.subr.mxu0 0.0
      %1418 = vmatpush2.msra.mxu0 %v1322
      %1419 = vmatprep.subr.mxu0 0.0
      %1420 = vmatpush2.msra.mxu0 %v1321
      %1421 = vmatprep.mubr.f32.mxu0 %v1348
      %1422 = vmatmul.mubr.f32.gmra.mxu0 %v1345
      %v1423 = vpop.f32.mrf.mxu0
      %v1424 = vadd.f32 0.0, %v1423
      %v1425 = vpop.f32.mrf.mxu0
      %1426 = vmatprep.mubr.f32.mxu0 %v1352
      %1427 = vmatmul.mubr.f32.gmra.mxu0 %v1350
      %v1428 = vpop.f32.mrf.mxu0
      %v1429 = vadd.f32 0.0, %v1428
      %v1430 = vpop.f32.mrf.mxu0
      %1431 = vdwg.mxu0
      %v1432 = vadd.f32 %v1296, %v1424
      %v1433 = vadd.f32 %v1297, %v1429
      %v1434 = vld [vmem:[%s138 + $0x10] sm:$0xfc]
      %v1435 = vld [vmem:[%s138 + $0x18] sm:$0xfc]
      %v1436 = vld [vmem:[%s138 + $0x30] sm:$0x3]
      %v1437 = vld [vmem:[%s138 + $0x38] sm:$0x3]
      %s1438 = scalar_lea.vmem %s1, 2560
      %v1439 = vld [vmem:[%s1438] sm:$0xff]
      %v1440 = vld [vmem:[%s1438 + $0x8] sm:$0xff]
      %v1441 = vld [vmem:[%s1438 + $0x10] sm:$0xff]
      %v1442 = vld [vmem:[%s1438 + $0x18] sm:$0xff]
      %v1443 = vld [vmem:[%s1438 + $0x20] sm:$0xff]
      %v1444 = vld [vmem:[%s1438 + $0x28] sm:$0xff]
      %v1445 = vld [vmem:[%s1438 + $0x30] sm:$0xff]
      %v1446 = vld [vmem:[%s1438 + $0x38] sm:$0xff]
      %v1447 = vld [vmem:[%s1438 + $0x40] sm:$0xff]
      %v1448 = vld [vmem:[%s1438 + $0x48] sm:$0xff]
      %v1449 = vld [vmem:[%s1438 + $0x50] sm:$0xff]
      %v1450 = vld [vmem:[%s1438 + $0x58] sm:$0xff]
      %v1451 = vld [vmem:[%s1438 + $0x60] sm:$0xff]
      %v1452 = vld [vmem:[%s1438 + $0x68] sm:$0xff]
      %v1453 = vld [vmem:[%s1438 + $0x70] sm:$0xff]
      %v1454 = vld [vmem:[%s1438 + $0x78] sm:$0xff]
      %v1455 = vld [vmem:[%s1438 + $0x80] sm:$0xff]
      %v1456 = vld [vmem:[%s1438 + $0x88] sm:$0xff]
      %v1457 = vld [vmem:[%s1438 + $0x90] sm:$0xff]
      %v1458 = vld [vmem:[%s1438 + $0x98] sm:$0xff]
      %v1459 = vld [vmem:[%s1438 + $0xa0] sm:$0xff]
      %v1460 = vld [vmem:[%s1438 + $0xa8] sm:$0xff]
      %v1461 = vld [vmem:[%s1438 + $0xb0] sm:$0xff]
      %v1462 = vld [vmem:[%s1438 + $0xb8] sm:$0xff]
      %v1463 = vld [vmem:[%s1438 + $0xc0] sm:$0xff]
      %v1464 = vld [vmem:[%s1438 + $0xc8] sm:$0xff]
      %v1465 = vld [vmem:[%s1438 + $0xd0] sm:$0xff]
      %v1466 = vld [vmem:[%s1438 + $0xd8] sm:$0xff]
      %v1467 = vld [vmem:[%s1438 + $0xe0] sm:$0xff]
      %v1468 = vld [vmem:[%s1438 + $0xe8] sm:$0xff]
      %v1469 = vld [vmem:[%s1438 + $0xf0] sm:$0xff]
      %v1470 = vld [vmem:[%s1438 + $0xf8] sm:$0xff]
      %v1475 = vrot.slane %v1434, 2
      %v1476 = vrot.slane %v1300, 2
      %v1477 = vsel %vm429, %v1475, %v1476
      %v1478 = vrot.slane %v1435, 2
      %v1479 = vrot.slane %v1301, 2
      %v1480 = vsel %vm429, %v1478, %v1479
      %v1481 = vrot.slane %v1436, 2
      %v1482 = vsel %vm429, %v1476, %v1481
      %v1483 = vrot.slane %v1437, 2
      %v1484 = vsel %vm429, %v1479, %v1483
      %1489 = vmatprep.subr.mxu0 0.0
      %1490 = vmatpush1.msra.mxu0 %v1454
      %1491 = vmatprep.subr.mxu0 0.0
      %1492 = vmatpush1.msra.mxu0 %v1453
      %1493 = vmatprep.subr.mxu0 0.0
      %1494 = vmatpush1.msra.mxu0 %v1452
      %1495 = vmatprep.subr.mxu0 0.0
      %1496 = vmatpush1.msra.mxu0 %v1451
      %1497 = vmatprep.subr.mxu0 0.0
      %1498 = vmatpush1.msra.mxu0 %v1450
      %1499 = vmatprep.subr.mxu0 0.0
      %1500 = vmatpush1.msra.mxu0 %v1449
      %1501 = vmatprep.subr.mxu0 0.0
      %1502 = vmatpush1.msra.mxu0 %v1448
      %1503 = vmatprep.subr.mxu0 0.0
      %1504 = vmatpush1.msra.mxu0 %v1447
      %1505 = vmatprep.subr.mxu0 0.0
      %1506 = vmatpush1.msra.mxu0 %v1446
      %1507 = vmatprep.subr.mxu0 0.0
      %1508 = vmatpush1.msra.mxu0 %v1445
      %1509 = vmatprep.subr.mxu0 0.0
      %1510 = vmatpush1.msra.mxu0 %v1444
      %1511 = vmatprep.subr.mxu0 0.0
      %1512 = vmatpush1.msra.mxu0 %v1443
      %1513 = vmatprep.subr.mxu0 0.0
      %1514 = vmatpush1.msra.mxu0 %v1442
      %1515 = vmatprep.subr.mxu0 0.0
      %1516 = vmatpush1.msra.mxu0 %v1441
      %1517 = vmatprep.subr.mxu0 0.0
      %1518 = vmatpush1.msra.mxu0 %v1440
      %1519 = vmatprep.subr.mxu0 0.0
      %1520 = vmatpush1.msra.mxu0 %v1439
      %1521 = vmatprep.subr.mxu0 0.0
      %1522 = vmatpush2.msra.mxu0 %v1470
      %1523 = vmatprep.subr.mxu0 0.0
      %1524 = vmatpush2.msra.mxu0 %v1469
      %1525 = vmatprep.subr.mxu0 0.0
      %1526 = vmatpush2.msra.mxu0 %v1468
      %1527 = vmatprep.subr.mxu0 0.0
      %1528 = vmatpush2.msra.mxu0 %v1467
      %1529 = vmatprep.subr.mxu0 0.0
      %1530 = vmatpush2.msra.mxu0 %v1466
      %1531 = vmatprep.subr.mxu0 0.0
      %1532 = vmatpush2.msra.mxu0 %v1465
      %1533 = vmatprep.subr.mxu0 0.0
      %1534 = vmatpush2.msra.mxu0 %v1464
      %1535 = vmatprep.subr.mxu0 0.0
      %1536 = vmatpush2.msra.mxu0 %v1463
      %1537 = vmatprep.subr.mxu0 0.0
      %1538 = vmatpush2.msra.mxu0 %v1462
      %1539 = vmatprep.subr.mxu0 0.0
      %1540 = vmatpush2.msra.mxu0 %v1461
      %1541 = vmatprep.subr.mxu0 0.0
      %1542 = vmatpush2.msra.mxu0 %v1460
      %1543 = vmatprep.subr.mxu0 0.0
      %1544 = vmatpush2.msra.mxu0 %v1459
      %1545 = vmatprep.subr.mxu0 0.0
      %1546 = vmatpush2.msra.mxu0 %v1458
      %1547 = vmatprep.subr.mxu0 0.0
      %1548 = vmatpush2.msra.mxu0 %v1457
      %1549 = vmatprep.subr.mxu0 0.0
      %1550 = vmatpush2.msra.mxu0 %v1456
      %1551 = vmatprep.subr.mxu0 0.0
      %1552 = vmatpush2.msra.mxu0 %v1455
      %1553 = vmatprep.mubr.f32.mxu0 %v1480
      %1554 = vmatmul.mubr.f32.gmra.mxu0 %v1477
      %v1555 = vpop.f32.mrf.mxu0
      %v1556 = vadd.f32 0.0, %v1555
      %v1557 = vpop.f32.mrf.mxu0
      %1558 = vmatprep.mubr.f32.mxu0 %v1484
      %1559 = vmatmul.mubr.f32.gmra.mxu0 %v1482
      %v1560 = vpop.f32.mrf.mxu0
      %v1561 = vadd.f32 0.0, %v1560
      %v1562 = vpop.f32.mrf.mxu0
      %1563 = vdwg.mxu0
      %v1564 = vadd.f32 %v1432, %v1556
      %v1565 = vadd.f32 %v1433, %v1561
      %v1566 = vld [vmem:[%s138 + $0x10] sm:$0xf8]
      %v1567 = vld [vmem:[%s138 + $0x18] sm:$0xf8]
      %v1568 = vld [vmem:[%s138 + $0x30] sm:$0x7]
      %v1569 = vld [vmem:[%s138 + $0x38] sm:$0x7]
      %s1570 = scalar_lea.vmem %s1, 2816
      %v1571 = vld [vmem:[%s1570] sm:$0xff]
      %v1572 = vld [vmem:[%s1570 + $0x8] sm:$0xff]
      %v1573 = vld [vmem:[%s1570 + $0x10] sm:$0xff]
      %v1574 = vld [vmem:[%s1570 + $0x18] sm:$0xff]
      %v1575 = vld [vmem:[%s1570 + $0x20] sm:$0xff]
      %v1576 = vld [vmem:[%s1570 + $0x28] sm:$0xff]
      %v1577 = vld [vmem:[%s1570 + $0x30] sm:$0xff]
      %v1578 = vld [vmem:[%s1570 + $0x38] sm:$0xff]
      %v1579 = vld [vmem:[%s1570 + $0x40] sm:$0xff]
      %v1580 = vld [vmem:[%s1570 + $0x48] sm:$0xff]
      %v1581 = vld [vmem:[%s1570 + $0x50] sm:$0xff]
      %v1582 = vld [vmem:[%s1570 + $0x58] sm:$0xff]
      %v1583 = vld [vmem:[%s1570 + $0x60] sm:$0xff]
      %v1584 = vld [vmem:[%s1570 + $0x68] sm:$0xff]
      %v1585 = vld [vmem:[%s1570 + $0x70] sm:$0xff]
      %v1586 = vld [vmem:[%s1570 + $0x78] sm:$0xff]
      %v1587 = vld [vmem:[%s1570 + $0x80] sm:$0xff]
      %v1588 = vld [vmem:[%s1570 + $0x88] sm:$0xff]
      %v1589 = vld [vmem:[%s1570 + $0x90] sm:$0xff]
      %v1590 = vld [vmem:[%s1570 + $0x98] sm:$0xff]
      %v1591 = vld [vmem:[%s1570 + $0xa0] sm:$0xff]
      %v1592 = vld [vmem:[%s1570 + $0xa8] sm:$0xff]
      %v1593 = vld [vmem:[%s1570 + $0xb0] sm:$0xff]
      %v1594 = vld [vmem:[%s1570 + $0xb8] sm:$0xff]
      %v1595 = vld [vmem:[%s1570 + $0xc0] sm:$0xff]
      %v1596 = vld [vmem:[%s1570 + $0xc8] sm:$0xff]
      %v1597 = vld [vmem:[%s1570 + $0xd0] sm:$0xff]
      %v1598 = vld [vmem:[%s1570 + $0xd8] sm:$0xff]
      %v1599 = vld [vmem:[%s1570 + $0xe0] sm:$0xff]
      %v1600 = vld [vmem:[%s1570 + $0xe8] sm:$0xff]
      %v1601 = vld [vmem:[%s1570 + $0xf0] sm:$0xff]
      %v1602 = vld [vmem:[%s1570 + $0xf8] sm:$0xff]
      %v1607 = vrot.slane %v1566, 3
      %v1608 = vrot.slane %v1300, 3
      %v1609 = vsel %vm562, %v1607, %v1608
      %v1610 = vrot.slane %v1567, 3
      %v1611 = vrot.slane %v1301, 3
      %v1612 = vsel %vm562, %v1610, %v1611
      %v1613 = vrot.slane %v1568, 3
      %v1614 = vsel %vm562, %v1608, %v1613
      %v1615 = vrot.slane %v1569, 3
      %v1616 = vsel %vm562, %v1611, %v1615
      %1621 = vmatprep.subr.mxu0 0.0
      %1622 = vmatpush1.msra.mxu0 %v1586
      %1623 = vmatprep.subr.mxu0 0.0
      %1624 = vmatpush1.msra.mxu0 %v1585
      %1625 = vmatprep.subr.mxu0 0.0
      %1626 = vmatpush1.msra.mxu0 %v1584
      %1627 = vmatprep.subr.mxu0 0.0
      %1628 = vmatpush1.msra.mxu0 %v1583
      %1629 = vmatprep.subr.mxu0 0.0
      %1630 = vmatpush1.msra.mxu0 %v1582
      %1631 = vmatprep.subr.mxu0 0.0
      %1632 = vmatpush1.msra.mxu0 %v1581
      %1633 = vmatprep.subr.mxu0 0.0
      %1634 = vmatpush1.msra.mxu0 %v1580
      %1635 = vmatprep.subr.mxu0 0.0
      %1636 = vmatpush1.msra.mxu0 %v1579
      %1637 = vmatprep.subr.mxu0 0.0
      %1638 = vmatpush1.msra.mxu0 %v1578
      %1639 = vmatprep.subr.mxu0 0.0
      %1640 = vmatpush1.msra.mxu0 %v1577
      %1641 = vmatprep.subr.mxu0 0.0
      %1642 = vmatpush1.msra.mxu0 %v1576
      %1643 = vmatprep.subr.mxu0 0.0
      %1644 = vmatpush1.msra.mxu0 %v1575
      %1645 = vmatprep.subr.mxu0 0.0
      %1646 = vmatpush1.msra.mxu0 %v1574
      %1647 = vmatprep.subr.mxu0 0.0
      %1648 = vmatpush1.msra.mxu0 %v1573
      %1649 = vmatprep.subr.mxu0 0.0
      %1650 = vmatpush1.msra.mxu0 %v1572
      %1651 = vmatprep.subr.mxu0 0.0
      %1652 = vmatpush1.msra.mxu0 %v1571
      %1653 = vmatprep.subr.mxu0 0.0
      %1654 = vmatpush2.msra.mxu0 %v1602
      %1655 = vmatprep.subr.mxu0 0.0
      %1656 = vmatpush2.msra.mxu0 %v1601
      %1657 = vmatprep.subr.mxu0 0.0
      %1658 = vmatpush2.msra.mxu0 %v1600
      %1659 = vmatprep.subr.mxu0 0.0
      %1660 = vmatpush2.msra.mxu0 %v1599
      %1661 = vmatprep.subr.mxu0 0.0
      %1662 = vmatpush2.msra.mxu0 %v1598
      %1663 = vmatprep.subr.mxu0 0.0
      %1664 = vmatpush2.msra.mxu0 %v1597
      %1665 = vmatprep.subr.mxu0 0.0
      %1666 = vmatpush2.msra.mxu0 %v1596
      %1667 = vmatprep.subr.mxu0 0.0
      %1668 = vmatpush2.msra.mxu0 %v1595
      %1669 = vmatprep.subr.mxu0 0.0
      %1670 = vmatpush2.msra.mxu0 %v1594
      %1671 = vmatprep.subr.mxu0 0.0
      %1672 = vmatpush2.msra.mxu0 %v1593
      %1673 = vmatprep.subr.mxu0 0.0
      %1674 = vmatpush2.msra.mxu0 %v1592
      %1675 = vmatprep.subr.mxu0 0.0
      %1676 = vmatpush2.msra.mxu0 %v1591
      %1677 = vmatprep.subr.mxu0 0.0
      %1678 = vmatpush2.msra.mxu0 %v1590
      %1679 = vmatprep.subr.mxu0 0.0
      %1680 = vmatpush2.msra.mxu0 %v1589
      %1681 = vmatprep.subr.mxu0 0.0
      %1682 = vmatpush2.msra.mxu0 %v1588
      %1683 = vmatprep.subr.mxu0 0.0
      %1684 = vmatpush2.msra.mxu0 %v1587
      %1685 = vmatprep.mubr.f32.mxu0 %v1612
      %1686 = vmatmul.mubr.f32.gmra.mxu0 %v1609
      %v1687 = vpop.f32.mrf.mxu0
      %v1688 = vadd.f32 0.0, %v1687
      %v1689 = vpop.f32.mrf.mxu0
      %1690 = vmatprep.mubr.f32.mxu0 %v1616
      %1691 = vmatmul.mubr.f32.gmra.mxu0 %v1614
      %v1692 = vpop.f32.mrf.mxu0
      %v1693 = vadd.f32 0.0, %v1692
      %v1694 = vpop.f32.mrf.mxu0
      %1695 = vdwg.mxu0
      %v1696 = vadd.f32 %v1564, %v1688
      %v1697 = vadd.f32 %v1565, %v1693
      %v1698 = vld [vmem:[%s138 + $0x10] sm:$0xf0]
      %v1699 = vld [vmem:[%s138 + $0x18] sm:$0xf0]
      %v1700 = vld [vmem:[%s138 + $0x30] sm:$0xf]
      %v1701 = vld [vmem:[%s138 + $0x38] sm:$0xf]
      %s1702 = scalar_lea.vmem %s1, 3072
      %v1703 = vld [vmem:[%s1702] sm:$0xff]
      %v1704 = vld [vmem:[%s1702 + $0x8] sm:$0xff]
      %v1705 = vld [vmem:[%s1702 + $0x10] sm:$0xff]
      %v1706 = vld [vmem:[%s1702 + $0x18] sm:$0xff]
      %v1707 = vld [vmem:[%s1702 + $0x20] sm:$0xff]
      %v1708 = vld [vmem:[%s1702 + $0x28] sm:$0xff]
      %v1709 = vld [vmem:[%s1702 + $0x30] sm:$0xff]
      %v1710 = vld [vmem:[%s1702 + $0x38] sm:$0xff]
      %v1711 = vld [vmem:[%s1702 + $0x40] sm:$0xff]
      %v1712 = vld [vmem:[%s1702 + $0x48] sm:$0xff]
      %v1713 = vld [vmem:[%s1702 + $0x50] sm:$0xff]
      %v1714 = vld [vmem:[%s1702 + $0x58] sm:$0xff]
      %v1715 = vld [vmem:[%s1702 + $0x60] sm:$0xff]
      %v1716 = vld [vmem:[%s1702 + $0x68] sm:$0xff]
      %v1717 = vld [vmem:[%s1702 + $0x70] sm:$0xff]
      %v1718 = vld [vmem:[%s1702 + $0x78] sm:$0xff]
      %v1719 = vld [vmem:[%s1702 + $0x80] sm:$0xff]
      %v1720 = vld [vmem:[%s1702 + $0x88] sm:$0xff]
      %v1721 = vld [vmem:[%s1702 + $0x90] sm:$0xff]
      %v1722 = vld [vmem:[%s1702 + $0x98] sm:$0xff]
      %v1723 = vld [vmem:[%s1702 + $0xa0] sm:$0xff]
      %v1724 = vld [vmem:[%s1702 + $0xa8] sm:$0xff]
      %v1725 = vld [vmem:[%s1702 + $0xb0] sm:$0xff]
      %v1726 = vld [vmem:[%s1702 + $0xb8] sm:$0xff]
      %v1727 = vld [vmem:[%s1702 + $0xc0] sm:$0xff]
      %v1728 = vld [vmem:[%s1702 + $0xc8] sm:$0xff]
      %v1729 = vld [vmem:[%s1702 + $0xd0] sm:$0xff]
      %v1730 = vld [vmem:[%s1702 + $0xd8] sm:$0xff]
      %v1731 = vld [vmem:[%s1702 + $0xe0] sm:$0xff]
      %v1732 = vld [vmem:[%s1702 + $0xe8] sm:$0xff]
      %v1733 = vld [vmem:[%s1702 + $0xf0] sm:$0xff]
      %v1734 = vld [vmem:[%s1702 + $0xf8] sm:$0xff]
      %v1739 = vrot.slane %v1698, 4
      %v1740 = vrot.slane %v1300, 4
      %v1741 = vsel %vm695, %v1739, %v1740
      %v1742 = vrot.slane %v1699, 4
      %v1743 = vrot.slane %v1301, 4
      %v1744 = vsel %vm695, %v1742, %v1743
      %v1745 = vrot.slane %v1700, 4
      %v1746 = vsel %vm695, %v1740, %v1745
      %v1747 = vrot.slane %v1701, 4
      %v1748 = vsel %vm695, %v1743, %v1747
      %1753 = vmatprep.subr.mxu0 0.0
      %1754 = vmatpush1.msra.mxu0 %v1718
      %1755 = vmatprep.subr.mxu0 0.0
      %1756 = vmatpush1.msra.mxu0 %v1717
      %1757 = vmatprep.subr.mxu0 0.0
      %1758 = vmatpush1.msra.mxu0 %v1716
      %1759 = vmatprep.subr.mxu0 0.0
      %1760 = vmatpush1.msra.mxu0 %v1715
      %1761 = vmatprep.subr.mxu0 0.0
      %1762 = vmatpush1.msra.mxu0 %v1714
      %1763 = vmatprep.subr.mxu0 0.0
      %1764 = vmatpush1.msra.mxu0 %v1713
      %1765 = vmatprep.subr.mxu0 0.0
      %1766 = vmatpush1.msra.mxu0 %v1712
      %1767 = vmatprep.subr.mxu0 0.0
      %1768 = vmatpush1.msra.mxu0 %v1711
      %1769 = vmatprep.subr.mxu0 0.0
      %1770 = vmatpush1.msra.mxu0 %v1710
      %1771 = vmatprep.subr.mxu0 0.0
      %1772 = vmatpush1.msra.mxu0 %v1709
      %1773 = vmatprep.subr.mxu0 0.0
      %1774 = vmatpush1.msra.mxu0 %v1708
      %1775 = vmatprep.subr.mxu0 0.0
      %1776 = vmatpush1.msra.mxu0 %v1707
      %1777 = vmatprep.subr.mxu0 0.0
      %1778 = vmatpush1.msra.mxu0 %v1706
      %1779 = vmatprep.subr.mxu0 0.0
      %1780 = vmatpush1.msra.mxu0 %v1705
      %1781 = vmatprep.subr.mxu0 0.0
      %1782 = vmatpush1.msra.mxu0 %v1704
      %1783 = vmatprep.subr.mxu0 0.0
      %1784 = vmatpush1.msra.mxu0 %v1703
      %1785 = vmatprep.subr.mxu0 0.0
      %1786 = vmatpush2.msra.mxu0 %v1734
      %1787 = vmatprep.subr.mxu0 0.0
      %1788 = vmatpush2.msra.mxu0 %v1733
      %1789 = vmatprep.subr.mxu0 0.0
      %1790 = vmatpush2.msra.mxu0 %v1732
      %1791 = vmatprep.subr.mxu0 0.0
      %1792 = vmatpush2.msra.mxu0 %v1731
      %1793 = vmatprep.subr.mxu0 0.0
      %1794 = vmatpush2.msra.mxu0 %v1730
      %1795 = vmatprep.subr.mxu0 0.0
      %1796 = vmatpush2.msra.mxu0 %v1729
      %1797 = vmatprep.subr.mxu0 0.0
      %1798 = vmatpush2.msra.mxu0 %v1728
      %1799 = vmatprep.subr.mxu0 0.0
      %1800 = vmatpush2.msra.mxu0 %v1727
      %1801 = vmatprep.subr.mxu0 0.0
      %1802 = vmatpush2.msra.mxu0 %v1726
      %1803 = vmatprep.subr.mxu0 0.0
      %1804 = vmatpush2.msra.mxu0 %v1725
      %1805 = vmatprep.subr.mxu0 0.0
      %1806 = vmatpush2.msra.mxu0 %v1724
      %1807 = vmatprep.subr.mxu0 0.0
      %1808 = vmatpush2.msra.mxu0 %v1723
      %1809 = vmatprep.subr.mxu0 0.0
      %1810 = vmatpush2.msra.mxu0 %v1722
      %1811 = vmatprep.subr.mxu0 0.0
      %1812 = vmatpush2.msra.mxu0 %v1721
      %1813 = vmatprep.subr.mxu0 0.0
      %1814 = vmatpush2.msra.mxu0 %v1720
      %1815 = vmatprep.subr.mxu0 0.0
      %1816 = vmatpush2.msra.mxu0 %v1719
      %1817 = vmatprep.mubr.f32.mxu0 %v1744
      %1818 = vmatmul.mubr.f32.gmra.mxu0 %v1741
      %v1819 = vpop.f32.mrf.mxu0
      %v1820 = vadd.f32 0.0, %v1819
      %v1821 = vpop.f32.mrf.mxu0
      %1822 = vmatprep.mubr.f32.mxu0 %v1748
      %1823 = vmatmul.mubr.f32.gmra.mxu0 %v1746
      %v1824 = vpop.f32.mrf.mxu0
      %v1825 = vadd.f32 0.0, %v1824
      %v1826 = vpop.f32.mrf.mxu0
      %1827 = vdwg.mxu0
      %v1828 = vadd.f32 %v1696, %v1820
      %v1829 = vadd.f32 %v1697, %v1825
      %v1830 = vld [vmem:[%s138 + $0x10] sm:$0xe0]
      %v1831 = vld [vmem:[%s138 + $0x18] sm:$0xe0]
      %v1832 = vld [vmem:[%s138 + $0x30] sm:$0x1f]
      %v1833 = vld [vmem:[%s138 + $0x38] sm:$0x1f]
      %s1834 = scalar_lea.vmem %s1, 3328
      %v1835 = vld [vmem:[%s1834] sm:$0xff]
      %v1836 = vld [vmem:[%s1834 + $0x8] sm:$0xff]
      %v1837 = vld [vmem:[%s1834 + $0x10] sm:$0xff]
      %v1838 = vld [vmem:[%s1834 + $0x18] sm:$0xff]
      %v1839 = vld [vmem:[%s1834 + $0x20] sm:$0xff]
      %v1840 = vld [vmem:[%s1834 + $0x28] sm:$0xff]
      %v1841 = vld [vmem:[%s1834 + $0x30] sm:$0xff]
      %v1842 = vld [vmem:[%s1834 + $0x38] sm:$0xff]
      %v1843 = vld [vmem:[%s1834 + $0x40] sm:$0xff]
      %v1844 = vld [vmem:[%s1834 + $0x48] sm:$0xff]
      %v1845 = vld [vmem:[%s1834 + $0x50] sm:$0xff]
      %v1846 = vld [vmem:[%s1834 + $0x58] sm:$0xff]
      %v1847 = vld [vmem:[%s1834 + $0x60] sm:$0xff]
      %v1848 = vld [vmem:[%s1834 + $0x68] sm:$0xff]
      %v1849 = vld [vmem:[%s1834 + $0x70] sm:$0xff]
      %v1850 = vld [vmem:[%s1834 + $0x78] sm:$0xff]
      %v1851 = vld [vmem:[%s1834 + $0x80] sm:$0xff]
      %v1852 = vld [vmem:[%s1834 + $0x88] sm:$0xff]
      %v1853 = vld [vmem:[%s1834 + $0x90] sm:$0xff]
      %v1854 = vld [vmem:[%s1834 + $0x98] sm:$0xff]
      %v1855 = vld [vmem:[%s1834 + $0xa0] sm:$0xff]
      %v1856 = vld [vmem:[%s1834 + $0xa8] sm:$0xff]
      %v1857 = vld [vmem:[%s1834 + $0xb0] sm:$0xff]
      %v1858 = vld [vmem:[%s1834 + $0xb8] sm:$0xff]
      %v1859 = vld [vmem:[%s1834 + $0xc0] sm:$0xff]
      %v1860 = vld [vmem:[%s1834 + $0xc8] sm:$0xff]
      %v1861 = vld [vmem:[%s1834 + $0xd0] sm:$0xff]
      %v1862 = vld [vmem:[%s1834 + $0xd8] sm:$0xff]
      %v1863 = vld [vmem:[%s1834 + $0xe0] sm:$0xff]
      %v1864 = vld [vmem:[%s1834 + $0xe8] sm:$0xff]
      %v1865 = vld [vmem:[%s1834 + $0xf0] sm:$0xff]
      %v1866 = vld [vmem:[%s1834 + $0xf8] sm:$0xff]
      %v1871 = vrot.slane %v1830, 5
      %v1872 = vrot.slane %v1300, 5
      %v1873 = vsel %vm828, %v1871, %v1872
      %v1874 = vrot.slane %v1831, 5
      %v1875 = vrot.slane %v1301, 5
      %v1876 = vsel %vm828, %v1874, %v1875
      %v1877 = vrot.slane %v1832, 5
      %v1878 = vsel %vm828, %v1872, %v1877
      %v1879 = vrot.slane %v1833, 5
      %v1880 = vsel %vm828, %v1875, %v1879
      %1885 = vmatprep.subr.mxu0 0.0
      %1886 = vmatpush1.msra.mxu0 %v1850
      %1887 = vmatprep.subr.mxu0 0.0
      %1888 = vmatpush1.msra.mxu0 %v1849
      %1889 = vmatprep.subr.mxu0 0.0
      %1890 = vmatpush1.msra.mxu0 %v1848
      %1891 = vmatprep.subr.mxu0 0.0
      %1892 = vmatpush1.msra.mxu0 %v1847
      %1893 = vmatprep.subr.mxu0 0.0
      %1894 = vmatpush1.msra.mxu0 %v1846
      %1895 = vmatprep.subr.mxu0 0.0
      %1896 = vmatpush1.msra.mxu0 %v1845
      %1897 = vmatprep.subr.mxu0 0.0
      %1898 = vmatpush1.msra.mxu0 %v1844
      %1899 = vmatprep.subr.mxu0 0.0
      %1900 = vmatpush1.msra.mxu0 %v1843
      %1901 = vmatprep.subr.mxu0 0.0
      %1902 = vmatpush1.msra.mxu0 %v1842
      %1903 = vmatprep.subr.mxu0 0.0
      %1904 = vmatpush1.msra.mxu0 %v1841
      %1905 = vmatprep.subr.mxu0 0.0
      %1906 = vmatpush1.msra.mxu0 %v1840
      %1907 = vmatprep.subr.mxu0 0.0
      %1908 = vmatpush1.msra.mxu0 %v1839
      %1909 = vmatprep.subr.mxu0 0.0
      %1910 = vmatpush1.msra.mxu0 %v1838
      %1911 = vmatprep.subr.mxu0 0.0
      %1912 = vmatpush1.msra.mxu0 %v1837
      %1913 = vmatprep.subr.mxu0 0.0
      %1914 = vmatpush1.msra.mxu0 %v1836
      %1915 = vmatprep.subr.mxu0 0.0
      %1916 = vmatpush1.msra.mxu0 %v1835
      %1917 = vmatprep.subr.mxu0 0.0
      %1918 = vmatpush2.msra.mxu0 %v1866
      %1919 = vmatprep.subr.mxu0 0.0
      %1920 = vmatpush2.msra.mxu0 %v1865
      %1921 = vmatprep.subr.mxu0 0.0
      %1922 = vmatpush2.msra.mxu0 %v1864
      %1923 = vmatprep.subr.mxu0 0.0
      %1924 = vmatpush2.msra.mxu0 %v1863
      %1925 = vmatprep.subr.mxu0 0.0
      %1926 = vmatpush2.msra.mxu0 %v1862
      %1927 = vmatprep.subr.mxu0 0.0
      %1928 = vmatpush2.msra.mxu0 %v1861
      %1929 = vmatprep.subr.mxu0 0.0
      %1930 = vmatpush2.msra.mxu0 %v1860
      %1931 = vmatprep.subr.mxu0 0.0
      %1932 = vmatpush2.msra.mxu0 %v1859
      %1933 = vmatprep.subr.mxu0 0.0
      %1934 = vmatpush2.msra.mxu0 %v1858
      %1935 = vmatprep.subr.mxu0 0.0
      %1936 = vmatpush2.msra.mxu0 %v1857
      %1937 = vmatprep.subr.mxu0 0.0
      %1938 = vmatpush2.msra.mxu0 %v1856
      %1939 = vmatprep.subr.mxu0 0.0
      %1940 = vmatpush2.msra.mxu0 %v1855
      %1941 = vmatprep.subr.mxu0 0.0
      %1942 = vmatpush2.msra.mxu0 %v1854
      %1943 = vmatprep.subr.mxu0 0.0
      %1944 = vmatpush2.msra.mxu0 %v1853
      %1945 = vmatprep.subr.mxu0 0.0
      %1946 = vmatpush2.msra.mxu0 %v1852
      %1947 = vmatprep.subr.mxu0 0.0
      %1948 = vmatpush2.msra.mxu0 %v1851
      %1949 = vmatprep.mubr.f32.mxu0 %v1876
      %1950 = vmatmul.mubr.f32.gmra.mxu0 %v1873
      %v1951 = vpop.f32.mrf.mxu0
      %v1952 = vadd.f32 0.0, %v1951
      %v1953 = vpop.f32.mrf.mxu0
      %1954 = vmatprep.mubr.f32.mxu0 %v1880
      %1955 = vmatmul.mubr.f32.gmra.mxu0 %v1878
      %v1956 = vpop.f32.mrf.mxu0
      %v1957 = vadd.f32 0.0, %v1956
      %v1958 = vpop.f32.mrf.mxu0
      %1959 = vdwg.mxu0
      %v1960 = vadd.f32 %v1828, %v1952
      %v1961 = vadd.f32 %v1829, %v1957
      %v1962 = vld [vmem:[%s138 + $0x10] sm:$0xc0]
      %v1963 = vld [vmem:[%s138 + $0x18] sm:$0xc0]
      %v1964 = vld [vmem:[%s138 + $0x30] sm:$0x3f]
      %v1965 = vld [vmem:[%s138 + $0x38] sm:$0x3f]
      %s1966 = scalar_lea.vmem %s1, 3584
      %v1967 = vld [vmem:[%s1966] sm:$0xff]
      %v1968 = vld [vmem:[%s1966 + $0x8] sm:$0xff]
      %v1969 = vld [vmem:[%s1966 + $0x10] sm:$0xff]
      %v1970 = vld [vmem:[%s1966 + $0x18] sm:$0xff]
      %v1971 = vld [vmem:[%s1966 + $0x20] sm:$0xff]
      %v1972 = vld [vmem:[%s1966 + $0x28] sm:$0xff]
      %v1973 = vld [vmem:[%s1966 + $0x30] sm:$0xff]
      %v1974 = vld [vmem:[%s1966 + $0x38] sm:$0xff]
      %v1975 = vld [vmem:[%s1966 + $0x40] sm:$0xff]
      %v1976 = vld [vmem:[%s1966 + $0x48] sm:$0xff]
      %v1977 = vld [vmem:[%s1966 + $0x50] sm:$0xff]
      %v1978 = vld [vmem:[%s1966 + $0x58] sm:$0xff]
      %v1979 = vld [vmem:[%s1966 + $0x60] sm:$0xff]
      %v1980 = vld [vmem:[%s1966 + $0x68] sm:$0xff]
      %v1981 = vld [vmem:[%s1966 + $0x70] sm:$0xff]
      %v1982 = vld [vmem:[%s1966 + $0x78] sm:$0xff]
      %v1983 = vld [vmem:[%s1966 + $0x80] sm:$0xff]
      %v1984 = vld [vmem:[%s1966 + $0x88] sm:$0xff]
      %v1985 = vld [vmem:[%s1966 + $0x90] sm:$0xff]
      %v1986 = vld [vmem:[%s1966 + $0x98] sm:$0xff]
      %v1987 = vld [vmem:[%s1966 + $0xa0] sm:$0xff]
      %v1988 = vld [vmem:[%s1966 + $0xa8] sm:$0xff]
      %v1989 = vld [vmem:[%s1966 + $0xb0] sm:$0xff]
      %v1990 = vld [vmem:[%s1966 + $0xb8] sm:$0xff]
      %v1991 = vld [vmem:[%s1966 + $0xc0] sm:$0xff]
      %v1992 = vld [vmem:[%s1966 + $0xc8] sm:$0xff]
      %v1993 = vld [vmem:[%s1966 + $0xd0] sm:$0xff]
      %v1994 = vld [vmem:[%s1966 + $0xd8] sm:$0xff]
      %v1995 = vld [vmem:[%s1966 + $0xe0] sm:$0xff]
      %v1996 = vld [vmem:[%s1966 + $0xe8] sm:$0xff]
      %v1997 = vld [vmem:[%s1966 + $0xf0] sm:$0xff]
      %v1998 = vld [vmem:[%s1966 + $0xf8] sm:$0xff]
      %v2003 = vrot.slane %v1962, 6
      %v2004 = vrot.slane %v1300, 6
      %v2005 = vsel %vm961, %v2003, %v2004
      %v2006 = vrot.slane %v1963, 6
      %v2007 = vrot.slane %v1301, 6
      %v2008 = vsel %vm961, %v2006, %v2007
      %v2009 = vrot.slane %v1964, 6
      %v2010 = vsel %vm961, %v2004, %v2009
      %v2011 = vrot.slane %v1965, 6
      %v2012 = vsel %vm961, %v2007, %v2011
      %2017 = vmatprep.subr.mxu0 0.0
      %2018 = vmatpush1.msra.mxu0 %v1982
      %2019 = vmatprep.subr.mxu0 0.0
      %2020 = vmatpush1.msra.mxu0 %v1981
      %2021 = vmatprep.subr.mxu0 0.0
      %2022 = vmatpush1.msra.mxu0 %v1980
      %2023 = vmatprep.subr.mxu0 0.0
      %2024 = vmatpush1.msra.mxu0 %v1979
      %2025 = vmatprep.subr.mxu0 0.0
      %2026 = vmatpush1.msra.mxu0 %v1978
      %2027 = vmatprep.subr.mxu0 0.0
      %2028 = vmatpush1.msra.mxu0 %v1977
      %2029 = vmatprep.subr.mxu0 0.0
      %2030 = vmatpush1.msra.mxu0 %v1976
      %2031 = vmatprep.subr.mxu0 0.0
      %2032 = vmatpush1.msra.mxu0 %v1975
      %2033 = vmatprep.subr.mxu0 0.0
      %2034 = vmatpush1.msra.mxu0 %v1974
      %2035 = vmatprep.subr.mxu0 0.0
      %2036 = vmatpush1.msra.mxu0 %v1973
      %2037 = vmatprep.subr.mxu0 0.0
      %2038 = vmatpush1.msra.mxu0 %v1972
      %2039 = vmatprep.subr.mxu0 0.0
      %2040 = vmatpush1.msra.mxu0 %v1971
      %2041 = vmatprep.subr.mxu0 0.0
      %2042 = vmatpush1.msra.mxu0 %v1970
      %2043 = vmatprep.subr.mxu0 0.0
      %2044 = vmatpush1.msra.mxu0 %v1969
      %2045 = vmatprep.subr.mxu0 0.0
      %2046 = vmatpush1.msra.mxu0 %v1968
      %2047 = vmatprep.subr.mxu0 0.0
      %2048 = vmatpush1.msra.mxu0 %v1967
      %2049 = vmatprep.subr.mxu0 0.0
      %2050 = vmatpush2.msra.mxu0 %v1998
      %2051 = vmatprep.subr.mxu0 0.0
      %2052 = vmatpush2.msra.mxu0 %v1997
      %2053 = vmatprep.subr.mxu0 0.0
      %2054 = vmatpush2.msra.mxu0 %v1996
      %2055 = vmatprep.subr.mxu0 0.0
      %2056 = vmatpush2.msra.mxu0 %v1995
      %2057 = vmatprep.subr.mxu0 0.0
      %2058 = vmatpush2.msra.mxu0 %v1994
      %2059 = vmatprep.subr.mxu0 0.0
      %2060 = vmatpush2.msra.mxu0 %v1993
      %2061 = vmatprep.subr.mxu0 0.0
      %2062 = vmatpush2.msra.mxu0 %v1992
      %2063 = vmatprep.subr.mxu0 0.0
      %2064 = vmatpush2.msra.mxu0 %v1991
      %2065 = vmatprep.subr.mxu0 0.0
      %2066 = vmatpush2.msra.mxu0 %v1990
      %2067 = vmatprep.subr.mxu0 0.0
      %2068 = vmatpush2.msra.mxu0 %v1989
      %2069 = vmatprep.subr.mxu0 0.0
      %2070 = vmatpush2.msra.mxu0 %v1988
      %2071 = vmatprep.subr.mxu0 0.0
      %2072 = vmatpush2.msra.mxu0 %v1987
      %2073 = vmatprep.subr.mxu0 0.0
      %2074 = vmatpush2.msra.mxu0 %v1986
      %2075 = vmatprep.subr.mxu0 0.0
      %2076 = vmatpush2.msra.mxu0 %v1985
      %2077 = vmatprep.subr.mxu0 0.0
      %2078 = vmatpush2.msra.mxu0 %v1984
      %2079 = vmatprep.subr.mxu0 0.0
      %2080 = vmatpush2.msra.mxu0 %v1983
      %2081 = vmatprep.mubr.f32.mxu0 %v2008
      %2082 = vmatmul.mubr.f32.gmra.mxu0 %v2005
      %v2083 = vpop.f32.mrf.mxu0
      %v2084 = vadd.f32 0.0, %v2083
      %v2085 = vpop.f32.mrf.mxu0
      %2086 = vmatprep.mubr.f32.mxu0 %v2012
      %2087 = vmatmul.mubr.f32.gmra.mxu0 %v2010
      %v2088 = vpop.f32.mrf.mxu0
      %v2089 = vadd.f32 0.0, %v2088
      %v2090 = vpop.f32.mrf.mxu0
      %2091 = vdwg.mxu0
      %v2092 = vadd.f32 %v1960, %v2084
      %v2093 = vadd.f32 %v1961, %v2089
      %v2094 = vld [vmem:[%s138 + $0x10] sm:$0x80]
      %v2095 = vld [vmem:[%s138 + $0x18] sm:$0x80]
      %v2096 = vld [vmem:[%s138 + $0x30] sm:$0x7f]
      %v2097 = vld [vmem:[%s138 + $0x38] sm:$0x7f]
      %s2098 = scalar_lea.vmem %s1, 3840
      %v2099 = vld [vmem:[%s2098] sm:$0xff]
      %v2100 = vld [vmem:[%s2098 + $0x8] sm:$0xff]
      %v2101 = vld [vmem:[%s2098 + $0x10] sm:$0xff]
      %v2102 = vld [vmem:[%s2098 + $0x18] sm:$0xff]
      %v2103 = vld [vmem:[%s2098 + $0x20] sm:$0xff]
      %v2104 = vld [vmem:[%s2098 + $0x28] sm:$0xff]
      %v2105 = vld [vmem:[%s2098 + $0x30] sm:$0xff]
      %v2106 = vld [vmem:[%s2098 + $0x38] sm:$0xff]
      %v2107 = vld [vmem:[%s2098 + $0x40] sm:$0xff]
      %v2108 = vld [vmem:[%s2098 + $0x48] sm:$0xff]
      %v2109 = vld [vmem:[%s2098 + $0x50] sm:$0xff]
      %v2110 = vld [vmem:[%s2098 + $0x58] sm:$0xff]
      %v2111 = vld [vmem:[%s2098 + $0x60] sm:$0xff]
      %v2112 = vld [vmem:[%s2098 + $0x68] sm:$0xff]
      %v2113 = vld [vmem:[%s2098 + $0x70] sm:$0xff]
      %v2114 = vld [vmem:[%s2098 + $0x78] sm:$0xff]
      %v2115 = vld [vmem:[%s2098 + $0x80] sm:$0xff]
      %v2116 = vld [vmem:[%s2098 + $0x88] sm:$0xff]
      %v2117 = vld [vmem:[%s2098 + $0x90] sm:$0xff]
      %v2118 = vld [vmem:[%s2098 + $0x98] sm:$0xff]
      %v2119 = vld [vmem:[%s2098 + $0xa0] sm:$0xff]
      %v2120 = vld [vmem:[%s2098 + $0xa8] sm:$0xff]
      %v2121 = vld [vmem:[%s2098 + $0xb0] sm:$0xff]
      %v2122 = vld [vmem:[%s2098 + $0xb8] sm:$0xff]
      %v2123 = vld [vmem:[%s2098 + $0xc0] sm:$0xff]
      %v2124 = vld [vmem:[%s2098 + $0xc8] sm:$0xff]
      %v2125 = vld [vmem:[%s2098 + $0xd0] sm:$0xff]
      %v2126 = vld [vmem:[%s2098 + $0xd8] sm:$0xff]
      %v2127 = vld [vmem:[%s2098 + $0xe0] sm:$0xff]
      %v2128 = vld [vmem:[%s2098 + $0xe8] sm:$0xff]
      %v2129 = vld [vmem:[%s2098 + $0xf0] sm:$0xff]
      %v2130 = vld [vmem:[%s2098 + $0xf8] sm:$0xff]
      %v2135 = vrot.slane %v2094, 7
      %v2136 = vrot.slane %v1300, 7
      %v2137 = vsel %vm1094, %v2135, %v2136
      %v2138 = vrot.slane %v2095, 7
      %v2139 = vrot.slane %v1301, 7
      %v2140 = vsel %vm1094, %v2138, %v2139
      %v2141 = vrot.slane %v2096, 7
      %v2142 = vsel %vm1094, %v2136, %v2141
      %v2143 = vrot.slane %v2097, 7
      %v2144 = vsel %vm1094, %v2139, %v2143
      %2149 = vmatprep.subr.mxu0 0.0
      %2150 = vmatpush1.msra.mxu0 %v2114
      %2151 = vmatprep.subr.mxu0 0.0
      %2152 = vmatpush1.msra.mxu0 %v2113
      %2153 = vmatprep.subr.mxu0 0.0
      %2154 = vmatpush1.msra.mxu0 %v2112
      %2155 = vmatprep.subr.mxu0 0.0
      %2156 = vmatpush1.msra.mxu0 %v2111
      %2157 = vmatprep.subr.mxu0 0.0
      %2158 = vmatpush1.msra.mxu0 %v2110
      %2159 = vmatprep.subr.mxu0 0.0
      %2160 = vmatpush1.msra.mxu0 %v2109
      %2161 = vmatprep.subr.mxu0 0.0
      %2162 = vmatpush1.msra.mxu0 %v2108
      %2163 = vmatprep.subr.mxu0 0.0
      %2164 = vmatpush1.msra.mxu0 %v2107
      %2165 = vmatprep.subr.mxu0 0.0
      %2166 = vmatpush1.msra.mxu0 %v2106
      %2167 = vmatprep.subr.mxu0 0.0
      %2168 = vmatpush1.msra.mxu0 %v2105
      %2169 = vmatprep.subr.mxu0 0.0
      %2170 = vmatpush1.msra.mxu0 %v2104
      %2171 = vmatprep.subr.mxu0 0.0
      %2172 = vmatpush1.msra.mxu0 %v2103
      %2173 = vmatprep.subr.mxu0 0.0
      %2174 = vmatpush1.msra.mxu0 %v2102
      %2175 = vmatprep.subr.mxu0 0.0
      %2176 = vmatpush1.msra.mxu0 %v2101
      %2177 = vmatprep.subr.mxu0 0.0
      %2178 = vmatpush1.msra.mxu0 %v2100
      %2179 = vmatprep.subr.mxu0 0.0
      %2180 = vmatpush1.msra.mxu0 %v2099
      %2181 = vmatprep.subr.mxu0 0.0
      %2182 = vmatpush2.msra.mxu0 %v2130
      %2183 = vmatprep.subr.mxu0 0.0
      %2184 = vmatpush2.msra.mxu0 %v2129
      %2185 = vmatprep.subr.mxu0 0.0
      %2186 = vmatpush2.msra.mxu0 %v2128
      %2187 = vmatprep.subr.mxu0 0.0
      %2188 = vmatpush2.msra.mxu0 %v2127
      %2189 = vmatprep.subr.mxu0 0.0
      %2190 = vmatpush2.msra.mxu0 %v2126
      %2191 = vmatprep.subr.mxu0 0.0
      %2192 = vmatpush2.msra.mxu0 %v2125
      %2193 = vmatprep.subr.mxu0 0.0
      %2194 = vmatpush2.msra.mxu0 %v2124
      %2195 = vmatprep.subr.mxu0 0.0
      %2196 = vmatpush2.msra.mxu0 %v2123
      %2197 = vmatprep.subr.mxu0 0.0
      %2198 = vmatpush2.msra.mxu0 %v2122
      %2199 = vmatprep.subr.mxu0 0.0
      %2200 = vmatpush2.msra.mxu0 %v2121
      %2201 = vmatprep.subr.mxu0 0.0
      %2202 = vmatpush2.msra.mxu0 %v2120
      %2203 = vmatprep.subr.mxu0 0.0
      %2204 = vmatpush2.msra.mxu0 %v2119
      %2205 = vmatprep.subr.mxu0 0.0
      %2206 = vmatpush2.msra.mxu0 %v2118
      %2207 = vmatprep.subr.mxu0 0.0
      %2208 = vmatpush2.msra.mxu0 %v2117
      %2209 = vmatprep.subr.mxu0 0.0
      %2210 = vmatpush2.msra.mxu0 %v2116
      %2211 = vmatprep.subr.mxu0 0.0
      %2212 = vmatpush2.msra.mxu0 %v2115
      %2213 = vmatprep.mubr.f32.mxu0 %v2140
      %2214 = vmatmul.mubr.f32.gmra.mxu0 %v2137
      %v2215 = vpop.f32.mrf.mxu0
      %v2216 = vadd.f32 0.0, %v2215
      %v2217 = vpop.f32.mrf.mxu0
      %2218 = vmatprep.mubr.f32.mxu0 %v2144
      %2219 = vmatmul.mubr.f32.gmra.mxu0 %v2142
      %v2220 = vpop.f32.mrf.mxu0
      %v2221 = vadd.f32 0.0, %v2220
      %v2222 = vpop.f32.mrf.mxu0
      %2223 = vdwg.mxu0
      %v2224 = vadd.f32 %v2092, %v2216
      %v2225 = vadd.f32 %v2093, %v2221
      %v2226 = vld [vmem:[%s138 + $0x30] sm:$0xff]
      %v2227 = vld [vmem:[%s138 + $0x38] sm:$0xff]
      %s2228 = scalar_lea.vmem %s1, 4096
      %v2229 = vld [vmem:[%s2228] sm:$0xff]
      %v2230 = vld [vmem:[%s2228 + $0x8] sm:$0xff]
      %v2231 = vld [vmem:[%s2228 + $0x10] sm:$0xff]
      %v2232 = vld [vmem:[%s2228 + $0x18] sm:$0xff]
      %v2233 = vld [vmem:[%s2228 + $0x20] sm:$0xff]
      %v2234 = vld [vmem:[%s2228 + $0x28] sm:$0xff]
      %v2235 = vld [vmem:[%s2228 + $0x30] sm:$0xff]
      %v2236 = vld [vmem:[%s2228 + $0x38] sm:$0xff]
      %v2237 = vld [vmem:[%s2228 + $0x40] sm:$0xff]
      %v2238 = vld [vmem:[%s2228 + $0x48] sm:$0xff]
      %v2239 = vld [vmem:[%s2228 + $0x50] sm:$0xff]
      %v2240 = vld [vmem:[%s2228 + $0x58] sm:$0xff]
      %v2241 = vld [vmem:[%s2228 + $0x60] sm:$0xff]
      %v2242 = vld [vmem:[%s2228 + $0x68] sm:$0xff]
      %v2243 = vld [vmem:[%s2228 + $0x70] sm:$0xff]
      %v2244 = vld [vmem:[%s2228 + $0x78] sm:$0xff]
      %v2245 = vld [vmem:[%s2228 + $0x80] sm:$0xff]
      %v2246 = vld [vmem:[%s2228 + $0x88] sm:$0xff]
      %v2247 = vld [vmem:[%s2228 + $0x90] sm:$0xff]
      %v2248 = vld [vmem:[%s2228 + $0x98] sm:$0xff]
      %v2249 = vld [vmem:[%s2228 + $0xa0] sm:$0xff]
      %v2250 = vld [vmem:[%s2228 + $0xa8] sm:$0xff]
      %v2251 = vld [vmem:[%s2228 + $0xb0] sm:$0xff]
      %v2252 = vld [vmem:[%s2228 + $0xb8] sm:$0xff]
      %v2253 = vld [vmem:[%s2228 + $0xc0] sm:$0xff]
      %v2254 = vld [vmem:[%s2228 + $0xc8] sm:$0xff]
      %v2255 = vld [vmem:[%s2228 + $0xd0] sm:$0xff]
      %v2256 = vld [vmem:[%s2228 + $0xd8] sm:$0xff]
      %v2257 = vld [vmem:[%s2228 + $0xe0] sm:$0xff]
      %v2258 = vld [vmem:[%s2228 + $0xe8] sm:$0xff]
      %v2259 = vld [vmem:[%s2228 + $0xf0] sm:$0xff]
      %v2260 = vld [vmem:[%s2228 + $0xf8] sm:$0xff]
      %2261 = vmatprep.subr.mxu0 0.0
      %2262 = vmatpush1.msra.mxu0 %v2244
      %2263 = vmatprep.subr.mxu0 0.0
      %2264 = vmatpush1.msra.mxu0 %v2243
      %2265 = vmatprep.subr.mxu0 0.0
      %2266 = vmatpush1.msra.mxu0 %v2242
      %2267 = vmatprep.subr.mxu0 0.0
      %2268 = vmatpush1.msra.mxu0 %v2241
      %2269 = vmatprep.subr.mxu0 0.0
      %2270 = vmatpush1.msra.mxu0 %v2240
      %2271 = vmatprep.subr.mxu0 0.0
      %2272 = vmatpush1.msra.mxu0 %v2239
      %2273 = vmatprep.subr.mxu0 0.0
      %2274 = vmatpush1.msra.mxu0 %v2238
      %2275 = vmatprep.subr.mxu0 0.0
      %2276 = vmatpush1.msra.mxu0 %v2237
      %2277 = vmatprep.subr.mxu0 0.0
      %2278 = vmatpush1.msra.mxu0 %v2236
      %2279 = vmatprep.subr.mxu0 0.0
      %2280 = vmatpush1.msra.mxu0 %v2235
      %2281 = vmatprep.subr.mxu0 0.0
      %2282 = vmatpush1.msra.mxu0 %v2234
      %2283 = vmatprep.subr.mxu0 0.0
      %2284 = vmatpush1.msra.mxu0 %v2233
      %2285 = vmatprep.subr.mxu0 0.0
      %2286 = vmatpush1.msra.mxu0 %v2232
      %2287 = vmatprep.subr.mxu0 0.0
      %2288 = vmatpush1.msra.mxu0 %v2231
      %2289 = vmatprep.subr.mxu0 0.0
      %2290 = vmatpush1.msra.mxu0 %v2230
      %2291 = vmatprep.subr.mxu0 0.0
      %2292 = vmatpush1.msra.mxu0 %v2229
      %2293 = vmatprep.subr.mxu0 0.0
      %2294 = vmatpush2.msra.mxu0 %v2260
      %2295 = vmatprep.subr.mxu0 0.0
      %2296 = vmatpush2.msra.mxu0 %v2259
      %2297 = vmatprep.subr.mxu0 0.0
      %2298 = vmatpush2.msra.mxu0 %v2258
      %2299 = vmatprep.subr.mxu0 0.0
      %2300 = vmatpush2.msra.mxu0 %v2257
      %2301 = vmatprep.subr.mxu0 0.0
      %2302 = vmatpush2.msra.mxu0 %v2256
      %2303 = vmatprep.subr.mxu0 0.0
      %2304 = vmatpush2.msra.mxu0 %v2255
      %2305 = vmatprep.subr.mxu0 0.0
      %2306 = vmatpush2.msra.mxu0 %v2254
      %2307 = vmatprep.subr.mxu0 0.0
      %2308 = vmatpush2.msra.mxu0 %v2253
      %2309 = vmatprep.subr.mxu0 0.0
      %2310 = vmatpush2.msra.mxu0 %v2252
      %2311 = vmatprep.subr.mxu0 0.0
      %2312 = vmatpush2.msra.mxu0 %v2251
      %2313 = vmatprep.subr.mxu0 0.0
      %2314 = vmatpush2.msra.mxu0 %v2250
      %2315 = vmatprep.subr.mxu0 0.0
      %2316 = vmatpush2.msra.mxu0 %v2249
      %2317 = vmatprep.subr.mxu0 0.0
      %2318 = vmatpush2.msra.mxu0 %v2248
      %2319 = vmatprep.subr.mxu0 0.0
      %2320 = vmatpush2.msra.mxu0 %v2247
      %2321 = vmatprep.subr.mxu0 0.0
      %2322 = vmatpush2.msra.mxu0 %v2246
      %2323 = vmatprep.subr.mxu0 0.0
      %2324 = vmatpush2.msra.mxu0 %v2245
      %2325 = vmatprep.mubr.f32.mxu0 %v1301
      %2326 = vmatmul.mubr.f32.gmra.mxu0 %v1300
      %v2327 = vpop.f32.mrf.mxu0
      %v2328 = vadd.f32 0.0, %v2327
      %v2329 = vpop.f32.mrf.mxu0
      %2330 = vmatprep.mubr.f32.mxu0 %v2227
      %2331 = vmatmul.mubr.f32.gmra.mxu0 %v2226
      %v2332 = vpop.f32.mrf.mxu0
      %v2333 = vadd.f32 0.0, %v2332
      %v2334 = vpop.f32.mrf.mxu0
      %2335 = vdwg.mxu0
      %v2336 = vadd.f32 %v2224, %v2328
      %v2337 = vadd.f32 %v2225, %v2333
      %v2338 = vld [vmem:[%s138 + $0x20] sm:$0xfe]
      %v2339 = vld [vmem:[%s138 + $0x28] sm:$0xfe]
      %v2340 = vld [vmem:[%s138 + $0x30] sm:$0xff]
      %v2341 = vld [vmem:[%s138 + $0x38] sm:$0xff]
      %v2342 = vld [vmem:[%s138 + $0x40] sm:$0x1]
      %v2343 = vld [vmem:[%s138 + $0x48] sm:$0x1]
      %s2344 = scalar_lea.vmem %s1, 4352
      %v2345 = vld [vmem:[%s2344] sm:$0xff]
      %v2346 = vld [vmem:[%s2344 + $0x8] sm:$0xff]
      %v2347 = vld [vmem:[%s2344 + $0x10] sm:$0xff]
      %v2348 = vld [vmem:[%s2344 + $0x18] sm:$0xff]
      %v2349 = vld [vmem:[%s2344 + $0x20] sm:$0xff]
      %v2350 = vld [vmem:[%s2344 + $0x28] sm:$0xff]
      %v2351 = vld [vmem:[%s2344 + $0x30] sm:$0xff]
      %v2352 = vld [vmem:[%s2344 + $0x38] sm:$0xff]
      %v2353 = vld [vmem:[%s2344 + $0x40] sm:$0xff]
      %v2354 = vld [vmem:[%s2344 + $0x48] sm:$0xff]
      %v2355 = vld [vmem:[%s2344 + $0x50] sm:$0xff]
      %v2356 = vld [vmem:[%s2344 + $0x58] sm:$0xff]
      %v2357 = vld [vmem:[%s2344 + $0x60] sm:$0xff]
      %v2358 = vld [vmem:[%s2344 + $0x68] sm:$0xff]
      %v2359 = vld [vmem:[%s2344 + $0x70] sm:$0xff]
      %v2360 = vld [vmem:[%s2344 + $0x78] sm:$0xff]
      %v2361 = vld [vmem:[%s2344 + $0x80] sm:$0xff]
      %v2362 = vld [vmem:[%s2344 + $0x88] sm:$0xff]
      %v2363 = vld [vmem:[%s2344 + $0x90] sm:$0xff]
      %v2364 = vld [vmem:[%s2344 + $0x98] sm:$0xff]
      %v2365 = vld [vmem:[%s2344 + $0xa0] sm:$0xff]
      %v2366 = vld [vmem:[%s2344 + $0xa8] sm:$0xff]
      %v2367 = vld [vmem:[%s2344 + $0xb0] sm:$0xff]
      %v2368 = vld [vmem:[%s2344 + $0xb8] sm:$0xff]
      %v2369 = vld [vmem:[%s2344 + $0xc0] sm:$0xff]
      %v2370 = vld [vmem:[%s2344 + $0xc8] sm:$0xff]
      %v2371 = vld [vmem:[%s2344 + $0xd0] sm:$0xff]
      %v2372 = vld [vmem:[%s2344 + $0xd8] sm:$0xff]
      %v2373 = vld [vmem:[%s2344 + $0xe0] sm:$0xff]
      %v2374 = vld [vmem:[%s2344 + $0xe8] sm:$0xff]
      %v2375 = vld [vmem:[%s2344 + $0xf0] sm:$0xff]
      %v2376 = vld [vmem:[%s2344 + $0xf8] sm:$0xff]
      %v2383 = vrot.slane %v2338, 1
      %v2384 = vrot.slane %v2340, 1
      %v2385 = vsel %vm223, %v2383, %v2384
      %v2386 = vrot.slane %v2339, 1
      %v2387 = vrot.slane %v2341, 1
      %v2388 = vsel %vm223, %v2386, %v2387
      %v2389 = vrot.slane %v2342, 1
      %v2390 = vsel %vm223, %v2384, %v2389
      %v2391 = vrot.slane %v2343, 1
      %v2392 = vsel %vm223, %v2387, %v2391
      %2397 = vmatprep.subr.mxu0 0.0
      %2398 = vmatpush1.msra.mxu0 %v2360
      %2399 = vmatprep.subr.mxu0 0.0
      %2400 = vmatpush1.msra.mxu0 %v2359
      %2401 = vmatprep.subr.mxu0 0.0
      %2402 = vmatpush1.msra.mxu0 %v2358
      %2403 = vmatprep.subr.mxu0 0.0
      %2404 = vmatpush1.msra.mxu0 %v2357
      %2405 = vmatprep.subr.mxu0 0.0
      %2406 = vmatpush1.msra.mxu0 %v2356
      %2407 = vmatprep.subr.mxu0 0.0
      %2408 = vmatpush1.msra.mxu0 %v2355
      %2409 = vmatprep.subr.mxu0 0.0
      %2410 = vmatpush1.msra.mxu0 %v2354
      %2411 = vmatprep.subr.mxu0 0.0
      %2412 = vmatpush1.msra.mxu0 %v2353
      %2413 = vmatprep.subr.mxu0 0.0
      %2414 = vmatpush1.msra.mxu0 %v2352
      %2415 = vmatprep.subr.mxu0 0.0
      %2416 = vmatpush1.msra.mxu0 %v2351
      %2417 = vmatprep.subr.mxu0 0.0
      %2418 = vmatpush1.msra.mxu0 %v2350
      %2419 = vmatprep.subr.mxu0 0.0
      %2420 = vmatpush1.msra.mxu0 %v2349
      %2421 = vmatprep.subr.mxu0 0.0
      %2422 = vmatpush1.msra.mxu0 %v2348
      %2423 = vmatprep.subr.mxu0 0.0
      %2424 = vmatpush1.msra.mxu0 %v2347
      %2425 = vmatprep.subr.mxu0 0.0
      %2426 = vmatpush1.msra.mxu0 %v2346
      %2427 = vmatprep.subr.mxu0 0.0
      %2428 = vmatpush1.msra.mxu0 %v2345
      %2429 = vmatprep.subr.mxu0 0.0
      %2430 = vmatpush2.msra.mxu0 %v2376
      %2431 = vmatprep.subr.mxu0 0.0
      %2432 = vmatpush2.msra.mxu0 %v2375
      %2433 = vmatprep.subr.mxu0 0.0
      %2434 = vmatpush2.msra.mxu0 %v2374
      %2435 = vmatprep.subr.mxu0 0.0
      %2436 = vmatpush2.msra.mxu0 %v2373
      %2437 = vmatprep.subr.mxu0 0.0
      %2438 = vmatpush2.msra.mxu0 %v2372
      %2439 = vmatprep.subr.mxu0 0.0
      %2440 = vmatpush2.msra.mxu0 %v2371
      %2441 = vmatprep.subr.mxu0 0.0
      %2442 = vmatpush2.msra.mxu0 %v2370
      %2443 = vmatprep.subr.mxu0 0.0
      %2444 = vmatpush2.msra.mxu0 %v2369
      %2445 = vmatprep.subr.mxu0 0.0
      %2446 = vmatpush2.msra.mxu0 %v2368
      %2447 = vmatprep.subr.mxu0 0.0
      %2448 = vmatpush2.msra.mxu0 %v2367
      %2449 = vmatprep.subr.mxu0 0.0
      %2450 = vmatpush2.msra.mxu0 %v2366
      %2451 = vmatprep.subr.mxu0 0.0
      %2452 = vmatpush2.msra.mxu0 %v2365
      %2453 = vmatprep.subr.mxu0 0.0
      %2454 = vmatpush2.msra.mxu0 %v2364
      %2455 = vmatprep.subr.mxu0 0.0
      %2456 = vmatpush2.msra.mxu0 %v2363
      %2457 = vmatprep.subr.mxu0 0.0
      %2458 = vmatpush2.msra.mxu0 %v2362
      %2459 = vmatprep.subr.mxu0 0.0
      %2460 = vmatpush2.msra.mxu0 %v2361
      %2461 = vmatprep.mubr.f32.mxu0 %v2388
      %2462 = vmatmul.mubr.f32.gmra.mxu0 %v2385
      %v2463 = vpop.f32.mrf.mxu0
      %v2464 = vadd.f32 0.0, %v2463
      %v2465 = vpop.f32.mrf.mxu0
      %2466 = vmatprep.mubr.f32.mxu0 %v2392
      %2467 = vmatmul.mubr.f32.gmra.mxu0 %v2390
      %v2468 = vpop.f32.mrf.mxu0
      %v2469 = vadd.f32 0.0, %v2468
      %v2470 = vpop.f32.mrf.mxu0
      %2471 = vdwg.mxu0
      %v2472 = vadd.f32 %v2336, %v2464
      %v2473 = vadd.f32 %v2337, %v2469
      %v2474 = vld [vmem:[%s138 + $0x20] sm:$0xfc]
      %v2475 = vld [vmem:[%s138 + $0x28] sm:$0xfc]
      %v2476 = vld [vmem:[%s138 + $0x40] sm:$0x3]
      %v2477 = vld [vmem:[%s138 + $0x48] sm:$0x3]
      %s2478 = scalar_lea.vmem %s1, 4608
      %v2479 = vld [vmem:[%s2478] sm:$0xff]
      %v2480 = vld [vmem:[%s2478 + $0x8] sm:$0xff]
      %v2481 = vld [vmem:[%s2478 + $0x10] sm:$0xff]
      %v2482 = vld [vmem:[%s2478 + $0x18] sm:$0xff]
      %v2483 = vld [vmem:[%s2478 + $0x20] sm:$0xff]
      %v2484 = vld [vmem:[%s2478 + $0x28] sm:$0xff]
      %v2485 = vld [vmem:[%s2478 + $0x30] sm:$0xff]
      %v2486 = vld [vmem:[%s2478 + $0x38] sm:$0xff]
      %v2487 = vld [vmem:[%s2478 + $0x40] sm:$0xff]
      %v2488 = vld [vmem:[%s2478 + $0x48] sm:$0xff]
      %v2489 = vld [vmem:[%s2478 + $0x50] sm:$0xff]
      %v2490 = vld [vmem:[%s2478 + $0x58] sm:$0xff]
      %v2491 = vld [vmem:[%s2478 + $0x60] sm:$0xff]
      %v2492 = vld [vmem:[%s2478 + $0x68] sm:$0xff]
      %v2493 = vld [vmem:[%s2478 + $0x70] sm:$0xff]
      %v2494 = vld [vmem:[%s2478 + $0x78] sm:$0xff]
      %v2495 = vld [vmem:[%s2478 + $0x80] sm:$0xff]
      %v2496 = vld [vmem:[%s2478 + $0x88] sm:$0xff]
      %v2497 = vld [vmem:[%s2478 + $0x90] sm:$0xff]
      %v2498 = vld [vmem:[%s2478 + $0x98] sm:$0xff]
      %v2499 = vld [vmem:[%s2478 + $0xa0] sm:$0xff]
      %v2500 = vld [vmem:[%s2478 + $0xa8] sm:$0xff]
      %v2501 = vld [vmem:[%s2478 + $0xb0] sm:$0xff]
      %v2502 = vld [vmem:[%s2478 + $0xb8] sm:$0xff]
      %v2503 = vld [vmem:[%s2478 + $0xc0] sm:$0xff]
      %v2504 = vld [vmem:[%s2478 + $0xc8] sm:$0xff]
      %v2505 = vld [vmem:[%s2478 + $0xd0] sm:$0xff]
      %v2506 = vld [vmem:[%s2478 + $0xd8] sm:$0xff]
      %v2507 = vld [vmem:[%s2478 + $0xe0] sm:$0xff]
      %v2508 = vld [vmem:[%s2478 + $0xe8] sm:$0xff]
      %v2509 = vld [vmem:[%s2478 + $0xf0] sm:$0xff]
      %v2510 = vld [vmem:[%s2478 + $0xf8] sm:$0xff]
      %v2515 = vrot.slane %v2474, 2
      %v2516 = vrot.slane %v2340, 2
      %v2517 = vsel %vm429, %v2515, %v2516
      %v2518 = vrot.slane %v2475, 2
      %v2519 = vrot.slane %v2341, 2
      %v2520 = vsel %vm429, %v2518, %v2519
      %v2521 = vrot.slane %v2476, 2
      %v2522 = vsel %vm429, %v2516, %v2521
      %v2523 = vrot.slane %v2477, 2
      %v2524 = vsel %vm429, %v2519, %v2523
      %2529 = vmatprep.subr.mxu0 0.0
      %2530 = vmatpush1.msra.mxu0 %v2494
      %2531 = vmatprep.subr.mxu0 0.0
      %2532 = vmatpush1.msra.mxu0 %v2493
      %2533 = vmatprep.subr.mxu0 0.0
      %2534 = vmatpush1.msra.mxu0 %v2492
      %2535 = vmatprep.subr.mxu0 0.0
      %2536 = vmatpush1.msra.mxu0 %v2491
      %2537 = vmatprep.subr.mxu0 0.0
      %2538 = vmatpush1.msra.mxu0 %v2490
      %2539 = vmatprep.subr.mxu0 0.0
      %2540 = vmatpush1.msra.mxu0 %v2489
      %2541 = vmatprep.subr.mxu0 0.0
      %2542 = vmatpush1.msra.mxu0 %v2488
      %2543 = vmatprep.subr.mxu0 0.0
      %2544 = vmatpush1.msra.mxu0 %v2487
      %2545 = vmatprep.subr.mxu0 0.0
      %2546 = vmatpush1.msra.mxu0 %v2486
      %2547 = vmatprep.subr.mxu0 0.0
      %2548 = vmatpush1.msra.mxu0 %v2485
      %2549 = vmatprep.subr.mxu0 0.0
      %2550 = vmatpush1.msra.mxu0 %v2484
      %2551 = vmatprep.subr.mxu0 0.0
      %2552 = vmatpush1.msra.mxu0 %v2483
      %2553 = vmatprep.subr.mxu0 0.0
      %2554 = vmatpush1.msra.mxu0 %v2482
      %2555 = vmatprep.subr.mxu0 0.0
      %2556 = vmatpush1.msra.mxu0 %v2481
      %2557 = vmatprep.subr.mxu0 0.0
      %2558 = vmatpush1.msra.mxu0 %v2480
      %2559 = vmatprep.subr.mxu0 0.0
      %2560 = vmatpush1.msra.mxu0 %v2479
      %2561 = vmatprep.subr.mxu0 0.0
      %2562 = vmatpush2.msra.mxu0 %v2510
      %2563 = vmatprep.subr.mxu0 0.0
      %2564 = vmatpush2.msra.mxu0 %v2509
      %2565 = vmatprep.subr.mxu0 0.0
      %2566 = vmatpush2.msra.mxu0 %v2508
      %2567 = vmatprep.subr.mxu0 0.0
      %2568 = vmatpush2.msra.mxu0 %v2507
      %2569 = vmatprep.subr.mxu0 0.0
      %2570 = vmatpush2.msra.mxu0 %v2506
      %2571 = vmatprep.subr.mxu0 0.0
      %2572 = vmatpush2.msra.mxu0 %v2505
      %2573 = vmatprep.subr.mxu0 0.0
      %2574 = vmatpush2.msra.mxu0 %v2504
      %2575 = vmatprep.subr.mxu0 0.0
      %2576 = vmatpush2.msra.mxu0 %v2503
      %2577 = vmatprep.subr.mxu0 0.0
      %2578 = vmatpush2.msra.mxu0 %v2502
      %2579 = vmatprep.subr.mxu0 0.0
      %2580 = vmatpush2.msra.mxu0 %v2501
      %2581 = vmatprep.subr.mxu0 0.0
      %2582 = vmatpush2.msra.mxu0 %v2500
      %2583 = vmatprep.subr.mxu0 0.0
      %2584 = vmatpush2.msra.mxu0 %v2499
      %2585 = vmatprep.subr.mxu0 0.0
      %2586 = vmatpush2.msra.mxu0 %v2498
      %2587 = vmatprep.subr.mxu0 0.0
      %2588 = vmatpush2.msra.mxu0 %v2497
      %2589 = vmatprep.subr.mxu0 0.0
      %2590 = vmatpush2.msra.mxu0 %v2496
      %2591 = vmatprep.subr.mxu0 0.0
      %2592 = vmatpush2.msra.mxu0 %v2495
      %2593 = vmatprep.mubr.f32.mxu0 %v2520
      %2594 = vmatmul.mubr.f32.gmra.mxu0 %v2517
      %v2595 = vpop.f32.mrf.mxu0
      %v2596 = vadd.f32 0.0, %v2595
      %v2597 = vpop.f32.mrf.mxu0
      %2598 = vmatprep.mubr.f32.mxu0 %v2524
      %2599 = vmatmul.mubr.f32.gmra.mxu0 %v2522
      %v2600 = vpop.f32.mrf.mxu0
      %v2601 = vadd.f32 0.0, %v2600
      %v2602 = vpop.f32.mrf.mxu0
      %2603 = vdwg.mxu0
      %v2604 = vadd.f32 %v2472, %v2596
      %v2605 = vadd.f32 %v2473, %v2601
      %v2606 = vld [vmem:[%s138 + $0x20] sm:$0xf8]
      %v2607 = vld [vmem:[%s138 + $0x28] sm:$0xf8]
      %v2608 = vld [vmem:[%s138 + $0x40] sm:$0x7]
      %v2609 = vld [vmem:[%s138 + $0x48] sm:$0x7]
      %s2610 = scalar_lea.vmem %s1, 4864
      %v2611 = vld [vmem:[%s2610] sm:$0xff]
      %v2612 = vld [vmem:[%s2610 + $0x8] sm:$0xff]
      %v2613 = vld [vmem:[%s2610 + $0x10] sm:$0xff]
      %v2614 = vld [vmem:[%s2610 + $0x18] sm:$0xff]
      %v2615 = vld [vmem:[%s2610 + $0x20] sm:$0xff]
      %v2616 = vld [vmem:[%s2610 + $0x28] sm:$0xff]
      %v2617 = vld [vmem:[%s2610 + $0x30] sm:$0xff]
      %v2618 = vld [vmem:[%s2610 + $0x38] sm:$0xff]
      %v2619 = vld [vmem:[%s2610 + $0x40] sm:$0xff]
      %v2620 = vld [vmem:[%s2610 + $0x48] sm:$0xff]
      %v2621 = vld [vmem:[%s2610 + $0x50] sm:$0xff]
      %v2622 = vld [vmem:[%s2610 + $0x58] sm:$0xff]
      %v2623 = vld [vmem:[%s2610 + $0x60] sm:$0xff]
      %v2624 = vld [vmem:[%s2610 + $0x68] sm:$0xff]
      %v2625 = vld [vmem:[%s2610 + $0x70] sm:$0xff]
      %v2626 = vld [vmem:[%s2610 + $0x78] sm:$0xff]
      %v2627 = vld [vmem:[%s2610 + $0x80] sm:$0xff]
      %v2628 = vld [vmem:[%s2610 + $0x88] sm:$0xff]
      %v2629 = vld [vmem:[%s2610 + $0x90] sm:$0xff]
      %v2630 = vld [vmem:[%s2610 + $0x98] sm:$0xff]
      %v2631 = vld [vmem:[%s2610 + $0xa0] sm:$0xff]
      %v2632 = vld [vmem:[%s2610 + $0xa8] sm:$0xff]
      %v2633 = vld [vmem:[%s2610 + $0xb0] sm:$0xff]
      %v2634 = vld [vmem:[%s2610 + $0xb8] sm:$0xff]
      %v2635 = vld [vmem:[%s2610 + $0xc0] sm:$0xff]
      %v2636 = vld [vmem:[%s2610 + $0xc8] sm:$0xff]
      %v2637 = vld [vmem:[%s2610 + $0xd0] sm:$0xff]
      %v2638 = vld [vmem:[%s2610 + $0xd8] sm:$0xff]
      %v2639 = vld [vmem:[%s2610 + $0xe0] sm:$0xff]
      %v2640 = vld [vmem:[%s2610 + $0xe8] sm:$0xff]
      %v2641 = vld [vmem:[%s2610 + $0xf0] sm:$0xff]
      %v2642 = vld [vmem:[%s2610 + $0xf8] sm:$0xff]
      %v2647 = vrot.slane %v2606, 3
      %v2648 = vrot.slane %v2340, 3
      %v2649 = vsel %vm562, %v2647, %v2648
      %v2650 = vrot.slane %v2607, 3
      %v2651 = vrot.slane %v2341, 3
      %v2652 = vsel %vm562, %v2650, %v2651
      %v2653 = vrot.slane %v2608, 3
      %v2654 = vsel %vm562, %v2648, %v2653
      %v2655 = vrot.slane %v2609, 3
      %v2656 = vsel %vm562, %v2651, %v2655
      %2661 = vmatprep.subr.mxu0 0.0
      %2662 = vmatpush1.msra.mxu0 %v2626
      %2663 = vmatprep.subr.mxu0 0.0
      %2664 = vmatpush1.msra.mxu0 %v2625
      %2665 = vmatprep.subr.mxu0 0.0
      %2666 = vmatpush1.msra.mxu0 %v2624
      %2667 = vmatprep.subr.mxu0 0.0
      %2668 = vmatpush1.msra.mxu0 %v2623
      %2669 = vmatprep.subr.mxu0 0.0
      %2670 = vmatpush1.msra.mxu0 %v2622
      %2671 = vmatprep.subr.mxu0 0.0
      %2672 = vmatpush1.msra.mxu0 %v2621
      %2673 = vmatprep.subr.mxu0 0.0
      %2674 = vmatpush1.msra.mxu0 %v2620
      %2675 = vmatprep.subr.mxu0 0.0
      %2676 = vmatpush1.msra.mxu0 %v2619
      %2677 = vmatprep.subr.mxu0 0.0
      %2678 = vmatpush1.msra.mxu0 %v2618
      %2679 = vmatprep.subr.mxu0 0.0
      %2680 = vmatpush1.msra.mxu0 %v2617
      %2681 = vmatprep.subr.mxu0 0.0
      %2682 = vmatpush1.msra.mxu0 %v2616
      %2683 = vmatprep.subr.mxu0 0.0
      %2684 = vmatpush1.msra.mxu0 %v2615
      %2685 = vmatprep.subr.mxu0 0.0
      %2686 = vmatpush1.msra.mxu0 %v2614
      %2687 = vmatprep.subr.mxu0 0.0
      %2688 = vmatpush1.msra.mxu0 %v2613
      %2689 = vmatprep.subr.mxu0 0.0
      %2690 = vmatpush1.msra.mxu0 %v2612
      %2691 = vmatprep.subr.mxu0 0.0
      %2692 = vmatpush1.msra.mxu0 %v2611
      %2693 = vmatprep.subr.mxu0 0.0
      %2694 = vmatpush2.msra.mxu0 %v2642
      %2695 = vmatprep.subr.mxu0 0.0
      %2696 = vmatpush2.msra.mxu0 %v2641
      %2697 = vmatprep.subr.mxu0 0.0
      %2698 = vmatpush2.msra.mxu0 %v2640
      %2699 = vmatprep.subr.mxu0 0.0
      %2700 = vmatpush2.msra.mxu0 %v2639
      %2701 = vmatprep.subr.mxu0 0.0
      %2702 = vmatpush2.msra.mxu0 %v2638
      %2703 = vmatprep.subr.mxu0 0.0
      %2704 = vmatpush2.msra.mxu0 %v2637
      %2705 = vmatprep.subr.mxu0 0.0
      %2706 = vmatpush2.msra.mxu0 %v2636
      %2707 = vmatprep.subr.mxu0 0.0
      %2708 = vmatpush2.msra.mxu0 %v2635
      %2709 = vmatprep.subr.mxu0 0.0
      %2710 = vmatpush2.msra.mxu0 %v2634
      %2711 = vmatprep.subr.mxu0 0.0
      %2712 = vmatpush2.msra.mxu0 %v2633
      %2713 = vmatprep.subr.mxu0 0.0
      %2714 = vmatpush2.msra.mxu0 %v2632
      %2715 = vmatprep.subr.mxu0 0.0
      %2716 = vmatpush2.msra.mxu0 %v2631
      %2717 = vmatprep.subr.mxu0 0.0
      %2718 = vmatpush2.msra.mxu0 %v2630
      %2719 = vmatprep.subr.mxu0 0.0
      %2720 = vmatpush2.msra.mxu0 %v2629
      %2721 = vmatprep.subr.mxu0 0.0
      %2722 = vmatpush2.msra.mxu0 %v2628
      %2723 = vmatprep.subr.mxu0 0.0
      %2724 = vmatpush2.msra.mxu0 %v2627
      %2725 = vmatprep.mubr.f32.mxu0 %v2652
      %2726 = vmatmul.mubr.f32.gmra.mxu0 %v2649
      %v2727 = vpop.f32.mrf.mxu0
      %v2728 = vadd.f32 0.0, %v2727
      %v2729 = vpop.f32.mrf.mxu0
      %2730 = vmatprep.mubr.f32.mxu0 %v2656
      %2731 = vmatmul.mubr.f32.gmra.mxu0 %v2654
      %v2732 = vpop.f32.mrf.mxu0
      %v2733 = vadd.f32 0.0, %v2732
      %v2734 = vpop.f32.mrf.mxu0
      %2735 = vdwg.mxu0
      %v2736 = vadd.f32 %v2604, %v2728
      %v2737 = vadd.f32 %v2605, %v2733
      %v2738 = vld [vmem:[%s138 + $0x20] sm:$0xf0]
      %v2739 = vld [vmem:[%s138 + $0x28] sm:$0xf0]
      %v2740 = vld [vmem:[%s138 + $0x40] sm:$0xf]
      %v2741 = vld [vmem:[%s138 + $0x48] sm:$0xf]
      %s2742 = scalar_lea.vmem %s1, 5120
      %v2743 = vld [vmem:[%s2742] sm:$0xff]
      %v2744 = vld [vmem:[%s2742 + $0x8] sm:$0xff]
      %v2745 = vld [vmem:[%s2742 + $0x10] sm:$0xff]
      %v2746 = vld [vmem:[%s2742 + $0x18] sm:$0xff]
      %v2747 = vld [vmem:[%s2742 + $0x20] sm:$0xff]
      %v2748 = vld [vmem:[%s2742 + $0x28] sm:$0xff]
      %v2749 = vld [vmem:[%s2742 + $0x30] sm:$0xff]
      %v2750 = vld [vmem:[%s2742 + $0x38] sm:$0xff]
      %v2751 = vld [vmem:[%s2742 + $0x40] sm:$0xff]
      %v2752 = vld [vmem:[%s2742 + $0x48] sm:$0xff]
      %v2753 = vld [vmem:[%s2742 + $0x50] sm:$0xff]
      %v2754 = vld [vmem:[%s2742 + $0x58] sm:$0xff]
      %v2755 = vld [vmem:[%s2742 + $0x60] sm:$0xff]
      %v2756 = vld [vmem:[%s2742 + $0x68] sm:$0xff]
      %v2757 = vld [vmem:[%s2742 + $0x70] sm:$0xff]
      %v2758 = vld [vmem:[%s2742 + $0x78] sm:$0xff]
      %v2759 = vld [vmem:[%s2742 + $0x80] sm:$0xff]
      %v2760 = vld [vmem:[%s2742 + $0x88] sm:$0xff]
      %v2761 = vld [vmem:[%s2742 + $0x90] sm:$0xff]
      %v2762 = vld [vmem:[%s2742 + $0x98] sm:$0xff]
      %v2763 = vld [vmem:[%s2742 + $0xa0] sm:$0xff]
      %v2764 = vld [vmem:[%s2742 + $0xa8] sm:$0xff]
      %v2765 = vld [vmem:[%s2742 + $0xb0] sm:$0xff]
      %v2766 = vld [vmem:[%s2742 + $0xb8] sm:$0xff]
      %v2767 = vld [vmem:[%s2742 + $0xc0] sm:$0xff]
      %v2768 = vld [vmem:[%s2742 + $0xc8] sm:$0xff]
      %v2769 = vld [vmem:[%s2742 + $0xd0] sm:$0xff]
      %v2770 = vld [vmem:[%s2742 + $0xd8] sm:$0xff]
      %v2771 = vld [vmem:[%s2742 + $0xe0] sm:$0xff]
      %v2772 = vld [vmem:[%s2742 + $0xe8] sm:$0xff]
      %v2773 = vld [vmem:[%s2742 + $0xf0] sm:$0xff]
      %v2774 = vld [vmem:[%s2742 + $0xf8] sm:$0xff]
      %v2779 = vrot.slane %v2738, 4
      %v2780 = vrot.slane %v2340, 4
      %v2781 = vsel %vm695, %v2779, %v2780
      %v2782 = vrot.slane %v2739, 4
      %v2783 = vrot.slane %v2341, 4
      %v2784 = vsel %vm695, %v2782, %v2783
      %v2785 = vrot.slane %v2740, 4
      %v2786 = vsel %vm695, %v2780, %v2785
      %v2787 = vrot.slane %v2741, 4
      %v2788 = vsel %vm695, %v2783, %v2787
      %2793 = vmatprep.subr.mxu0 0.0
      %2794 = vmatpush1.msra.mxu0 %v2758
      %2795 = vmatprep.subr.mxu0 0.0
      %2796 = vmatpush1.msra.mxu0 %v2757
      %2797 = vmatprep.subr.mxu0 0.0
      %2798 = vmatpush1.msra.mxu0 %v2756
      %2799 = vmatprep.subr.mxu0 0.0
      %2800 = vmatpush1.msra.mxu0 %v2755
      %2801 = vmatprep.subr.mxu0 0.0
      %2802 = vmatpush1.msra.mxu0 %v2754
      %2803 = vmatprep.subr.mxu0 0.0
      %2804 = vmatpush1.msra.mxu0 %v2753
      %2805 = vmatprep.subr.mxu0 0.0
      %2806 = vmatpush1.msra.mxu0 %v2752
      %2807 = vmatprep.subr.mxu0 0.0
      %2808 = vmatpush1.msra.mxu0 %v2751
      %2809 = vmatprep.subr.mxu0 0.0
      %2810 = vmatpush1.msra.mxu0 %v2750
      %2811 = vmatprep.subr.mxu0 0.0
      %2812 = vmatpush1.msra.mxu0 %v2749
      %2813 = vmatprep.subr.mxu0 0.0
      %2814 = vmatpush1.msra.mxu0 %v2748
      %2815 = vmatprep.subr.mxu0 0.0
      %2816 = vmatpush1.msra.mxu0 %v2747
      %2817 = vmatprep.subr.mxu0 0.0
      %2818 = vmatpush1.msra.mxu0 %v2746
      %2819 = vmatprep.subr.mxu0 0.0
      %2820 = vmatpush1.msra.mxu0 %v2745
      %2821 = vmatprep.subr.mxu0 0.0
      %2822 = vmatpush1.msra.mxu0 %v2744
      %2823 = vmatprep.subr.mxu0 0.0
      %2824 = vmatpush1.msra.mxu0 %v2743
      %2825 = vmatprep.subr.mxu0 0.0
      %2826 = vmatpush2.msra.mxu0 %v2774
      %2827 = vmatprep.subr.mxu0 0.0
      %2828 = vmatpush2.msra.mxu0 %v2773
      %2829 = vmatprep.subr.mxu0 0.0
      %2830 = vmatpush2.msra.mxu0 %v2772
      %2831 = vmatprep.subr.mxu0 0.0
      %2832 = vmatpush2.msra.mxu0 %v2771
      %2833 = vmatprep.subr.mxu0 0.0
      %2834 = vmatpush2.msra.mxu0 %v2770
      %2835 = vmatprep.subr.mxu0 0.0
      %2836 = vmatpush2.msra.mxu0 %v2769
      %2837 = vmatprep.subr.mxu0 0.0
      %2838 = vmatpush2.msra.mxu0 %v2768
      %2839 = vmatprep.subr.mxu0 0.0
      %2840 = vmatpush2.msra.mxu0 %v2767
      %2841 = vmatprep.subr.mxu0 0.0
      %2842 = vmatpush2.msra.mxu0 %v2766
      %2843 = vmatprep.subr.mxu0 0.0
      %2844 = vmatpush2.msra.mxu0 %v2765
      %2845 = vmatprep.subr.mxu0 0.0
      %2846 = vmatpush2.msra.mxu0 %v2764
      %2847 = vmatprep.subr.mxu0 0.0
      %2848 = vmatpush2.msra.mxu0 %v2763
      %2849 = vmatprep.subr.mxu0 0.0
      %2850 = vmatpush2.msra.mxu0 %v2762
      %2851 = vmatprep.subr.mxu0 0.0
      %2852 = vmatpush2.msra.mxu0 %v2761
      %2853 = vmatprep.subr.mxu0 0.0
      %2854 = vmatpush2.msra.mxu0 %v2760
      %2855 = vmatprep.subr.mxu0 0.0
      %2856 = vmatpush2.msra.mxu0 %v2759
      %2857 = vmatprep.mubr.f32.mxu0 %v2784
      %2858 = vmatmul.mubr.f32.gmra.mxu0 %v2781
      %v2859 = vpop.f32.mrf.mxu0
      %v2860 = vadd.f32 0.0, %v2859
      %v2861 = vpop.f32.mrf.mxu0
      %2862 = vmatprep.mubr.f32.mxu0 %v2788
      %2863 = vmatmul.mubr.f32.gmra.mxu0 %v2786
      %v2864 = vpop.f32.mrf.mxu0
      %v2865 = vadd.f32 0.0, %v2864
      %v2866 = vpop.f32.mrf.mxu0
      %2867 = vdwg.mxu0
      %v2868 = vadd.f32 %v2736, %v2860
      %v2869 = vadd.f32 %v2737, %v2865
      %v2870 = vld [vmem:[%s138 + $0x20] sm:$0xe0]
      %v2871 = vld [vmem:[%s138 + $0x28] sm:$0xe0]
      %v2872 = vld [vmem:[%s138 + $0x40] sm:$0x1f]
      %v2873 = vld [vmem:[%s138 + $0x48] sm:$0x1f]
      %s2874 = scalar_lea.vmem %s1, 5376
      %v2875 = vld [vmem:[%s2874] sm:$0xff]
      %v2876 = vld [vmem:[%s2874 + $0x8] sm:$0xff]
      %v2877 = vld [vmem:[%s2874 + $0x10] sm:$0xff]
      %v2878 = vld [vmem:[%s2874 + $0x18] sm:$0xff]
      %v2879 = vld [vmem:[%s2874 + $0x20] sm:$0xff]
      %v2880 = vld [vmem:[%s2874 + $0x28] sm:$0xff]
      %v2881 = vld [vmem:[%s2874 + $0x30] sm:$0xff]
      %v2882 = vld [vmem:[%s2874 + $0x38] sm:$0xff]
      %v2883 = vld [vmem:[%s2874 + $0x40] sm:$0xff]
      %v2884 = vld [vmem:[%s2874 + $0x48] sm:$0xff]
      %v2885 = vld [vmem:[%s2874 + $0x50] sm:$0xff]
      %v2886 = vld [vmem:[%s2874 + $0x58] sm:$0xff]
      %v2887 = vld [vmem:[%s2874 + $0x60] sm:$0xff]
      %v2888 = vld [vmem:[%s2874 + $0x68] sm:$0xff]
      %v2889 = vld [vmem:[%s2874 + $0x70] sm:$0xff]
      %v2890 = vld [vmem:[%s2874 + $0x78] sm:$0xff]
      %v2891 = vld [vmem:[%s2874 + $0x80] sm:$0xff]
      %v2892 = vld [vmem:[%s2874 + $0x88] sm:$0xff]
      %v2893 = vld [vmem:[%s2874 + $0x90] sm:$0xff]
      %v2894 = vld [vmem:[%s2874 + $0x98] sm:$0xff]
      %v2895 = vld [vmem:[%s2874 + $0xa0] sm:$0xff]
      %v2896 = vld [vmem:[%s2874 + $0xa8] sm:$0xff]
      %v2897 = vld [vmem:[%s2874 + $0xb0] sm:$0xff]
      %v2898 = vld [vmem:[%s2874 + $0xb8] sm:$0xff]
      %v2899 = vld [vmem:[%s2874 + $0xc0] sm:$0xff]
      %v2900 = vld [vmem:[%s2874 + $0xc8] sm:$0xff]
      %v2901 = vld [vmem:[%s2874 + $0xd0] sm:$0xff]
      %v2902 = vld [vmem:[%s2874 + $0xd8] sm:$0xff]
      %v2903 = vld [vmem:[%s2874 + $0xe0] sm:$0xff]
      %v2904 = vld [vmem:[%s2874 + $0xe8] sm:$0xff]
      %v2905 = vld [vmem:[%s2874 + $0xf0] sm:$0xff]
      %v2906 = vld [vmem:[%s2874 + $0xf8] sm:$0xff]
      %v2911 = vrot.slane %v2870, 5
      %v2912 = vrot.slane %v2340, 5
      %v2913 = vsel %vm828, %v2911, %v2912
      %v2914 = vrot.slane %v2871, 5
      %v2915 = vrot.slane %v2341, 5
      %v2916 = vsel %vm828, %v2914, %v2915
      %v2917 = vrot.slane %v2872, 5
      %v2918 = vsel %vm828, %v2912, %v2917
      %v2919 = vrot.slane %v2873, 5
      %v2920 = vsel %vm828, %v2915, %v2919
      %2925 = vmatprep.subr.mxu0 0.0
      %2926 = vmatpush1.msra.mxu0 %v2890
      %2927 = vmatprep.subr.mxu0 0.0
      %2928 = vmatpush1.msra.mxu0 %v2889
      %2929 = vmatprep.subr.mxu0 0.0
      %2930 = vmatpush1.msra.mxu0 %v2888
      %2931 = vmatprep.subr.mxu0 0.0
      %2932 = vmatpush1.msra.mxu0 %v2887
      %2933 = vmatprep.subr.mxu0 0.0
      %2934 = vmatpush1.msra.mxu0 %v2886
      %2935 = vmatprep.subr.mxu0 0.0
      %2936 = vmatpush1.msra.mxu0 %v2885
      %2937 = vmatprep.subr.mxu0 0.0
      %2938 = vmatpush1.msra.mxu0 %v2884
      %2939 = vmatprep.subr.mxu0 0.0
      %2940 = vmatpush1.msra.mxu0 %v2883
      %2941 = vmatprep.subr.mxu0 0.0
      %2942 = vmatpush1.msra.mxu0 %v2882
      %2943 = vmatprep.subr.mxu0 0.0
      %2944 = vmatpush1.msra.mxu0 %v2881
      %2945 = vmatprep.subr.mxu0 0.0
      %2946 = vmatpush1.msra.mxu0 %v2880
      %2947 = vmatprep.subr.mxu0 0.0
      %2948 = vmatpush1.msra.mxu0 %v2879
      %2949 = vmatprep.subr.mxu0 0.0
      %2950 = vmatpush1.msra.mxu0 %v2878
      %2951 = vmatprep.subr.mxu0 0.0
      %2952 = vmatpush1.msra.mxu0 %v2877
      %2953 = vmatprep.subr.mxu0 0.0
      %2954 = vmatpush1.msra.mxu0 %v2876
      %2955 = vmatprep.subr.mxu0 0.0
      %2956 = vmatpush1.msra.mxu0 %v2875
      %2957 = vmatprep.subr.mxu0 0.0
      %2958 = vmatpush2.msra.mxu0 %v2906
      %2959 = vmatprep.subr.mxu0 0.0
      %2960 = vmatpush2.msra.mxu0 %v2905
      %2961 = vmatprep.subr.mxu0 0.0
      %2962 = vmatpush2.msra.mxu0 %v2904
      %2963 = vmatprep.subr.mxu0 0.0
      %2964 = vmatpush2.msra.mxu0 %v2903
      %2965 = vmatprep.subr.mxu0 0.0
      %2966 = vmatpush2.msra.mxu0 %v2902
      %2967 = vmatprep.subr.mxu0 0.0
      %2968 = vmatpush2.msra.mxu0 %v2901
      %2969 = vmatprep.subr.mxu0 0.0
      %2970 = vmatpush2.msra.mxu0 %v2900
      %2971 = vmatprep.subr.mxu0 0.0
      %2972 = vmatpush2.msra.mxu0 %v2899
      %2973 = vmatprep.subr.mxu0 0.0
      %2974 = vmatpush2.msra.mxu0 %v2898
      %2975 = vmatprep.subr.mxu0 0.0
      %2976 = vmatpush2.msra.mxu0 %v2897
      %2977 = vmatprep.subr.mxu0 0.0
      %2978 = vmatpush2.msra.mxu0 %v2896
      %2979 = vmatprep.subr.mxu0 0.0
      %2980 = vmatpush2.msra.mxu0 %v2895
      %2981 = vmatprep.subr.mxu0 0.0
      %2982 = vmatpush2.msra.mxu0 %v2894
      %2983 = vmatprep.subr.mxu0 0.0
      %2984 = vmatpush2.msra.mxu0 %v2893
      %2985 = vmatprep.subr.mxu0 0.0
      %2986 = vmatpush2.msra.mxu0 %v2892
      %2987 = vmatprep.subr.mxu0 0.0
      %2988 = vmatpush2.msra.mxu0 %v2891
      %2989 = vmatprep.mubr.f32.mxu0 %v2916
      %2990 = vmatmul.mubr.f32.gmra.mxu0 %v2913
      %v2991 = vpop.f32.mrf.mxu0
      %v2992 = vadd.f32 0.0, %v2991
      %v2993 = vpop.f32.mrf.mxu0
      %2994 = vmatprep.mubr.f32.mxu0 %v2920
      %2995 = vmatmul.mubr.f32.gmra.mxu0 %v2918
      %v2996 = vpop.f32.mrf.mxu0
      %v2997 = vadd.f32 0.0, %v2996
      %v2998 = vpop.f32.mrf.mxu0
      %2999 = vdwg.mxu0
      %v3000 = vadd.f32 %v2868, %v2992
      %v3001 = vadd.f32 %v2869, %v2997
      %v3002 = vld [vmem:[%s138 + $0x20] sm:$0xc0]
      %v3003 = vld [vmem:[%s138 + $0x28] sm:$0xc0]
      %v3004 = vld [vmem:[%s138 + $0x40] sm:$0x3f]
      %v3005 = vld [vmem:[%s138 + $0x48] sm:$0x3f]
      %s3006 = scalar_lea.vmem %s1, 5632
      %v3007 = vld [vmem:[%s3006] sm:$0xff]
      %v3008 = vld [vmem:[%s3006 + $0x8] sm:$0xff]
      %v3009 = vld [vmem:[%s3006 + $0x10] sm:$0xff]
      %v3010 = vld [vmem:[%s3006 + $0x18] sm:$0xff]
      %v3011 = vld [vmem:[%s3006 + $0x20] sm:$0xff]
      %v3012 = vld [vmem:[%s3006 + $0x28] sm:$0xff]
      %v3013 = vld [vmem:[%s3006 + $0x30] sm:$0xff]
      %v3014 = vld [vmem:[%s3006 + $0x38] sm:$0xff]
      %v3015 = vld [vmem:[%s3006 + $0x40] sm:$0xff]
      %v3016 = vld [vmem:[%s3006 + $0x48] sm:$0xff]
      %v3017 = vld [vmem:[%s3006 + $0x50] sm:$0xff]
      %v3018 = vld [vmem:[%s3006 + $0x58] sm:$0xff]
      %v3019 = vld [vmem:[%s3006 + $0x60] sm:$0xff]
      %v3020 = vld [vmem:[%s3006 + $0x68] sm:$0xff]
      %v3021 = vld [vmem:[%s3006 + $0x70] sm:$0xff]
      %v3022 = vld [vmem:[%s3006 + $0x78] sm:$0xff]
      %v3023 = vld [vmem:[%s3006 + $0x80] sm:$0xff]
      %v3024 = vld [vmem:[%s3006 + $0x88] sm:$0xff]
      %v3025 = vld [vmem:[%s3006 + $0x90] sm:$0xff]
      %v3026 = vld [vmem:[%s3006 + $0x98] sm:$0xff]
      %v3027 = vld [vmem:[%s3006 + $0xa0] sm:$0xff]
      %v3028 = vld [vmem:[%s3006 + $0xa8] sm:$0xff]
      %v3029 = vld [vmem:[%s3006 + $0xb0] sm:$0xff]
      %v3030 = vld [vmem:[%s3006 + $0xb8] sm:$0xff]
      %v3031 = vld [vmem:[%s3006 + $0xc0] sm:$0xff]
      %v3032 = vld [vmem:[%s3006 + $0xc8] sm:$0xff]
      %v3033 = vld [vmem:[%s3006 + $0xd0] sm:$0xff]
      %v3034 = vld [vmem:[%s3006 + $0xd8] sm:$0xff]
      %v3035 = vld [vmem:[%s3006 + $0xe0] sm:$0xff]
      %v3036 = vld [vmem:[%s3006 + $0xe8] sm:$0xff]
      %v3037 = vld [vmem:[%s3006 + $0xf0] sm:$0xff]
      %v3038 = vld [vmem:[%s3006 + $0xf8] sm:$0xff]
      %v3043 = vrot.slane %v3002, 6
      %v3044 = vrot.slane %v2340, 6
      %v3045 = vsel %vm961, %v3043, %v3044
      %v3046 = vrot.slane %v3003, 6
      %v3047 = vrot.slane %v2341, 6
      %v3048 = vsel %vm961, %v3046, %v3047
      %v3049 = vrot.slane %v3004, 6
      %v3050 = vsel %vm961, %v3044, %v3049
      %v3051 = vrot.slane %v3005, 6
      %v3052 = vsel %vm961, %v3047, %v3051
      %3057 = vmatprep.subr.mxu0 0.0
      %3058 = vmatpush1.msra.mxu0 %v3022
      %3059 = vmatprep.subr.mxu0 0.0
      %3060 = vmatpush1.msra.mxu0 %v3021
      %3061 = vmatprep.subr.mxu0 0.0
      %3062 = vmatpush1.msra.mxu0 %v3020
      %3063 = vmatprep.subr.mxu0 0.0
      %3064 = vmatpush1.msra.mxu0 %v3019
      %3065 = vmatprep.subr.mxu0 0.0
      %3066 = vmatpush1.msra.mxu0 %v3018
      %3067 = vmatprep.subr.mxu0 0.0
      %3068 = vmatpush1.msra.mxu0 %v3017
      %3069 = vmatprep.subr.mxu0 0.0
      %3070 = vmatpush1.msra.mxu0 %v3016
      %3071 = vmatprep.subr.mxu0 0.0
      %3072 = vmatpush1.msra.mxu0 %v3015
      %3073 = vmatprep.subr.mxu0 0.0
      %3074 = vmatpush1.msra.mxu0 %v3014
      %3075 = vmatprep.subr.mxu0 0.0
      %3076 = vmatpush1.msra.mxu0 %v3013
      %3077 = vmatprep.subr.mxu0 0.0
      %3078 = vmatpush1.msra.mxu0 %v3012
      %3079 = vmatprep.subr.mxu0 0.0
      %3080 = vmatpush1.msra.mxu0 %v3011
      %3081 = vmatprep.subr.mxu0 0.0
      %3082 = vmatpush1.msra.mxu0 %v3010
      %3083 = vmatprep.subr.mxu0 0.0
      %3084 = vmatpush1.msra.mxu0 %v3009
      %3085 = vmatprep.subr.mxu0 0.0
      %3086 = vmatpush1.msra.mxu0 %v3008
      %3087 = vmatprep.subr.mxu0 0.0
      %3088 = vmatpush1.msra.mxu0 %v3007
      %3089 = vmatprep.subr.mxu0 0.0
      %3090 = vmatpush2.msra.mxu0 %v3038
      %3091 = vmatprep.subr.mxu0 0.0
      %3092 = vmatpush2.msra.mxu0 %v3037
      %3093 = vmatprep.subr.mxu0 0.0
      %3094 = vmatpush2.msra.mxu0 %v3036
      %3095 = vmatprep.subr.mxu0 0.0
      %3096 = vmatpush2.msra.mxu0 %v3035
      %3097 = vmatprep.subr.mxu0 0.0
      %3098 = vmatpush2.msra.mxu0 %v3034
      %3099 = vmatprep.subr.mxu0 0.0
      %3100 = vmatpush2.msra.mxu0 %v3033
      %3101 = vmatprep.subr.mxu0 0.0
      %3102 = vmatpush2.msra.mxu0 %v3032
      %3103 = vmatprep.subr.mxu0 0.0
      %3104 = vmatpush2.msra.mxu0 %v3031
      %3105 = vmatprep.subr.mxu0 0.0
      %3106 = vmatpush2.msra.mxu0 %v3030
      %3107 = vmatprep.subr.mxu0 0.0
      %3108 = vmatpush2.msra.mxu0 %v3029
      %3109 = vmatprep.subr.mxu0 0.0
      %3110 = vmatpush2.msra.mxu0 %v3028
      %3111 = vmatprep.subr.mxu0 0.0
      %3112 = vmatpush2.msra.mxu0 %v3027
      %3113 = vmatprep.subr.mxu0 0.0
      %3114 = vmatpush2.msra.mxu0 %v3026
      %3115 = vmatprep.subr.mxu0 0.0
      %3116 = vmatpush2.msra.mxu0 %v3025
      %3117 = vmatprep.subr.mxu0 0.0
      %3118 = vmatpush2.msra.mxu0 %v3024
      %3119 = vmatprep.subr.mxu0 0.0
      %3120 = vmatpush2.msra.mxu0 %v3023
      %3121 = vmatprep.mubr.f32.mxu0 %v3048
      %3122 = vmatmul.mubr.f32.gmra.mxu0 %v3045
      %v3123 = vpop.f32.mrf.mxu0
      %v3124 = vadd.f32 0.0, %v3123
      %v3125 = vpop.f32.mrf.mxu0
      %3126 = vmatprep.mubr.f32.mxu0 %v3052
      %3127 = vmatmul.mubr.f32.gmra.mxu0 %v3050
      %v3128 = vpop.f32.mrf.mxu0
      %v3129 = vadd.f32 0.0, %v3128
      %v3130 = vpop.f32.mrf.mxu0
      %3131 = vdwg.mxu0
      %v3132 = vadd.f32 %v3000, %v3124
      %v3133 = vadd.f32 %v3001, %v3129
      %v3134 = vld [vmem:[%s138 + $0x20] sm:$0x80]
      %v3135 = vld [vmem:[%s138 + $0x28] sm:$0x80]
      %v3136 = vld [vmem:[%s138 + $0x40] sm:$0x7f]
      %v3137 = vld [vmem:[%s138 + $0x48] sm:$0x7f]
      %s3138 = scalar_lea.vmem %s1, 5888
      %v3139 = vld [vmem:[%s3138] sm:$0xff]
      %v3140 = vld [vmem:[%s3138 + $0x8] sm:$0xff]
      %v3141 = vld [vmem:[%s3138 + $0x10] sm:$0xff]
      %v3142 = vld [vmem:[%s3138 + $0x18] sm:$0xff]
      %v3143 = vld [vmem:[%s3138 + $0x20] sm:$0xff]
      %v3144 = vld [vmem:[%s3138 + $0x28] sm:$0xff]
      %v3145 = vld [vmem:[%s3138 + $0x30] sm:$0xff]
      %v3146 = vld [vmem:[%s3138 + $0x38] sm:$0xff]
      %v3147 = vld [vmem:[%s3138 + $0x40] sm:$0xff]
      %v3148 = vld [vmem:[%s3138 + $0x48] sm:$0xff]
      %v3149 = vld [vmem:[%s3138 + $0x50] sm:$0xff]
      %v3150 = vld [vmem:[%s3138 + $0x58] sm:$0xff]
      %v3151 = vld [vmem:[%s3138 + $0x60] sm:$0xff]
      %v3152 = vld [vmem:[%s3138 + $0x68] sm:$0xff]
      %v3153 = vld [vmem:[%s3138 + $0x70] sm:$0xff]
      %v3154 = vld [vmem:[%s3138 + $0x78] sm:$0xff]
      %v3155 = vld [vmem:[%s3138 + $0x80] sm:$0xff]
      %v3156 = vld [vmem:[%s3138 + $0x88] sm:$0xff]
      %v3157 = vld [vmem:[%s3138 + $0x90] sm:$0xff]
      %v3158 = vld [vmem:[%s3138 + $0x98] sm:$0xff]
      %v3159 = vld [vmem:[%s3138 + $0xa0] sm:$0xff]
      %v3160 = vld [vmem:[%s3138 + $0xa8] sm:$0xff]
      %v3161 = vld [vmem:[%s3138 + $0xb0] sm:$0xff]
      %v3162 = vld [vmem:[%s3138 + $0xb8] sm:$0xff]
      %v3163 = vld [vmem:[%s3138 + $0xc0] sm:$0xff]
      %v3164 = vld [vmem:[%s3138 + $0xc8] sm:$0xff]
      %v3165 = vld [vmem:[%s3138 + $0xd0] sm:$0xff]
      %v3166 = vld [vmem:[%s3138 + $0xd8] sm:$0xff]
      %v3167 = vld [vmem:[%s3138 + $0xe0] sm:$0xff]
      %v3168 = vld [vmem:[%s3138 + $0xe8] sm:$0xff]
      %v3169 = vld [vmem:[%s3138 + $0xf0] sm:$0xff]
      %v3170 = vld [vmem:[%s3138 + $0xf8] sm:$0xff]
      %v3175 = vrot.slane %v3134, 7
      %v3176 = vrot.slane %v2340, 7
      %v3177 = vsel %vm1094, %v3175, %v3176
      %v3178 = vrot.slane %v3135, 7
      %v3179 = vrot.slane %v2341, 7
      %v3180 = vsel %vm1094, %v3178, %v3179
      %v3181 = vrot.slane %v3136, 7
      %v3182 = vsel %vm1094, %v3176, %v3181
      %v3183 = vrot.slane %v3137, 7
      %v3184 = vsel %vm1094, %v3179, %v3183
      %3189 = vmatprep.subr.mxu0 0.0
      %3190 = vmatpush1.msra.mxu0 %v3154
      %3191 = vmatprep.subr.mxu0 0.0
      %3192 = vmatpush1.msra.mxu0 %v3153
      %3193 = vmatprep.subr.mxu0 0.0
      %3194 = vmatpush1.msra.mxu0 %v3152
      %3195 = vmatprep.subr.mxu0 0.0
      %3196 = vmatpush1.msra.mxu0 %v3151
      %3197 = vmatprep.subr.mxu0 0.0
      %3198 = vmatpush1.msra.mxu0 %v3150
      %3199 = vmatprep.subr.mxu0 0.0
      %3200 = vmatpush1.msra.mxu0 %v3149
      %3201 = vmatprep.subr.mxu0 0.0
      %3202 = vmatpush1.msra.mxu0 %v3148
      %3203 = vmatprep.subr.mxu0 0.0
      %3204 = vmatpush1.msra.mxu0 %v3147
      %3205 = vmatprep.subr.mxu0 0.0
      %3206 = vmatpush1.msra.mxu0 %v3146
      %3207 = vmatprep.subr.mxu0 0.0
      %3208 = vmatpush1.msra.mxu0 %v3145
      %3209 = vmatprep.subr.mxu0 0.0
      %3210 = vmatpush1.msra.mxu0 %v3144
      %3211 = vmatprep.subr.mxu0 0.0
      %3212 = vmatpush1.msra.mxu0 %v3143
      %3213 = vmatprep.subr.mxu0 0.0
      %3214 = vmatpush1.msra.mxu0 %v3142
      %3215 = vmatprep.subr.mxu0 0.0
      %3216 = vmatpush1.msra.mxu0 %v3141
      %3217 = vmatprep.subr.mxu0 0.0
      %3218 = vmatpush1.msra.mxu0 %v3140
      %3219 = vmatprep.subr.mxu0 0.0
      %3220 = vmatpush1.msra.mxu0 %v3139
      %3221 = vmatprep.subr.mxu0 0.0
      %3222 = vmatpush2.msra.mxu0 %v3170
      %3223 = vmatprep.subr.mxu0 0.0
      %3224 = vmatpush2.msra.mxu0 %v3169
      %3225 = vmatprep.subr.mxu0 0.0
      %3226 = vmatpush2.msra.mxu0 %v3168
      %3227 = vmatprep.subr.mxu0 0.0
      %3228 = vmatpush2.msra.mxu0 %v3167
      %3229 = vmatprep.subr.mxu0 0.0
      %3230 = vmatpush2.msra.mxu0 %v3166
      %3231 = vmatprep.subr.mxu0 0.0
      %3232 = vmatpush2.msra.mxu0 %v3165
      %3233 = vmatprep.subr.mxu0 0.0
      %3234 = vmatpush2.msra.mxu0 %v3164
      %3235 = vmatprep.subr.mxu0 0.0
      %3236 = vmatpush2.msra.mxu0 %v3163
      %3237 = vmatprep.subr.mxu0 0.0
      %3238 = vmatpush2.msra.mxu0 %v3162
      %3239 = vmatprep.subr.mxu0 0.0
      %3240 = vmatpush2.msra.mxu0 %v3161
      %3241 = vmatprep.subr.mxu0 0.0
      %3242 = vmatpush2.msra.mxu0 %v3160
      %3243 = vmatprep.subr.mxu0 0.0
      %3244 = vmatpush2.msra.mxu0 %v3159
      %3245 = vmatprep.subr.mxu0 0.0
      %3246 = vmatpush2.msra.mxu0 %v3158
      %3247 = vmatprep.subr.mxu0 0.0
      %3248 = vmatpush2.msra.mxu0 %v3157
      %3249 = vmatprep.subr.mxu0 0.0
      %3250 = vmatpush2.msra.mxu0 %v3156
      %3251 = vmatprep.subr.mxu0 0.0
      %3252 = vmatpush2.msra.mxu0 %v3155
      %3253 = vmatprep.mubr.f32.mxu0 %v3180
      %3254 = vmatmul.mubr.f32.gmra.mxu0 %v3177
      %v3255 = vpop.f32.mrf.mxu0
      %v3256 = vadd.f32 0.0, %v3255
      %v3257 = vpop.f32.mrf.mxu0
      %3258 = vmatprep.mubr.f32.mxu0 %v3184
      %3259 = vmatmul.mubr.f32.gmra.mxu0 %v3182
      %v3260 = vpop.f32.mrf.mxu0
      %v3261 = vadd.f32 0.0, %v3260
      %v3262 = vpop.f32.mrf.mxu0
      %3263 = vdwg.mxu0
      %v3264 = vadd.f32 %v3132, %v3256
      %v3265 = vadd.f32 %v3133, %v3261
      %v3266 = vld [vmem:[%s138 + $0x40] sm:$0xff]
      %v3267 = vld [vmem:[%s138 + $0x48] sm:$0xff]
      %s3268 = scalar_lea.vmem %s1, 6144
      %v3269 = vld [vmem:[%s3268] sm:$0xff]
      %v3270 = vld [vmem:[%s3268 + $0x8] sm:$0xff]
      %v3271 = vld [vmem:[%s3268 + $0x10] sm:$0xff]
      %v3272 = vld [vmem:[%s3268 + $0x18] sm:$0xff]
      %v3273 = vld [vmem:[%s3268 + $0x20] sm:$0xff]
      %v3274 = vld [vmem:[%s3268 + $0x28] sm:$0xff]
      %v3275 = vld [vmem:[%s3268 + $0x30] sm:$0xff]
      %v3276 = vld [vmem:[%s3268 + $0x38] sm:$0xff]
      %v3277 = vld [vmem:[%s3268 + $0x40] sm:$0xff]
      %v3278 = vld [vmem:[%s3268 + $0x48] sm:$0xff]
      %v3279 = vld [vmem:[%s3268 + $0x50] sm:$0xff]
      %v3280 = vld [vmem:[%s3268 + $0x58] sm:$0xff]
      %v3281 = vld [vmem:[%s3268 + $0x60] sm:$0xff]
      %v3282 = vld [vmem:[%s3268 + $0x68] sm:$0xff]
      %v3283 = vld [vmem:[%s3268 + $0x70] sm:$0xff]
      %v3284 = vld [vmem:[%s3268 + $0x78] sm:$0xff]
      %v3285 = vld [vmem:[%s3268 + $0x80] sm:$0xff]
      %v3286 = vld [vmem:[%s3268 + $0x88] sm:$0xff]
      %v3287 = vld [vmem:[%s3268 + $0x90] sm:$0xff]
      %v3288 = vld [vmem:[%s3268 + $0x98] sm:$0xff]
      %v3289 = vld [vmem:[%s3268 + $0xa0] sm:$0xff]
      %v3290 = vld [vmem:[%s3268 + $0xa8] sm:$0xff]
      %v3291 = vld [vmem:[%s3268 + $0xb0] sm:$0xff]
      %v3292 = vld [vmem:[%s3268 + $0xb8] sm:$0xff]
      %v3293 = vld [vmem:[%s3268 + $0xc0] sm:$0xff]
      %v3294 = vld [vmem:[%s3268 + $0xc8] sm:$0xff]
      %v3295 = vld [vmem:[%s3268 + $0xd0] sm:$0xff]
      %v3296 = vld [vmem:[%s3268 + $0xd8] sm:$0xff]
      %v3297 = vld [vmem:[%s3268 + $0xe0] sm:$0xff]
      %v3298 = vld [vmem:[%s3268 + $0xe8] sm:$0xff]
      %v3299 = vld [vmem:[%s3268 + $0xf0] sm:$0xff]
      %v3300 = vld [vmem:[%s3268 + $0xf8] sm:$0xff]
      %3301 = vmatprep.subr.mxu0 0.0
      %3302 = vmatpush1.msra.mxu0 %v3284
      %3303 = vmatprep.subr.mxu0 0.0
      %3304 = vmatpush1.msra.mxu0 %v3283
      %3305 = vmatprep.subr.mxu0 0.0
      %3306 = vmatpush1.msra.mxu0 %v3282
      %3307 = vmatprep.subr.mxu0 0.0
      %3308 = vmatpush1.msra.mxu0 %v3281
      %3309 = vmatprep.subr.mxu0 0.0
      %3310 = vmatpush1.msra.mxu0 %v3280
      %3311 = vmatprep.subr.mxu0 0.0
      %3312 = vmatpush1.msra.mxu0 %v3279
      %3313 = vmatprep.subr.mxu0 0.0
      %3314 = vmatpush1.msra.mxu0 %v3278
      %3315 = vmatprep.subr.mxu0 0.0
      %3316 = vmatpush1.msra.mxu0 %v3277
      %3317 = vmatprep.subr.mxu0 0.0
      %3318 = vmatpush1.msra.mxu0 %v3276
      %3319 = vmatprep.subr.mxu0 0.0
      %3320 = vmatpush1.msra.mxu0 %v3275
      %3321 = vmatprep.subr.mxu0 0.0
      %3322 = vmatpush1.msra.mxu0 %v3274
      %3323 = vmatprep.subr.mxu0 0.0
      %3324 = vmatpush1.msra.mxu0 %v3273
      %3325 = vmatprep.subr.mxu0 0.0
      %3326 = vmatpush1.msra.mxu0 %v3272
      %3327 = vmatprep.subr.mxu0 0.0
      %3328 = vmatpush1.msra.mxu0 %v3271
      %3329 = vmatprep.subr.mxu0 0.0
      %3330 = vmatpush1.msra.mxu0 %v3270
      %3331 = vmatprep.subr.mxu0 0.0
      %3332 = vmatpush1.msra.mxu0 %v3269
      %3333 = vmatprep.subr.mxu0 0.0
      %3334 = vmatpush2.msra.mxu0 %v3300
      %3335 = vmatprep.subr.mxu0 0.0
      %3336 = vmatpush2.msra.mxu0 %v3299
      %3337 = vmatprep.subr.mxu0 0.0
      %3338 = vmatpush2.msra.mxu0 %v3298
      %3339 = vmatprep.subr.mxu0 0.0
      %3340 = vmatpush2.msra.mxu0 %v3297
      %3341 = vmatprep.subr.mxu0 0.0
      %3342 = vmatpush2.msra.mxu0 %v3296
      %3343 = vmatprep.subr.mxu0 0.0
      %3344 = vmatpush2.msra.mxu0 %v3295
      %3345 = vmatprep.subr.mxu0 0.0
      %3346 = vmatpush2.msra.mxu0 %v3294
      %3347 = vmatprep.subr.mxu0 0.0
      %3348 = vmatpush2.msra.mxu0 %v3293
      %3349 = vmatprep.subr.mxu0 0.0
      %3350 = vmatpush2.msra.mxu0 %v3292
      %3351 = vmatprep.subr.mxu0 0.0
      %3352 = vmatpush2.msra.mxu0 %v3291
      %3353 = vmatprep.subr.mxu0 0.0
      %3354 = vmatpush2.msra.mxu0 %v3290
      %3355 = vmatprep.subr.mxu0 0.0
      %3356 = vmatpush2.msra.mxu0 %v3289
      %3357 = vmatprep.subr.mxu0 0.0
      %3358 = vmatpush2.msra.mxu0 %v3288
      %3359 = vmatprep.subr.mxu0 0.0
      %3360 = vmatpush2.msra.mxu0 %v3287
      %3361 = vmatprep.subr.mxu0 0.0
      %3362 = vmatpush2.msra.mxu0 %v3286
      %3363 = vmatprep.subr.mxu0 0.0
      %3364 = vmatpush2.msra.mxu0 %v3285
      %3365 = vmatprep.mubr.f32.mxu0 %v2341
      %3366 = vmatmul.mubr.f32.gmra.mxu0 %v2340
      %v3367 = vpop.f32.mrf.mxu0
      %v3368 = vadd.f32 0.0, %v3367
      %v3369 = vpop.f32.mrf.mxu0
      %3370 = vmatprep.mubr.f32.mxu0 %v3267
      %3371 = vmatmul.mubr.f32.gmra.mxu0 %v3266
      %v3372 = vpop.f32.mrf.mxu0
      %v3373 = vadd.f32 0.0, %v3372
      %v3374 = vpop.f32.mrf.mxu0
      %3375 = vdwg.mxu0
      %v3376 = vadd.f32 %v3264, %v3368
      %v3377 = vadd.f32 %v3265, %v3373
      %v3378 = vld [vmem:[%s138 + $0x30] sm:$0xfe]
      %v3379 = vld [vmem:[%s138 + $0x38] sm:$0xfe]
      %v3380 = vld [vmem:[%s138 + $0x40] sm:$0xff]
      %v3381 = vld [vmem:[%s138 + $0x48] sm:$0xff]
      %v3382 = vld [vmem:[%s138 + $0x50] sm:$0x1]
      %v3383 = vld [vmem:[%s138 + $0x58] sm:$0x1]
      %s3384 = scalar_lea.vmem %s1, 6400
      %v3385 = vld [vmem:[%s3384] sm:$0xff]
      %v3386 = vld [vmem:[%s3384 + $0x8] sm:$0xff]
      %v3387 = vld [vmem:[%s3384 + $0x10] sm:$0xff]
      %v3388 = vld [vmem:[%s3384 + $0x18] sm:$0xff]
      %v3389 = vld [vmem:[%s3384 + $0x20] sm:$0xff]
      %v3390 = vld [vmem:[%s3384 + $0x28] sm:$0xff]
      %v3391 = vld [vmem:[%s3384 + $0x30] sm:$0xff]
      %v3392 = vld [vmem:[%s3384 + $0x38] sm:$0xff]
      %v3393 = vld [vmem:[%s3384 + $0x40] sm:$0xff]
      %v3394 = vld [vmem:[%s3384 + $0x48] sm:$0xff]
      %v3395 = vld [vmem:[%s3384 + $0x50] sm:$0xff]
      %v3396 = vld [vmem:[%s3384 + $0x58] sm:$0xff]
      %v3397 = vld [vmem:[%s3384 + $0x60] sm:$0xff]
      %v3398 = vld [vmem:[%s3384 + $0x68] sm:$0xff]
      %v3399 = vld [vmem:[%s3384 + $0x70] sm:$0xff]
      %v3400 = vld [vmem:[%s3384 + $0x78] sm:$0xff]
      %v3401 = vld [vmem:[%s3384 + $0x80] sm:$0xff]
      %v3402 = vld [vmem:[%s3384 + $0x88] sm:$0xff]
      %v3403 = vld [vmem:[%s3384 + $0x90] sm:$0xff]
      %v3404 = vld [vmem:[%s3384 + $0x98] sm:$0xff]
      %v3405 = vld [vmem:[%s3384 + $0xa0] sm:$0xff]
      %v3406 = vld [vmem:[%s3384 + $0xa8] sm:$0xff]
      %v3407 = vld [vmem:[%s3384 + $0xb0] sm:$0xff]
      %v3408 = vld [vmem:[%s3384 + $0xb8] sm:$0xff]
      %v3409 = vld [vmem:[%s3384 + $0xc0] sm:$0xff]
      %v3410 = vld [vmem:[%s3384 + $0xc8] sm:$0xff]
      %v3411 = vld [vmem:[%s3384 + $0xd0] sm:$0xff]
      %v3412 = vld [vmem:[%s3384 + $0xd8] sm:$0xff]
      %v3413 = vld [vmem:[%s3384 + $0xe0] sm:$0xff]
      %v3414 = vld [vmem:[%s3384 + $0xe8] sm:$0xff]
      %v3415 = vld [vmem:[%s3384 + $0xf0] sm:$0xff]
      %v3416 = vld [vmem:[%s3384 + $0xf8] sm:$0xff]
      %v3423 = vrot.slane %v3378, 1
      %v3424 = vrot.slane %v3380, 1
      %v3425 = vsel %vm223, %v3423, %v3424
      %v3426 = vrot.slane %v3379, 1
      %v3427 = vrot.slane %v3381, 1
      %v3428 = vsel %vm223, %v3426, %v3427
      %v3429 = vrot.slane %v3382, 1
      %v3430 = vsel %vm223, %v3424, %v3429
      %v3431 = vrot.slane %v3383, 1
      %v3432 = vsel %vm223, %v3427, %v3431
      %3437 = vmatprep.subr.mxu0 0.0
      %3438 = vmatpush1.msra.mxu0 %v3400
      %3439 = vmatprep.subr.mxu0 0.0
      %3440 = vmatpush1.msra.mxu0 %v3399
      %3441 = vmatprep.subr.mxu0 0.0
      %3442 = vmatpush1.msra.mxu0 %v3398
      %3443 = vmatprep.subr.mxu0 0.0
      %3444 = vmatpush1.msra.mxu0 %v3397
      %3445 = vmatprep.subr.mxu0 0.0
      %3446 = vmatpush1.msra.mxu0 %v3396
      %3447 = vmatprep.subr.mxu0 0.0
      %3448 = vmatpush1.msra.mxu0 %v3395
      %3449 = vmatprep.subr.mxu0 0.0
      %3450 = vmatpush1.msra.mxu0 %v3394
      %3451 = vmatprep.subr.mxu0 0.0
      %3452 = vmatpush1.msra.mxu0 %v3393
      %3453 = vmatprep.subr.mxu0 0.0
      %3454 = vmatpush1.msra.mxu0 %v3392
      %3455 = vmatprep.subr.mxu0 0.0
      %3456 = vmatpush1.msra.mxu0 %v3391
      %3457 = vmatprep.subr.mxu0 0.0
      %3458 = vmatpush1.msra.mxu0 %v3390
      %3459 = vmatprep.subr.mxu0 0.0
      %3460 = vmatpush1.msra.mxu0 %v3389
      %3461 = vmatprep.subr.mxu0 0.0
      %3462 = vmatpush1.msra.mxu0 %v3388
      %3463 = vmatprep.subr.mxu0 0.0
      %3464 = vmatpush1.msra.mxu0 %v3387
      %3465 = vmatprep.subr.mxu0 0.0
      %3466 = vmatpush1.msra.mxu0 %v3386
      %3467 = vmatprep.subr.mxu0 0.0
      %3468 = vmatpush1.msra.mxu0 %v3385
      %3469 = vmatprep.subr.mxu0 0.0
      %3470 = vmatpush2.msra.mxu0 %v3416
      %3471 = vmatprep.subr.mxu0 0.0
      %3472 = vmatpush2.msra.mxu0 %v3415
      %3473 = vmatprep.subr.mxu0 0.0
      %3474 = vmatpush2.msra.mxu0 %v3414
      %3475 = vmatprep.subr.mxu0 0.0
      %3476 = vmatpush2.msra.mxu0 %v3413
      %3477 = vmatprep.subr.mxu0 0.0
      %3478 = vmatpush2.msra.mxu0 %v3412
      %3479 = vmatprep.subr.mxu0 0.0
      %3480 = vmatpush2.msra.mxu0 %v3411
      %3481 = vmatprep.subr.mxu0 0.0
      %3482 = vmatpush2.msra.mxu0 %v3410
      %3483 = vmatprep.subr.mxu0 0.0
      %3484 = vmatpush2.msra.mxu0 %v3409
      %3485 = vmatprep.subr.mxu0 0.0
      %3486 = vmatpush2.msra.mxu0 %v3408
      %3487 = vmatprep.subr.mxu0 0.0
      %3488 = vmatpush2.msra.mxu0 %v3407
      %3489 = vmatprep.subr.mxu0 0.0
      %3490 = vmatpush2.msra.mxu0 %v3406
      %3491 = vmatprep.subr.mxu0 0.0
      %3492 = vmatpush2.msra.mxu0 %v3405
      %3493 = vmatprep.subr.mxu0 0.0
      %3494 = vmatpush2.msra.mxu0 %v3404
      %3495 = vmatprep.subr.mxu0 0.0
      %3496 = vmatpush2.msra.mxu0 %v3403
      %3497 = vmatprep.subr.mxu0 0.0
      %3498 = vmatpush2.msra.mxu0 %v3402
      %3499 = vmatprep.subr.mxu0 0.0
      %3500 = vmatpush2.msra.mxu0 %v3401
      %3501 = vmatprep.mubr.f32.mxu0 %v3428
      %3502 = vmatmul.mubr.f32.gmra.mxu0 %v3425
      %v3503 = vpop.f32.mrf.mxu0
      %v3504 = vadd.f32 0.0, %v3503
      %v3505 = vpop.f32.mrf.mxu0
      %3506 = vmatprep.mubr.f32.mxu0 %v3432
      %3507 = vmatmul.mubr.f32.gmra.mxu0 %v3430
      %v3508 = vpop.f32.mrf.mxu0
      %v3509 = vadd.f32 0.0, %v3508
      %v3510 = vpop.f32.mrf.mxu0
      %3511 = vdwg.mxu0
      %v3512 = vadd.f32 %v3376, %v3504
      %v3513 = vadd.f32 %v3377, %v3509
      %v3514 = vld [vmem:[%s138 + $0x30] sm:$0xfc]
      %v3515 = vld [vmem:[%s138 + $0x38] sm:$0xfc]
      %v3516 = vld [vmem:[%s138 + $0x50] sm:$0x3]
      %v3517 = vld [vmem:[%s138 + $0x58] sm:$0x3]
      %s3518 = scalar_lea.vmem %s1, 6656
      %v3519 = vld [vmem:[%s3518] sm:$0xff]
      %v3520 = vld [vmem:[%s3518 + $0x8] sm:$0xff]
      %v3521 = vld [vmem:[%s3518 + $0x10] sm:$0xff]
      %v3522 = vld [vmem:[%s3518 + $0x18] sm:$0xff]
      %v3523 = vld [vmem:[%s3518 + $0x20] sm:$0xff]
      %v3524 = vld [vmem:[%s3518 + $0x28] sm:$0xff]
      %v3525 = vld [vmem:[%s3518 + $0x30] sm:$0xff]
      %v3526 = vld [vmem:[%s3518 + $0x38] sm:$0xff]
      %v3527 = vld [vmem:[%s3518 + $0x40] sm:$0xff]
      %v3528 = vld [vmem:[%s3518 + $0x48] sm:$0xff]
      %v3529 = vld [vmem:[%s3518 + $0x50] sm:$0xff]
      %v3530 = vld [vmem:[%s3518 + $0x58] sm:$0xff]
      %v3531 = vld [vmem:[%s3518 + $0x60] sm:$0xff]
      %v3532 = vld [vmem:[%s3518 + $0x68] sm:$0xff]
      %v3533 = vld [vmem:[%s3518 + $0x70] sm:$0xff]
      %v3534 = vld [vmem:[%s3518 + $0x78] sm:$0xff]
      %v3535 = vld [vmem:[%s3518 + $0x80] sm:$0xff]
      %v3536 = vld [vmem:[%s3518 + $0x88] sm:$0xff]
      %v3537 = vld [vmem:[%s3518 + $0x90] sm:$0xff]
      %v3538 = vld [vmem:[%s3518 + $0x98] sm:$0xff]
      %v3539 = vld [vmem:[%s3518 + $0xa0] sm:$0xff]
      %v3540 = vld [vmem:[%s3518 + $0xa8] sm:$0xff]
      %v3541 = vld [vmem:[%s3518 + $0xb0] sm:$0xff]
      %v3542 = vld [vmem:[%s3518 + $0xb8] sm:$0xff]
      %v3543 = vld [vmem:[%s3518 + $0xc0] sm:$0xff]
      %v3544 = vld [vmem:[%s3518 + $0xc8] sm:$0xff]
      %v3545 = vld [vmem:[%s3518 + $0xd0] sm:$0xff]
      %v3546 = vld [vmem:[%s3518 + $0xd8] sm:$0xff]
      %v3547 = vld [vmem:[%s3518 + $0xe0] sm:$0xff]
      %v3548 = vld [vmem:[%s3518 + $0xe8] sm:$0xff]
      %v3549 = vld [vmem:[%s3518 + $0xf0] sm:$0xff]
      %v3550 = vld [vmem:[%s3518 + $0xf8] sm:$0xff]
      %v3555 = vrot.slane %v3514, 2
      %v3556 = vrot.slane %v3380, 2
      %v3557 = vsel %vm429, %v3555, %v3556
      %v3558 = vrot.slane %v3515, 2
      %v3559 = vrot.slane %v3381, 2
      %v3560 = vsel %vm429, %v3558, %v3559
      %v3561 = vrot.slane %v3516, 2
      %v3562 = vsel %vm429, %v3556, %v3561
      %v3563 = vrot.slane %v3517, 2
      %v3564 = vsel %vm429, %v3559, %v3563
      %3569 = vmatprep.subr.mxu0 0.0
      %3570 = vmatpush1.msra.mxu0 %v3534
      %3571 = vmatprep.subr.mxu0 0.0
      %3572 = vmatpush1.msra.mxu0 %v3533
      %3573 = vmatprep.subr.mxu0 0.0
      %3574 = vmatpush1.msra.mxu0 %v3532
      %3575 = vmatprep.subr.mxu0 0.0
      %3576 = vmatpush1.msra.mxu0 %v3531
      %3577 = vmatprep.subr.mxu0 0.0
      %3578 = vmatpush1.msra.mxu0 %v3530
      %3579 = vmatprep.subr.mxu0 0.0
      %3580 = vmatpush1.msra.mxu0 %v3529
      %3581 = vmatprep.subr.mxu0 0.0
      %3582 = vmatpush1.msra.mxu0 %v3528
      %3583 = vmatprep.subr.mxu0 0.0
      %3584 = vmatpush1.msra.mxu0 %v3527
      %3585 = vmatprep.subr.mxu0 0.0
      %3586 = vmatpush1.msra.mxu0 %v3526
      %3587 = vmatprep.subr.mxu0 0.0
      %3588 = vmatpush1.msra.mxu0 %v3525
      %3589 = vmatprep.subr.mxu0 0.0
      %3590 = vmatpush1.msra.mxu0 %v3524
      %3591 = vmatprep.subr.mxu0 0.0
      %3592 = vmatpush1.msra.mxu0 %v3523
      %3593 = vmatprep.subr.mxu0 0.0
      %3594 = vmatpush1.msra.mxu0 %v3522
      %3595 = vmatprep.subr.mxu0 0.0
      %3596 = vmatpush1.msra.mxu0 %v3521
      %3597 = vmatprep.subr.mxu0 0.0
      %3598 = vmatpush1.msra.mxu0 %v3520
      %3599 = vmatprep.subr.mxu0 0.0
      %3600 = vmatpush1.msra.mxu0 %v3519
      %3601 = vmatprep.subr.mxu0 0.0
      %3602 = vmatpush2.msra.mxu0 %v3550
      %3603 = vmatprep.subr.mxu0 0.0
      %3604 = vmatpush2.msra.mxu0 %v3549
      %3605 = vmatprep.subr.mxu0 0.0
      %3606 = vmatpush2.msra.mxu0 %v3548
      %3607 = vmatprep.subr.mxu0 0.0
      %3608 = vmatpush2.msra.mxu0 %v3547
      %3609 = vmatprep.subr.mxu0 0.0
      %3610 = vmatpush2.msra.mxu0 %v3546
      %3611 = vmatprep.subr.mxu0 0.0
      %3612 = vmatpush2.msra.mxu0 %v3545
      %3613 = vmatprep.subr.mxu0 0.0
      %3614 = vmatpush2.msra.mxu0 %v3544
      %3615 = vmatprep.subr.mxu0 0.0
      %3616 = vmatpush2.msra.mxu0 %v3543
      %3617 = vmatprep.subr.mxu0 0.0
      %3618 = vmatpush2.msra.mxu0 %v3542
      %3619 = vmatprep.subr.mxu0 0.0
      %3620 = vmatpush2.msra.mxu0 %v3541
      %3621 = vmatprep.subr.mxu0 0.0
      %3622 = vmatpush2.msra.mxu0 %v3540
      %3623 = vmatprep.subr.mxu0 0.0
      %3624 = vmatpush2.msra.mxu0 %v3539
      %3625 = vmatprep.subr.mxu0 0.0
      %3626 = vmatpush2.msra.mxu0 %v3538
      %3627 = vmatprep.subr.mxu0 0.0
      %3628 = vmatpush2.msra.mxu0 %v3537
      %3629 = vmatprep.subr.mxu0 0.0
      %3630 = vmatpush2.msra.mxu0 %v3536
      %3631 = vmatprep.subr.mxu0 0.0
      %3632 = vmatpush2.msra.mxu0 %v3535
      %3633 = vmatprep.mubr.f32.mxu0 %v3560
      %3634 = vmatmul.mubr.f32.gmra.mxu0 %v3557
      %v3635 = vpop.f32.mrf.mxu0
      %v3636 = vadd.f32 0.0, %v3635
      %v3637 = vpop.f32.mrf.mxu0
      %3638 = vmatprep.mubr.f32.mxu0 %v3564
      %3639 = vmatmul.mubr.f32.gmra.mxu0 %v3562
      %v3640 = vpop.f32.mrf.mxu0
      %v3641 = vadd.f32 0.0, %v3640
      %v3642 = vpop.f32.mrf.mxu0
      %3643 = vdwg.mxu0
      %v3644 = vadd.f32 %v3512, %v3636
      %v3645 = vadd.f32 %v3513, %v3641
      %v3646 = vld [vmem:[%s138 + $0x30] sm:$0xf8]
      %v3647 = vld [vmem:[%s138 + $0x38] sm:$0xf8]
      %v3648 = vld [vmem:[%s138 + $0x50] sm:$0x7]
      %v3649 = vld [vmem:[%s138 + $0x58] sm:$0x7]
      %s3650 = scalar_lea.vmem %s1, 6912
      %v3651 = vld [vmem:[%s3650] sm:$0xff]
      %v3652 = vld [vmem:[%s3650 + $0x8] sm:$0xff]
      %v3653 = vld [vmem:[%s3650 + $0x10] sm:$0xff]
      %v3654 = vld [vmem:[%s3650 + $0x18] sm:$0xff]
      %v3655 = vld [vmem:[%s3650 + $0x20] sm:$0xff]
      %v3656 = vld [vmem:[%s3650 + $0x28] sm:$0xff]
      %v3657 = vld [vmem:[%s3650 + $0x30] sm:$0xff]
      %v3658 = vld [vmem:[%s3650 + $0x38] sm:$0xff]
      %v3659 = vld [vmem:[%s3650 + $0x40] sm:$0xff]
      %v3660 = vld [vmem:[%s3650 + $0x48] sm:$0xff]
      %v3661 = vld [vmem:[%s3650 + $0x50] sm:$0xff]
      %v3662 = vld [vmem:[%s3650 + $0x58] sm:$0xff]
      %v3663 = vld [vmem:[%s3650 + $0x60] sm:$0xff]
      %v3664 = vld [vmem:[%s3650 + $0x68] sm:$0xff]
      %v3665 = vld [vmem:[%s3650 + $0x70] sm:$0xff]
      %v3666 = vld [vmem:[%s3650 + $0x78] sm:$0xff]
      %v3667 = vld [vmem:[%s3650 + $0x80] sm:$0xff]
      %v3668 = vld [vmem:[%s3650 + $0x88] sm:$0xff]
      %v3669 = vld [vmem:[%s3650 + $0x90] sm:$0xff]
      %v3670 = vld [vmem:[%s3650 + $0x98] sm:$0xff]
      %v3671 = vld [vmem:[%s3650 + $0xa0] sm:$0xff]
      %v3672 = vld [vmem:[%s3650 + $0xa8] sm:$0xff]
      %v3673 = vld [vmem:[%s3650 + $0xb0] sm:$0xff]
      %v3674 = vld [vmem:[%s3650 + $0xb8] sm:$0xff]
      %v3675 = vld [vmem:[%s3650 + $0xc0] sm:$0xff]
      %v3676 = vld [vmem:[%s3650 + $0xc8] sm:$0xff]
      %v3677 = vld [vmem:[%s3650 + $0xd0] sm:$0xff]
      %v3678 = vld [vmem:[%s3650 + $0xd8] sm:$0xff]
      %v3679 = vld [vmem:[%s3650 + $0xe0] sm:$0xff]
      %v3680 = vld [vmem:[%s3650 + $0xe8] sm:$0xff]
      %v3681 = vld [vmem:[%s3650 + $0xf0] sm:$0xff]
      %v3682 = vld [vmem:[%s3650 + $0xf8] sm:$0xff]
      %v3687 = vrot.slane %v3646, 3
      %v3688 = vrot.slane %v3380, 3
      %v3689 = vsel %vm562, %v3687, %v3688
      %v3690 = vrot.slane %v3647, 3
      %v3691 = vrot.slane %v3381, 3
      %v3692 = vsel %vm562, %v3690, %v3691
      %v3693 = vrot.slane %v3648, 3
      %v3694 = vsel %vm562, %v3688, %v3693
      %v3695 = vrot.slane %v3649, 3
      %v3696 = vsel %vm562, %v3691, %v3695
      %3701 = vmatprep.subr.mxu0 0.0
      %3702 = vmatpush1.msra.mxu0 %v3666
      %3703 = vmatprep.subr.mxu0 0.0
      %3704 = vmatpush1.msra.mxu0 %v3665
      %3705 = vmatprep.subr.mxu0 0.0
      %3706 = vmatpush1.msra.mxu0 %v3664
      %3707 = vmatprep.subr.mxu0 0.0
      %3708 = vmatpush1.msra.mxu0 %v3663
      %3709 = vmatprep.subr.mxu0 0.0
      %3710 = vmatpush1.msra.mxu0 %v3662
      %3711 = vmatprep.subr.mxu0 0.0
      %3712 = vmatpush1.msra.mxu0 %v3661
      %3713 = vmatprep.subr.mxu0 0.0
      %3714 = vmatpush1.msra.mxu0 %v3660
      %3715 = vmatprep.subr.mxu0 0.0
      %3716 = vmatpush1.msra.mxu0 %v3659
      %3717 = vmatprep.subr.mxu0 0.0
      %3718 = vmatpush1.msra.mxu0 %v3658
      %3719 = vmatprep.subr.mxu0 0.0
      %3720 = vmatpush1.msra.mxu0 %v3657
      %3721 = vmatprep.subr.mxu0 0.0
      %3722 = vmatpush1.msra.mxu0 %v3656
      %3723 = vmatprep.subr.mxu0 0.0
      %3724 = vmatpush1.msra.mxu0 %v3655
      %3725 = vmatprep.subr.mxu0 0.0
      %3726 = vmatpush1.msra.mxu0 %v3654
      %3727 = vmatprep.subr.mxu0 0.0
      %3728 = vmatpush1.msra.mxu0 %v3653
      %3729 = vmatprep.subr.mxu0 0.0
      %3730 = vmatpush1.msra.mxu0 %v3652
      %3731 = vmatprep.subr.mxu0 0.0
      %3732 = vmatpush1.msra.mxu0 %v3651
      %3733 = vmatprep.subr.mxu0 0.0
      %3734 = vmatpush2.msra.mxu0 %v3682
      %3735 = vmatprep.subr.mxu0 0.0
      %3736 = vmatpush2.msra.mxu0 %v3681
      %3737 = vmatprep.subr.mxu0 0.0
      %3738 = vmatpush2.msra.mxu0 %v3680
      %3739 = vmatprep.subr.mxu0 0.0
      %3740 = vmatpush2.msra.mxu0 %v3679
      %3741 = vmatprep.subr.mxu0 0.0
      %3742 = vmatpush2.msra.mxu0 %v3678
      %3743 = vmatprep.subr.mxu0 0.0
      %3744 = vmatpush2.msra.mxu0 %v3677
      %3745 = vmatprep.subr.mxu0 0.0
      %3746 = vmatpush2.msra.mxu0 %v3676
      %3747 = vmatprep.subr.mxu0 0.0
      %3748 = vmatpush2.msra.mxu0 %v3675
      %3749 = vmatprep.subr.mxu0 0.0
      %3750 = vmatpush2.msra.mxu0 %v3674
      %3751 = vmatprep.subr.mxu0 0.0
      %3752 = vmatpush2.msra.mxu0 %v3673
      %3753 = vmatprep.subr.mxu0 0.0
      %3754 = vmatpush2.msra.mxu0 %v3672
      %3755 = vmatprep.subr.mxu0 0.0
      %3756 = vmatpush2.msra.mxu0 %v3671
      %3757 = vmatprep.subr.mxu0 0.0
      %3758 = vmatpush2.msra.mxu0 %v3670
      %3759 = vmatprep.subr.mxu0 0.0
      %3760 = vmatpush2.msra.mxu0 %v3669
      %3761 = vmatprep.subr.mxu0 0.0
      %3762 = vmatpush2.msra.mxu0 %v3668
      %3763 = vmatprep.subr.mxu0 0.0
      %3764 = vmatpush2.msra.mxu0 %v3667
      %3765 = vmatprep.mubr.f32.mxu0 %v3692
      %3766 = vmatmul.mubr.f32.gmra.mxu0 %v3689
      %v3767 = vpop.f32.mrf.mxu0
      %v3768 = vadd.f32 0.0, %v3767
      %v3769 = vpop.f32.mrf.mxu0
      %3770 = vmatprep.mubr.f32.mxu0 %v3696
      %3771 = vmatmul.mubr.f32.gmra.mxu0 %v3694
      %v3772 = vpop.f32.mrf.mxu0
      %v3773 = vadd.f32 0.0, %v3772
      %v3774 = vpop.f32.mrf.mxu0
      %3775 = vdwg.mxu0
      %v3776 = vadd.f32 %v3644, %v3768
      %v3777 = vadd.f32 %v3645, %v3773
      %v3778 = vld [vmem:[%s138 + $0x30] sm:$0xf0]
      %v3779 = vld [vmem:[%s138 + $0x38] sm:$0xf0]
      %v3780 = vld [vmem:[%s138 + $0x50] sm:$0xf]
      %v3781 = vld [vmem:[%s138 + $0x58] sm:$0xf]
      %s3782 = scalar_lea.vmem %s1, 7168
      %v3783 = vld [vmem:[%s3782] sm:$0xff]
      %v3784 = vld [vmem:[%s3782 + $0x8] sm:$0xff]
      %v3785 = vld [vmem:[%s3782 + $0x10] sm:$0xff]
      %v3786 = vld [vmem:[%s3782 + $0x18] sm:$0xff]
      %v3787 = vld [vmem:[%s3782 + $0x20] sm:$0xff]
      %v3788 = vld [vmem:[%s3782 + $0x28] sm:$0xff]
      %v3789 = vld [vmem:[%s3782 + $0x30] sm:$0xff]
      %v3790 = vld [vmem:[%s3782 + $0x38] sm:$0xff]
      %v3791 = vld [vmem:[%s3782 + $0x40] sm:$0xff]
      %v3792 = vld [vmem:[%s3782 + $0x48] sm:$0xff]
      %v3793 = vld [vmem:[%s3782 + $0x50] sm:$0xff]
      %v3794 = vld [vmem:[%s3782 + $0x58] sm:$0xff]
      %v3795 = vld [vmem:[%s3782 + $0x60] sm:$0xff]
      %v3796 = vld [vmem:[%s3782 + $0x68] sm:$0xff]
      %v3797 = vld [vmem:[%s3782 + $0x70] sm:$0xff]
      %v3798 = vld [vmem:[%s3782 + $0x78] sm:$0xff]
      %v3799 = vld [vmem:[%s3782 + $0x80] sm:$0xff]
      %v3800 = vld [vmem:[%s3782 + $0x88] sm:$0xff]
      %v3801 = vld [vmem:[%s3782 + $0x90] sm:$0xff]
      %v3802 = vld [vmem:[%s3782 + $0x98] sm:$0xff]
      %v3803 = vld [vmem:[%s3782 + $0xa0] sm:$0xff]
      %v3804 = vld [vmem:[%s3782 + $0xa8] sm:$0xff]
      %v3805 = vld [vmem:[%s3782 + $0xb0] sm:$0xff]
      %v3806 = vld [vmem:[%s3782 + $0xb8] sm:$0xff]
      %v3807 = vld [vmem:[%s3782 + $0xc0] sm:$0xff]
      %v3808 = vld [vmem:[%s3782 + $0xc8] sm:$0xff]
      %v3809 = vld [vmem:[%s3782 + $0xd0] sm:$0xff]
      %v3810 = vld [vmem:[%s3782 + $0xd8] sm:$0xff]
      %v3811 = vld [vmem:[%s3782 + $0xe0] sm:$0xff]
      %v3812 = vld [vmem:[%s3782 + $0xe8] sm:$0xff]
      %v3813 = vld [vmem:[%s3782 + $0xf0] sm:$0xff]
      %v3814 = vld [vmem:[%s3782 + $0xf8] sm:$0xff]
      %v3819 = vrot.slane %v3778, 4
      %v3820 = vrot.slane %v3380, 4
      %v3821 = vsel %vm695, %v3819, %v3820
      %v3822 = vrot.slane %v3779, 4
      %v3823 = vrot.slane %v3381, 4
      %v3824 = vsel %vm695, %v3822, %v3823
      %v3825 = vrot.slane %v3780, 4
      %v3826 = vsel %vm695, %v3820, %v3825
      %v3827 = vrot.slane %v3781, 4
      %v3828 = vsel %vm695, %v3823, %v3827
      %3833 = vmatprep.subr.mxu0 0.0
      %3834 = vmatpush1.msra.mxu0 %v3798
      %3835 = vmatprep.subr.mxu0 0.0
      %3836 = vmatpush1.msra.mxu0 %v3797
      %3837 = vmatprep.subr.mxu0 0.0
      %3838 = vmatpush1.msra.mxu0 %v3796
      %3839 = vmatprep.subr.mxu0 0.0
      %3840 = vmatpush1.msra.mxu0 %v3795
      %3841 = vmatprep.subr.mxu0 0.0
      %3842 = vmatpush1.msra.mxu0 %v3794
      %3843 = vmatprep.subr.mxu0 0.0
      %3844 = vmatpush1.msra.mxu0 %v3793
      %3845 = vmatprep.subr.mxu0 0.0
      %3846 = vmatpush1.msra.mxu0 %v3792
      %3847 = vmatprep.subr.mxu0 0.0
      %3848 = vmatpush1.msra.mxu0 %v3791
      %3849 = vmatprep.subr.mxu0 0.0
      %3850 = vmatpush1.msra.mxu0 %v3790
      %3851 = vmatprep.subr.mxu0 0.0
      %3852 = vmatpush1.msra.mxu0 %v3789
      %3853 = vmatprep.subr.mxu0 0.0
      %3854 = vmatpush1.msra.mxu0 %v3788
      %3855 = vmatprep.subr.mxu0 0.0
      %3856 = vmatpush1.msra.mxu0 %v3787
      %3857 = vmatprep.subr.mxu0 0.0
      %3858 = vmatpush1.msra.mxu0 %v3786
      %3859 = vmatprep.subr.mxu0 0.0
      %3860 = vmatpush1.msra.mxu0 %v3785
      %3861 = vmatprep.subr.mxu0 0.0
      %3862 = vmatpush1.msra.mxu0 %v3784
      %3863 = vmatprep.subr.mxu0 0.0
      %3864 = vmatpush1.msra.mxu0 %v3783
      %3865 = vmatprep.subr.mxu0 0.0
      %3866 = vmatpush2.msra.mxu0 %v3814
      %3867 = vmatprep.subr.mxu0 0.0
      %3868 = vmatpush2.msra.mxu0 %v3813
      %3869 = vmatprep.subr.mxu0 0.0
      %3870 = vmatpush2.msra.mxu0 %v3812
      %3871 = vmatprep.subr.mxu0 0.0
      %3872 = vmatpush2.msra.mxu0 %v3811
      %3873 = vmatprep.subr.mxu0 0.0
      %3874 = vmatpush2.msra.mxu0 %v3810
      %3875 = vmatprep.subr.mxu0 0.0
      %3876 = vmatpush2.msra.mxu0 %v3809
      %3877 = vmatprep.subr.mxu0 0.0
      %3878 = vmatpush2.msra.mxu0 %v3808
      %3879 = vmatprep.subr.mxu0 0.0
      %3880 = vmatpush2.msra.mxu0 %v3807
      %3881 = vmatprep.subr.mxu0 0.0
      %3882 = vmatpush2.msra.mxu0 %v3806
      %3883 = vmatprep.subr.mxu0 0.0
      %3884 = vmatpush2.msra.mxu0 %v3805
      %3885 = vmatprep.subr.mxu0 0.0
      %3886 = vmatpush2.msra.mxu0 %v3804
      %3887 = vmatprep.subr.mxu0 0.0
      %3888 = vmatpush2.msra.mxu0 %v3803
      %3889 = vmatprep.subr.mxu0 0.0
      %3890 = vmatpush2.msra.mxu0 %v3802
      %3891 = vmatprep.subr.mxu0 0.0
      %3892 = vmatpush2.msra.mxu0 %v3801
      %3893 = vmatprep.subr.mxu0 0.0
      %3894 = vmatpush2.msra.mxu0 %v3800
      %3895 = vmatprep.subr.mxu0 0.0
      %3896 = vmatpush2.msra.mxu0 %v3799
      %3897 = vmatprep.mubr.f32.mxu0 %v3824
      %3898 = vmatmul.mubr.f32.gmra.mxu0 %v3821
      %v3899 = vpop.f32.mrf.mxu0
      %v3900 = vadd.f32 0.0, %v3899
      %v3901 = vpop.f32.mrf.mxu0
      %3902 = vmatprep.mubr.f32.mxu0 %v3828
      %3903 = vmatmul.mubr.f32.gmra.mxu0 %v3826
      %v3904 = vpop.f32.mrf.mxu0
      %v3905 = vadd.f32 0.0, %v3904
      %v3906 = vpop.f32.mrf.mxu0
      %3907 = vdwg.mxu0
      %v3908 = vadd.f32 %v3776, %v3900
      %v3909 = vadd.f32 %v3777, %v3905
      %v3910 = vld [vmem:[%s138 + $0x30] sm:$0xe0]
      %v3911 = vld [vmem:[%s138 + $0x38] sm:$0xe0]
      %v3912 = vld [vmem:[%s138 + $0x50] sm:$0x1f]
      %v3913 = vld [vmem:[%s138 + $0x58] sm:$0x1f]
      %s3914 = scalar_lea.vmem %s1, 7424
      %v3915 = vld [vmem:[%s3914] sm:$0xff]
      %v3916 = vld [vmem:[%s3914 + $0x8] sm:$0xff]
      %v3917 = vld [vmem:[%s3914 + $0x10] sm:$0xff]
      %v3918 = vld [vmem:[%s3914 + $0x18] sm:$0xff]
      %v3919 = vld [vmem:[%s3914 + $0x20] sm:$0xff]
      %v3920 = vld [vmem:[%s3914 + $0x28] sm:$0xff]
      %v3921 = vld [vmem:[%s3914 + $0x30] sm:$0xff]
      %v3922 = vld [vmem:[%s3914 + $0x38] sm:$0xff]
      %v3923 = vld [vmem:[%s3914 + $0x40] sm:$0xff]
      %v3924 = vld [vmem:[%s3914 + $0x48] sm:$0xff]
      %v3925 = vld [vmem:[%s3914 + $0x50] sm:$0xff]
      %v3926 = vld [vmem:[%s3914 + $0x58] sm:$0xff]
      %v3927 = vld [vmem:[%s3914 + $0x60] sm:$0xff]
      %v3928 = vld [vmem:[%s3914 + $0x68] sm:$0xff]
      %v3929 = vld [vmem:[%s3914 + $0x70] sm:$0xff]
      %v3930 = vld [vmem:[%s3914 + $0x78] sm:$0xff]
      %v3931 = vld [vmem:[%s3914 + $0x80] sm:$0xff]
      %v3932 = vld [vmem:[%s3914 + $0x88] sm:$0xff]
      %v3933 = vld [vmem:[%s3914 + $0x90] sm:$0xff]
      %v3934 = vld [vmem:[%s3914 + $0x98] sm:$0xff]
      %v3935 = vld [vmem:[%s3914 + $0xa0] sm:$0xff]
      %v3936 = vld [vmem:[%s3914 + $0xa8] sm:$0xff]
      %v3937 = vld [vmem:[%s3914 + $0xb0] sm:$0xff]
      %v3938 = vld [vmem:[%s3914 + $0xb8] sm:$0xff]
      %v3939 = vld [vmem:[%s3914 + $0xc0] sm:$0xff]
      %v3940 = vld [vmem:[%s3914 + $0xc8] sm:$0xff]
      %v3941 = vld [vmem:[%s3914 + $0xd0] sm:$0xff]
      %v3942 = vld [vmem:[%s3914 + $0xd8] sm:$0xff]
      %v3943 = vld [vmem:[%s3914 + $0xe0] sm:$0xff]
      %v3944 = vld [vmem:[%s3914 + $0xe8] sm:$0xff]
      %v3945 = vld [vmem:[%s3914 + $0xf0] sm:$0xff]
      %v3946 = vld [vmem:[%s3914 + $0xf8] sm:$0xff]
      %v3951 = vrot.slane %v3910, 5
      %v3952 = vrot.slane %v3380, 5
      %v3953 = vsel %vm828, %v3951, %v3952
      %v3954 = vrot.slane %v3911, 5
      %v3955 = vrot.slane %v3381, 5
      %v3956 = vsel %vm828, %v3954, %v3955
      %v3957 = vrot.slane %v3912, 5
      %v3958 = vsel %vm828, %v3952, %v3957
      %v3959 = vrot.slane %v3913, 5
      %v3960 = vsel %vm828, %v3955, %v3959
      %3965 = vmatprep.subr.mxu0 0.0
      %3966 = vmatpush1.msra.mxu0 %v3930
      %3967 = vmatprep.subr.mxu0 0.0
      %3968 = vmatpush1.msra.mxu0 %v3929
      %3969 = vmatprep.subr.mxu0 0.0
      %3970 = vmatpush1.msra.mxu0 %v3928
      %3971 = vmatprep.subr.mxu0 0.0
      %3972 = vmatpush1.msra.mxu0 %v3927
      %3973 = vmatprep.subr.mxu0 0.0
      %3974 = vmatpush1.msra.mxu0 %v3926
      %3975 = vmatprep.subr.mxu0 0.0
      %3976 = vmatpush1.msra.mxu0 %v3925
      %3977 = vmatprep.subr.mxu0 0.0
      %3978 = vmatpush1.msra.mxu0 %v3924
      %3979 = vmatprep.subr.mxu0 0.0
      %3980 = vmatpush1.msra.mxu0 %v3923
      %3981 = vmatprep.subr.mxu0 0.0
      %3982 = vmatpush1.msra.mxu0 %v3922
      %3983 = vmatprep.subr.mxu0 0.0
      %3984 = vmatpush1.msra.mxu0 %v3921
      %3985 = vmatprep.subr.mxu0 0.0
      %3986 = vmatpush1.msra.mxu0 %v3920
      %3987 = vmatprep.subr.mxu0 0.0
      %3988 = vmatpush1.msra.mxu0 %v3919
      %3989 = vmatprep.subr.mxu0 0.0
      %3990 = vmatpush1.msra.mxu0 %v3918
      %3991 = vmatprep.subr.mxu0 0.0
      %3992 = vmatpush1.msra.mxu0 %v3917
      %3993 = vmatprep.subr.mxu0 0.0
      %3994 = vmatpush1.msra.mxu0 %v3916
      %3995 = vmatprep.subr.mxu0 0.0
      %3996 = vmatpush1.msra.mxu0 %v3915
      %3997 = vmatprep.subr.mxu0 0.0
      %3998 = vmatpush2.msra.mxu0 %v3946
      %3999 = vmatprep.subr.mxu0 0.0
      %4000 = vmatpush2.msra.mxu0 %v3945
      %4001 = vmatprep.subr.mxu0 0.0
      %4002 = vmatpush2.msra.mxu0 %v3944
      %4003 = vmatprep.subr.mxu0 0.0
      %4004 = vmatpush2.msra.mxu0 %v3943
      %4005 = vmatprep.subr.mxu0 0.0
      %4006 = vmatpush2.msra.mxu0 %v3942
      %4007 = vmatprep.subr.mxu0 0.0
      %4008 = vmatpush2.msra.mxu0 %v3941
      %4009 = vmatprep.subr.mxu0 0.0
      %4010 = vmatpush2.msra.mxu0 %v3940
      %4011 = vmatprep.subr.mxu0 0.0
      %4012 = vmatpush2.msra.mxu0 %v3939
      %4013 = vmatprep.subr.mxu0 0.0
      %4014 = vmatpush2.msra.mxu0 %v3938
      %4015 = vmatprep.subr.mxu0 0.0
      %4016 = vmatpush2.msra.mxu0 %v3937
      %4017 = vmatprep.subr.mxu0 0.0
      %4018 = vmatpush2.msra.mxu0 %v3936
      %4019 = vmatprep.subr.mxu0 0.0
      %4020 = vmatpush2.msra.mxu0 %v3935
      %4021 = vmatprep.subr.mxu0 0.0
      %4022 = vmatpush2.msra.mxu0 %v3934
      %4023 = vmatprep.subr.mxu0 0.0
      %4024 = vmatpush2.msra.mxu0 %v3933
      %4025 = vmatprep.subr.mxu0 0.0
      %4026 = vmatpush2.msra.mxu0 %v3932
      %4027 = vmatprep.subr.mxu0 0.0
      %4028 = vmatpush2.msra.mxu0 %v3931
      %4029 = vmatprep.mubr.f32.mxu0 %v3956
      %4030 = vmatmul.mubr.f32.gmra.mxu0 %v3953
      %v4031 = vpop.f32.mrf.mxu0
      %v4032 = vadd.f32 0.0, %v4031
      %v4033 = vpop.f32.mrf.mxu0
      %4034 = vmatprep.mubr.f32.mxu0 %v3960
      %4035 = vmatmul.mubr.f32.gmra.mxu0 %v3958
      %v4036 = vpop.f32.mrf.mxu0
      %v4037 = vadd.f32 0.0, %v4036
      %v4038 = vpop.f32.mrf.mxu0
      %4039 = vdwg.mxu0
      %v4040 = vadd.f32 %v3908, %v4032
      %v4041 = vadd.f32 %v3909, %v4037
      %v4042 = vld [vmem:[%s138 + $0x30] sm:$0xc0]
      %v4043 = vld [vmem:[%s138 + $0x38] sm:$0xc0]
      %v4044 = vld [vmem:[%s138 + $0x50] sm:$0x3f]
      %v4045 = vld [vmem:[%s138 + $0x58] sm:$0x3f]
      %s4046 = scalar_lea.vmem %s1, 7680
      %v4047 = vld [vmem:[%s4046] sm:$0xff]
      %v4048 = vld [vmem:[%s4046 + $0x8] sm:$0xff]
      %v4049 = vld [vmem:[%s4046 + $0x10] sm:$0xff]
      %v4050 = vld [vmem:[%s4046 + $0x18] sm:$0xff]
      %v4051 = vld [vmem:[%s4046 + $0x20] sm:$0xff]
      %v4052 = vld [vmem:[%s4046 + $0x28] sm:$0xff]
      %v4053 = vld [vmem:[%s4046 + $0x30] sm:$0xff]
      %v4054 = vld [vmem:[%s4046 + $0x38] sm:$0xff]
      %v4055 = vld [vmem:[%s4046 + $0x40] sm:$0xff]
      %v4056 = vld [vmem:[%s4046 + $0x48] sm:$0xff]
      %v4057 = vld [vmem:[%s4046 + $0x50] sm:$0xff]
      %v4058 = vld [vmem:[%s4046 + $0x58] sm:$0xff]
      %v4059 = vld [vmem:[%s4046 + $0x60] sm:$0xff]
      %v4060 = vld [vmem:[%s4046 + $0x68] sm:$0xff]
      %v4061 = vld [vmem:[%s4046 + $0x70] sm:$0xff]
      %v4062 = vld [vmem:[%s4046 + $0x78] sm:$0xff]
      %v4063 = vld [vmem:[%s4046 + $0x80] sm:$0xff]
      %v4064 = vld [vmem:[%s4046 + $0x88] sm:$0xff]
      %v4065 = vld [vmem:[%s4046 + $0x90] sm:$0xff]
      %v4066 = vld [vmem:[%s4046 + $0x98] sm:$0xff]
      %v4067 = vld [vmem:[%s4046 + $0xa0] sm:$0xff]
      %v4068 = vld [vmem:[%s4046 + $0xa8] sm:$0xff]
      %v4069 = vld [vmem:[%s4046 + $0xb0] sm:$0xff]
      %v4070 = vld [vmem:[%s4046 + $0xb8] sm:$0xff]
      %v4071 = vld [vmem:[%s4046 + $0xc0] sm:$0xff]
      %v4072 = vld [vmem:[%s4046 + $0xc8] sm:$0xff]
      %v4073 = vld [vmem:[%s4046 + $0xd0] sm:$0xff]
      %v4074 = vld [vmem:[%s4046 + $0xd8] sm:$0xff]
      %v4075 = vld [vmem:[%s4046 + $0xe0] sm:$0xff]
      %v4076 = vld [vmem:[%s4046 + $0xe8] sm:$0xff]
      %v4077 = vld [vmem:[%s4046 + $0xf0] sm:$0xff]
      %v4078 = vld [vmem:[%s4046 + $0xf8] sm:$0xff]
      %v4083 = vrot.slane %v4042, 6
      %v4084 = vrot.slane %v3380, 6
      %v4085 = vsel %vm961, %v4083, %v4084
      %v4086 = vrot.slane %v4043, 6
      %v4087 = vrot.slane %v3381, 6
      %v4088 = vsel %vm961, %v4086, %v4087
      %v4089 = vrot.slane %v4044, 6
      %v4090 = vsel %vm961, %v4084, %v4089
      %v4091 = vrot.slane %v4045, 6
      %v4092 = vsel %vm961, %v4087, %v4091
      %4097 = vmatprep.subr.mxu0 0.0
      %4098 = vmatpush1.msra.mxu0 %v4062
      %4099 = vmatprep.subr.mxu0 0.0
      %4100 = vmatpush1.msra.mxu0 %v4061
      %4101 = vmatprep.subr.mxu0 0.0
      %4102 = vmatpush1.msra.mxu0 %v4060
      %4103 = vmatprep.subr.mxu0 0.0
      %4104 = vmatpush1.msra.mxu0 %v4059
      %4105 = vmatprep.subr.mxu0 0.0
      %4106 = vmatpush1.msra.mxu0 %v4058
      %4107 = vmatprep.subr.mxu0 0.0
      %4108 = vmatpush1.msra.mxu0 %v4057
      %4109 = vmatprep.subr.mxu0 0.0
      %4110 = vmatpush1.msra.mxu0 %v4056
      %4111 = vmatprep.subr.mxu0 0.0
      %4112 = vmatpush1.msra.mxu0 %v4055
      %4113 = vmatprep.subr.mxu0 0.0
      %4114 = vmatpush1.msra.mxu0 %v4054
      %4115 = vmatprep.subr.mxu0 0.0
      %4116 = vmatpush1.msra.mxu0 %v4053
      %4117 = vmatprep.subr.mxu0 0.0
      %4118 = vmatpush1.msra.mxu0 %v4052
      %4119 = vmatprep.subr.mxu0 0.0
      %4120 = vmatpush1.msra.mxu0 %v4051
      %4121 = vmatprep.subr.mxu0 0.0
      %4122 = vmatpush1.msra.mxu0 %v4050
      %4123 = vmatprep.subr.mxu0 0.0
      %4124 = vmatpush1.msra.mxu0 %v4049
      %4125 = vmatprep.subr.mxu0 0.0
      %4126 = vmatpush1.msra.mxu0 %v4048
      %4127 = vmatprep.subr.mxu0 0.0
      %4128 = vmatpush1.msra.mxu0 %v4047
      %4129 = vmatprep.subr.mxu0 0.0
      %4130 = vmatpush2.msra.mxu0 %v4078
      %4131 = vmatprep.subr.mxu0 0.0
      %4132 = vmatpush2.msra.mxu0 %v4077
      %4133 = vmatprep.subr.mxu0 0.0
      %4134 = vmatpush2.msra.mxu0 %v4076
      %4135 = vmatprep.subr.mxu0 0.0
      %4136 = vmatpush2.msra.mxu0 %v4075
      %4137 = vmatprep.subr.mxu0 0.0
      %4138 = vmatpush2.msra.mxu0 %v4074
      %4139 = vmatprep.subr.mxu0 0.0
      %4140 = vmatpush2.msra.mxu0 %v4073
      %4141 = vmatprep.subr.mxu0 0.0
      %4142 = vmatpush2.msra.mxu0 %v4072
      %4143 = vmatprep.subr.mxu0 0.0
      %4144 = vmatpush2.msra.mxu0 %v4071
      %4145 = vmatprep.subr.mxu0 0.0
      %4146 = vmatpush2.msra.mxu0 %v4070
      %4147 = vmatprep.subr.mxu0 0.0
      %4148 = vmatpush2.msra.mxu0 %v4069
      %4149 = vmatprep.subr.mxu0 0.0
      %4150 = vmatpush2.msra.mxu0 %v4068
      %4151 = vmatprep.subr.mxu0 0.0
      %4152 = vmatpush2.msra.mxu0 %v4067
      %4153 = vmatprep.subr.mxu0 0.0
      %4154 = vmatpush2.msra.mxu0 %v4066
      %4155 = vmatprep.subr.mxu0 0.0
      %4156 = vmatpush2.msra.mxu0 %v4065
      %4157 = vmatprep.subr.mxu0 0.0
      %4158 = vmatpush2.msra.mxu0 %v4064
      %4159 = vmatprep.subr.mxu0 0.0
      %4160 = vmatpush2.msra.mxu0 %v4063
      %4161 = vmatprep.mubr.f32.mxu0 %v4088
      %4162 = vmatmul.mubr.f32.gmra.mxu0 %v4085
      %v4163 = vpop.f32.mrf.mxu0
      %v4164 = vadd.f32 0.0, %v4163
      %v4165 = vpop.f32.mrf.mxu0
      %4166 = vmatprep.mubr.f32.mxu0 %v4092
      %4167 = vmatmul.mubr.f32.gmra.mxu0 %v4090
      %v4168 = vpop.f32.mrf.mxu0
      %v4169 = vadd.f32 0.0, %v4168
      %v4170 = vpop.f32.mrf.mxu0
      %4171 = vdwg.mxu0
      %v4172 = vadd.f32 %v4040, %v4164
      %v4173 = vadd.f32 %v4041, %v4169
      %v4174 = vld [vmem:[%s138 + $0x30] sm:$0x80]
      %v4175 = vld [vmem:[%s138 + $0x38] sm:$0x80]
      %v4176 = vld [vmem:[%s138 + $0x50] sm:$0x7f]
      %v4177 = vld [vmem:[%s138 + $0x58] sm:$0x7f]
      %s4178 = scalar_lea.vmem %s1, 7936
      %v4179 = vld [vmem:[%s4178] sm:$0xff]
      %v4180 = vld [vmem:[%s4178 + $0x8] sm:$0xff]
      %v4181 = vld [vmem:[%s4178 + $0x10] sm:$0xff]
      %v4182 = vld [vmem:[%s4178 + $0x18] sm:$0xff]
      %v4183 = vld [vmem:[%s4178 + $0x20] sm:$0xff]
      %v4184 = vld [vmem:[%s4178 + $0x28] sm:$0xff]
      %v4185 = vld [vmem:[%s4178 + $0x30] sm:$0xff]
      %v4186 = vld [vmem:[%s4178 + $0x38] sm:$0xff]
      %v4187 = vld [vmem:[%s4178 + $0x40] sm:$0xff]
      %v4188 = vld [vmem:[%s4178 + $0x48] sm:$0xff]
      %v4189 = vld [vmem:[%s4178 + $0x50] sm:$0xff]
      %v4190 = vld [vmem:[%s4178 + $0x58] sm:$0xff]
      %v4191 = vld [vmem:[%s4178 + $0x60] sm:$0xff]
      %v4192 = vld [vmem:[%s4178 + $0x68] sm:$0xff]
      %v4193 = vld [vmem:[%s4178 + $0x70] sm:$0xff]
      %v4194 = vld [vmem:[%s4178 + $0x78] sm:$0xff]
      %v4195 = vld [vmem:[%s4178 + $0x80] sm:$0xff]
      %v4196 = vld [vmem:[%s4178 + $0x88] sm:$0xff]
      %v4197 = vld [vmem:[%s4178 + $0x90] sm:$0xff]
      %v4198 = vld [vmem:[%s4178 + $0x98] sm:$0xff]
      %v4199 = vld [vmem:[%s4178 + $0xa0] sm:$0xff]
      %v4200 = vld [vmem:[%s4178 + $0xa8] sm:$0xff]
      %v4201 = vld [vmem:[%s4178 + $0xb0] sm:$0xff]
      %v4202 = vld [vmem:[%s4178 + $0xb8] sm:$0xff]
      %v4203 = vld [vmem:[%s4178 + $0xc0] sm:$0xff]
      %v4204 = vld [vmem:[%s4178 + $0xc8] sm:$0xff]
      %v4205 = vld [vmem:[%s4178 + $0xd0] sm:$0xff]
      %v4206 = vld [vmem:[%s4178 + $0xd8] sm:$0xff]
      %v4207 = vld [vmem:[%s4178 + $0xe0] sm:$0xff]
      %v4208 = vld [vmem:[%s4178 + $0xe8] sm:$0xff]
      %v4209 = vld [vmem:[%s4178 + $0xf0] sm:$0xff]
      %v4210 = vld [vmem:[%s4178 + $0xf8] sm:$0xff]
      %v4215 = vrot.slane %v4174, 7
      %v4216 = vrot.slane %v3380, 7
      %v4217 = vsel %vm1094, %v4215, %v4216
      %v4218 = vrot.slane %v4175, 7
      %v4219 = vrot.slane %v3381, 7
      %v4220 = vsel %vm1094, %v4218, %v4219
      %v4221 = vrot.slane %v4176, 7
      %v4222 = vsel %vm1094, %v4216, %v4221
      %v4223 = vrot.slane %v4177, 7
      %v4224 = vsel %vm1094, %v4219, %v4223
      %4229 = vmatprep.subr.mxu0 0.0
      %4230 = vmatpush1.msra.mxu0 %v4194
      %4231 = vmatprep.subr.mxu0 0.0
      %4232 = vmatpush1.msra.mxu0 %v4193
      %4233 = vmatprep.subr.mxu0 0.0
      %4234 = vmatpush1.msra.mxu0 %v4192
      %4235 = vmatprep.subr.mxu0 0.0
      %4236 = vmatpush1.msra.mxu0 %v4191
      %4237 = vmatprep.subr.mxu0 0.0
      %4238 = vmatpush1.msra.mxu0 %v4190
      %4239 = vmatprep.subr.mxu0 0.0
      %4240 = vmatpush1.msra.mxu0 %v4189
      %4241 = vmatprep.subr.mxu0 0.0
      %4242 = vmatpush1.msra.mxu0 %v4188
      %4243 = vmatprep.subr.mxu0 0.0
      %4244 = vmatpush1.msra.mxu0 %v4187
      %4245 = vmatprep.subr.mxu0 0.0
      %4246 = vmatpush1.msra.mxu0 %v4186
      %4247 = vmatprep.subr.mxu0 0.0
      %4248 = vmatpush1.msra.mxu0 %v4185
      %4249 = vmatprep.subr.mxu0 0.0
      %4250 = vmatpush1.msra.mxu0 %v4184
      %4251 = vmatprep.subr.mxu0 0.0
      %4252 = vmatpush1.msra.mxu0 %v4183
      %4253 = vmatprep.subr.mxu0 0.0
      %4254 = vmatpush1.msra.mxu0 %v4182
      %4255 = vmatprep.subr.mxu0 0.0
      %4256 = vmatpush1.msra.mxu0 %v4181
      %4257 = vmatprep.subr.mxu0 0.0
      %4258 = vmatpush1.msra.mxu0 %v4180
      %4259 = vmatprep.subr.mxu0 0.0
      %4260 = vmatpush1.msra.mxu0 %v4179
      %4261 = vmatprep.subr.mxu0 0.0
      %4262 = vmatpush2.msra.mxu0 %v4210
      %4263 = vmatprep.subr.mxu0 0.0
      %4264 = vmatpush2.msra.mxu0 %v4209
      %4265 = vmatprep.subr.mxu0 0.0
      %4266 = vmatpush2.msra.mxu0 %v4208
      %4267 = vmatprep.subr.mxu0 0.0
      %4268 = vmatpush2.msra.mxu0 %v4207
      %4269 = vmatprep.subr.mxu0 0.0
      %4270 = vmatpush2.msra.mxu0 %v4206
      %4271 = vmatprep.subr.mxu0 0.0
      %4272 = vmatpush2.msra.mxu0 %v4205
      %4273 = vmatprep.subr.mxu0 0.0
      %4274 = vmatpush2.msra.mxu0 %v4204
      %4275 = vmatprep.subr.mxu0 0.0
      %4276 = vmatpush2.msra.mxu0 %v4203
      %4277 = vmatprep.subr.mxu0 0.0
      %4278 = vmatpush2.msra.mxu0 %v4202
      %4279 = vmatprep.subr.mxu0 0.0
      %4280 = vmatpush2.msra.mxu0 %v4201
      %4281 = vmatprep.subr.mxu0 0.0
      %4282 = vmatpush2.msra.mxu0 %v4200
      %4283 = vmatprep.subr.mxu0 0.0
      %4284 = vmatpush2.msra.mxu0 %v4199
      %4285 = vmatprep.subr.mxu0 0.0
      %4286 = vmatpush2.msra.mxu0 %v4198
      %4287 = vmatprep.subr.mxu0 0.0
      %4288 = vmatpush2.msra.mxu0 %v4197
      %4289 = vmatprep.subr.mxu0 0.0
      %4290 = vmatpush2.msra.mxu0 %v4196
      %4291 = vmatprep.subr.mxu0 0.0
      %4292 = vmatpush2.msra.mxu0 %v4195
      %4293 = vmatprep.mubr.f32.mxu0 %v4220
      %4294 = vmatmul.mubr.f32.gmra.mxu0 %v4217
      %v4295 = vpop.f32.mrf.mxu0
      %v4296 = vadd.f32 0.0, %v4295
      %v4297 = vpop.f32.mrf.mxu0
      %4298 = vmatprep.mubr.f32.mxu0 %v4224
      %4299 = vmatmul.mubr.f32.gmra.mxu0 %v4222
      %v4300 = vpop.f32.mrf.mxu0
      %v4301 = vadd.f32 0.0, %v4300
      %v4302 = vpop.f32.mrf.mxu0
      %4303 = vdwg.mxu0
      %v4304 = vadd.f32 %v4172, %v4296
      %v4305 = vadd.f32 %v4173, %v4301
      %v4306 = vld [vmem:[%s138 + $0x50] sm:$0xff]
      %v4307 = vld [vmem:[%s138 + $0x58] sm:$0xff]
      %s4308 = scalar_lea.vmem %s1, 8192
      %v4309 = vld [vmem:[%s4308] sm:$0xff]
      %v4310 = vld [vmem:[%s4308 + $0x8] sm:$0xff]
      %v4311 = vld [vmem:[%s4308 + $0x10] sm:$0xff]
      %v4312 = vld [vmem:[%s4308 + $0x18] sm:$0xff]
      %v4313 = vld [vmem:[%s4308 + $0x20] sm:$0xff]
      %v4314 = vld [vmem:[%s4308 + $0x28] sm:$0xff]
      %v4315 = vld [vmem:[%s4308 + $0x30] sm:$0xff]
      %v4316 = vld [vmem:[%s4308 + $0x38] sm:$0xff]
      %v4317 = vld [vmem:[%s4308 + $0x40] sm:$0xff]
      %v4318 = vld [vmem:[%s4308 + $0x48] sm:$0xff]
      %v4319 = vld [vmem:[%s4308 + $0x50] sm:$0xff]
      %v4320 = vld [vmem:[%s4308 + $0x58] sm:$0xff]
      %v4321 = vld [vmem:[%s4308 + $0x60] sm:$0xff]
      %v4322 = vld [vmem:[%s4308 + $0x68] sm:$0xff]
      %v4323 = vld [vmem:[%s4308 + $0x70] sm:$0xff]
      %v4324 = vld [vmem:[%s4308 + $0x78] sm:$0xff]
      %v4325 = vld [vmem:[%s4308 + $0x80] sm:$0xff]
      %v4326 = vld [vmem:[%s4308 + $0x88] sm:$0xff]
      %v4327 = vld [vmem:[%s4308 + $0x90] sm:$0xff]
      %v4328 = vld [vmem:[%s4308 + $0x98] sm:$0xff]
      %v4329 = vld [vmem:[%s4308 + $0xa0] sm:$0xff]
      %v4330 = vld [vmem:[%s4308 + $0xa8] sm:$0xff]
      %v4331 = vld [vmem:[%s4308 + $0xb0] sm:$0xff]
      %v4332 = vld [vmem:[%s4308 + $0xb8] sm:$0xff]
      %v4333 = vld [vmem:[%s4308 + $0xc0] sm:$0xff]
      %v4334 = vld [vmem:[%s4308 + $0xc8] sm:$0xff]
      %v4335 = vld [vmem:[%s4308 + $0xd0] sm:$0xff]
      %v4336 = vld [vmem:[%s4308 + $0xd8] sm:$0xff]
      %v4337 = vld [vmem:[%s4308 + $0xe0] sm:$0xff]
      %v4338 = vld [vmem:[%s4308 + $0xe8] sm:$0xff]
      %v4339 = vld [vmem:[%s4308 + $0xf0] sm:$0xff]
      %v4340 = vld [vmem:[%s4308 + $0xf8] sm:$0xff]
      %4341 = vmatprep.subr.mxu0 0.0
      %4342 = vmatpush1.msra.mxu0 %v4324
      %4343 = vmatprep.subr.mxu0 0.0
      %4344 = vmatpush1.msra.mxu0 %v4323
      %4345 = vmatprep.subr.mxu0 0.0
      %4346 = vmatpush1.msra.mxu0 %v4322
      %4347 = vmatprep.subr.mxu0 0.0
      %4348 = vmatpush1.msra.mxu0 %v4321
      %4349 = vmatprep.subr.mxu0 0.0
      %4350 = vmatpush1.msra.mxu0 %v4320
      %4351 = vmatprep.subr.mxu0 0.0
      %4352 = vmatpush1.msra.mxu0 %v4319
      %4353 = vmatprep.subr.mxu0 0.0
      %4354 = vmatpush1.msra.mxu0 %v4318
      %4355 = vmatprep.subr.mxu0 0.0
      %4356 = vmatpush1.msra.mxu0 %v4317
      %4357 = vmatprep.subr.mxu0 0.0
      %4358 = vmatpush1.msra.mxu0 %v4316
      %4359 = vmatprep.subr.mxu0 0.0
      %4360 = vmatpush1.msra.mxu0 %v4315
      %4361 = vmatprep.subr.mxu0 0.0
      %4362 = vmatpush1.msra.mxu0 %v4314
      %4363 = vmatprep.subr.mxu0 0.0
      %4364 = vmatpush1.msra.mxu0 %v4313
      %4365 = vmatprep.subr.mxu0 0.0
      %4366 = vmatpush1.msra.mxu0 %v4312
      %4367 = vmatprep.subr.mxu0 0.0
      %4368 = vmatpush1.msra.mxu0 %v4311
      %4369 = vmatprep.subr.mxu0 0.0
      %4370 = vmatpush1.msra.mxu0 %v4310
      %4371 = vmatprep.subr.mxu0 0.0
      %4372 = vmatpush1.msra.mxu0 %v4309
      %4373 = vmatprep.subr.mxu0 0.0
      %4374 = vmatpush2.msra.mxu0 %v4340
      %4375 = vmatprep.subr.mxu0 0.0
      %4376 = vmatpush2.msra.mxu0 %v4339
      %4377 = vmatprep.subr.mxu0 0.0
      %4378 = vmatpush2.msra.mxu0 %v4338
      %4379 = vmatprep.subr.mxu0 0.0
      %4380 = vmatpush2.msra.mxu0 %v4337
      %4381 = vmatprep.subr.mxu0 0.0
      %4382 = vmatpush2.msra.mxu0 %v4336
      %4383 = vmatprep.subr.mxu0 0.0
      %4384 = vmatpush2.msra.mxu0 %v4335
      %4385 = vmatprep.subr.mxu0 0.0
      %4386 = vmatpush2.msra.mxu0 %v4334
      %4387 = vmatprep.subr.mxu0 0.0
      %4388 = vmatpush2.msra.mxu0 %v4333
      %4389 = vmatprep.subr.mxu0 0.0
      %4390 = vmatpush2.msra.mxu0 %v4332
      %4391 = vmatprep.subr.mxu0 0.0
      %4392 = vmatpush2.msra.mxu0 %v4331
      %4393 = vmatprep.subr.mxu0 0.0
      %4394 = vmatpush2.msra.mxu0 %v4330
      %4395 = vmatprep.subr.mxu0 0.0
      %4396 = vmatpush2.msra.mxu0 %v4329
      %4397 = vmatprep.subr.mxu0 0.0
      %4398 = vmatpush2.msra.mxu0 %v4328
      %4399 = vmatprep.subr.mxu0 0.0
      %4400 = vmatpush2.msra.mxu0 %v4327
      %4401 = vmatprep.subr.mxu0 0.0
      %4402 = vmatpush2.msra.mxu0 %v4326
      %4403 = vmatprep.subr.mxu0 0.0
      %4404 = vmatpush2.msra.mxu0 %v4325
      %4405 = vmatprep.mubr.f32.mxu0 %v3381
      %4406 = vmatmul.mubr.f32.gmra.mxu0 %v3380
      %v4407 = vpop.f32.mrf.mxu0
      %v4408 = vadd.f32 0.0, %v4407
      %v4409 = vpop.f32.mrf.mxu0
      %4410 = vmatprep.mubr.f32.mxu0 %v4307
      %4411 = vmatmul.mubr.f32.gmra.mxu0 %v4306
      %v4412 = vpop.f32.mrf.mxu0
      %v4413 = vadd.f32 0.0, %v4412
      %v4414 = vpop.f32.mrf.mxu0
      %4415 = vdwg.mxu0
      %v4416 = vadd.f32 %v4304, %v4408
      %v4417 = vadd.f32 %v4305, %v4413
      %v4418 = vld [vmem:[%s138 + $0x40] sm:$0xfe]
      %v4419 = vld [vmem:[%s138 + $0x48] sm:$0xfe]
      %v4420 = vld [vmem:[%s138 + $0x50] sm:$0xff]
      %v4421 = vld [vmem:[%s138 + $0x58] sm:$0xff]
      %v4422 = vld [vmem:[%s138 + $0x60] sm:$0x1]
      %v4423 = vld [vmem:[%s138 + $0x68] sm:$0x1]
      %s4424 = scalar_lea.vmem %s1, 8448
      %v4425 = vld [vmem:[%s4424] sm:$0xff]
      %v4426 = vld [vmem:[%s4424 + $0x8] sm:$0xff]
      %v4427 = vld [vmem:[%s4424 + $0x10] sm:$0xff]
      %v4428 = vld [vmem:[%s4424 + $0x18] sm:$0xff]
      %v4429 = vld [vmem:[%s4424 + $0x20] sm:$0xff]
      %v4430 = vld [vmem:[%s4424 + $0x28] sm:$0xff]
      %v4431 = vld [vmem:[%s4424 + $0x30] sm:$0xff]
      %v4432 = vld [vmem:[%s4424 + $0x38] sm:$0xff]
      %v4433 = vld [vmem:[%s4424 + $0x40] sm:$0xff]
      %v4434 = vld [vmem:[%s4424 + $0x48] sm:$0xff]
      %v4435 = vld [vmem:[%s4424 + $0x50] sm:$0xff]
      %v4436 = vld [vmem:[%s4424 + $0x58] sm:$0xff]
      %v4437 = vld [vmem:[%s4424 + $0x60] sm:$0xff]
      %v4438 = vld [vmem:[%s4424 + $0x68] sm:$0xff]
      %v4439 = vld [vmem:[%s4424 + $0x70] sm:$0xff]
      %v4440 = vld [vmem:[%s4424 + $0x78] sm:$0xff]
      %v4441 = vld [vmem:[%s4424 + $0x80] sm:$0xff]
      %v4442 = vld [vmem:[%s4424 + $0x88] sm:$0xff]
      %v4443 = vld [vmem:[%s4424 + $0x90] sm:$0xff]
      %v4444 = vld [vmem:[%s4424 + $0x98] sm:$0xff]
      %v4445 = vld [vmem:[%s4424 + $0xa0] sm:$0xff]
      %v4446 = vld [vmem:[%s4424 + $0xa8] sm:$0xff]
      %v4447 = vld [vmem:[%s4424 + $0xb0] sm:$0xff]
      %v4448 = vld [vmem:[%s4424 + $0xb8] sm:$0xff]
      %v4449 = vld [vmem:[%s4424 + $0xc0] sm:$0xff]
      %v4450 = vld [vmem:[%s4424 + $0xc8] sm:$0xff]
      %v4451 = vld [vmem:[%s4424 + $0xd0] sm:$0xff]
      %v4452 = vld [vmem:[%s4424 + $0xd8] sm:$0xff]
      %v4453 = vld [vmem:[%s4424 + $0xe0] sm:$0xff]
      %v4454 = vld [vmem:[%s4424 + $0xe8] sm:$0xff]
      %v4455 = vld [vmem:[%s4424 + $0xf0] sm:$0xff]
      %v4456 = vld [vmem:[%s4424 + $0xf8] sm:$0xff]
      %v4463 = vrot.slane %v4418, 1
      %v4464 = vrot.slane %v4420, 1
      %v4465 = vsel %vm223, %v4463, %v4464
      %v4466 = vrot.slane %v4419, 1
      %v4467 = vrot.slane %v4421, 1
      %v4468 = vsel %vm223, %v4466, %v4467
      %v4469 = vrot.slane %v4422, 1
      %v4470 = vsel %vm223, %v4464, %v4469
      %v4471 = vrot.slane %v4423, 1
      %v4472 = vsel %vm223, %v4467, %v4471
      %4477 = vmatprep.subr.mxu0 0.0
      %4478 = vmatpush1.msra.mxu0 %v4440
      %4479 = vmatprep.subr.mxu0 0.0
      %4480 = vmatpush1.msra.mxu0 %v4439
      %4481 = vmatprep.subr.mxu0 0.0
      %4482 = vmatpush1.msra.mxu0 %v4438
      %4483 = vmatprep.subr.mxu0 0.0
      %4484 = vmatpush1.msra.mxu0 %v4437
      %4485 = vmatprep.subr.mxu0 0.0
      %4486 = vmatpush1.msra.mxu0 %v4436
      %4487 = vmatprep.subr.mxu0 0.0
      %4488 = vmatpush1.msra.mxu0 %v4435
      %4489 = vmatprep.subr.mxu0 0.0
      %4490 = vmatpush1.msra.mxu0 %v4434
      %4491 = vmatprep.subr.mxu0 0.0
      %4492 = vmatpush1.msra.mxu0 %v4433
      %4493 = vmatprep.subr.mxu0 0.0
      %4494 = vmatpush1.msra.mxu0 %v4432
      %4495 = vmatprep.subr.mxu0 0.0
      %4496 = vmatpush1.msra.mxu0 %v4431
      %4497 = vmatprep.subr.mxu0 0.0
      %4498 = vmatpush1.msra.mxu0 %v4430
      %4499 = vmatprep.subr.mxu0 0.0
      %4500 = vmatpush1.msra.mxu0 %v4429
      %4501 = vmatprep.subr.mxu0 0.0
      %4502 = vmatpush1.msra.mxu0 %v4428
      %4503 = vmatprep.subr.mxu0 0.0
      %4504 = vmatpush1.msra.mxu0 %v4427
      %4505 = vmatprep.subr.mxu0 0.0
      %4506 = vmatpush1.msra.mxu0 %v4426
      %4507 = vmatprep.subr.mxu0 0.0
      %4508 = vmatpush1.msra.mxu0 %v4425
      %4509 = vmatprep.subr.mxu0 0.0
      %4510 = vmatpush2.msra.mxu0 %v4456
      %4511 = vmatprep.subr.mxu0 0.0
      %4512 = vmatpush2.msra.mxu0 %v4455
      %4513 = vmatprep.subr.mxu0 0.0
      %4514 = vmatpush2.msra.mxu0 %v4454
      %4515 = vmatprep.subr.mxu0 0.0
      %4516 = vmatpush2.msra.mxu0 %v4453
      %4517 = vmatprep.subr.mxu0 0.0
      %4518 = vmatpush2.msra.mxu0 %v4452
      %4519 = vmatprep.subr.mxu0 0.0
      %4520 = vmatpush2.msra.mxu0 %v4451
      %4521 = vmatprep.subr.mxu0 0.0
      %4522 = vmatpush2.msra.mxu0 %v4450
      %4523 = vmatprep.subr.mxu0 0.0
      %4524 = vmatpush2.msra.mxu0 %v4449
      %4525 = vmatprep.subr.mxu0 0.0
      %4526 = vmatpush2.msra.mxu0 %v4448
      %4527 = vmatprep.subr.mxu0 0.0
      %4528 = vmatpush2.msra.mxu0 %v4447
      %4529 = vmatprep.subr.mxu0 0.0
      %4530 = vmatpush2.msra.mxu0 %v4446
      %4531 = vmatprep.subr.mxu0 0.0
      %4532 = vmatpush2.msra.mxu0 %v4445
      %4533 = vmatprep.subr.mxu0 0.0
      %4534 = vmatpush2.msra.mxu0 %v4444
      %4535 = vmatprep.subr.mxu0 0.0
      %4536 = vmatpush2.msra.mxu0 %v4443
      %4537 = vmatprep.subr.mxu0 0.0
      %4538 = vmatpush2.msra.mxu0 %v4442
      %4539 = vmatprep.subr.mxu0 0.0
      %4540 = vmatpush2.msra.mxu0 %v4441
      %4541 = vmatprep.mubr.f32.mxu0 %v4468
      %4542 = vmatmul.mubr.f32.gmra.mxu0 %v4465
      %v4543 = vpop.f32.mrf.mxu0
      %v4544 = vadd.f32 0.0, %v4543
      %v4545 = vpop.f32.mrf.mxu0
      %4546 = vmatprep.mubr.f32.mxu0 %v4472
      %4547 = vmatmul.mubr.f32.gmra.mxu0 %v4470
      %v4548 = vpop.f32.mrf.mxu0
      %v4549 = vadd.f32 0.0, %v4548
      %v4550 = vpop.f32.mrf.mxu0
      %4551 = vdwg.mxu0
      %v4552 = vadd.f32 %v4416, %v4544
      %v4553 = vadd.f32 %v4417, %v4549
      %v4554 = vld [vmem:[%s138 + $0x40] sm:$0xfc]
      %v4555 = vld [vmem:[%s138 + $0x48] sm:$0xfc]
      %v4556 = vld [vmem:[%s138 + $0x60] sm:$0x3]
      %v4557 = vld [vmem:[%s138 + $0x68] sm:$0x3]
      %s4558 = scalar_lea.vmem %s1, 8704
      %v4559 = vld [vmem:[%s4558] sm:$0xff]
      %v4560 = vld [vmem:[%s4558 + $0x8] sm:$0xff]
      %v4561 = vld [vmem:[%s4558 + $0x10] sm:$0xff]
      %v4562 = vld [vmem:[%s4558 + $0x18] sm:$0xff]
      %v4563 = vld [vmem:[%s4558 + $0x20] sm:$0xff]
      %v4564 = vld [vmem:[%s4558 + $0x28] sm:$0xff]
      %v4565 = vld [vmem:[%s4558 + $0x30] sm:$0xff]
      %v4566 = vld [vmem:[%s4558 + $0x38] sm:$0xff]
      %v4567 = vld [vmem:[%s4558 + $0x40] sm:$0xff]
      %v4568 = vld [vmem:[%s4558 + $0x48] sm:$0xff]
      %v4569 = vld [vmem:[%s4558 + $0x50] sm:$0xff]
      %v4570 = vld [vmem:[%s4558 + $0x58] sm:$0xff]
      %v4571 = vld [vmem:[%s4558 + $0x60] sm:$0xff]
      %v4572 = vld [vmem:[%s4558 + $0x68] sm:$0xff]
      %v4573 = vld [vmem:[%s4558 + $0x70] sm:$0xff]
      %v4574 = vld [vmem:[%s4558 + $0x78] sm:$0xff]
      %v4575 = vld [vmem:[%s4558 + $0x80] sm:$0xff]
      %v4576 = vld [vmem:[%s4558 + $0x88] sm:$0xff]
      %v4577 = vld [vmem:[%s4558 + $0x90] sm:$0xff]
      %v4578 = vld [vmem:[%s4558 + $0x98] sm:$0xff]
      %v4579 = vld [vmem:[%s4558 + $0xa0] sm:$0xff]
      %v4580 = vld [vmem:[%s4558 + $0xa8] sm:$0xff]
      %v4581 = vld [vmem:[%s4558 + $0xb0] sm:$0xff]
      %v4582 = vld [vmem:[%s4558 + $0xb8] sm:$0xff]
      %v4583 = vld [vmem:[%s4558 + $0xc0] sm:$0xff]
      %v4584 = vld [vmem:[%s4558 + $0xc8] sm:$0xff]
      %v4585 = vld [vmem:[%s4558 + $0xd0] sm:$0xff]
      %v4586 = vld [vmem:[%s4558 + $0xd8] sm:$0xff]
      %v4587 = vld [vmem:[%s4558 + $0xe0] sm:$0xff]
      %v4588 = vld [vmem:[%s4558 + $0xe8] sm:$0xff]
      %v4589 = vld [vmem:[%s4558 + $0xf0] sm:$0xff]
      %v4590 = vld [vmem:[%s4558 + $0xf8] sm:$0xff]
      %v4595 = vrot.slane %v4554, 2
      %v4596 = vrot.slane %v4420, 2
      %v4597 = vsel %vm429, %v4595, %v4596
      %v4598 = vrot.slane %v4555, 2
      %v4599 = vrot.slane %v4421, 2
      %v4600 = vsel %vm429, %v4598, %v4599
      %v4601 = vrot.slane %v4556, 2
      %v4602 = vsel %vm429, %v4596, %v4601
      %v4603 = vrot.slane %v4557, 2
      %v4604 = vsel %vm429, %v4599, %v4603
      %4609 = vmatprep.subr.mxu0 0.0
      %4610 = vmatpush1.msra.mxu0 %v4574
      %4611 = vmatprep.subr.mxu0 0.0
      %4612 = vmatpush1.msra.mxu0 %v4573
      %4613 = vmatprep.subr.mxu0 0.0
      %4614 = vmatpush1.msra.mxu0 %v4572
      %4615 = vmatprep.subr.mxu0 0.0
      %4616 = vmatpush1.msra.mxu0 %v4571
      %4617 = vmatprep.subr.mxu0 0.0
      %4618 = vmatpush1.msra.mxu0 %v4570
      %4619 = vmatprep.subr.mxu0 0.0
      %4620 = vmatpush1.msra.mxu0 %v4569
      %4621 = vmatprep.subr.mxu0 0.0
      %4622 = vmatpush1.msra.mxu0 %v4568
      %4623 = vmatprep.subr.mxu0 0.0
      %4624 = vmatpush1.msra.mxu0 %v4567
      %4625 = vmatprep.subr.mxu0 0.0
      %4626 = vmatpush1.msra.mxu0 %v4566
      %4627 = vmatprep.subr.mxu0 0.0
      %4628 = vmatpush1.msra.mxu0 %v4565
      %4629 = vmatprep.subr.mxu0 0.0
      %4630 = vmatpush1.msra.mxu0 %v4564
      %4631 = vmatprep.subr.mxu0 0.0
      %4632 = vmatpush1.msra.mxu0 %v4563
      %4633 = vmatprep.subr.mxu0 0.0
      %4634 = vmatpush1.msra.mxu0 %v4562
      %4635 = vmatprep.subr.mxu0 0.0
      %4636 = vmatpush1.msra.mxu0 %v4561
      %4637 = vmatprep.subr.mxu0 0.0
      %4638 = vmatpush1.msra.mxu0 %v4560
      %4639 = vmatprep.subr.mxu0 0.0
      %4640 = vmatpush1.msra.mxu0 %v4559
      %4641 = vmatprep.subr.mxu0 0.0
      %4642 = vmatpush2.msra.mxu0 %v4590
      %4643 = vmatprep.subr.mxu0 0.0
      %4644 = vmatpush2.msra.mxu0 %v4589
      %4645 = vmatprep.subr.mxu0 0.0
      %4646 = vmatpush2.msra.mxu0 %v4588
      %4647 = vmatprep.subr.mxu0 0.0
      %4648 = vmatpush2.msra.mxu0 %v4587
      %4649 = vmatprep.subr.mxu0 0.0
      %4650 = vmatpush2.msra.mxu0 %v4586
      %4651 = vmatprep.subr.mxu0 0.0
      %4652 = vmatpush2.msra.mxu0 %v4585
      %4653 = vmatprep.subr.mxu0 0.0
      %4654 = vmatpush2.msra.mxu0 %v4584
      %4655 = vmatprep.subr.mxu0 0.0
      %4656 = vmatpush2.msra.mxu0 %v4583
      %4657 = vmatprep.subr.mxu0 0.0
      %4658 = vmatpush2.msra.mxu0 %v4582
      %4659 = vmatprep.subr.mxu0 0.0
      %4660 = vmatpush2.msra.mxu0 %v4581
      %4661 = vmatprep.subr.mxu0 0.0
      %4662 = vmatpush2.msra.mxu0 %v4580
      %4663 = vmatprep.subr.mxu0 0.0
      %4664 = vmatpush2.msra.mxu0 %v4579
      %4665 = vmatprep.subr.mxu0 0.0
      %4666 = vmatpush2.msra.mxu0 %v4578
      %4667 = vmatprep.subr.mxu0 0.0
      %4668 = vmatpush2.msra.mxu0 %v4577
      %4669 = vmatprep.subr.mxu0 0.0
      %4670 = vmatpush2.msra.mxu0 %v4576
      %4671 = vmatprep.subr.mxu0 0.0
      %4672 = vmatpush2.msra.mxu0 %v4575
      %4673 = vmatprep.mubr.f32.mxu0 %v4600
      %4674 = vmatmul.mubr.f32.gmra.mxu0 %v4597
      %v4675 = vpop.f32.mrf.mxu0
      %v4676 = vadd.f32 0.0, %v4675
      %v4677 = vpop.f32.mrf.mxu0
      %4678 = vmatprep.mubr.f32.mxu0 %v4604
      %4679 = vmatmul.mubr.f32.gmra.mxu0 %v4602
      %v4680 = vpop.f32.mrf.mxu0
      %v4681 = vadd.f32 0.0, %v4680
      %v4682 = vpop.f32.mrf.mxu0
      %4683 = vdwg.mxu0
      %v4684 = vadd.f32 %v4552, %v4676
      %v4685 = vadd.f32 %v4553, %v4681
      %v4686 = vld [vmem:[%s138 + $0x40] sm:$0xf8]
      %v4687 = vld [vmem:[%s138 + $0x48] sm:$0xf8]
      %v4688 = vld [vmem:[%s138 + $0x60] sm:$0x7]
      %v4689 = vld [vmem:[%s138 + $0x68] sm:$0x7]
      %s4690 = scalar_lea.vmem %s1, 8960
      %v4691 = vld [vmem:[%s4690] sm:$0xff]
      %v4692 = vld [vmem:[%s4690 + $0x8] sm:$0xff]
      %v4693 = vld [vmem:[%s4690 + $0x10] sm:$0xff]
      %v4694 = vld [vmem:[%s4690 + $0x18] sm:$0xff]
      %v4695 = vld [vmem:[%s4690 + $0x20] sm:$0xff]
      %v4696 = vld [vmem:[%s4690 + $0x28] sm:$0xff]
      %v4697 = vld [vmem:[%s4690 + $0x30] sm:$0xff]
      %v4698 = vld [vmem:[%s4690 + $0x38] sm:$0xff]
      %v4699 = vld [vmem:[%s4690 + $0x40] sm:$0xff]
      %v4700 = vld [vmem:[%s4690 + $0x48] sm:$0xff]
      %v4701 = vld [vmem:[%s4690 + $0x50] sm:$0xff]
      %v4702 = vld [vmem:[%s4690 + $0x58] sm:$0xff]
      %v4703 = vld [vmem:[%s4690 + $0x60] sm:$0xff]
      %v4704 = vld [vmem:[%s4690 + $0x68] sm:$0xff]
      %v4705 = vld [vmem:[%s4690 + $0x70] sm:$0xff]
      %v4706 = vld [vmem:[%s4690 + $0x78] sm:$0xff]
      %v4707 = vld [vmem:[%s4690 + $0x80] sm:$0xff]
      %v4708 = vld [vmem:[%s4690 + $0x88] sm:$0xff]
      %v4709 = vld [vmem:[%s4690 + $0x90] sm:$0xff]
      %v4710 = vld [vmem:[%s4690 + $0x98] sm:$0xff]
      %v4711 = vld [vmem:[%s4690 + $0xa0] sm:$0xff]
      %v4712 = vld [vmem:[%s4690 + $0xa8] sm:$0xff]
      %v4713 = vld [vmem:[%s4690 + $0xb0] sm:$0xff]
      %v4714 = vld [vmem:[%s4690 + $0xb8] sm:$0xff]
      %v4715 = vld [vmem:[%s4690 + $0xc0] sm:$0xff]
      %v4716 = vld [vmem:[%s4690 + $0xc8] sm:$0xff]
      %v4717 = vld [vmem:[%s4690 + $0xd0] sm:$0xff]
      %v4718 = vld [vmem:[%s4690 + $0xd8] sm:$0xff]
      %v4719 = vld [vmem:[%s4690 + $0xe0] sm:$0xff]
      %v4720 = vld [vmem:[%s4690 + $0xe8] sm:$0xff]
      %v4721 = vld [vmem:[%s4690 + $0xf0] sm:$0xff]
      %v4722 = vld [vmem:[%s4690 + $0xf8] sm:$0xff]
      %v4727 = vrot.slane %v4686, 3
      %v4728 = vrot.slane %v4420, 3
      %v4729 = vsel %vm562, %v4727, %v4728
      %v4730 = vrot.slane %v4687, 3
      %v4731 = vrot.slane %v4421, 3
      %v4732 = vsel %vm562, %v4730, %v4731
      %v4733 = vrot.slane %v4688, 3
      %v4734 = vsel %vm562, %v4728, %v4733
      %v4735 = vrot.slane %v4689, 3
      %v4736 = vsel %vm562, %v4731, %v4735
      %4741 = vmatprep.subr.mxu0 0.0
      %4742 = vmatpush1.msra.mxu0 %v4706
      %4743 = vmatprep.subr.mxu0 0.0
      %4744 = vmatpush1.msra.mxu0 %v4705
      %4745 = vmatprep.subr.mxu0 0.0
      %4746 = vmatpush1.msra.mxu0 %v4704
      %4747 = vmatprep.subr.mxu0 0.0
      %4748 = vmatpush1.msra.mxu0 %v4703
      %4749 = vmatprep.subr.mxu0 0.0
      %4750 = vmatpush1.msra.mxu0 %v4702
      %4751 = vmatprep.subr.mxu0 0.0
      %4752 = vmatpush1.msra.mxu0 %v4701
      %4753 = vmatprep.subr.mxu0 0.0
      %4754 = vmatpush1.msra.mxu0 %v4700
      %4755 = vmatprep.subr.mxu0 0.0
      %4756 = vmatpush1.msra.mxu0 %v4699
      %4757 = vmatprep.subr.mxu0 0.0
      %4758 = vmatpush1.msra.mxu0 %v4698
      %4759 = vmatprep.subr.mxu0 0.0
      %4760 = vmatpush1.msra.mxu0 %v4697
      %4761 = vmatprep.subr.mxu0 0.0
      %4762 = vmatpush1.msra.mxu0 %v4696
      %4763 = vmatprep.subr.mxu0 0.0
      %4764 = vmatpush1.msra.mxu0 %v4695
      %4765 = vmatprep.subr.mxu0 0.0
      %4766 = vmatpush1.msra.mxu0 %v4694
      %4767 = vmatprep.subr.mxu0 0.0
      %4768 = vmatpush1.msra.mxu0 %v4693
      %4769 = vmatprep.subr.mxu0 0.0
      %4770 = vmatpush1.msra.mxu0 %v4692
      %4771 = vmatprep.subr.mxu0 0.0
      %4772 = vmatpush1.msra.mxu0 %v4691
      %4773 = vmatprep.subr.mxu0 0.0
      %4774 = vmatpush2.msra.mxu0 %v4722
      %4775 = vmatprep.subr.mxu0 0.0
      %4776 = vmatpush2.msra.mxu0 %v4721
      %4777 = vmatprep.subr.mxu0 0.0
      %4778 = vmatpush2.msra.mxu0 %v4720
      %4779 = vmatprep.subr.mxu0 0.0
      %4780 = vmatpush2.msra.mxu0 %v4719
      %4781 = vmatprep.subr.mxu0 0.0
      %4782 = vmatpush2.msra.mxu0 %v4718
      %4783 = vmatprep.subr.mxu0 0.0
      %4784 = vmatpush2.msra.mxu0 %v4717
      %4785 = vmatprep.subr.mxu0 0.0
      %4786 = vmatpush2.msra.mxu0 %v4716
      %4787 = vmatprep.subr.mxu0 0.0
      %4788 = vmatpush2.msra.mxu0 %v4715
      %4789 = vmatprep.subr.mxu0 0.0
      %4790 = vmatpush2.msra.mxu0 %v4714
      %4791 = vmatprep.subr.mxu0 0.0
      %4792 = vmatpush2.msra.mxu0 %v4713
      %4793 = vmatprep.subr.mxu0 0.0
      %4794 = vmatpush2.msra.mxu0 %v4712
      %4795 = vmatprep.subr.mxu0 0.0
      %4796 = vmatpush2.msra.mxu0 %v4711
      %4797 = vmatprep.subr.mxu0 0.0
      %4798 = vmatpush2.msra.mxu0 %v4710
      %4799 = vmatprep.subr.mxu0 0.0
      %4800 = vmatpush2.msra.mxu0 %v4709
      %4801 = vmatprep.subr.mxu0 0.0
      %4802 = vmatpush2.msra.mxu0 %v4708
      %4803 = vmatprep.subr.mxu0 0.0
      %4804 = vmatpush2.msra.mxu0 %v4707
      %4805 = vmatprep.mubr.f32.mxu0 %v4732
      %4806 = vmatmul.mubr.f32.gmra.mxu0 %v4729
      %v4807 = vpop.f32.mrf.mxu0
      %v4808 = vadd.f32 0.0, %v4807
      %v4809 = vpop.f32.mrf.mxu0
      %4810 = vmatprep.mubr.f32.mxu0 %v4736
      %4811 = vmatmul.mubr.f32.gmra.mxu0 %v4734
      %v4812 = vpop.f32.mrf.mxu0
      %v4813 = vadd.f32 0.0, %v4812
      %v4814 = vpop.f32.mrf.mxu0
      %4815 = vdwg.mxu0
      %v4816 = vadd.f32 %v4684, %v4808
      %v4817 = vadd.f32 %v4685, %v4813
      %v4818 = vld [vmem:[%s138 + $0x40] sm:$0xf0]
      %v4819 = vld [vmem:[%s138 + $0x48] sm:$0xf0]
      %v4820 = vld [vmem:[%s138 + $0x60] sm:$0xf]
      %v4821 = vld [vmem:[%s138 + $0x68] sm:$0xf]
      %s4822 = scalar_lea.vmem %s1, 9216
      %v4823 = vld [vmem:[%s4822] sm:$0xff]
      %v4824 = vld [vmem:[%s4822 + $0x8] sm:$0xff]
      %v4825 = vld [vmem:[%s4822 + $0x10] sm:$0xff]
      %v4826 = vld [vmem:[%s4822 + $0x18] sm:$0xff]
      %v4827 = vld [vmem:[%s4822 + $0x20] sm:$0xff]
      %v4828 = vld [vmem:[%s4822 + $0x28] sm:$0xff]
      %v4829 = vld [vmem:[%s4822 + $0x30] sm:$0xff]
      %v4830 = vld [vmem:[%s4822 + $0x38] sm:$0xff]
      %v4831 = vld [vmem:[%s4822 + $0x40] sm:$0xff]
      %v4832 = vld [vmem:[%s4822 + $0x48] sm:$0xff]
      %v4833 = vld [vmem:[%s4822 + $0x50] sm:$0xff]
      %v4834 = vld [vmem:[%s4822 + $0x58] sm:$0xff]
      %v4835 = vld [vmem:[%s4822 + $0x60] sm:$0xff]
      %v4836 = vld [vmem:[%s4822 + $0x68] sm:$0xff]
      %v4837 = vld [vmem:[%s4822 + $0x70] sm:$0xff]
      %v4838 = vld [vmem:[%s4822 + $0x78] sm:$0xff]
      %v4839 = vld [vmem:[%s4822 + $0x80] sm:$0xff]
      %v4840 = vld [vmem:[%s4822 + $0x88] sm:$0xff]
      %v4841 = vld [vmem:[%s4822 + $0x90] sm:$0xff]
      %v4842 = vld [vmem:[%s4822 + $0x98] sm:$0xff]
      %v4843 = vld [vmem:[%s4822 + $0xa0] sm:$0xff]
      %v4844 = vld [vmem:[%s4822 + $0xa8] sm:$0xff]
      %v4845 = vld [vmem:[%s4822 + $0xb0] sm:$0xff]
      %v4846 = vld [vmem:[%s4822 + $0xb8] sm:$0xff]
      %v4847 = vld [vmem:[%s4822 + $0xc0] sm:$0xff]
      %v4848 = vld [vmem:[%s4822 + $0xc8] sm:$0xff]
      %v4849 = vld [vmem:[%s4822 + $0xd0] sm:$0xff]
      %v4850 = vld [vmem:[%s4822 + $0xd8] sm:$0xff]
      %v4851 = vld [vmem:[%s4822 + $0xe0] sm:$0xff]
      %v4852 = vld [vmem:[%s4822 + $0xe8] sm:$0xff]
      %v4853 = vld [vmem:[%s4822 + $0xf0] sm:$0xff]
      %v4854 = vld [vmem:[%s4822 + $0xf8] sm:$0xff]
      %v4859 = vrot.slane %v4818, 4
      %v4860 = vrot.slane %v4420, 4
      %v4861 = vsel %vm695, %v4859, %v4860
      %v4862 = vrot.slane %v4819, 4
      %v4863 = vrot.slane %v4421, 4
      %v4864 = vsel %vm695, %v4862, %v4863
      %v4865 = vrot.slane %v4820, 4
      %v4866 = vsel %vm695, %v4860, %v4865
      %v4867 = vrot.slane %v4821, 4
      %v4868 = vsel %vm695, %v4863, %v4867
      %4873 = vmatprep.subr.mxu0 0.0
      %4874 = vmatpush1.msra.mxu0 %v4838
      %4875 = vmatprep.subr.mxu0 0.0
      %4876 = vmatpush1.msra.mxu0 %v4837
      %4877 = vmatprep.subr.mxu0 0.0
      %4878 = vmatpush1.msra.mxu0 %v4836
      %4879 = vmatprep.subr.mxu0 0.0
      %4880 = vmatpush1.msra.mxu0 %v4835
      %4881 = vmatprep.subr.mxu0 0.0
      %4882 = vmatpush1.msra.mxu0 %v4834
      %4883 = vmatprep.subr.mxu0 0.0
      %4884 = vmatpush1.msra.mxu0 %v4833
      %4885 = vmatprep.subr.mxu0 0.0
      %4886 = vmatpush1.msra.mxu0 %v4832
      %4887 = vmatprep.subr.mxu0 0.0
      %4888 = vmatpush1.msra.mxu0 %v4831
      %4889 = vmatprep.subr.mxu0 0.0
      %4890 = vmatpush1.msra.mxu0 %v4830
      %4891 = vmatprep.subr.mxu0 0.0
      %4892 = vmatpush1.msra.mxu0 %v4829
      %4893 = vmatprep.subr.mxu0 0.0
      %4894 = vmatpush1.msra.mxu0 %v4828
      %4895 = vmatprep.subr.mxu0 0.0
      %4896 = vmatpush1.msra.mxu0 %v4827
      %4897 = vmatprep.subr.mxu0 0.0
      %4898 = vmatpush1.msra.mxu0 %v4826
      %4899 = vmatprep.subr.mxu0 0.0
      %4900 = vmatpush1.msra.mxu0 %v4825
      %4901 = vmatprep.subr.mxu0 0.0
      %4902 = vmatpush1.msra.mxu0 %v4824
      %4903 = vmatprep.subr.mxu0 0.0
      %4904 = vmatpush1.msra.mxu0 %v4823
      %4905 = vmatprep.subr.mxu0 0.0
      %4906 = vmatpush2.msra.mxu0 %v4854
      %4907 = vmatprep.subr.mxu0 0.0
      %4908 = vmatpush2.msra.mxu0 %v4853
      %4909 = vmatprep.subr.mxu0 0.0
      %4910 = vmatpush2.msra.mxu0 %v4852
      %4911 = vmatprep.subr.mxu0 0.0
      %4912 = vmatpush2.msra.mxu0 %v4851
      %4913 = vmatprep.subr.mxu0 0.0
      %4914 = vmatpush2.msra.mxu0 %v4850
      %4915 = vmatprep.subr.mxu0 0.0
      %4916 = vmatpush2.msra.mxu0 %v4849
      %4917 = vmatprep.subr.mxu0 0.0
      %4918 = vmatpush2.msra.mxu0 %v4848
      %4919 = vmatprep.subr.mxu0 0.0
      %4920 = vmatpush2.msra.mxu0 %v4847
      %4921 = vmatprep.subr.mxu0 0.0
      %4922 = vmatpush2.msra.mxu0 %v4846
      %4923 = vmatprep.subr.mxu0 0.0
      %4924 = vmatpush2.msra.mxu0 %v4845
      %4925 = vmatprep.subr.mxu0 0.0
      %4926 = vmatpush2.msra.mxu0 %v4844
      %4927 = vmatprep.subr.mxu0 0.0
      %4928 = vmatpush2.msra.mxu0 %v4843
      %4929 = vmatprep.subr.mxu0 0.0
      %4930 = vmatpush2.msra.mxu0 %v4842
      %4931 = vmatprep.subr.mxu0 0.0
      %4932 = vmatpush2.msra.mxu0 %v4841
      %4933 = vmatprep.subr.mxu0 0.0
      %4934 = vmatpush2.msra.mxu0 %v4840
      %4935 = vmatprep.subr.mxu0 0.0
      %4936 = vmatpush2.msra.mxu0 %v4839
      %4937 = vmatprep.mubr.f32.mxu0 %v4864
      %4938 = vmatmul.mubr.f32.gmra.mxu0 %v4861
      %v4939 = vpop.f32.mrf.mxu0
      %v4940 = vadd.f32 0.0, %v4939
      %v4941 = vpop.f32.mrf.mxu0
      %4942 = vmatprep.mubr.f32.mxu0 %v4868
      %4943 = vmatmul.mubr.f32.gmra.mxu0 %v4866
      %v4944 = vpop.f32.mrf.mxu0
      %v4945 = vadd.f32 0.0, %v4944
      %v4946 = vpop.f32.mrf.mxu0
      %4947 = vdwg.mxu0
      %v4948 = vadd.f32 %v4816, %v4940
      %v4949 = vadd.f32 %v4817, %v4945
      %v4950 = vld [vmem:[%s138 + $0x40] sm:$0xe0]
      %v4951 = vld [vmem:[%s138 + $0x48] sm:$0xe0]
      %v4952 = vld [vmem:[%s138 + $0x60] sm:$0x1f]
      %v4953 = vld [vmem:[%s138 + $0x68] sm:$0x1f]
      %s4954 = scalar_lea.vmem %s1, 9472
      %v4955 = vld [vmem:[%s4954] sm:$0xff]
      %v4956 = vld [vmem:[%s4954 + $0x8] sm:$0xff]
      %v4957 = vld [vmem:[%s4954 + $0x10] sm:$0xff]
      %v4958 = vld [vmem:[%s4954 + $0x18] sm:$0xff]
      %v4959 = vld [vmem:[%s4954 + $0x20] sm:$0xff]
      %v4960 = vld [vmem:[%s4954 + $0x28] sm:$0xff]
      %v4961 = vld [vmem:[%s4954 + $0x30] sm:$0xff]
      %v4962 = vld [vmem:[%s4954 + $0x38] sm:$0xff]
      %v4963 = vld [vmem:[%s4954 + $0x40] sm:$0xff]
      %v4964 = vld [vmem:[%s4954 + $0x48] sm:$0xff]
      %v4965 = vld [vmem:[%s4954 + $0x50] sm:$0xff]
      %v4966 = vld [vmem:[%s4954 + $0x58] sm:$0xff]
      %v4967 = vld [vmem:[%s4954 + $0x60] sm:$0xff]
      %v4968 = vld [vmem:[%s4954 + $0x68] sm:$0xff]
      %v4969 = vld [vmem:[%s4954 + $0x70] sm:$0xff]
      %v4970 = vld [vmem:[%s4954 + $0x78] sm:$0xff]
      %v4971 = vld [vmem:[%s4954 + $0x80] sm:$0xff]
      %v4972 = vld [vmem:[%s4954 + $0x88] sm:$0xff]
      %v4973 = vld [vmem:[%s4954 + $0x90] sm:$0xff]
      %v4974 = vld [vmem:[%s4954 + $0x98] sm:$0xff]
      %v4975 = vld [vmem:[%s4954 + $0xa0] sm:$0xff]
      %v4976 = vld [vmem:[%s4954 + $0xa8] sm:$0xff]
      %v4977 = vld [vmem:[%s4954 + $0xb0] sm:$0xff]
      %v4978 = vld [vmem:[%s4954 + $0xb8] sm:$0xff]
      %v4979 = vld [vmem:[%s4954 + $0xc0] sm:$0xff]
      %v4980 = vld [vmem:[%s4954 + $0xc8] sm:$0xff]
      %v4981 = vld [vmem:[%s4954 + $0xd0] sm:$0xff]
      %v4982 = vld [vmem:[%s4954 + $0xd8] sm:$0xff]
      %v4983 = vld [vmem:[%s4954 + $0xe0] sm:$0xff]
      %v4984 = vld [vmem:[%s4954 + $0xe8] sm:$0xff]
      %v4985 = vld [vmem:[%s4954 + $0xf0] sm:$0xff]
      %v4986 = vld [vmem:[%s4954 + $0xf8] sm:$0xff]
      %v4991 = vrot.slane %v4950, 5
      %v4992 = vrot.slane %v4420, 5
      %v4993 = vsel %vm828, %v4991, %v4992
      %v4994 = vrot.slane %v4951, 5
      %v4995 = vrot.slane %v4421, 5
      %v4996 = vsel %vm828, %v4994, %v4995
      %v4997 = vrot.slane %v4952, 5
      %v4998 = vsel %vm828, %v4992, %v4997
      %v4999 = vrot.slane %v4953, 5
      %v5000 = vsel %vm828, %v4995, %v4999
      %5005 = vmatprep.subr.mxu0 0.0
      %5006 = vmatpush1.msra.mxu0 %v4970
      %5007 = vmatprep.subr.mxu0 0.0
      %5008 = vmatpush1.msra.mxu0 %v4969
      %5009 = vmatprep.subr.mxu0 0.0
      %5010 = vmatpush1.msra.mxu0 %v4968
      %5011 = vmatprep.subr.mxu0 0.0
      %5012 = vmatpush1.msra.mxu0 %v4967
      %5013 = vmatprep.subr.mxu0 0.0
      %5014 = vmatpush1.msra.mxu0 %v4966
      %5015 = vmatprep.subr.mxu0 0.0
      %5016 = vmatpush1.msra.mxu0 %v4965
      %5017 = vmatprep.subr.mxu0 0.0
      %5018 = vmatpush1.msra.mxu0 %v4964
      %5019 = vmatprep.subr.mxu0 0.0
      %5020 = vmatpush1.msra.mxu0 %v4963
      %5021 = vmatprep.subr.mxu0 0.0
      %5022 = vmatpush1.msra.mxu0 %v4962
      %5023 = vmatprep.subr.mxu0 0.0
      %5024 = vmatpush1.msra.mxu0 %v4961
      %5025 = vmatprep.subr.mxu0 0.0
      %5026 = vmatpush1.msra.mxu0 %v4960
      %5027 = vmatprep.subr.mxu0 0.0
      %5028 = vmatpush1.msra.mxu0 %v4959
      %5029 = vmatprep.subr.mxu0 0.0
      %5030 = vmatpush1.msra.mxu0 %v4958
      %5031 = vmatprep.subr.mxu0 0.0
      %5032 = vmatpush1.msra.mxu0 %v4957
      %5033 = vmatprep.subr.mxu0 0.0
      %5034 = vmatpush1.msra.mxu0 %v4956
      %5035 = vmatprep.subr.mxu0 0.0
      %5036 = vmatpush1.msra.mxu0 %v4955
      %5037 = vmatprep.subr.mxu0 0.0
      %5038 = vmatpush2.msra.mxu0 %v4986
      %5039 = vmatprep.subr.mxu0 0.0
      %5040 = vmatpush2.msra.mxu0 %v4985
      %5041 = vmatprep.subr.mxu0 0.0
      %5042 = vmatpush2.msra.mxu0 %v4984
      %5043 = vmatprep.subr.mxu0 0.0
      %5044 = vmatpush2.msra.mxu0 %v4983
      %5045 = vmatprep.subr.mxu0 0.0
      %5046 = vmatpush2.msra.mxu0 %v4982
      %5047 = vmatprep.subr.mxu0 0.0
      %5048 = vmatpush2.msra.mxu0 %v4981
      %5049 = vmatprep.subr.mxu0 0.0
      %5050 = vmatpush2.msra.mxu0 %v4980
      %5051 = vmatprep.subr.mxu0 0.0
      %5052 = vmatpush2.msra.mxu0 %v4979
      %5053 = vmatprep.subr.mxu0 0.0
      %5054 = vmatpush2.msra.mxu0 %v4978
      %5055 = vmatprep.subr.mxu0 0.0
      %5056 = vmatpush2.msra.mxu0 %v4977
      %5057 = vmatprep.subr.mxu0 0.0
      %5058 = vmatpush2.msra.mxu0 %v4976
      %5059 = vmatprep.subr.mxu0 0.0
      %5060 = vmatpush2.msra.mxu0 %v4975
      %5061 = vmatprep.subr.mxu0 0.0
      %5062 = vmatpush2.msra.mxu0 %v4974
      %5063 = vmatprep.subr.mxu0 0.0
      %5064 = vmatpush2.msra.mxu0 %v4973
      %5065 = vmatprep.subr.mxu0 0.0
      %5066 = vmatpush2.msra.mxu0 %v4972
      %5067 = vmatprep.subr.mxu0 0.0
      %5068 = vmatpush2.msra.mxu0 %v4971
      %5069 = vmatprep.mubr.f32.mxu0 %v4996
      %5070 = vmatmul.mubr.f32.gmra.mxu0 %v4993
      %v5071 = vpop.f32.mrf.mxu0
      %v5072 = vadd.f32 0.0, %v5071
      %v5073 = vpop.f32.mrf.mxu0
      %5074 = vmatprep.mubr.f32.mxu0 %v5000
      %5075 = vmatmul.mubr.f32.gmra.mxu0 %v4998
      %v5076 = vpop.f32.mrf.mxu0
      %v5077 = vadd.f32 0.0, %v5076
      %v5078 = vpop.f32.mrf.mxu0
      %5079 = vdwg.mxu0
      %v5080 = vadd.f32 %v4948, %v5072
      %v5081 = vadd.f32 %v4949, %v5077
      %v5082 = vld [vmem:[%s138 + $0x40] sm:$0xc0]
      %v5083 = vld [vmem:[%s138 + $0x48] sm:$0xc0]
      %v5084 = vld [vmem:[%s138 + $0x60] sm:$0x3f]
      %v5085 = vld [vmem:[%s138 + $0x68] sm:$0x3f]
      %s5086 = scalar_lea.vmem %s1, 9728
      %v5087 = vld [vmem:[%s5086] sm:$0xff]
      %v5088 = vld [vmem:[%s5086 + $0x8] sm:$0xff]
      %v5089 = vld [vmem:[%s5086 + $0x10] sm:$0xff]
      %v5090 = vld [vmem:[%s5086 + $0x18] sm:$0xff]
      %v5091 = vld [vmem:[%s5086 + $0x20] sm:$0xff]
      %v5092 = vld [vmem:[%s5086 + $0x28] sm:$0xff]
      %v5093 = vld [vmem:[%s5086 + $0x30] sm:$0xff]
      %v5094 = vld [vmem:[%s5086 + $0x38] sm:$0xff]
      %v5095 = vld [vmem:[%s5086 + $0x40] sm:$0xff]
      %v5096 = vld [vmem:[%s5086 + $0x48] sm:$0xff]
      %v5097 = vld [vmem:[%s5086 + $0x50] sm:$0xff]
      %v5098 = vld [vmem:[%s5086 + $0x58] sm:$0xff]
      %v5099 = vld [vmem:[%s5086 + $0x60] sm:$0xff]
      %v5100 = vld [vmem:[%s5086 + $0x68] sm:$0xff]
      %v5101 = vld [vmem:[%s5086 + $0x70] sm:$0xff]
      %v5102 = vld [vmem:[%s5086 + $0x78] sm:$0xff]
      %v5103 = vld [vmem:[%s5086 + $0x80] sm:$0xff]
      %v5104 = vld [vmem:[%s5086 + $0x88] sm:$0xff]
      %v5105 = vld [vmem:[%s5086 + $0x90] sm:$0xff]
      %v5106 = vld [vmem:[%s5086 + $0x98] sm:$0xff]
      %v5107 = vld [vmem:[%s5086 + $0xa0] sm:$0xff]
      %v5108 = vld [vmem:[%s5086 + $0xa8] sm:$0xff]
      %v5109 = vld [vmem:[%s5086 + $0xb0] sm:$0xff]
      %v5110 = vld [vmem:[%s5086 + $0xb8] sm:$0xff]
      %v5111 = vld [vmem:[%s5086 + $0xc0] sm:$0xff]
      %v5112 = vld [vmem:[%s5086 + $0xc8] sm:$0xff]
      %v5113 = vld [vmem:[%s5086 + $0xd0] sm:$0xff]
      %v5114 = vld [vmem:[%s5086 + $0xd8] sm:$0xff]
      %v5115 = vld [vmem:[%s5086 + $0xe0] sm:$0xff]
      %v5116 = vld [vmem:[%s5086 + $0xe8] sm:$0xff]
      %v5117 = vld [vmem:[%s5086 + $0xf0] sm:$0xff]
      %v5118 = vld [vmem:[%s5086 + $0xf8] sm:$0xff]
      %v5123 = vrot.slane %v5082, 6
      %v5124 = vrot.slane %v4420, 6
      %v5125 = vsel %vm961, %v5123, %v5124
      %v5126 = vrot.slane %v5083, 6
      %v5127 = vrot.slane %v4421, 6
      %v5128 = vsel %vm961, %v5126, %v5127
      %v5129 = vrot.slane %v5084, 6
      %v5130 = vsel %vm961, %v5124, %v5129
      %v5131 = vrot.slane %v5085, 6
      %v5132 = vsel %vm961, %v5127, %v5131
      %5137 = vmatprep.subr.mxu0 0.0
      %5138 = vmatpush1.msra.mxu0 %v5102
      %5139 = vmatprep.subr.mxu0 0.0
      %5140 = vmatpush1.msra.mxu0 %v5101
      %5141 = vmatprep.subr.mxu0 0.0
      %5142 = vmatpush1.msra.mxu0 %v5100
      %5143 = vmatprep.subr.mxu0 0.0
      %5144 = vmatpush1.msra.mxu0 %v5099
      %5145 = vmatprep.subr.mxu0 0.0
      %5146 = vmatpush1.msra.mxu0 %v5098
      %5147 = vmatprep.subr.mxu0 0.0
      %5148 = vmatpush1.msra.mxu0 %v5097
      %5149 = vmatprep.subr.mxu0 0.0
      %5150 = vmatpush1.msra.mxu0 %v5096
      %5151 = vmatprep.subr.mxu0 0.0
      %5152 = vmatpush1.msra.mxu0 %v5095
      %5153 = vmatprep.subr.mxu0 0.0
      %5154 = vmatpush1.msra.mxu0 %v5094
      %5155 = vmatprep.subr.mxu0 0.0
      %5156 = vmatpush1.msra.mxu0 %v5093
      %5157 = vmatprep.subr.mxu0 0.0
      %5158 = vmatpush1.msra.mxu0 %v5092
      %5159 = vmatprep.subr.mxu0 0.0
      %5160 = vmatpush1.msra.mxu0 %v5091
      %5161 = vmatprep.subr.mxu0 0.0
      %5162 = vmatpush1.msra.mxu0 %v5090
      %5163 = vmatprep.subr.mxu0 0.0
      %5164 = vmatpush1.msra.mxu0 %v5089
      %5165 = vmatprep.subr.mxu0 0.0
      %5166 = vmatpush1.msra.mxu0 %v5088
      %5167 = vmatprep.subr.mxu0 0.0
      %5168 = vmatpush1.msra.mxu0 %v5087
      %5169 = vmatprep.subr.mxu0 0.0
      %5170 = vmatpush2.msra.mxu0 %v5118
      %5171 = vmatprep.subr.mxu0 0.0
      %5172 = vmatpush2.msra.mxu0 %v5117
      %5173 = vmatprep.subr.mxu0 0.0
      %5174 = vmatpush2.msra.mxu0 %v5116
      %5175 = vmatprep.subr.mxu0 0.0
      %5176 = vmatpush2.msra.mxu0 %v5115
      %5177 = vmatprep.subr.mxu0 0.0
      %5178 = vmatpush2.msra.mxu0 %v5114
      %5179 = vmatprep.subr.mxu0 0.0
      %5180 = vmatpush2.msra.mxu0 %v5113
      %5181 = vmatprep.subr.mxu0 0.0
      %5182 = vmatpush2.msra.mxu0 %v5112
      %5183 = vmatprep.subr.mxu0 0.0
      %5184 = vmatpush2.msra.mxu0 %v5111
      %5185 = vmatprep.subr.mxu0 0.0
      %5186 = vmatpush2.msra.mxu0 %v5110
      %5187 = vmatprep.subr.mxu0 0.0
      %5188 = vmatpush2.msra.mxu0 %v5109
      %5189 = vmatprep.subr.mxu0 0.0
      %5190 = vmatpush2.msra.mxu0 %v5108
      %5191 = vmatprep.subr.mxu0 0.0
      %5192 = vmatpush2.msra.mxu0 %v5107
      %5193 = vmatprep.subr.mxu0 0.0
      %5194 = vmatpush2.msra.mxu0 %v5106
      %5195 = vmatprep.subr.mxu0 0.0
      %5196 = vmatpush2.msra.mxu0 %v5105
      %5197 = vmatprep.subr.mxu0 0.0
      %5198 = vmatpush2.msra.mxu0 %v5104
      %5199 = vmatprep.subr.mxu0 0.0
      %5200 = vmatpush2.msra.mxu0 %v5103
      %5201 = vmatprep.mubr.f32.mxu0 %v5128
      %5202 = vmatmul.mubr.f32.gmra.mxu0 %v5125
      %v5203 = vpop.f32.mrf.mxu0
      %v5204 = vadd.f32 0.0, %v5203
      %v5205 = vpop.f32.mrf.mxu0
      %5206 = vmatprep.mubr.f32.mxu0 %v5132
      %5207 = vmatmul.mubr.f32.gmra.mxu0 %v5130
      %v5208 = vpop.f32.mrf.mxu0
      %v5209 = vadd.f32 0.0, %v5208
      %v5210 = vpop.f32.mrf.mxu0
      %5211 = vdwg.mxu0
      %v5212 = vadd.f32 %v5080, %v5204
      %v5213 = vadd.f32 %v5081, %v5209
      %v5214 = vld [vmem:[%s138 + $0x40] sm:$0x80]
      %v5215 = vld [vmem:[%s138 + $0x48] sm:$0x80]
      %v5216 = vld [vmem:[%s138 + $0x60] sm:$0x7f]
      %v5217 = vld [vmem:[%s138 + $0x68] sm:$0x7f]
      %s5218 = scalar_lea.vmem %s1, 9984
      %v5219 = vld [vmem:[%s5218] sm:$0xff]
      %v5220 = vld [vmem:[%s5218 + $0x8] sm:$0xff]
      %v5221 = vld [vmem:[%s5218 + $0x10] sm:$0xff]
      %v5222 = vld [vmem:[%s5218 + $0x18] sm:$0xff]
      %v5223 = vld [vmem:[%s5218 + $0x20] sm:$0xff]
      %v5224 = vld [vmem:[%s5218 + $0x28] sm:$0xff]
      %v5225 = vld [vmem:[%s5218 + $0x30] sm:$0xff]
      %v5226 = vld [vmem:[%s5218 + $0x38] sm:$0xff]
      %v5227 = vld [vmem:[%s5218 + $0x40] sm:$0xff]
      %v5228 = vld [vmem:[%s5218 + $0x48] sm:$0xff]
      %v5229 = vld [vmem:[%s5218 + $0x50] sm:$0xff]
      %v5230 = vld [vmem:[%s5218 + $0x58] sm:$0xff]
      %v5231 = vld [vmem:[%s5218 + $0x60] sm:$0xff]
      %v5232 = vld [vmem:[%s5218 + $0x68] sm:$0xff]
      %v5233 = vld [vmem:[%s5218 + $0x70] sm:$0xff]
      %v5234 = vld [vmem:[%s5218 + $0x78] sm:$0xff]
      %v5235 = vld [vmem:[%s5218 + $0x80] sm:$0xff]
      %v5236 = vld [vmem:[%s5218 + $0x88] sm:$0xff]
      %v5237 = vld [vmem:[%s5218 + $0x90] sm:$0xff]
      %v5238 = vld [vmem:[%s5218 + $0x98] sm:$0xff]
      %v5239 = vld [vmem:[%s5218 + $0xa0] sm:$0xff]
      %v5240 = vld [vmem:[%s5218 + $0xa8] sm:$0xff]
      %v5241 = vld [vmem:[%s5218 + $0xb0] sm:$0xff]
      %v5242 = vld [vmem:[%s5218 + $0xb8] sm:$0xff]
      %v5243 = vld [vmem:[%s5218 + $0xc0] sm:$0xff]
      %v5244 = vld [vmem:[%s5218 + $0xc8] sm:$0xff]
      %v5245 = vld [vmem:[%s5218 + $0xd0] sm:$0xff]
      %v5246 = vld [vmem:[%s5218 + $0xd8] sm:$0xff]
      %v5247 = vld [vmem:[%s5218 + $0xe0] sm:$0xff]
      %v5248 = vld [vmem:[%s5218 + $0xe8] sm:$0xff]
      %v5249 = vld [vmem:[%s5218 + $0xf0] sm:$0xff]
      %v5250 = vld [vmem:[%s5218 + $0xf8] sm:$0xff]
      %v5255 = vrot.slane %v5214, 7
      %v5256 = vrot.slane %v4420, 7
      %v5257 = vsel %vm1094, %v5255, %v5256
      %v5258 = vrot.slane %v5215, 7
      %v5259 = vrot.slane %v4421, 7
      %v5260 = vsel %vm1094, %v5258, %v5259
      %v5261 = vrot.slane %v5216, 7
      %v5262 = vsel %vm1094, %v5256, %v5261
      %v5263 = vrot.slane %v5217, 7
      %v5264 = vsel %vm1094, %v5259, %v5263
      %5269 = vmatprep.subr.mxu0 0.0
      %5270 = vmatpush1.msra.mxu0 %v5234
      %5271 = vmatprep.subr.mxu0 0.0
      %5272 = vmatpush1.msra.mxu0 %v5233
      %5273 = vmatprep.subr.mxu0 0.0
      %5274 = vmatpush1.msra.mxu0 %v5232
      %5275 = vmatprep.subr.mxu0 0.0
      %5276 = vmatpush1.msra.mxu0 %v5231
      %5277 = vmatprep.subr.mxu0 0.0
      %5278 = vmatpush1.msra.mxu0 %v5230
      %5279 = vmatprep.subr.mxu0 0.0
      %5280 = vmatpush1.msra.mxu0 %v5229
      %5281 = vmatprep.subr.mxu0 0.0
      %5282 = vmatpush1.msra.mxu0 %v5228
      %5283 = vmatprep.subr.mxu0 0.0
      %5284 = vmatpush1.msra.mxu0 %v5227
      %5285 = vmatprep.subr.mxu0 0.0
      %5286 = vmatpush1.msra.mxu0 %v5226
      %5287 = vmatprep.subr.mxu0 0.0
      %5288 = vmatpush1.msra.mxu0 %v5225
      %5289 = vmatprep.subr.mxu0 0.0
      %5290 = vmatpush1.msra.mxu0 %v5224
      %5291 = vmatprep.subr.mxu0 0.0
      %5292 = vmatpush1.msra.mxu0 %v5223
      %5293 = vmatprep.subr.mxu0 0.0
      %5294 = vmatpush1.msra.mxu0 %v5222
      %5295 = vmatprep.subr.mxu0 0.0
      %5296 = vmatpush1.msra.mxu0 %v5221
      %5297 = vmatprep.subr.mxu0 0.0
      %5298 = vmatpush1.msra.mxu0 %v5220
      %5299 = vmatprep.subr.mxu0 0.0
      %5300 = vmatpush1.msra.mxu0 %v5219
      %5301 = vmatprep.subr.mxu0 0.0
      %5302 = vmatpush2.msra.mxu0 %v5250
      %5303 = vmatprep.subr.mxu0 0.0
      %5304 = vmatpush2.msra.mxu0 %v5249
      %5305 = vmatprep.subr.mxu0 0.0
      %5306 = vmatpush2.msra.mxu0 %v5248
      %5307 = vmatprep.subr.mxu0 0.0
      %5308 = vmatpush2.msra.mxu0 %v5247
      %5309 = vmatprep.subr.mxu0 0.0
      %5310 = vmatpush2.msra.mxu0 %v5246
      %5311 = vmatprep.subr.mxu0 0.0
      %5312 = vmatpush2.msra.mxu0 %v5245
      %5313 = vmatprep.subr.mxu0 0.0
      %5314 = vmatpush2.msra.mxu0 %v5244
      %5315 = vmatprep.subr.mxu0 0.0
      %5316 = vmatpush2.msra.mxu0 %v5243
      %5317 = vmatprep.subr.mxu0 0.0
      %5318 = vmatpush2.msra.mxu0 %v5242
      %5319 = vmatprep.subr.mxu0 0.0
      %5320 = vmatpush2.msra.mxu0 %v5241
      %5321 = vmatprep.subr.mxu0 0.0
      %5322 = vmatpush2.msra.mxu0 %v5240
      %5323 = vmatprep.subr.mxu0 0.0
      %5324 = vmatpush2.msra.mxu0 %v5239
      %5325 = vmatprep.subr.mxu0 0.0
      %5326 = vmatpush2.msra.mxu0 %v5238
      %5327 = vmatprep.subr.mxu0 0.0
      %5328 = vmatpush2.msra.mxu0 %v5237
      %5329 = vmatprep.subr.mxu0 0.0
      %5330 = vmatpush2.msra.mxu0 %v5236
      %5331 = vmatprep.subr.mxu0 0.0
      %5332 = vmatpush2.msra.mxu0 %v5235
      %5333 = vmatprep.mubr.f32.mxu0 %v5260
      %5334 = vmatmul.mubr.f32.gmra.mxu0 %v5257
      %v5335 = vpop.f32.mrf.mxu0
      %v5336 = vadd.f32 0.0, %v5335
      %v5337 = vpop.f32.mrf.mxu0
      %5338 = vmatprep.mubr.f32.mxu0 %v5264
      %5339 = vmatmul.mubr.f32.gmra.mxu0 %v5262
      %v5340 = vpop.f32.mrf.mxu0
      %v5341 = vadd.f32 0.0, %v5340
      %v5342 = vpop.f32.mrf.mxu0
      %5343 = vdwg.mxu0
      %v5344 = vadd.f32 %v5212, %v5336
      %v5345 = vadd.f32 %v5213, %v5341
      %v5346 = vld [vmem:[%s138 + $0x60] sm:$0xff]
      %v5347 = vld [vmem:[%s138 + $0x68] sm:$0xff]
      %s5348 = scalar_lea.vmem %s1, 10240
      %v5349 = vld [vmem:[%s5348] sm:$0xff]
      %v5350 = vld [vmem:[%s5348 + $0x8] sm:$0xff]
      %v5351 = vld [vmem:[%s5348 + $0x10] sm:$0xff]
      %v5352 = vld [vmem:[%s5348 + $0x18] sm:$0xff]
      %v5353 = vld [vmem:[%s5348 + $0x20] sm:$0xff]
      %v5354 = vld [vmem:[%s5348 + $0x28] sm:$0xff]
      %v5355 = vld [vmem:[%s5348 + $0x30] sm:$0xff]
      %v5356 = vld [vmem:[%s5348 + $0x38] sm:$0xff]
      %v5357 = vld [vmem:[%s5348 + $0x40] sm:$0xff]
      %v5358 = vld [vmem:[%s5348 + $0x48] sm:$0xff]
      %v5359 = vld [vmem:[%s5348 + $0x50] sm:$0xff]
      %v5360 = vld [vmem:[%s5348 + $0x58] sm:$0xff]
      %v5361 = vld [vmem:[%s5348 + $0x60] sm:$0xff]
      %v5362 = vld [vmem:[%s5348 + $0x68] sm:$0xff]
      %v5363 = vld [vmem:[%s5348 + $0x70] sm:$0xff]
      %v5364 = vld [vmem:[%s5348 + $0x78] sm:$0xff]
      %v5365 = vld [vmem:[%s5348 + $0x80] sm:$0xff]
      %v5366 = vld [vmem:[%s5348 + $0x88] sm:$0xff]
      %v5367 = vld [vmem:[%s5348 + $0x90] sm:$0xff]
      %v5368 = vld [vmem:[%s5348 + $0x98] sm:$0xff]
      %v5369 = vld [vmem:[%s5348 + $0xa0] sm:$0xff]
      %v5370 = vld [vmem:[%s5348 + $0xa8] sm:$0xff]
      %v5371 = vld [vmem:[%s5348 + $0xb0] sm:$0xff]
      %v5372 = vld [vmem:[%s5348 + $0xb8] sm:$0xff]
      %v5373 = vld [vmem:[%s5348 + $0xc0] sm:$0xff]
      %v5374 = vld [vmem:[%s5348 + $0xc8] sm:$0xff]
      %v5375 = vld [vmem:[%s5348 + $0xd0] sm:$0xff]
      %v5376 = vld [vmem:[%s5348 + $0xd8] sm:$0xff]
      %v5377 = vld [vmem:[%s5348 + $0xe0] sm:$0xff]
      %v5378 = vld [vmem:[%s5348 + $0xe8] sm:$0xff]
      %v5379 = vld [vmem:[%s5348 + $0xf0] sm:$0xff]
      %v5380 = vld [vmem:[%s5348 + $0xf8] sm:$0xff]
      %5381 = vmatprep.subr.mxu0 0.0
      %5382 = vmatpush1.msra.mxu0 %v5364
      %5383 = vmatprep.subr.mxu0 0.0
      %5384 = vmatpush1.msra.mxu0 %v5363
      %5385 = vmatprep.subr.mxu0 0.0
      %5386 = vmatpush1.msra.mxu0 %v5362
      %5387 = vmatprep.subr.mxu0 0.0
      %5388 = vmatpush1.msra.mxu0 %v5361
      %5389 = vmatprep.subr.mxu0 0.0
      %5390 = vmatpush1.msra.mxu0 %v5360
      %5391 = vmatprep.subr.mxu0 0.0
      %5392 = vmatpush1.msra.mxu0 %v5359
      %5393 = vmatprep.subr.mxu0 0.0
      %5394 = vmatpush1.msra.mxu0 %v5358
      %5395 = vmatprep.subr.mxu0 0.0
      %5396 = vmatpush1.msra.mxu0 %v5357
      %5397 = vmatprep.subr.mxu0 0.0
      %5398 = vmatpush1.msra.mxu0 %v5356
      %5399 = vmatprep.subr.mxu0 0.0
      %5400 = vmatpush1.msra.mxu0 %v5355
      %5401 = vmatprep.subr.mxu0 0.0
      %5402 = vmatpush1.msra.mxu0 %v5354
      %5403 = vmatprep.subr.mxu0 0.0
      %5404 = vmatpush1.msra.mxu0 %v5353
      %5405 = vmatprep.subr.mxu0 0.0
      %5406 = vmatpush1.msra.mxu0 %v5352
      %5407 = vmatprep.subr.mxu0 0.0
      %5408 = vmatpush1.msra.mxu0 %v5351
      %5409 = vmatprep.subr.mxu0 0.0
      %5410 = vmatpush1.msra.mxu0 %v5350
      %5411 = vmatprep.subr.mxu0 0.0
      %5412 = vmatpush1.msra.mxu0 %v5349
      %5413 = vmatprep.subr.mxu0 0.0
      %5414 = vmatpush2.msra.mxu0 %v5380
      %5415 = vmatprep.subr.mxu0 0.0
      %5416 = vmatpush2.msra.mxu0 %v5379
      %5417 = vmatprep.subr.mxu0 0.0
      %5418 = vmatpush2.msra.mxu0 %v5378
      %5419 = vmatprep.subr.mxu0 0.0
      %5420 = vmatpush2.msra.mxu0 %v5377
      %5421 = vmatprep.subr.mxu0 0.0
      %5422 = vmatpush2.msra.mxu0 %v5376
      %5423 = vmatprep.subr.mxu0 0.0
      %5424 = vmatpush2.msra.mxu0 %v5375
      %5425 = vmatprep.subr.mxu0 0.0
      %5426 = vmatpush2.msra.mxu0 %v5374
      %5427 = vmatprep.subr.mxu0 0.0
      %5428 = vmatpush2.msra.mxu0 %v5373
      %5429 = vmatprep.subr.mxu0 0.0
      %5430 = vmatpush2.msra.mxu0 %v5372
      %5431 = vmatprep.subr.mxu0 0.0
      %5432 = vmatpush2.msra.mxu0 %v5371
      %5433 = vmatprep.subr.mxu0 0.0
      %5434 = vmatpush2.msra.mxu0 %v5370
      %5435 = vmatprep.subr.mxu0 0.0
      %5436 = vmatpush2.msra.mxu0 %v5369
      %5437 = vmatprep.subr.mxu0 0.0
      %5438 = vmatpush2.msra.mxu0 %v5368
      %5439 = vmatprep.subr.mxu0 0.0
      %5440 = vmatpush2.msra.mxu0 %v5367
      %5441 = vmatprep.subr.mxu0 0.0
      %5442 = vmatpush2.msra.mxu0 %v5366
      %5443 = vmatprep.subr.mxu0 0.0
      %5444 = vmatpush2.msra.mxu0 %v5365
      %5445 = vmatprep.mubr.f32.mxu0 %v4421
      %5446 = vmatmul.mubr.f32.gmra.mxu0 %v4420
      %v5447 = vpop.f32.mrf.mxu0
      %v5448 = vadd.f32 0.0, %v5447
      %v5449 = vpop.f32.mrf.mxu0
      %5450 = vmatprep.mubr.f32.mxu0 %v5347
      %5451 = vmatmul.mubr.f32.gmra.mxu0 %v5346
      %v5452 = vpop.f32.mrf.mxu0
      %v5453 = vadd.f32 0.0, %v5452
      %v5454 = vpop.f32.mrf.mxu0
      %5455 = vdwg.mxu0
      %v5456 = vadd.f32 %v5344, %v5448
      %v5457 = vadd.f32 %v5345, %v5453
      %v5458 = vld [vmem:[%s138 + $0x50] sm:$0xfe]
      %v5459 = vld [vmem:[%s138 + $0x58] sm:$0xfe]
      %v5460 = vld [vmem:[%s138 + $0x60] sm:$0xff]
      %v5461 = vld [vmem:[%s138 + $0x68] sm:$0xff]
      %v5462 = vld [vmem:[%s138 + $0x70] sm:$0x1]
      %v5463 = vld [vmem:[%s138 + $0x78] sm:$0x1]
      %s5464 = scalar_lea.vmem %s1, 10496
      %v5465 = vld [vmem:[%s5464] sm:$0xff]
      %v5466 = vld [vmem:[%s5464 + $0x8] sm:$0xff]
      %v5467 = vld [vmem:[%s5464 + $0x10] sm:$0xff]
      %v5468 = vld [vmem:[%s5464 + $0x18] sm:$0xff]
      %v5469 = vld [vmem:[%s5464 + $0x20] sm:$0xff]
      %v5470 = vld [vmem:[%s5464 + $0x28] sm:$0xff]
      %v5471 = vld [vmem:[%s5464 + $0x30] sm:$0xff]
      %v5472 = vld [vmem:[%s5464 + $0x38] sm:$0xff]
      %v5473 = vld [vmem:[%s5464 + $0x40] sm:$0xff]
      %v5474 = vld [vmem:[%s5464 + $0x48] sm:$0xff]
      %v5475 = vld [vmem:[%s5464 + $0x50] sm:$0xff]
      %v5476 = vld [vmem:[%s5464 + $0x58] sm:$0xff]
      %v5477 = vld [vmem:[%s5464 + $0x60] sm:$0xff]
      %v5478 = vld [vmem:[%s5464 + $0x68] sm:$0xff]
      %v5479 = vld [vmem:[%s5464 + $0x70] sm:$0xff]
      %v5480 = vld [vmem:[%s5464 + $0x78] sm:$0xff]
      %v5481 = vld [vmem:[%s5464 + $0x80] sm:$0xff]
      %v5482 = vld [vmem:[%s5464 + $0x88] sm:$0xff]
      %v5483 = vld [vmem:[%s5464 + $0x90] sm:$0xff]
      %v5484 = vld [vmem:[%s5464 + $0x98] sm:$0xff]
      %v5485 = vld [vmem:[%s5464 + $0xa0] sm:$0xff]
      %v5486 = vld [vmem:[%s5464 + $0xa8] sm:$0xff]
      %v5487 = vld [vmem:[%s5464 + $0xb0] sm:$0xff]
      %v5488 = vld [vmem:[%s5464 + $0xb8] sm:$0xff]
      %v5489 = vld [vmem:[%s5464 + $0xc0] sm:$0xff]
      %v5490 = vld [vmem:[%s5464 + $0xc8] sm:$0xff]
      %v5491 = vld [vmem:[%s5464 + $0xd0] sm:$0xff]
      %v5492 = vld [vmem:[%s5464 + $0xd8] sm:$0xff]
      %v5493 = vld [vmem:[%s5464 + $0xe0] sm:$0xff]
      %v5494 = vld [vmem:[%s5464 + $0xe8] sm:$0xff]
      %v5495 = vld [vmem:[%s5464 + $0xf0] sm:$0xff]
      %v5496 = vld [vmem:[%s5464 + $0xf8] sm:$0xff]
      %v5503 = vrot.slane %v5458, 1
      %v5504 = vrot.slane %v5460, 1
      %v5505 = vsel %vm223, %v5503, %v5504
      %v5506 = vrot.slane %v5459, 1
      %v5507 = vrot.slane %v5461, 1
      %v5508 = vsel %vm223, %v5506, %v5507
      %v5509 = vrot.slane %v5462, 1
      %v5510 = vsel %vm223, %v5504, %v5509
      %v5511 = vrot.slane %v5463, 1
      %v5512 = vsel %vm223, %v5507, %v5511
      %5517 = vmatprep.subr.mxu0 0.0
      %5518 = vmatpush1.msra.mxu0 %v5480
      %5519 = vmatprep.subr.mxu0 0.0
      %5520 = vmatpush1.msra.mxu0 %v5479
      %5521 = vmatprep.subr.mxu0 0.0
      %5522 = vmatpush1.msra.mxu0 %v5478
      %5523 = vmatprep.subr.mxu0 0.0
      %5524 = vmatpush1.msra.mxu0 %v5477
      %5525 = vmatprep.subr.mxu0 0.0
      %5526 = vmatpush1.msra.mxu0 %v5476
      %5527 = vmatprep.subr.mxu0 0.0
      %5528 = vmatpush1.msra.mxu0 %v5475
      %5529 = vmatprep.subr.mxu0 0.0
      %5530 = vmatpush1.msra.mxu0 %v5474
      %5531 = vmatprep.subr.mxu0 0.0
      %5532 = vmatpush1.msra.mxu0 %v5473
      %5533 = vmatprep.subr.mxu0 0.0
      %5534 = vmatpush1.msra.mxu0 %v5472
      %5535 = vmatprep.subr.mxu0 0.0
      %5536 = vmatpush1.msra.mxu0 %v5471
      %5537 = vmatprep.subr.mxu0 0.0
      %5538 = vmatpush1.msra.mxu0 %v5470
      %5539 = vmatprep.subr.mxu0 0.0
      %5540 = vmatpush1.msra.mxu0 %v5469
      %5541 = vmatprep.subr.mxu0 0.0
      %5542 = vmatpush1.msra.mxu0 %v5468
      %5543 = vmatprep.subr.mxu0 0.0
      %5544 = vmatpush1.msra.mxu0 %v5467
      %5545 = vmatprep.subr.mxu0 0.0
      %5546 = vmatpush1.msra.mxu0 %v5466
      %5547 = vmatprep.subr.mxu0 0.0
      %5548 = vmatpush1.msra.mxu0 %v5465
      %5549 = vmatprep.subr.mxu0 0.0
      %5550 = vmatpush2.msra.mxu0 %v5496
      %5551 = vmatprep.subr.mxu0 0.0
      %5552 = vmatpush2.msra.mxu0 %v5495
      %5553 = vmatprep.subr.mxu0 0.0
      %5554 = vmatpush2.msra.mxu0 %v5494
      %5555 = vmatprep.subr.mxu0 0.0
      %5556 = vmatpush2.msra.mxu0 %v5493
      %5557 = vmatprep.subr.mxu0 0.0
      %5558 = vmatpush2.msra.mxu0 %v5492
      %5559 = vmatprep.subr.mxu0 0.0
      %5560 = vmatpush2.msra.mxu0 %v5491
      %5561 = vmatprep.subr.mxu0 0.0
      %5562 = vmatpush2.msra.mxu0 %v5490
      %5563 = vmatprep.subr.mxu0 0.0
      %5564 = vmatpush2.msra.mxu0 %v5489
      %5565 = vmatprep.subr.mxu0 0.0
      %5566 = vmatpush2.msra.mxu0 %v5488
      %5567 = vmatprep.subr.mxu0 0.0
      %5568 = vmatpush2.msra.mxu0 %v5487
      %5569 = vmatprep.subr.mxu0 0.0
      %5570 = vmatpush2.msra.mxu0 %v5486
      %5571 = vmatprep.subr.mxu0 0.0
      %5572 = vmatpush2.msra.mxu0 %v5485
      %5573 = vmatprep.subr.mxu0 0.0
      %5574 = vmatpush2.msra.mxu0 %v5484
      %5575 = vmatprep.subr.mxu0 0.0
      %5576 = vmatpush2.msra.mxu0 %v5483
      %5577 = vmatprep.subr.mxu0 0.0
      %5578 = vmatpush2.msra.mxu0 %v5482
      %5579 = vmatprep.subr.mxu0 0.0
      %5580 = vmatpush2.msra.mxu0 %v5481
      %5581 = vmatprep.mubr.f32.mxu0 %v5508
      %5582 = vmatmul.mubr.f32.gmra.mxu0 %v5505
      %v5583 = vpop.f32.mrf.mxu0
      %v5584 = vadd.f32 0.0, %v5583
      %v5585 = vpop.f32.mrf.mxu0
      %5586 = vmatprep.mubr.f32.mxu0 %v5512
      %5587 = vmatmul.mubr.f32.gmra.mxu0 %v5510
      %v5588 = vpop.f32.mrf.mxu0
      %v5589 = vadd.f32 0.0, %v5588
      %v5590 = vpop.f32.mrf.mxu0
      %5591 = vdwg.mxu0
      %v5592 = vadd.f32 %v5456, %v5584
      %v5593 = vadd.f32 %v5457, %v5589
      %v5594 = vld [vmem:[%s138 + $0x50] sm:$0xfc]
      %v5595 = vld [vmem:[%s138 + $0x58] sm:$0xfc]
      %v5596 = vld [vmem:[%s138 + $0x70] sm:$0x3]
      %v5597 = vld [vmem:[%s138 + $0x78] sm:$0x3]
      %s5598 = scalar_lea.vmem %s1, 10752
      %v5599 = vld [vmem:[%s5598] sm:$0xff]
      %v5600 = vld [vmem:[%s5598 + $0x8] sm:$0xff]
      %v5601 = vld [vmem:[%s5598 + $0x10] sm:$0xff]
      %v5602 = vld [vmem:[%s5598 + $0x18] sm:$0xff]
      %v5603 = vld [vmem:[%s5598 + $0x20] sm:$0xff]
      %v5604 = vld [vmem:[%s5598 + $0x28] sm:$0xff]
      %v5605 = vld [vmem:[%s5598 + $0x30] sm:$0xff]
      %v5606 = vld [vmem:[%s5598 + $0x38] sm:$0xff]
      %v5607 = vld [vmem:[%s5598 + $0x40] sm:$0xff]
      %v5608 = vld [vmem:[%s5598 + $0x48] sm:$0xff]
      %v5609 = vld [vmem:[%s5598 + $0x50] sm:$0xff]
      %v5610 = vld [vmem:[%s5598 + $0x58] sm:$0xff]
      %v5611 = vld [vmem:[%s5598 + $0x60] sm:$0xff]
      %v5612 = vld [vmem:[%s5598 + $0x68] sm:$0xff]
      %v5613 = vld [vmem:[%s5598 + $0x70] sm:$0xff]
      %v5614 = vld [vmem:[%s5598 + $0x78] sm:$0xff]
      %v5615 = vld [vmem:[%s5598 + $0x80] sm:$0xff]
      %v5616 = vld [vmem:[%s5598 + $0x88] sm:$0xff]
      %v5617 = vld [vmem:[%s5598 + $0x90] sm:$0xff]
      %v5618 = vld [vmem:[%s5598 + $0x98] sm:$0xff]
      %v5619 = vld [vmem:[%s5598 + $0xa0] sm:$0xff]
      %v5620 = vld [vmem:[%s5598 + $0xa8] sm:$0xff]
      %v5621 = vld [vmem:[%s5598 + $0xb0] sm:$0xff]
      %v5622 = vld [vmem:[%s5598 + $0xb8] sm:$0xff]
      %v5623 = vld [vmem:[%s5598 + $0xc0] sm:$0xff]
      %v5624 = vld [vmem:[%s5598 + $0xc8] sm:$0xff]
      %v5625 = vld [vmem:[%s5598 + $0xd0] sm:$0xff]
      %v5626 = vld [vmem:[%s5598 + $0xd8] sm:$0xff]
      %v5627 = vld [vmem:[%s5598 + $0xe0] sm:$0xff]
      %v5628 = vld [vmem:[%s5598 + $0xe8] sm:$0xff]
      %v5629 = vld [vmem:[%s5598 + $0xf0] sm:$0xff]
      %v5630 = vld [vmem:[%s5598 + $0xf8] sm:$0xff]
      %v5635 = vrot.slane %v5594, 2
      %v5636 = vrot.slane %v5460, 2
      %v5637 = vsel %vm429, %v5635, %v5636
      %v5638 = vrot.slane %v5595, 2
      %v5639 = vrot.slane %v5461, 2
      %v5640 = vsel %vm429, %v5638, %v5639
      %v5641 = vrot.slane %v5596, 2
      %v5642 = vsel %vm429, %v5636, %v5641
      %v5643 = vrot.slane %v5597, 2
      %v5644 = vsel %vm429, %v5639, %v5643
      %5649 = vmatprep.subr.mxu0 0.0
      %5650 = vmatpush1.msra.mxu0 %v5614
      %5651 = vmatprep.subr.mxu0 0.0
      %5652 = vmatpush1.msra.mxu0 %v5613
      %5653 = vmatprep.subr.mxu0 0.0
      %5654 = vmatpush1.msra.mxu0 %v5612
      %5655 = vmatprep.subr.mxu0 0.0
      %5656 = vmatpush1.msra.mxu0 %v5611
      %5657 = vmatprep.subr.mxu0 0.0
      %5658 = vmatpush1.msra.mxu0 %v5610
      %5659 = vmatprep.subr.mxu0 0.0
      %5660 = vmatpush1.msra.mxu0 %v5609
      %5661 = vmatprep.subr.mxu0 0.0
      %5662 = vmatpush1.msra.mxu0 %v5608
      %5663 = vmatprep.subr.mxu0 0.0
      %5664 = vmatpush1.msra.mxu0 %v5607
      %5665 = vmatprep.subr.mxu0 0.0
      %5666 = vmatpush1.msra.mxu0 %v5606
      %5667 = vmatprep.subr.mxu0 0.0
      %5668 = vmatpush1.msra.mxu0 %v5605
      %5669 = vmatprep.subr.mxu0 0.0
      %5670 = vmatpush1.msra.mxu0 %v5604
      %5671 = vmatprep.subr.mxu0 0.0
      %5672 = vmatpush1.msra.mxu0 %v5603
      %5673 = vmatprep.subr.mxu0 0.0
      %5674 = vmatpush1.msra.mxu0 %v5602
      %5675 = vmatprep.subr.mxu0 0.0
      %5676 = vmatpush1.msra.mxu0 %v5601
      %5677 = vmatprep.subr.mxu0 0.0
      %5678 = vmatpush1.msra.mxu0 %v5600
      %5679 = vmatprep.subr.mxu0 0.0
      %5680 = vmatpush1.msra.mxu0 %v5599
      %5681 = vmatprep.subr.mxu0 0.0
      %5682 = vmatpush2.msra.mxu0 %v5630
      %5683 = vmatprep.subr.mxu0 0.0
      %5684 = vmatpush2.msra.mxu0 %v5629
      %5685 = vmatprep.subr.mxu0 0.0
      %5686 = vmatpush2.msra.mxu0 %v5628
      %5687 = vmatprep.subr.mxu0 0.0
      %5688 = vmatpush2.msra.mxu0 %v5627
      %5689 = vmatprep.subr.mxu0 0.0
      %5690 = vmatpush2.msra.mxu0 %v5626
      %5691 = vmatprep.subr.mxu0 0.0
      %5692 = vmatpush2.msra.mxu0 %v5625
      %5693 = vmatprep.subr.mxu0 0.0
      %5694 = vmatpush2.msra.mxu0 %v5624
      %5695 = vmatprep.subr.mxu0 0.0
      %5696 = vmatpush2.msra.mxu0 %v5623
      %5697 = vmatprep.subr.mxu0 0.0
      %5698 = vmatpush2.msra.mxu0 %v5622
      %5699 = vmatprep.subr.mxu0 0.0
      %5700 = vmatpush2.msra.mxu0 %v5621
      %5701 = vmatprep.subr.mxu0 0.0
      %5702 = vmatpush2.msra.mxu0 %v5620
      %5703 = vmatprep.subr.mxu0 0.0
      %5704 = vmatpush2.msra.mxu0 %v5619
      %5705 = vmatprep.subr.mxu0 0.0
      %5706 = vmatpush2.msra.mxu0 %v5618
      %5707 = vmatprep.subr.mxu0 0.0
      %5708 = vmatpush2.msra.mxu0 %v5617
      %5709 = vmatprep.subr.mxu0 0.0
      %5710 = vmatpush2.msra.mxu0 %v5616
      %5711 = vmatprep.subr.mxu0 0.0
      %5712 = vmatpush2.msra.mxu0 %v5615
      %5713 = vmatprep.mubr.f32.mxu0 %v5640
      %5714 = vmatmul.mubr.f32.gmra.mxu0 %v5637
      %v5715 = vpop.f32.mrf.mxu0
      %v5716 = vadd.f32 0.0, %v5715
      %v5717 = vpop.f32.mrf.mxu0
      %5718 = vmatprep.mubr.f32.mxu0 %v5644
      %5719 = vmatmul.mubr.f32.gmra.mxu0 %v5642
      %v5720 = vpop.f32.mrf.mxu0
      %v5721 = vadd.f32 0.0, %v5720
      %v5722 = vpop.f32.mrf.mxu0
      %5723 = vdwg.mxu0
      %v5724 = vadd.f32 %v5592, %v5716
      %v5725 = vadd.f32 %v5593, %v5721
      %v5726 = vld [vmem:[%s138 + $0x50] sm:$0xf8]
      %v5727 = vld [vmem:[%s138 + $0x58] sm:$0xf8]
      %v5728 = vld [vmem:[%s138 + $0x70] sm:$0x7]
      %v5729 = vld [vmem:[%s138 + $0x78] sm:$0x7]
      %s5730 = scalar_lea.vmem %s1, 11008
      %v5731 = vld [vmem:[%s5730] sm:$0xff]
      %v5732 = vld [vmem:[%s5730 + $0x8] sm:$0xff]
      %v5733 = vld [vmem:[%s5730 + $0x10] sm:$0xff]
      %v5734 = vld [vmem:[%s5730 + $0x18] sm:$0xff]
      %v5735 = vld [vmem:[%s5730 + $0x20] sm:$0xff]
      %v5736 = vld [vmem:[%s5730 + $0x28] sm:$0xff]
      %v5737 = vld [vmem:[%s5730 + $0x30] sm:$0xff]
      %v5738 = vld [vmem:[%s5730 + $0x38] sm:$0xff]
      %v5739 = vld [vmem:[%s5730 + $0x40] sm:$0xff]
      %v5740 = vld [vmem:[%s5730 + $0x48] sm:$0xff]
      %v5741 = vld [vmem:[%s5730 + $0x50] sm:$0xff]
      %v5742 = vld [vmem:[%s5730 + $0x58] sm:$0xff]
      %v5743 = vld [vmem:[%s5730 + $0x60] sm:$0xff]
      %v5744 = vld [vmem:[%s5730 + $0x68] sm:$0xff]
      %v5745 = vld [vmem:[%s5730 + $0x70] sm:$0xff]
      %v5746 = vld [vmem:[%s5730 + $0x78] sm:$0xff]
      %v5747 = vld [vmem:[%s5730 + $0x80] sm:$0xff]
      %v5748 = vld [vmem:[%s5730 + $0x88] sm:$0xff]
      %v5749 = vld [vmem:[%s5730 + $0x90] sm:$0xff]
      %v5750 = vld [vmem:[%s5730 + $0x98] sm:$0xff]
      %v5751 = vld [vmem:[%s5730 + $0xa0] sm:$0xff]
      %v5752 = vld [vmem:[%s5730 + $0xa8] sm:$0xff]
      %v5753 = vld [vmem:[%s5730 + $0xb0] sm:$0xff]
      %v5754 = vld [vmem:[%s5730 + $0xb8] sm:$0xff]
      %v5755 = vld [vmem:[%s5730 + $0xc0] sm:$0xff]
      %v5756 = vld [vmem:[%s5730 + $0xc8] sm:$0xff]
      %v5757 = vld [vmem:[%s5730 + $0xd0] sm:$0xff]
      %v5758 = vld [vmem:[%s5730 + $0xd8] sm:$0xff]
      %v5759 = vld [vmem:[%s5730 + $0xe0] sm:$0xff]
      %v5760 = vld [vmem:[%s5730 + $0xe8] sm:$0xff]
      %v5761 = vld [vmem:[%s5730 + $0xf0] sm:$0xff]
      %v5762 = vld [vmem:[%s5730 + $0xf8] sm:$0xff]
      %v5767 = vrot.slane %v5726, 3
      %v5768 = vrot.slane %v5460, 3
      %v5769 = vsel %vm562, %v5767, %v5768
      %v5770 = vrot.slane %v5727, 3
      %v5771 = vrot.slane %v5461, 3
      %v5772 = vsel %vm562, %v5770, %v5771
      %v5773 = vrot.slane %v5728, 3
      %v5774 = vsel %vm562, %v5768, %v5773
      %v5775 = vrot.slane %v5729, 3
      %v5776 = vsel %vm562, %v5771, %v5775
      %5781 = vmatprep.subr.mxu0 0.0
      %5782 = vmatpush1.msra.mxu0 %v5746
      %5783 = vmatprep.subr.mxu0 0.0
      %5784 = vmatpush1.msra.mxu0 %v5745
      %5785 = vmatprep.subr.mxu0 0.0
      %5786 = vmatpush1.msra.mxu0 %v5744
      %5787 = vmatprep.subr.mxu0 0.0
      %5788 = vmatpush1.msra.mxu0 %v5743
      %5789 = vmatprep.subr.mxu0 0.0
      %5790 = vmatpush1.msra.mxu0 %v5742
      %5791 = vmatprep.subr.mxu0 0.0
      %5792 = vmatpush1.msra.mxu0 %v5741
      %5793 = vmatprep.subr.mxu0 0.0
      %5794 = vmatpush1.msra.mxu0 %v5740
      %5795 = vmatprep.subr.mxu0 0.0
      %5796 = vmatpush1.msra.mxu0 %v5739
      %5797 = vmatprep.subr.mxu0 0.0
      %5798 = vmatpush1.msra.mxu0 %v5738
      %5799 = vmatprep.subr.mxu0 0.0
      %5800 = vmatpush1.msra.mxu0 %v5737
      %5801 = vmatprep.subr.mxu0 0.0
      %5802 = vmatpush1.msra.mxu0 %v5736
      %5803 = vmatprep.subr.mxu0 0.0
      %5804 = vmatpush1.msra.mxu0 %v5735
      %5805 = vmatprep.subr.mxu0 0.0
      %5806 = vmatpush1.msra.mxu0 %v5734
      %5807 = vmatprep.subr.mxu0 0.0
      %5808 = vmatpush1.msra.mxu0 %v5733
      %5809 = vmatprep.subr.mxu0 0.0
      %5810 = vmatpush1.msra.mxu0 %v5732
      %5811 = vmatprep.subr.mxu0 0.0
      %5812 = vmatpush1.msra.mxu0 %v5731
      %5813 = vmatprep.subr.mxu0 0.0
      %5814 = vmatpush2.msra.mxu0 %v5762
      %5815 = vmatprep.subr.mxu0 0.0
      %5816 = vmatpush2.msra.mxu0 %v5761
      %5817 = vmatprep.subr.mxu0 0.0
      %5818 = vmatpush2.msra.mxu0 %v5760
      %5819 = vmatprep.subr.mxu0 0.0
      %5820 = vmatpush2.msra.mxu0 %v5759
      %5821 = vmatprep.subr.mxu0 0.0
      %5822 = vmatpush2.msra.mxu0 %v5758
      %5823 = vmatprep.subr.mxu0 0.0
      %5824 = vmatpush2.msra.mxu0 %v5757
      %5825 = vmatprep.subr.mxu0 0.0
      %5826 = vmatpush2.msra.mxu0 %v5756
      %5827 = vmatprep.subr.mxu0 0.0
      %5828 = vmatpush2.msra.mxu0 %v5755
      %5829 = vmatprep.subr.mxu0 0.0
      %5830 = vmatpush2.msra.mxu0 %v5754
      %5831 = vmatprep.subr.mxu0 0.0
      %5832 = vmatpush2.msra.mxu0 %v5753
      %5833 = vmatprep.subr.mxu0 0.0
      %5834 = vmatpush2.msra.mxu0 %v5752
      %5835 = vmatprep.subr.mxu0 0.0
      %5836 = vmatpush2.msra.mxu0 %v5751
      %5837 = vmatprep.subr.mxu0 0.0
      %5838 = vmatpush2.msra.mxu0 %v5750
      %5839 = vmatprep.subr.mxu0 0.0
      %5840 = vmatpush2.msra.mxu0 %v5749
      %5841 = vmatprep.subr.mxu0 0.0
      %5842 = vmatpush2.msra.mxu0 %v5748
      %5843 = vmatprep.subr.mxu0 0.0
      %5844 = vmatpush2.msra.mxu0 %v5747
      %5845 = vmatprep.mubr.f32.mxu0 %v5772
      %5846 = vmatmul.mubr.f32.gmra.mxu0 %v5769
      %v5847 = vpop.f32.mrf.mxu0
      %v5848 = vadd.f32 0.0, %v5847
      %v5849 = vpop.f32.mrf.mxu0
      %5850 = vmatprep.mubr.f32.mxu0 %v5776
      %5851 = vmatmul.mubr.f32.gmra.mxu0 %v5774
      %v5852 = vpop.f32.mrf.mxu0
      %v5853 = vadd.f32 0.0, %v5852
      %v5854 = vpop.f32.mrf.mxu0
      %5855 = vdwg.mxu0
      %v5856 = vadd.f32 %v5724, %v5848
      %v5857 = vadd.f32 %v5725, %v5853
      %v5858 = vld [vmem:[%s138 + $0x50] sm:$0xf0]
      %v5859 = vld [vmem:[%s138 + $0x58] sm:$0xf0]
      %v5860 = vld [vmem:[%s138 + $0x70] sm:$0xf]
      %v5861 = vld [vmem:[%s138 + $0x78] sm:$0xf]
      %s5862 = scalar_lea.vmem %s1, 11264
      %v5863 = vld [vmem:[%s5862] sm:$0xff]
      %v5864 = vld [vmem:[%s5862 + $0x8] sm:$0xff]
      %v5865 = vld [vmem:[%s5862 + $0x10] sm:$0xff]
      %v5866 = vld [vmem:[%s5862 + $0x18] sm:$0xff]
      %v5867 = vld [vmem:[%s5862 + $0x20] sm:$0xff]
      %v5868 = vld [vmem:[%s5862 + $0x28] sm:$0xff]
      %v5869 = vld [vmem:[%s5862 + $0x30] sm:$0xff]
      %v5870 = vld [vmem:[%s5862 + $0x38] sm:$0xff]
      %v5871 = vld [vmem:[%s5862 + $0x40] sm:$0xff]
      %v5872 = vld [vmem:[%s5862 + $0x48] sm:$0xff]
      %v5873 = vld [vmem:[%s5862 + $0x50] sm:$0xff]
      %v5874 = vld [vmem:[%s5862 + $0x58] sm:$0xff]
      %v5875 = vld [vmem:[%s5862 + $0x60] sm:$0xff]
      %v5876 = vld [vmem:[%s5862 + $0x68] sm:$0xff]
      %v5877 = vld [vmem:[%s5862 + $0x70] sm:$0xff]
      %v5878 = vld [vmem:[%s5862 + $0x78] sm:$0xff]
      %v5879 = vld [vmem:[%s5862 + $0x80] sm:$0xff]
      %v5880 = vld [vmem:[%s5862 + $0x88] sm:$0xff]
      %v5881 = vld [vmem:[%s5862 + $0x90] sm:$0xff]
      %v5882 = vld [vmem:[%s5862 + $0x98] sm:$0xff]
      %v5883 = vld [vmem:[%s5862 + $0xa0] sm:$0xff]
      %v5884 = vld [vmem:[%s5862 + $0xa8] sm:$0xff]
      %v5885 = vld [vmem:[%s5862 + $0xb0] sm:$0xff]
      %v5886 = vld [vmem:[%s5862 + $0xb8] sm:$0xff]
      %v5887 = vld [vmem:[%s5862 + $0xc0] sm:$0xff]
      %v5888 = vld [vmem:[%s5862 + $0xc8] sm:$0xff]
      %v5889 = vld [vmem:[%s5862 + $0xd0] sm:$0xff]
      %v5890 = vld [vmem:[%s5862 + $0xd8] sm:$0xff]
      %v5891 = vld [vmem:[%s5862 + $0xe0] sm:$0xff]
      %v5892 = vld [vmem:[%s5862 + $0xe8] sm:$0xff]
      %v5893 = vld [vmem:[%s5862 + $0xf0] sm:$0xff]
      %v5894 = vld [vmem:[%s5862 + $0xf8] sm:$0xff]
      %v5899 = vrot.slane %v5858, 4
      %v5900 = vrot.slane %v5460, 4
      %v5901 = vsel %vm695, %v5899, %v5900
      %v5902 = vrot.slane %v5859, 4
      %v5903 = vrot.slane %v5461, 4
      %v5904 = vsel %vm695, %v5902, %v5903
      %v5905 = vrot.slane %v5860, 4
      %v5906 = vsel %vm695, %v5900, %v5905
      %v5907 = vrot.slane %v5861, 4
      %v5908 = vsel %vm695, %v5903, %v5907
      %5913 = vmatprep.subr.mxu0 0.0
      %5914 = vmatpush1.msra.mxu0 %v5878
      %5915 = vmatprep.subr.mxu0 0.0
      %5916 = vmatpush1.msra.mxu0 %v5877
      %5917 = vmatprep.subr.mxu0 0.0
      %5918 = vmatpush1.msra.mxu0 %v5876
      %5919 = vmatprep.subr.mxu0 0.0
      %5920 = vmatpush1.msra.mxu0 %v5875
      %5921 = vmatprep.subr.mxu0 0.0
      %5922 = vmatpush1.msra.mxu0 %v5874
      %5923 = vmatprep.subr.mxu0 0.0
      %5924 = vmatpush1.msra.mxu0 %v5873
      %5925 = vmatprep.subr.mxu0 0.0
      %5926 = vmatpush1.msra.mxu0 %v5872
      %5927 = vmatprep.subr.mxu0 0.0
      %5928 = vmatpush1.msra.mxu0 %v5871
      %5929 = vmatprep.subr.mxu0 0.0
      %5930 = vmatpush1.msra.mxu0 %v5870
      %5931 = vmatprep.subr.mxu0 0.0
      %5932 = vmatpush1.msra.mxu0 %v5869
      %5933 = vmatprep.subr.mxu0 0.0
      %5934 = vmatpush1.msra.mxu0 %v5868
      %5935 = vmatprep.subr.mxu0 0.0
      %5936 = vmatpush1.msra.mxu0 %v5867
      %5937 = vmatprep.subr.mxu0 0.0
      %5938 = vmatpush1.msra.mxu0 %v5866
      %5939 = vmatprep.subr.mxu0 0.0
      %5940 = vmatpush1.msra.mxu0 %v5865
      %5941 = vmatprep.subr.mxu0 0.0
      %5942 = vmatpush1.msra.mxu0 %v5864
      %5943 = vmatprep.subr.mxu0 0.0
      %5944 = vmatpush1.msra.mxu0 %v5863
      %5945 = vmatprep.subr.mxu0 0.0
      %5946 = vmatpush2.msra.mxu0 %v5894
      %5947 = vmatprep.subr.mxu0 0.0
      %5948 = vmatpush2.msra.mxu0 %v5893
      %5949 = vmatprep.subr.mxu0 0.0
      %5950 = vmatpush2.msra.mxu0 %v5892
      %5951 = vmatprep.subr.mxu0 0.0
      %5952 = vmatpush2.msra.mxu0 %v5891
      %5953 = vmatprep.subr.mxu0 0.0
      %5954 = vmatpush2.msra.mxu0 %v5890
      %5955 = vmatprep.subr.mxu0 0.0
      %5956 = vmatpush2.msra.mxu0 %v5889
      %5957 = vmatprep.subr.mxu0 0.0
      %5958 = vmatpush2.msra.mxu0 %v5888
      %5959 = vmatprep.subr.mxu0 0.0
      %5960 = vmatpush2.msra.mxu0 %v5887
      %5961 = vmatprep.subr.mxu0 0.0
      %5962 = vmatpush2.msra.mxu0 %v5886
      %5963 = vmatprep.subr.mxu0 0.0
      %5964 = vmatpush2.msra.mxu0 %v5885
      %5965 = vmatprep.subr.mxu0 0.0
      %5966 = vmatpush2.msra.mxu0 %v5884
      %5967 = vmatprep.subr.mxu0 0.0
      %5968 = vmatpush2.msra.mxu0 %v5883
      %5969 = vmatprep.subr.mxu0 0.0
      %5970 = vmatpush2.msra.mxu0 %v5882
      %5971 = vmatprep.subr.mxu0 0.0
      %5972 = vmatpush2.msra.mxu0 %v5881
      %5973 = vmatprep.subr.mxu0 0.0
      %5974 = vmatpush2.msra.mxu0 %v5880
      %5975 = vmatprep.subr.mxu0 0.0
      %5976 = vmatpush2.msra.mxu0 %v5879
      %5977 = vmatprep.mubr.f32.mxu0 %v5904
      %5978 = vmatmul.mubr.f32.gmra.mxu0 %v5901
      %v5979 = vpop.f32.mrf.mxu0
      %v5980 = vadd.f32 0.0, %v5979
      %v5981 = vpop.f32.mrf.mxu0
      %5982 = vmatprep.mubr.f32.mxu0 %v5908
      %5983 = vmatmul.mubr.f32.gmra.mxu0 %v5906
      %v5984 = vpop.f32.mrf.mxu0
      %v5985 = vadd.f32 0.0, %v5984
      %v5986 = vpop.f32.mrf.mxu0
      %5987 = vdwg.mxu0
      %v5988 = vadd.f32 %v5856, %v5980
      %v5989 = vadd.f32 %v5857, %v5985
      %v5990 = vld [vmem:[%s138 + $0x50] sm:$0xe0]
      %v5991 = vld [vmem:[%s138 + $0x58] sm:$0xe0]
      %v5992 = vld [vmem:[%s138 + $0x70] sm:$0x1f]
      %v5993 = vld [vmem:[%s138 + $0x78] sm:$0x1f]
      %s5994 = scalar_lea.vmem %s1, 11520
      %v5995 = vld [vmem:[%s5994] sm:$0xff]
      %v5996 = vld [vmem:[%s5994 + $0x8] sm:$0xff]
      %v5997 = vld [vmem:[%s5994 + $0x10] sm:$0xff]
      %v5998 = vld [vmem:[%s5994 + $0x18] sm:$0xff]
      %v5999 = vld [vmem:[%s5994 + $0x20] sm:$0xff]
      %v6000 = vld [vmem:[%s5994 + $0x28] sm:$0xff]
      %v6001 = vld [vmem:[%s5994 + $0x30] sm:$0xff]
      %v6002 = vld [vmem:[%s5994 + $0x38] sm:$0xff]
      %v6003 = vld [vmem:[%s5994 + $0x40] sm:$0xff]
      %v6004 = vld [vmem:[%s5994 + $0x48] sm:$0xff]
      %v6005 = vld [vmem:[%s5994 + $0x50] sm:$0xff]
      %v6006 = vld [vmem:[%s5994 + $0x58] sm:$0xff]
      %v6007 = vld [vmem:[%s5994 + $0x60] sm:$0xff]
      %v6008 = vld [vmem:[%s5994 + $0x68] sm:$0xff]
      %v6009 = vld [vmem:[%s5994 + $0x70] sm:$0xff]
      %v6010 = vld [vmem:[%s5994 + $0x78] sm:$0xff]
      %v6011 = vld [vmem:[%s5994 + $0x80] sm:$0xff]
      %v6012 = vld [vmem:[%s5994 + $0x88] sm:$0xff]
      %v6013 = vld [vmem:[%s5994 + $0x90] sm:$0xff]
      %v6014 = vld [vmem:[%s5994 + $0x98] sm:$0xff]
      %v6015 = vld [vmem:[%s5994 + $0xa0] sm:$0xff]
      %v6016 = vld [vmem:[%s5994 + $0xa8] sm:$0xff]
      %v6017 = vld [vmem:[%s5994 + $0xb0] sm:$0xff]
      %v6018 = vld [vmem:[%s5994 + $0xb8] sm:$0xff]
      %v6019 = vld [vmem:[%s5994 + $0xc0] sm:$0xff]
      %v6020 = vld [vmem:[%s5994 + $0xc8] sm:$0xff]
      %v6021 = vld [vmem:[%s5994 + $0xd0] sm:$0xff]
      %v6022 = vld [vmem:[%s5994 + $0xd8] sm:$0xff]
      %v6023 = vld [vmem:[%s5994 + $0xe0] sm:$0xff]
      %v6024 = vld [vmem:[%s5994 + $0xe8] sm:$0xff]
      %v6025 = vld [vmem:[%s5994 + $0xf0] sm:$0xff]
      %v6026 = vld [vmem:[%s5994 + $0xf8] sm:$0xff]
      %v6031 = vrot.slane %v5990, 5
      %v6032 = vrot.slane %v5460, 5
      %v6033 = vsel %vm828, %v6031, %v6032
      %v6034 = vrot.slane %v5991, 5
      %v6035 = vrot.slane %v5461, 5
      %v6036 = vsel %vm828, %v6034, %v6035
      %v6037 = vrot.slane %v5992, 5
      %v6038 = vsel %vm828, %v6032, %v6037
      %v6039 = vrot.slane %v5993, 5
      %v6040 = vsel %vm828, %v6035, %v6039
      %6045 = vmatprep.subr.mxu0 0.0
      %6046 = vmatpush1.msra.mxu0 %v6010
      %6047 = vmatprep.subr.mxu0 0.0
      %6048 = vmatpush1.msra.mxu0 %v6009
      %6049 = vmatprep.subr.mxu0 0.0
      %6050 = vmatpush1.msra.mxu0 %v6008
      %6051 = vmatprep.subr.mxu0 0.0
      %6052 = vmatpush1.msra.mxu0 %v6007
      %6053 = vmatprep.subr.mxu0 0.0
      %6054 = vmatpush1.msra.mxu0 %v6006
      %6055 = vmatprep.subr.mxu0 0.0
      %6056 = vmatpush1.msra.mxu0 %v6005
      %6057 = vmatprep.subr.mxu0 0.0
      %6058 = vmatpush1.msra.mxu0 %v6004
      %6059 = vmatprep.subr.mxu0 0.0
      %6060 = vmatpush1.msra.mxu0 %v6003
      %6061 = vmatprep.subr.mxu0 0.0
      %6062 = vmatpush1.msra.mxu0 %v6002
      %6063 = vmatprep.subr.mxu0 0.0
      %6064 = vmatpush1.msra.mxu0 %v6001
      %6065 = vmatprep.subr.mxu0 0.0
      %6066 = vmatpush1.msra.mxu0 %v6000
      %6067 = vmatprep.subr.mxu0 0.0
      %6068 = vmatpush1.msra.mxu0 %v5999
      %6069 = vmatprep.subr.mxu0 0.0
      %6070 = vmatpush1.msra.mxu0 %v5998
      %6071 = vmatprep.subr.mxu0 0.0
      %6072 = vmatpush1.msra.mxu0 %v5997
      %6073 = vmatprep.subr.mxu0 0.0
      %6074 = vmatpush1.msra.mxu0 %v5996
      %6075 = vmatprep.subr.mxu0 0.0
      %6076 = vmatpush1.msra.mxu0 %v5995
      %6077 = vmatprep.subr.mxu0 0.0
      %6078 = vmatpush2.msra.mxu0 %v6026
      %6079 = vmatprep.subr.mxu0 0.0
      %6080 = vmatpush2.msra.mxu0 %v6025
      %6081 = vmatprep.subr.mxu0 0.0
      %6082 = vmatpush2.msra.mxu0 %v6024
      %6083 = vmatprep.subr.mxu0 0.0
      %6084 = vmatpush2.msra.mxu0 %v6023
      %6085 = vmatprep.subr.mxu0 0.0
      %6086 = vmatpush2.msra.mxu0 %v6022
      %6087 = vmatprep.subr.mxu0 0.0
      %6088 = vmatpush2.msra.mxu0 %v6021
      %6089 = vmatprep.subr.mxu0 0.0
      %6090 = vmatpush2.msra.mxu0 %v6020
      %6091 = vmatprep.subr.mxu0 0.0
      %6092 = vmatpush2.msra.mxu0 %v6019
      %6093 = vmatprep.subr.mxu0 0.0
      %6094 = vmatpush2.msra.mxu0 %v6018
      %6095 = vmatprep.subr.mxu0 0.0
      %6096 = vmatpush2.msra.mxu0 %v6017
      %6097 = vmatprep.subr.mxu0 0.0
      %6098 = vmatpush2.msra.mxu0 %v6016
      %6099 = vmatprep.subr.mxu0 0.0
      %6100 = vmatpush2.msra.mxu0 %v6015
      %6101 = vmatprep.subr.mxu0 0.0
      %6102 = vmatpush2.msra.mxu0 %v6014
      %6103 = vmatprep.subr.mxu0 0.0
      %6104 = vmatpush2.msra.mxu0 %v6013
      %6105 = vmatprep.subr.mxu0 0.0
      %6106 = vmatpush2.msra.mxu0 %v6012
      %6107 = vmatprep.subr.mxu0 0.0
      %6108 = vmatpush2.msra.mxu0 %v6011
      %6109 = vmatprep.mubr.f32.mxu0 %v6036
      %6110 = vmatmul.mubr.f32.gmra.mxu0 %v6033
      %v6111 = vpop.f32.mrf.mxu0
      %v6112 = vadd.f32 0.0, %v6111
      %v6113 = vpop.f32.mrf.mxu0
      %6114 = vmatprep.mubr.f32.mxu0 %v6040
      %6115 = vmatmul.mubr.f32.gmra.mxu0 %v6038
      %v6116 = vpop.f32.mrf.mxu0
      %v6117 = vadd.f32 0.0, %v6116
      %v6118 = vpop.f32.mrf.mxu0
      %6119 = vdwg.mxu0
      %v6120 = vadd.f32 %v5988, %v6112
      %v6121 = vadd.f32 %v5989, %v6117
      %v6122 = vld [vmem:[%s138 + $0x50] sm:$0xc0]
      %v6123 = vld [vmem:[%s138 + $0x58] sm:$0xc0]
      %v6124 = vld [vmem:[%s138 + $0x70] sm:$0x3f]
      %v6125 = vld [vmem:[%s138 + $0x78] sm:$0x3f]
      %s6126 = scalar_lea.vmem %s1, 11776
      %v6127 = vld [vmem:[%s6126] sm:$0xff]
      %v6128 = vld [vmem:[%s6126 + $0x8] sm:$0xff]
      %v6129 = vld [vmem:[%s6126 + $0x10] sm:$0xff]
      %v6130 = vld [vmem:[%s6126 + $0x18] sm:$0xff]
      %v6131 = vld [vmem:[%s6126 + $0x20] sm:$0xff]
      %v6132 = vld [vmem:[%s6126 + $0x28] sm:$0xff]
      %v6133 = vld [vmem:[%s6126 + $0x30] sm:$0xff]
      %v6134 = vld [vmem:[%s6126 + $0x38] sm:$0xff]
      %v6135 = vld [vmem:[%s6126 + $0x40] sm:$0xff]
      %v6136 = vld [vmem:[%s6126 + $0x48] sm:$0xff]
      %v6137 = vld [vmem:[%s6126 + $0x50] sm:$0xff]
      %v6138 = vld [vmem:[%s6126 + $0x58] sm:$0xff]
      %v6139 = vld [vmem:[%s6126 + $0x60] sm:$0xff]
      %v6140 = vld [vmem:[%s6126 + $0x68] sm:$0xff]
      %v6141 = vld [vmem:[%s6126 + $0x70] sm:$0xff]
      %v6142 = vld [vmem:[%s6126 + $0x78] sm:$0xff]
      %v6143 = vld [vmem:[%s6126 + $0x80] sm:$0xff]
      %v6144 = vld [vmem:[%s6126 + $0x88] sm:$0xff]
      %v6145 = vld [vmem:[%s6126 + $0x90] sm:$0xff]
      %v6146 = vld [vmem:[%s6126 + $0x98] sm:$0xff]
      %v6147 = vld [vmem:[%s6126 + $0xa0] sm:$0xff]
      %v6148 = vld [vmem:[%s6126 + $0xa8] sm:$0xff]
      %v6149 = vld [vmem:[%s6126 + $0xb0] sm:$0xff]
      %v6150 = vld [vmem:[%s6126 + $0xb8] sm:$0xff]
      %v6151 = vld [vmem:[%s6126 + $0xc0] sm:$0xff]
      %v6152 = vld [vmem:[%s6126 + $0xc8] sm:$0xff]
      %v6153 = vld [vmem:[%s6126 + $0xd0] sm:$0xff]
      %v6154 = vld [vmem:[%s6126 + $0xd8] sm:$0xff]
      %v6155 = vld [vmem:[%s6126 + $0xe0] sm:$0xff]
      %v6156 = vld [vmem:[%s6126 + $0xe8] sm:$0xff]
      %v6157 = vld [vmem:[%s6126 + $0xf0] sm:$0xff]
      %v6158 = vld [vmem:[%s6126 + $0xf8] sm:$0xff]
      %v6163 = vrot.slane %v6122, 6
      %v6164 = vrot.slane %v5460, 6
      %v6165 = vsel %vm961, %v6163, %v6164
      %v6166 = vrot.slane %v6123, 6
      %v6167 = vrot.slane %v5461, 6
      %v6168 = vsel %vm961, %v6166, %v6167
      %v6169 = vrot.slane %v6124, 6
      %v6170 = vsel %vm961, %v6164, %v6169
      %v6171 = vrot.slane %v6125, 6
      %v6172 = vsel %vm961, %v6167, %v6171
      %6177 = vmatprep.subr.mxu0 0.0
      %6178 = vmatpush1.msra.mxu0 %v6142
      %6179 = vmatprep.subr.mxu0 0.0
      %6180 = vmatpush1.msra.mxu0 %v6141
      %6181 = vmatprep.subr.mxu0 0.0
      %6182 = vmatpush1.msra.mxu0 %v6140
      %6183 = vmatprep.subr.mxu0 0.0
      %6184 = vmatpush1.msra.mxu0 %v6139
      %6185 = vmatprep.subr.mxu0 0.0
      %6186 = vmatpush1.msra.mxu0 %v6138
      %6187 = vmatprep.subr.mxu0 0.0
      %6188 = vmatpush1.msra.mxu0 %v6137
      %6189 = vmatprep.subr.mxu0 0.0
      %6190 = vmatpush1.msra.mxu0 %v6136
      %6191 = vmatprep.subr.mxu0 0.0
      %6192 = vmatpush1.msra.mxu0 %v6135
      %6193 = vmatprep.subr.mxu0 0.0
      %6194 = vmatpush1.msra.mxu0 %v6134
      %6195 = vmatprep.subr.mxu0 0.0
      %6196 = vmatpush1.msra.mxu0 %v6133
      %6197 = vmatprep.subr.mxu0 0.0
      %6198 = vmatpush1.msra.mxu0 %v6132
      %6199 = vmatprep.subr.mxu0 0.0
      %6200 = vmatpush1.msra.mxu0 %v6131
      %6201 = vmatprep.subr.mxu0 0.0
      %6202 = vmatpush1.msra.mxu0 %v6130
      %6203 = vmatprep.subr.mxu0 0.0
      %6204 = vmatpush1.msra.mxu0 %v6129
      %6205 = vmatprep.subr.mxu0 0.0
      %6206 = vmatpush1.msra.mxu0 %v6128
      %6207 = vmatprep.subr.mxu0 0.0
      %6208 = vmatpush1.msra.mxu0 %v6127
      %6209 = vmatprep.subr.mxu0 0.0
      %6210 = vmatpush2.msra.mxu0 %v6158
      %6211 = vmatprep.subr.mxu0 0.0
      %6212 = vmatpush2.msra.mxu0 %v6157
      %6213 = vmatprep.subr.mxu0 0.0
      %6214 = vmatpush2.msra.mxu0 %v6156
      %6215 = vmatprep.subr.mxu0 0.0
      %6216 = vmatpush2.msra.mxu0 %v6155
      %6217 = vmatprep.subr.mxu0 0.0
      %6218 = vmatpush2.msra.mxu0 %v6154
      %6219 = vmatprep.subr.mxu0 0.0
      %6220 = vmatpush2.msra.mxu0 %v6153
      %6221 = vmatprep.subr.mxu0 0.0
      %6222 = vmatpush2.msra.mxu0 %v6152
      %6223 = vmatprep.subr.mxu0 0.0
      %6224 = vmatpush2.msra.mxu0 %v6151
      %6225 = vmatprep.subr.mxu0 0.0
      %6226 = vmatpush2.msra.mxu0 %v6150
      %6227 = vmatprep.subr.mxu0 0.0
      %6228 = vmatpush2.msra.mxu0 %v6149
      %6229 = vmatprep.subr.mxu0 0.0
      %6230 = vmatpush2.msra.mxu0 %v6148
      %6231 = vmatprep.subr.mxu0 0.0
      %6232 = vmatpush2.msra.mxu0 %v6147
      %6233 = vmatprep.subr.mxu0 0.0
      %6234 = vmatpush2.msra.mxu0 %v6146
      %6235 = vmatprep.subr.mxu0 0.0
      %6236 = vmatpush2.msra.mxu0 %v6145
      %6237 = vmatprep.subr.mxu0 0.0
      %6238 = vmatpush2.msra.mxu0 %v6144
      %6239 = vmatprep.subr.mxu0 0.0
      %6240 = vmatpush2.msra.mxu0 %v6143
      %6241 = vmatprep.mubr.f32.mxu0 %v6168
      %6242 = vmatmul.mubr.f32.gmra.mxu0 %v6165
      %v6243 = vpop.f32.mrf.mxu0
      %v6244 = vadd.f32 0.0, %v6243
      %v6245 = vpop.f32.mrf.mxu0
      %6246 = vmatprep.mubr.f32.mxu0 %v6172
      %6247 = vmatmul.mubr.f32.gmra.mxu0 %v6170
      %v6248 = vpop.f32.mrf.mxu0
      %v6249 = vadd.f32 0.0, %v6248
      %v6250 = vpop.f32.mrf.mxu0
      %6251 = vdwg.mxu0
      %v6252 = vadd.f32 %v6120, %v6244
      %v6253 = vadd.f32 %v6121, %v6249
      %v6254 = vld [vmem:[%s138 + $0x50] sm:$0x80]
      %v6255 = vld [vmem:[%s138 + $0x58] sm:$0x80]
      %v6256 = vld [vmem:[%s138 + $0x70] sm:$0x7f]
      %v6257 = vld [vmem:[%s138 + $0x78] sm:$0x7f]
      %s6258 = scalar_lea.vmem %s1, 12032
      %v6259 = vld [vmem:[%s6258] sm:$0xff]
      %v6260 = vld [vmem:[%s6258 + $0x8] sm:$0xff]
      %v6261 = vld [vmem:[%s6258 + $0x10] sm:$0xff]
      %v6262 = vld [vmem:[%s6258 + $0x18] sm:$0xff]
      %v6263 = vld [vmem:[%s6258 + $0x20] sm:$0xff]
      %v6264 = vld [vmem:[%s6258 + $0x28] sm:$0xff]
      %v6265 = vld [vmem:[%s6258 + $0x30] sm:$0xff]
      %v6266 = vld [vmem:[%s6258 + $0x38] sm:$0xff]
      %v6267 = vld [vmem:[%s6258 + $0x40] sm:$0xff]
      %v6268 = vld [vmem:[%s6258 + $0x48] sm:$0xff]
      %v6269 = vld [vmem:[%s6258 + $0x50] sm:$0xff]
      %v6270 = vld [vmem:[%s6258 + $0x58] sm:$0xff]
      %v6271 = vld [vmem:[%s6258 + $0x60] sm:$0xff]
      %v6272 = vld [vmem:[%s6258 + $0x68] sm:$0xff]
      %v6273 = vld [vmem:[%s6258 + $0x70] sm:$0xff]
      %v6274 = vld [vmem:[%s6258 + $0x78] sm:$0xff]
      %v6275 = vld [vmem:[%s6258 + $0x80] sm:$0xff]
      %v6276 = vld [vmem:[%s6258 + $0x88] sm:$0xff]
      %v6277 = vld [vmem:[%s6258 + $0x90] sm:$0xff]
      %v6278 = vld [vmem:[%s6258 + $0x98] sm:$0xff]
      %v6279 = vld [vmem:[%s6258 + $0xa0] sm:$0xff]
      %v6280 = vld [vmem:[%s6258 + $0xa8] sm:$0xff]
      %v6281 = vld [vmem:[%s6258 + $0xb0] sm:$0xff]
      %v6282 = vld [vmem:[%s6258 + $0xb8] sm:$0xff]
      %v6283 = vld [vmem:[%s6258 + $0xc0] sm:$0xff]
      %v6284 = vld [vmem:[%s6258 + $0xc8] sm:$0xff]
      %v6285 = vld [vmem:[%s6258 + $0xd0] sm:$0xff]
      %v6286 = vld [vmem:[%s6258 + $0xd8] sm:$0xff]
      %v6287 = vld [vmem:[%s6258 + $0xe0] sm:$0xff]
      %v6288 = vld [vmem:[%s6258 + $0xe8] sm:$0xff]
      %v6289 = vld [vmem:[%s6258 + $0xf0] sm:$0xff]
      %v6290 = vld [vmem:[%s6258 + $0xf8] sm:$0xff]
      %v6295 = vrot.slane %v6254, 7
      %v6296 = vrot.slane %v5460, 7
      %v6297 = vsel %vm1094, %v6295, %v6296
      %v6298 = vrot.slane %v6255, 7
      %v6299 = vrot.slane %v5461, 7
      %v6300 = vsel %vm1094, %v6298, %v6299
      %v6301 = vrot.slane %v6256, 7
      %v6302 = vsel %vm1094, %v6296, %v6301
      %v6303 = vrot.slane %v6257, 7
      %v6304 = vsel %vm1094, %v6299, %v6303
      %6309 = vmatprep.subr.mxu0 0.0
      %6310 = vmatpush1.msra.mxu0 %v6274
      %6311 = vmatprep.subr.mxu0 0.0
      %6312 = vmatpush1.msra.mxu0 %v6273
      %6313 = vmatprep.subr.mxu0 0.0
      %6314 = vmatpush1.msra.mxu0 %v6272
      %6315 = vmatprep.subr.mxu0 0.0
      %6316 = vmatpush1.msra.mxu0 %v6271
      %6317 = vmatprep.subr.mxu0 0.0
      %6318 = vmatpush1.msra.mxu0 %v6270
      %6319 = vmatprep.subr.mxu0 0.0
      %6320 = vmatpush1.msra.mxu0 %v6269
      %6321 = vmatprep.subr.mxu0 0.0
      %6322 = vmatpush1.msra.mxu0 %v6268
      %6323 = vmatprep.subr.mxu0 0.0
      %6324 = vmatpush1.msra.mxu0 %v6267
      %6325 = vmatprep.subr.mxu0 0.0
      %6326 = vmatpush1.msra.mxu0 %v6266
      %6327 = vmatprep.subr.mxu0 0.0
      %6328 = vmatpush1.msra.mxu0 %v6265
      %6329 = vmatprep.subr.mxu0 0.0
      %6330 = vmatpush1.msra.mxu0 %v6264
      %6331 = vmatprep.subr.mxu0 0.0
      %6332 = vmatpush1.msra.mxu0 %v6263
      %6333 = vmatprep.subr.mxu0 0.0
      %6334 = vmatpush1.msra.mxu0 %v6262
      %6335 = vmatprep.subr.mxu0 0.0
      %6336 = vmatpush1.msra.mxu0 %v6261
      %6337 = vmatprep.subr.mxu0 0.0
      %6338 = vmatpush1.msra.mxu0 %v6260
      %6339 = vmatprep.subr.mxu0 0.0
      %6340 = vmatpush1.msra.mxu0 %v6259
      %6341 = vmatprep.subr.mxu0 0.0
      %6342 = vmatpush2.msra.mxu0 %v6290
      %6343 = vmatprep.subr.mxu0 0.0
      %6344 = vmatpush2.msra.mxu0 %v6289
      %6345 = vmatprep.subr.mxu0 0.0
      %6346 = vmatpush2.msra.mxu0 %v6288
      %6347 = vmatprep.subr.mxu0 0.0
      %6348 = vmatpush2.msra.mxu0 %v6287
      %6349 = vmatprep.subr.mxu0 0.0
      %6350 = vmatpush2.msra.mxu0 %v6286
      %6351 = vmatprep.subr.mxu0 0.0
      %6352 = vmatpush2.msra.mxu0 %v6285
      %6353 = vmatprep.subr.mxu0 0.0
      %6354 = vmatpush2.msra.mxu0 %v6284
      %6355 = vmatprep.subr.mxu0 0.0
      %6356 = vmatpush2.msra.mxu0 %v6283
      %6357 = vmatprep.subr.mxu0 0.0
      %6358 = vmatpush2.msra.mxu0 %v6282
      %6359 = vmatprep.subr.mxu0 0.0
      %6360 = vmatpush2.msra.mxu0 %v6281
      %6361 = vmatprep.subr.mxu0 0.0
      %6362 = vmatpush2.msra.mxu0 %v6280
      %6363 = vmatprep.subr.mxu0 0.0
      %6364 = vmatpush2.msra.mxu0 %v6279
      %6365 = vmatprep.subr.mxu0 0.0
      %6366 = vmatpush2.msra.mxu0 %v6278
      %6367 = vmatprep.subr.mxu0 0.0
      %6368 = vmatpush2.msra.mxu0 %v6277
      %6369 = vmatprep.subr.mxu0 0.0
      %6370 = vmatpush2.msra.mxu0 %v6276
      %6371 = vmatprep.subr.mxu0 0.0
      %6372 = vmatpush2.msra.mxu0 %v6275
      %6373 = vmatprep.mubr.f32.mxu0 %v6300
      %6374 = vmatmul.mubr.f32.gmra.mxu0 %v6297
      %v6375 = vpop.f32.mrf.mxu0
      %v6376 = vadd.f32 0.0, %v6375
      %v6377 = vpop.f32.mrf.mxu0
      %6378 = vmatprep.mubr.f32.mxu0 %v6304
      %6379 = vmatmul.mubr.f32.gmra.mxu0 %v6302
      %v6380 = vpop.f32.mrf.mxu0
      %v6381 = vadd.f32 0.0, %v6380
      %v6382 = vpop.f32.mrf.mxu0
      %6383 = vdwg.mxu0
      %v6384 = vadd.f32 %v6252, %v6376
      %v6385 = vadd.f32 %v6253, %v6381
      %v6386 = vld [vmem:[%s138 + $0x70] sm:$0xff]
      %v6387 = vld [vmem:[%s138 + $0x78] sm:$0xff]
      %s6388 = scalar_lea.vmem %s1, 12288
      %v6389 = vld [vmem:[%s6388] sm:$0xff]
      %v6390 = vld [vmem:[%s6388 + $0x8] sm:$0xff]
      %v6391 = vld [vmem:[%s6388 + $0x10] sm:$0xff]
      %v6392 = vld [vmem:[%s6388 + $0x18] sm:$0xff]
      %v6393 = vld [vmem:[%s6388 + $0x20] sm:$0xff]
      %v6394 = vld [vmem:[%s6388 + $0x28] sm:$0xff]
      %v6395 = vld [vmem:[%s6388 + $0x30] sm:$0xff]
      %v6396 = vld [vmem:[%s6388 + $0x38] sm:$0xff]
      %v6397 = vld [vmem:[%s6388 + $0x40] sm:$0xff]
      %v6398 = vld [vmem:[%s6388 + $0x48] sm:$0xff]
      %v6399 = vld [vmem:[%s6388 + $0x50] sm:$0xff]
      %v6400 = vld [vmem:[%s6388 + $0x58] sm:$0xff]
      %v6401 = vld [vmem:[%s6388 + $0x60] sm:$0xff]
      %v6402 = vld [vmem:[%s6388 + $0x68] sm:$0xff]
      %v6403 = vld [vmem:[%s6388 + $0x70] sm:$0xff]
      %v6404 = vld [vmem:[%s6388 + $0x78] sm:$0xff]
      %v6405 = vld [vmem:[%s6388 + $0x80] sm:$0xff]
      %v6406 = vld [vmem:[%s6388 + $0x88] sm:$0xff]
      %v6407 = vld [vmem:[%s6388 + $0x90] sm:$0xff]
      %v6408 = vld [vmem:[%s6388 + $0x98] sm:$0xff]
      %v6409 = vld [vmem:[%s6388 + $0xa0] sm:$0xff]
      %v6410 = vld [vmem:[%s6388 + $0xa8] sm:$0xff]
      %v6411 = vld [vmem:[%s6388 + $0xb0] sm:$0xff]
      %v6412 = vld [vmem:[%s6388 + $0xb8] sm:$0xff]
      %v6413 = vld [vmem:[%s6388 + $0xc0] sm:$0xff]
      %v6414 = vld [vmem:[%s6388 + $0xc8] sm:$0xff]
      %v6415 = vld [vmem:[%s6388 + $0xd0] sm:$0xff]
      %v6416 = vld [vmem:[%s6388 + $0xd8] sm:$0xff]
      %v6417 = vld [vmem:[%s6388 + $0xe0] sm:$0xff]
      %v6418 = vld [vmem:[%s6388 + $0xe8] sm:$0xff]
      %v6419 = vld [vmem:[%s6388 + $0xf0] sm:$0xff]
      %v6420 = vld [vmem:[%s6388 + $0xf8] sm:$0xff]
      %6421 = vmatprep.subr.mxu0 0.0
      %6422 = vmatpush1.msra.mxu0 %v6404
      %6423 = vmatprep.subr.mxu0 0.0
      %6424 = vmatpush1.msra.mxu0 %v6403
      %6425 = vmatprep.subr.mxu0 0.0
      %6426 = vmatpush1.msra.mxu0 %v6402
      %6427 = vmatprep.subr.mxu0 0.0
      %6428 = vmatpush1.msra.mxu0 %v6401
      %6429 = vmatprep.subr.mxu0 0.0
      %6430 = vmatpush1.msra.mxu0 %v6400
      %6431 = vmatprep.subr.mxu0 0.0
      %6432 = vmatpush1.msra.mxu0 %v6399
      %6433 = vmatprep.subr.mxu0 0.0
      %6434 = vmatpush1.msra.mxu0 %v6398
      %6435 = vmatprep.subr.mxu0 0.0
      %6436 = vmatpush1.msra.mxu0 %v6397
      %6437 = vmatprep.subr.mxu0 0.0
      %6438 = vmatpush1.msra.mxu0 %v6396
      %6439 = vmatprep.subr.mxu0 0.0
      %6440 = vmatpush1.msra.mxu0 %v6395
      %6441 = vmatprep.subr.mxu0 0.0
      %6442 = vmatpush1.msra.mxu0 %v6394
      %6443 = vmatprep.subr.mxu0 0.0
      %6444 = vmatpush1.msra.mxu0 %v6393
      %6445 = vmatprep.subr.mxu0 0.0
      %6446 = vmatpush1.msra.mxu0 %v6392
      %6447 = vmatprep.subr.mxu0 0.0
      %6448 = vmatpush1.msra.mxu0 %v6391
      %6449 = vmatprep.subr.mxu0 0.0
      %6450 = vmatpush1.msra.mxu0 %v6390
      %6451 = vmatprep.subr.mxu0 0.0
      %6452 = vmatpush1.msra.mxu0 %v6389
      %6453 = vmatprep.subr.mxu0 0.0
      %6454 = vmatpush2.msra.mxu0 %v6420
      %6455 = vmatprep.subr.mxu0 0.0
      %6456 = vmatpush2.msra.mxu0 %v6419
      %6457 = vmatprep.subr.mxu0 0.0
      %6458 = vmatpush2.msra.mxu0 %v6418
      %6459 = vmatprep.subr.mxu0 0.0
      %6460 = vmatpush2.msra.mxu0 %v6417
      %6461 = vmatprep.subr.mxu0 0.0
      %6462 = vmatpush2.msra.mxu0 %v6416
      %6463 = vmatprep.subr.mxu0 0.0
      %6464 = vmatpush2.msra.mxu0 %v6415
      %6465 = vmatprep.subr.mxu0 0.0
      %6466 = vmatpush2.msra.mxu0 %v6414
      %6467 = vmatprep.subr.mxu0 0.0
      %6468 = vmatpush2.msra.mxu0 %v6413
      %6469 = vmatprep.subr.mxu0 0.0
      %6470 = vmatpush2.msra.mxu0 %v6412
      %6471 = vmatprep.subr.mxu0 0.0
      %6472 = vmatpush2.msra.mxu0 %v6411
      %6473 = vmatprep.subr.mxu0 0.0
      %6474 = vmatpush2.msra.mxu0 %v6410
      %6475 = vmatprep.subr.mxu0 0.0
      %6476 = vmatpush2.msra.mxu0 %v6409
      %6477 = vmatprep.subr.mxu0 0.0
      %6478 = vmatpush2.msra.mxu0 %v6408
      %6479 = vmatprep.subr.mxu0 0.0
      %6480 = vmatpush2.msra.mxu0 %v6407
      %6481 = vmatprep.subr.mxu0 0.0
      %6482 = vmatpush2.msra.mxu0 %v6406
      %6483 = vmatprep.subr.mxu0 0.0
      %6484 = vmatpush2.msra.mxu0 %v6405
      %6485 = vmatprep.mubr.f32.mxu0 %v5461
      %6486 = vmatmul.mubr.f32.gmra.mxu0 %v5460
      %v6487 = vpop.f32.mrf.mxu0
      %v6488 = vadd.f32 0.0, %v6487
      %v6489 = vpop.f32.mrf.mxu0
      %6490 = vmatprep.mubr.f32.mxu0 %v6387
      %6491 = vmatmul.mubr.f32.gmra.mxu0 %v6386
      %v6492 = vpop.f32.mrf.mxu0
      %v6493 = vadd.f32 0.0, %v6492
      %v6494 = vpop.f32.mrf.mxu0
      %6495 = vdwg.mxu0
      %v6496 = vadd.f32 %v6384, %v6488
      %v6497 = vadd.f32 %v6385, %v6493
      %6498 = vst [vmem:[%s143] sm:$0xff] %v6496
      %6499 = vst [vmem:[%s143 + $0x8] sm:$0xff] %v6497
      %p6500 = scmp.lt.s32.totalorder %s13, 1
      %s6501 = scalar_select %p6500, %s13, 1
      %s6502 = smul.addr %s6501, 2
      %s6503 = smul.addr %s6502, 8
      %s6504 = scalar_lea.vmem %s2, %s6503
      // Predicated region
      $region29: #{basic_refine_forward.1} parent=27 // pred_check
        %p6505 = pneg %p78
      $region30: #{basic_refine_forward.1} parent=27 // pred_check_branch
        %6507 = sbr.rel (%p6505) target = $region32
      $region31: #{basic_refine_forward.1} parent=27 // pred_region
        _
      $region32: #{basic_refine_forward.1} parent=27 // pred_fallthru
        _
    $region28: #{basic_refine_forward.1} parent=5 // pred_fallthru
      _
    %p6508 = scmp.le.s32.totalorder 2, %s8
    // Predicated region
    $region33: #{basic_refine_forward.1} parent=5 // pred_check
      %p6509 = pneg %p6508
    $region34: #{basic_refine_forward.1} parent=5 // pred_check_branch
      %6511 = sbr.rel (%p6509) target = $region36
    $region35: #{basic_refine_forward.1} parent=5 // pred_region
      %s6512 = ssub.s32 %s8, 2
      // Predicated region
      $region37: #{basic_refine_forward.1} parent=35 // pred_check
        %p6513 = pneg %p84
      $region38: #{basic_refine_forward.1} parent=35 // pred_check_branch
        %6515 = sbr.rel (%p6513) target = $region40
      $region39: #{basic_refine_forward.1} parent=35 // pred_region
        %p6516 = scmp.lt.s32.totalorder %s14, 1
        %s6517 = scalar_select %p6516, %s14, 1
        %s6518 = smul.addr %s6517, 2
        %s6519 = smul.addr %s6518, 8
        %s6520 = scalar_lea.vmem %s2, %s6519
      $region40: #{basic_refine_forward.1} parent=35 // pred_fallthru
        _
    $region36: #{basic_refine_forward.1} parent=5 // pred_fallthru
      _
  $region6: #{basic_refine_forward.1} parent=0 // loop_footer
    %s12 = sadd.s32 1, %s8
  $region7: #{basic_refine_forward.1} parent=0 // loop_footer_branch
    %7 = sbr.rel target = $region3
  $region8: #{basic_refine_forward.1} parent=0 // loop_exit
    _

</llo_original>
